<compile_context>
chip_gen: v7x
topology: tpu7x:2x2x1
jax: 0.10.0
libtpu: 0.0.40
codegen_flags: <defaults>
</compile_context>

<pallas_src>
import jax
import jax.numpy as jnp
from jax.experimental import pallas as pl
from jax.experimental.pallas import tpu as pltpu

DT = 1.0  # matches `dt = 1` in neuralpde/network.py


# ---------------------------------------------------------------------------
# Pallas kernels
# ---------------------------------------------------------------------------
def _fullspec(shape):
    # whole-array block (no grid) -> index map takes zero args
    return pl.BlockSpec(shape, lambda *_: (0,) * len(shape))


def _lc0_fwd_kernel(w_ref, p_ref, b_ref, z_ref, a_ref):
    # LocallyConnected2d forward (untied per-position weights) + fused ReLU.
    # w: (Co, R, NM); p: (R, NM); b: (Co, NM); z/a: (Co, NM)
    z = jnp.sum(w_ref[...] * p_ref[...][None, :, :], axis=1) + b_ref[...]
    z_ref[...] = z
    a_ref[...] = jnp.maximum(z, 0.0)


def lc0_forward(w, p, b):
    Co, R, NM = w.shape
    return pl.pallas_call(
        _lc0_fwd_kernel,
        out_shape=(jax.ShapeDtypeStruct((Co, NM), jnp.float32),
                   jax.ShapeDtypeStruct((Co, NM), jnp.float32)),
        in_specs=[_fullspec(w.shape), _fullspec(p.shape), _fullspec(b.shape)],
        out_specs=(_fullspec((Co, NM)), _fullspec((Co, NM))),
    )(w, p, b)


def _lc1_fwd_kernel(w_ref, p_ref, b_ref, o_ref):
    # final LC layer: no activation
    o_ref[...] = jnp.sum(w_ref[...] * p_ref[...][None, :, :], axis=1) + b_ref[...]


def lc1_forward(w, p, b):
    Co, R, NM = w.shape
    return pl.pallas_call(
        _lc1_fwd_kernel,
        out_shape=jax.ShapeDtypeStruct((Co, NM), jnp.float32),
        in_specs=[_fullspec(w.shape), _fullspec(p.shape), _fullspec(b.shape)],
        out_specs=_fullspec((Co, NM)),
    )(w, p, b)


def _conv_fwd_kernel(w_ref, p_ref, b_ref, z_ref, a_ref):
    # Conv2d forward as im2col matmul; bias-add + ReLU fused.
    # w: (Co, R); p: (R, NM); b: (Co, 1); z/a: (Co, NM)
    z = (jnp.dot(w_ref[...], p_ref[...], preferred_element_type=jnp.float32)
         + b_ref[...])
    z_ref[...] = z
    a_ref[...] = jnp.maximum(z, 0.0)


def conv_forward(w2, p, b_col):
    Co = w2.shape[0]
    NM = p.shape[1]
    return pl.pallas_call(
        _conv_fwd_kernel,
        out_shape=(jax.ShapeDtypeStruct((Co, NM), jnp.float32),
                   jax.ShapeDtypeStruct((Co, NM), jnp.float32)),
        in_specs=[_fullspec(w2.shape), _fullspec(p.shape), _fullspec(b_col.shape)],
        out_specs=(_fullspec((Co, NM)), _fullspec((Co, NM))),
    )(w2, p, b_col)


def _conv_bwd_kernel(w_ref, p_ref, z_ref, o_ref):
    # Transposed Conv2d (VJP) as ONE wide matmul over B*NM lanes, with the
    # ReLU backward mask of this layer's pre-activation fused in.
    # w: (Co, R); p: (R, B*NM); z: (Co, B*NM) tiled pre-activation; o: (Co, B*NM)
    d = jnp.dot(w_ref[...], p_ref[...], preferred_element_type=jnp.float32)
    o_ref[...] = jnp.where(z_ref[...] > 0.0, d, 0.0)


def conv_backward(wb2, pb, z_tiled):
    Co = wb2.shape[0]
    L = pb.shape[1]
    return pl.pallas_call(
        _conv_bwd_kernel,
        out_shape=jax.ShapeDtypeStruct((Co, L), jnp.float32),
        in_specs=[_fullspec(wb2.shape), _fullspec(pb.shape),
                  _fullspec(z_tiled.shape)],
        out_specs=_fullspec((Co, L)),
    )(wb2, pb, z_tiled)


def _lc_bwd_kernel(w_ref, g_ref, o_ref):
    # LC transposed (VJP): per-position contraction over output channels.
    # Only the patch rows corresponding to the x/y input channels are passed.
    # w: (Co, R, NM); g: (1, Co, NM); o: (1, R, NM)
    o_ref[0] = jnp.sum(w_ref[...] * g_ref[0][:, None, :], axis=0)


def lc_backward(w, g):
    Co, R, NM = w.shape
    B = g.shape[0]
    return pl.pallas_call(
        _lc_bwd_kernel,
        out_shape=jax.ShapeDtypeStruct((B, R, NM), jnp.float32),
        grid=(B,),
        in_specs=[pl.BlockSpec((Co, R, NM), lambda b: (0, 0, 0)),  # weight resident
                  pl.BlockSpec((1, Co, NM), lambda b: (b, 0, 0))],
        out_specs=pl.BlockSpec((1, R, NM), lambda b: (b, 0, 0)),
        compiler_params=pltpu.CompilerParams(
            dimension_semantics=("parallel",)),   # B steps independent (v7x 2 TCs)
    )(w, g)


def _pde_rk_kernel(kx_ref, ky_ref, v1_ref, v2_ref, f_ref,
                   urx_ref, ury_ref, urk_ref, a_ref, amb_ref,
                   ui_ref, uf_ref):
    # pde = kappa*(u_xx+u_yy) + kx*u_x + ky*u_y + v1*u_x + v2*u_y + f
    # The diffusion term is identically zero (ReLU double-backward == 0 for a
    # piecewise-linear net, exactly reproducing torch.autograd), so it and its
    # dead input DMAs are dropped.
    pde = ((kx_ref[...] + v1_ref[...]) * urx_ref[...]
           + (ky_ref[...] + v2_ref[...]) * ury_ref[...]
           + f_ref[...])
    ui_ref[...] = urk_ref[...] - DT * jnp.dot(
        a_ref[...], pde, preferred_element_type=jnp.float32)
    uf_ref[...] = urk_ref[...] - DT * jnp.dot(
        amb_ref[...], pde, preferred_element_type=jnp.float32)


def pde_rk(kx, ky, v1, v2, f, urx, ury, urk, A, Amb):
    q, NM = urk.shape
    args = (kx, ky, v1, v2, f, urx, ury, urk, A, Amb)
    return pl.pallas_call(
        _pde_rk_kernel,
        out_shape=(jax.ShapeDtypeStruct((q, NM), jnp.float32),
                   jax.ShapeDtypeStruct((q, NM), jnp.float32)),
        in_specs=[_fullspec(a.shape) for a in args],
        out_specs=(_fullspec((q, NM)), _fullspec((q, NM))),
    )(*args)


# ---------------------------------------------------------------------------
# Glue: im2col / col2im patch plumbing (plain JAX)
# TODO(synk): fold im2col/col2im (and ideally the whole fwd+VJP stack) into a
#             single VMEM-resident pallas_call using pltpu.roll-based shifts.
# ---------------------------------------------------------------------------
def im2col(x, k, pad):
    # x: (C, N, M) -> (C*k*k, N*M); flatten order (c, a, b) matches
    # torch Conv2d weight.reshape(Cout, Cin*k*k)
    C, N, M = x.shape
    xp = jnp.pad(x, ((0, 0), (pad, pad), (pad, pad)))
    cols = [xp[:, a:a + N, b:b + M] for a in range(k) for b in range(k)]
    pat = jnp.stack(cols, axis=1)                 # (C, k*k, N, M)
    return pat.reshape(C * k * k, N * M)


def im2col_folded(x, k, pad):
    # x: (C, B, N, M) -> (C*k*k, B*N*M); lane index = b*N*M + n*M + m, i.e. the
    # cotangent batch B is folded into the matmul N dimension.
    C, B, N, M = x.shape
    xp = jnp.pad(x, ((0, 0), (0, 0), (pad, pad), (pad, pad)))
    cols = [xp[:, :, a:a + N, b:b + M] for a in range(k) for b in range(k)]
    pat = jnp.stack(cols, axis=1)                 # (C, k*k, B, N, M)
    return pat.reshape(C * k * k, B * N * M)


def col2im(t, C, k, pad, N, M):
    # scatter-add inverse of im2col; t: (C*k*k, N*M) -> (C, N, M)
    t = t.reshape(C, k, k, N, M)
    out = jnp.zeros((C, N + 2 * pad, M + 2 * pad), jnp.float32)
    for a in range(k):
        for b in range(k):
            out = out.at[:, a:a + N, b:b + M].add(t[:, a, b])
    return out[:, pad:pad + N, pad:pad + M]


# ---------------------------------------------------------------------------
# Network
# ---------------------------------------------------------------------------
class PallasNetwork:
    def __init__(self, q, shape, kernel, key):
        self.q = q
        self.T, self.N, self.M = shape
        self.k = kernel
        assert kernel % 2 == 1, "Kernel size must be odd!"
        self.pad = kernel // 2
        self.cin = 2 + self.T
        self.hid = 2 * (4 + q)
        self.cout = 4 + q
        N, M = self.N, self.M
        NM = N * M
        kk = kernel * kernel
        keys = jax.random.split(key, 16)

        def init(kkey, shp, fan_in):
            return (jax.random.normal(kkey, shp, jnp.float32)
                    * jnp.sqrt(2.0 / fan_in))

        # LocallyConnected2d #0 (untied weights, layout (Cout, Cin*k*k, N*M))
        self.w_lc0 = init(keys[0], (self.hid, self.cin * kk, NM), self.cin * kk)
        self.b_lc0 = 0.01 * jax.random.normal(keys[1], (self.hid, NM), jnp.float32)
        # 4 x Conv2d(hid -> hid, kernel, same padding)
        self.w_conv = [init(keys[2 + i], (self.hid, self.hid, kernel, kernel),
                            self.hid * kk) for i in range(4)]
        self.b_conv = [0.01 * jax.random.normal(keys[6 + i], (self.hid,),
                                                jnp.float32) for i in range(4)]
        # LocallyConnected2d #1
        self.w_lc1 = init(keys[10], (self.cout, self.hid * kk, NM), self.hid * kk)
        self.b_lc1 = 0.01 * jax.random.normal(keys[11], (self.cout, NM), jnp.float32)

        # matmul-layout conv weights: forward (Cout, Cin*k*k) and transposed
        # (flipped kernels + swapped channel axes) for the VJP.
        self.w_conv_fwd = [w.reshape(self.hid, self.hid * kk) for w in self.w_conv]
        self.w_conv_bwd = [jnp.transpose(w[:, :, ::-1, ::-1], (1, 0, 2, 3))
                           .reshape(self.hid, self.hid * kk) for w in self.w_conv]
        self.b_conv_col = [b[:, None] for b in self.b_conv]

        # cotangent channels requested by torch.autograd.grad:
        # [kappa, v1, v2, u_rk[0..q-1]]  -> B = 3 + q channels
        chans = jnp.asarray([0, 1, 2] + [4 + i for i in range(q)], jnp.int32)

        # LC#1 backward with one-hot (all-ones spatial) cotangents is an exact
        # row gather of its untied weights, and its col2im is therefore a pure
        # function of the weights -> precompute once here (layout
        # (hid, B, N, M) ready for the folded backward conv loop).
        t = jnp.take(self.w_lc1, chans, axis=0)                   # (B, hid*k*k, NM)
        da5 = jax.vmap(lambda tt: col2im(tt, self.hid, kernel, self.pad, N, M))(t)
        self.da5_t = jnp.transpose(da5, (1, 0, 2, 3))             # (hid, B, N, M)

        # LC#0 backward only needs gradients of the x and y input channels
        # (patch rows 0 .. 2*k*k-1): pre-slice the weights once.
        self.w_lc0_bwd = self.w_lc0[:, :2 * kk, :]                # (hid, 2*k*k, NM)

        # TODO(synk): RK() loads Butcher_IRKq.txt from disk in the original;
        # no file I/O allowed here, so deterministic synthetic IRK coefficients
        # with the same shapes/structure are used instead.
        self.rk_A = (jax.random.uniform(keys[12], (q, q), jnp.float32)
                     * jnp.tril(jnp.ones((q, q), jnp.float32)) / q)
        self.rk_b = jax.random.uniform(keys[13], (q,), jnp.float32) / q
        self.rk_c = jnp.linspace(0.0, 1.0, q, dtype=jnp.float32)
        self.rk_Amb = self.rk_A - self.rk_b[None, :]

    def forward(self, x, y, u):
        N, M, NM = self.N, self.M, self.N * self.M
        k, pad, q = self.k, self.pad, self.q
        hid, cin = self.hid, self.cin
        B = 3 + q

        # ---------------- forward through the conv stack ------------------
        inp = jnp.concatenate([x[None], y[None], u], axis=0)     # (cin, N, M)
        p0 = im2col(inp, k, pad)                                  # (cin*k*k, NM)
        z1, a = lc0_forward(self.w_lc0, p0, self.b_lc0)           # (hid, NM) x2
        zs = [z1]
        for i in range(4):
            p = im2col(a.reshape(hid, N, M), k, pad)              # (hid*k*k, NM)
            z, a = conv_forward(self.w_conv_fwd[i], p, self.b_conv_col[i])
            zs.append(z)
        p5 = im2col(a.reshape(hid, N, M), k, pad)                 # (hid*k*k, NM)
        outs = lc1_forward(self.w_lc1, p5, self.b_lc1)            # (cout, NM)

        kappa, v1, v2, f = outs[0], outs[1], outs[2], outs[3]
        u_rk = outs[4:]                                           # (q, NM)

        # ------------ VJPs w.r.t. coordinate inputs x and y ---------------
        # torch.autograd.grad(outs, (x, y), one-hot channel cotangents).
        # The stack is piecewise linear, so the backward pass is a chain of
        # ReLU masks + transposed linear layers, batched over B = 3 + q.
        #
        # LC#1 backward + col2im of the one-hot cotangents is precomputed in
        # __init__ (self.da5_t); only the runtime ReLU mask remains here.
        m5 = (zs[4] > 0.0).astype(jnp.float32).reshape(hid, N, M)
        d = self.da5_t * m5[:, None]                              # (hid, B, N, M)

        # backward through Conv2d #4..#1: one wide (hid, R) @ (R, B*NM) matmul
        # per layer, with that layer's ReLU backward mask fused in-kernel.
        for i in range(3, -1, -1):
            pb = im2col_folded(d, k, pad)                         # (hid*k*k, B*NM)
            z_tiled = jnp.tile(zs[i], (1, B))                     # (hid, B*NM)
            dflat = conv_backward(self.w_conv_bwd[i], pb, z_tiled)  # (hid, B*NM)
            d = dflat.reshape(hid, B, N, M)
        dz1 = dflat.reshape(hid, B, NM).transpose(1, 0, 2)        # (B, hid, NM)

        # backward through LocallyConnected2d #0 — only the x/y patch rows.
        t0 = lc_backward(self.w_lc0_bwd, dz1)                     # (B, 2*k*k, NM)
        dinp = jax.vmap(lambda tt: col2im(tt, 2, k, pad, N, M))(t0)  # (B, 2, N, M)
        grad_x = dinp[:, 0].reshape(B, NM)
        grad_y = dinp[:, 1].reshape(B, NM)

        kappa_x, kappa_y = grad_x[0], grad_y[0]
        v1_x, v1_y = grad_x[1], grad_y[1]
        v2_x, v2_y = grad_x[2], grad_y[2]
        u_rk_x = grad_x[3:]                                       # (q, NM)
        u_rk_y = grad_y[3:]
        # u_rk_xx / u_rk_yy: the net is piecewise linear (ReLU + linear), and
        # torch's ReLU double-backward contributes exactly zero w.r.t. its
        # input, so the second derivatives are identically zero; the
        # kappa*(u_xx+u_yy) diffusion term is therefore dropped in the fused
        # PDE/RK kernel below (exact reproduction of torch behavior).

        # ------------- PDE residual + implicit RK update (fused) -----------
        uhat_i, uhat_f = pde_rk(kappa_x[None], kappa_y[None],
                                v1[None], v2[None], f[None],
                                u_rk_x, u_rk_y, u_rk,
                                self.rk_A, self.rk_Amb)

        rs = lambda arr: arr.reshape(N, M)
        return (uhat_i.reshape(q, N, M), uhat_f.reshape(q, N, M),
                rs(kappa), rs(kappa_x), rs(kappa_y),
                rs(v1), rs(v1_x), rs(v1_y),
                rs(v2), rs(v2_x), rs(v2_y), rs(f))


if __name__ == "__main__":
    q = 8
    T, N, M = 4, 16, 16          # shape=(T, N, M); N*M = 256 (lane friendly)
    kernel = 3

    key = jax.random.PRNGKey(0)
    kp, ku = jax.random.split(key, 2)

    net = PallasNetwork(q, (T, N, M), kernel, kp)

    xs = jnp.linspace(-1.0, 1.0, N, dtype=jnp.float32)
    ys = jnp.linspace(-1.0, 1.0, M, dtype=jnp.float32)
    x = jnp.broadcast_to(xs[:, None], (N, M))
    y = jnp.broadcast_to(ys[None, :], (N, M))
    u = jax.random.normal(ku, (T, N, M), dtype=jnp.float32)

    fwd = jax.jit(net.forward)
    outs = fwd(x, y, u)
    jax.block_until_ready(outs)

    assert outs[0].shape == (q, N, M) and outs[1].shape == (q, N, M)
    assert outs[2].shape == (N, M) and outs[11].shape == (N, M)
    print("KERNEL_OK")
</pallas_src>

<mosaic_0001>
module attributes {stable_mosaic.version = 11 : i64} {
  func.func @_lc0_fwd_kernel(%arg0: memref<24x54x256xf32, #tpu.memory_space<vmem>>, %arg1: memref<54x256xf32, #tpu.memory_space<vmem>>, %arg2: memref<24x256xf32, #tpu.memory_space<vmem>>, %arg3: memref<24x256xf32, #tpu.memory_space<vmem>>, %arg4: memref<24x256xf32, #tpu.memory_space<vmem>>) attributes {dimension_semantics = [], scalar_prefetch = 0 : i64, scratch_operands = 0 : i64, tpu.core_type = #tpu.core_type<tc>} {
    %c0 = arith.constant 0 : index
    %c0_0 = arith.constant 0 : index
    %c0_1 = arith.constant 0 : index
    %0 = vector.load %arg0[%c0, %c0_0, %c0_1] : memref<24x54x256xf32, #tpu.memory_space<vmem>>, vector<24x54x256xf32>
    %c0_2 = arith.constant 0 : index
    %c0_3 = arith.constant 0 : index
    %1 = vector.load %arg1[%c0_2, %c0_3] : memref<54x256xf32, #tpu.memory_space<vmem>>, vector<54x256xf32>
    %2 = vector.shape_cast %1 : vector<54x256xf32> to vector<1x54x256xf32>
    %3 = vector.broadcast %2 : vector<1x54x256xf32> to vector<24x54x256xf32>
    %4 = arith.mulf %0, %3 : vector<24x54x256xf32>
    %cst = arith.constant dense<0.000000e+00> : vector<24x256xf32>
    %5 = vector.multi_reduction <add>, %4, %cst [1] : vector<24x54x256xf32> to vector<24x256xf32>
    %c0_4 = arith.constant 0 : index
    %c0_5 = arith.constant 0 : index
    %6 = vector.load %arg2[%c0_4, %c0_5] : memref<24x256xf32, #tpu.memory_space<vmem>>, vector<24x256xf32>
    %7 = arith.addf %5, %6 : vector<24x256xf32>
    %c0_6 = arith.constant 0 : index
    %c0_7 = arith.constant 0 : index
    %8 = vector.load %arg3[%c0_6, %c0_7] : memref<24x256xf32, #tpu.memory_space<vmem>>, vector<24x256xf32>
    tpu.vector_store %arg3[%c0_6, %c0_7], %7 {strides = array<i32>} : memref<24x256xf32, #tpu.memory_space<vmem>>, vector<24x256xf32>,
    %cst_8 = arith.constant 0.000000e+00 : f32
    %9 = vector.broadcast %cst_8 : f32 to vector<24x256xf32>
    %10 = arith.maximumf %7, %9 : vector<24x256xf32>
    %c0_9 = arith.constant 0 : index
    %c0_10 = arith.constant 0 : index
    %11 = vector.load %arg4[%c0_9, %c0_10] : memref<24x256xf32, #tpu.memory_space<vmem>>, vector<24x256xf32>
    tpu.vector_store %arg4[%c0_9, %c0_10], %10 {strides = array<i32>} : memref<24x256xf32, #tpu.memory_space<vmem>>, vector<24x256xf32>,
    return
  }
}

module attributes {stable_mosaic.version = 11 : i64} {
  func.func @_conv_fwd_kernel(%arg0: memref<24x216xf32, #tpu.memory_space<vmem>>, %arg1: memref<216x256xf32, #tpu.memory_space<vmem>>, %arg2: memref<24x1xf32, #tpu.memory_space<vmem>>, %arg3: memref<24x256xf32, #tpu.memory_space<vmem>>, %arg4: memref<24x256xf32, #tpu.memory_space<vmem>>) attributes {dimension_semantics = [], scalar_prefetch = 0 : i64, scratch_operands = 0 : i64, tpu.core_type = #tpu.core_type<tc>} {
    %c0 = arith.constant 0 : index
    %c0_0 = arith.constant 0 : index
    %0 = vector.load %arg0[%c0, %c0_0] : memref<24x216xf32, #tpu.memory_space<vmem>>, vector<24x216xf32>
    %c0_1 = arith.constant 0 : index
    %c0_2 = arith.constant 0 : index
    %1 = vector.load %arg1[%c0_1, %c0_2] : memref<216x256xf32, #tpu.memory_space<vmem>>, vector<216x256xf32>
    %cst = arith.constant dense<0.000000e+00> : vector<24x256xf32>
    %2 = tpu.matmul %0, %1, %cst {dimension_numbers = #tpu.dot_dimension_numbers<[1], [0], [0], [1], [0, 0, 1, 1], [], []>} : vector<24x216xf32>, vector<216x256xf32>, vector<24x256xf32> -> vector<24x256xf32>
    %c0_3 = arith.constant 0 : index
    %c0_4 = arith.constant 0 : index
    %3 = vector.load %arg2[%c0_3, %c0_4] : memref<24x1xf32, #tpu.memory_space<vmem>>, vector<24x1xf32>
    %4 = vector.broadcast %3 : vector<24x1xf32> to vector<24x256xf32>
    %5 = arith.addf %2, %4 : vector<24x256xf32>
    %c0_5 = arith.constant 0 : index
    %c0_6 = arith.constant 0 : index
    %6 = vector.load %arg3[%c0_5, %c0_6] : memref<24x256xf32, #tpu.memory_space<vmem>>, vector<24x256xf32>
    tpu.vector_store %arg3[%c0_5, %c0_6], %5 {strides = array<i32>} : memref<24x256xf32, #tpu.memory_space<vmem>>, vector<24x256xf32>,
    %cst_7 = arith.constant 0.000000e+00 : f32
    %7 = vector.broadcast %cst_7 : f32 to vector<24x256xf32>
    %8 = arith.maximumf %5, %7 : vector<24x256xf32>
    %c0_8 = arith.constant 0 : index
    %c0_9 = arith.constant 0 : index
    %9 = vector.load %arg4[%c0_8, %c0_9] : memref<24x256xf32, #tpu.memory_space<vmem>>, vector<24x256xf32>
    tpu.vector_store %arg4[%c0_8, %c0_9], %8 {strides = array<i32>} : memref<24x256xf32, #tpu.memory_space<vmem>>, vector<24x256xf32>,
    return
  }
}

module attributes {stable_mosaic.version = 11 : i64} {
  func.func @_conv_bwd_kernel(%arg0: memref<24x216xf32, #tpu.memory_space<vmem>>, %arg1: memref<216x2816xf32, #tpu.memory_space<vmem>>, %arg2: memref<24x2816xf32, #tpu.memory_space<vmem>>, %arg3: memref<24x2816xf32, #tpu.memory_space<vmem>>) attributes {dimension_semantics = [], scalar_prefetch = 0 : i64, scratch_operands = 0 : i64, tpu.core_type = #tpu.core_type<tc>} {
    %c0 = arith.constant 0 : index
    %c0_0 = arith.constant 0 : index
    %0 = vector.load %arg0[%c0, %c0_0] : memref<24x216xf32, #tpu.memory_space<vmem>>, vector<24x216xf32>
    %c0_1 = arith.constant 0 : index
    %c0_2 = arith.constant 0 : index
    %1 = vector.load %arg1[%c0_1, %c0_2] : memref<216x2816xf32, #tpu.memory_space<vmem>>, vector<216x2816xf32>
    %cst = arith.constant dense<0.000000e+00> : vector<24x2816xf32>
    %2 = tpu.matmul %0, %1, %cst {dimension_numbers = #tpu.dot_dimension_numbers<[1], [0], [0], [1], [0, 0, 1, 1], [], []>} : vector<24x216xf32>, vector<216x2816xf32>, vector<24x2816xf32> -> vector<24x2816xf32>
    %c0_3 = arith.constant 0 : index
    %c0_4 = arith.constant 0 : index
    %3 = vector.load %arg2[%c0_3, %c0_4] : memref<24x2816xf32, #tpu.memory_space<vmem>>, vector<24x2816xf32>
    %cst_5 = arith.constant 0.000000e+00 : f32
    %4 = vector.broadcast %cst_5 : f32 to vector<24x2816xf32>
    %5 = arith.cmpf ogt, %3, %4 : vector<24x2816xf32>
    %cst_6 = arith.constant 0.000000e+00 : f32
    %6 = vector.broadcast %cst_6 : f32 to vector<24x2816xf32>
    %7 = arith.select %5, %2, %6 : vector<24x2816xi1>, vector<24x2816xf32>
    %c0_7 = arith.constant 0 : index
    %c0_8 = arith.constant 0 : index
    %8 = vector.load %arg3[%c0_7, %c0_8] : memref<24x2816xf32, #tpu.memory_space<vmem>>, vector<24x2816xf32>
    tpu.vector_store %arg3[%c0_7, %c0_8], %7 {strides = array<i32>} : memref<24x2816xf32, #tpu.memory_space<vmem>>, vector<24x2816xf32>,
    return
  }
}

module attributes {stable_mosaic.version = 11 : i64} {
  func.func @_lc_bwd_kernel(%arg0: i32, %arg1: memref<24x18x256xf32, #tpu.memory_space<vmem>>, %arg2: memref<1x24x256xf32, #tpu.memory_space<vmem>>, %arg3: memref<1x18x256xf32, #tpu.memory_space<vmem>>) attributes {dimension_semantics = [#tpu.dimension_semantics<parallel>], iteration_bounds = array<i64: 11>, scalar_prefetch = 0 : i64, scratch_operands = 0 : i64, tpu.core_type = #tpu.core_type<tc>, window_params = [{pipeline_mode = #tpu.pipeline_mode<synchronous>, transform_indices = @transform_0, window_bounds = array<i64: 24, 18, 256>}, {transform_indices = @transform_1, window_bounds = array<i64: 1, 24, 256>}, {transform_indices = @transform_2, window_bounds = array<i64: 1, 18, 256>}]} {
    %c0 = arith.constant 0 : index
    %c0_0 = arith.constant 0 : index
    %c0_1 = arith.constant 0 : index
    %0 = vector.load %arg1[%c0, %c0_0, %c0_1] : memref<24x18x256xf32, #tpu.memory_space<vmem>>, vector<24x18x256xf32>
    %c0_2 = arith.constant 0 : index
    %c0_3 = arith.constant 0 : index
    %c0_4 = arith.constant 0 : index
    %1 = vector.load %arg2[%c0_2, %c0_3, %c0_4] : memref<1x24x256xf32, #tpu.memory_space<vmem>>, vector<1x24x256xf32>
    %2 = vector.shape_cast %1 : vector<1x24x256xf32> to vector<24x256xf32>
    %3 = vector.shape_cast %2 : vector<24x256xf32> to vector<24x1x256xf32>
    %4 = vector.broadcast %3 : vector<24x1x256xf32> to vector<24x18x256xf32>
    %5 = arith.mulf %0, %4 : vector<24x18x256xf32>
    %cst = arith.constant dense<0.000000e+00> : vector<18x256xf32>
    %6 = vector.multi_reduction <add>, %5, %cst [0] : vector<24x18x256xf32> to vector<18x256xf32>
    %c0_5 = arith.constant 0 : index
    %c0_6 = arith.constant 0 : index
    %c0_7 = arith.constant 0 : index
    %7 = vector.load %arg3[%c0_5, %c0_6, %c0_7] : memref<1x18x256xf32, #tpu.memory_space<vmem>>, vector<1x18x256xf32>
    %8 = vector.shape_cast %7 : vector<1x18x256xf32> to vector<18x256xf32>
    %9 = vector.shape_cast %6 : vector<18x256xf32> to vector<1x18x256xf32>
    tpu.vector_store %arg3[%c0_5, %c0_6, %c0_7], %9 {strides = array<i32>} : memref<1x18x256xf32, #tpu.memory_space<vmem>>, vector<1x18x256xf32>,
    return
  }
  func.func @transform_0(%arg0: i32) -> (i32, i32, i32) {
    %c0_i32 = arith.constant 0 : i32
    %c0_i32_0 = arith.constant 0 : i32
    %c0_i32_1 = arith.constant 0 : i32
    %c0_i32_2 = arith.constant 0 : i32
    return %c0_i32, %c0_i32_0, %c0_i32_1 : i32, i32, i32
  }
  func.func @transform_1(%arg0: i32) -> (i32, i32, i32) {
    %c0_i32 = arith.constant 0 : i32
    %c0_i32_0 = arith.constant 0 : i32
    %c0_i32_1 = arith.constant 0 : i32
    return %arg0, %c0_i32, %c0_i32_0 : i32, i32, i32
  }
  func.func @transform_2(%arg0: i32) -> (i32, i32, i32) {
    %c0_i32 = arith.constant 0 : i32
    %c0_i32_0 = arith.constant 0 : i32
    %c0_i32_1 = arith.constant 0 : i32
    return %arg0, %c0_i32, %c0_i32_0 : i32, i32, i32
  }
}

module attributes {stable_mosaic.version = 11 : i64} {
  func.func @_lc1_fwd_kernel(%arg0: memref<12x216x256xf32, #tpu.memory_space<vmem>>, %arg1: memref<216x256xf32, #tpu.memory_space<vmem>>, %arg2: memref<12x256xf32, #tpu.memory_space<vmem>>, %arg3: memref<12x256xf32, #tpu.memory_space<vmem>>) attributes {dimension_semantics = [], scalar_prefetch = 0 : i64, scratch_operands = 0 : i64, tpu.core_type = #tpu.core_type<tc>} {
    %c0 = arith.constant 0 : index
    %c0_0 = arith.constant 0 : index
    %c0_1 = arith.constant 0 : index
    %0 = vector.load %arg0[%c0, %c0_0, %c0_1] : memref<12x216x256xf32, #tpu.memory_space<vmem>>, vector<12x216x256xf32>
    %c0_2 = arith.constant 0 : index
    %c0_3 = arith.constant 0 : index
    %1 = vector.load %arg1[%c0_2, %c0_3] : memref<216x256xf32, #tpu.memory_space<vmem>>, vector<216x256xf32>
    %2 = vector.shape_cast %1 : vector<216x256xf32> to vector<1x216x256xf32>
    %3 = vector.broadcast %2 : vector<1x216x256xf32> to vector<12x216x256xf32>
    %4 = arith.mulf %0, %3 : vector<12x216x256xf32>
    %cst = arith.constant dense<0.000000e+00> : vector<12x256xf32>
    %5 = vector.multi_reduction <add>, %4, %cst [1] : vector<12x216x256xf32> to vector<12x256xf32>
    %c0_4 = arith.constant 0 : index
    %c0_5 = arith.constant 0 : index
    %6 = vector.load %arg2[%c0_4, %c0_5] : memref<12x256xf32, #tpu.memory_space<vmem>>, vector<12x256xf32>
    %7 = arith.addf %5, %6 : vector<12x256xf32>
    %c0_6 = arith.constant 0 : index
    %c0_7 = arith.constant 0 : index
    %8 = vector.load %arg3[%c0_6, %c0_7] : memref<12x256xf32, #tpu.memory_space<vmem>>, vector<12x256xf32>
    tpu.vector_store %arg3[%c0_6, %c0_7], %7 {strides = array<i32>} : memref<12x256xf32, #tpu.memory_space<vmem>>, vector<12x256xf32>,
    return
  }
}

module attributes {stable_mosaic.version = 11 : i64} {
  func.func @_pde_rk_kernel(%arg0: memref<1x256xf32, #tpu.memory_space<vmem>>, %arg1: memref<1x256xf32, #tpu.memory_space<vmem>>, %arg2: memref<1x256xf32, #tpu.memory_space<vmem>>, %arg3: memref<1x256xf32, #tpu.memory_space<vmem>>, %arg4: memref<1x256xf32, #tpu.memory_space<vmem>>, %arg5: memref<8x256xf32, #tpu.memory_space<vmem>>, %arg6: memref<8x256xf32, #tpu.memory_space<vmem>>, %arg7: memref<8x256xf32, #tpu.memory_space<vmem>>, %arg8: memref<8x8xf32, #tpu.memory_space<vmem>>, %arg9: memref<8x8xf32, #tpu.memory_space<vmem>>, %arg10: memref<8x256xf32, #tpu.memory_space<vmem>>, %arg11: memref<8x256xf32, #tpu.memory_space<vmem>>) attributes {dimension_semantics = [], scalar_prefetch = 0 : i64, scratch_operands = 0 : i64, tpu.core_type = #tpu.core_type<tc>} {
    %c0 = arith.constant 0 : index
    %c0_0 = arith.constant 0 : index
    %0 = vector.load %arg0[%c0, %c0_0] : memref<1x256xf32, #tpu.memory_space<vmem>>, vector<1x256xf32>
    %c0_1 = arith.constant 0 : index
    %c0_2 = arith.constant 0 : index
    %1 = vector.load %arg2[%c0_1, %c0_2] : memref<1x256xf32, #tpu.memory_space<vmem>>, vector<1x256xf32>
    %2 = arith.addf %0, %1 : vector<1x256xf32>
    %c0_3 = arith.constant 0 : index
    %c0_4 = arith.constant 0 : index
    %3 = vector.load %arg5[%c0_3, %c0_4] : memref<8x256xf32, #tpu.memory_space<vmem>>, vector<8x256xf32>
    %4 = vector.broadcast %2 : vector<1x256xf32> to vector<8x256xf32>
    %5 = arith.mulf %4, %3 : vector<8x256xf32>
    %c0_5 = arith.constant 0 : index
    %c0_6 = arith.constant 0 : index
    %6 = vector.load %arg1[%c0_5, %c0_6] : memref<1x256xf32, #tpu.memory_space<vmem>>, vector<1x256xf32>
    %c0_7 = arith.constant 0 : index
    %c0_8 = arith.constant 0 : index
    %7 = vector.load %arg3[%c0_7, %c0_8] : memref<1x256xf32, #tpu.memory_space<vmem>>, vector<1x256xf32>
    %8 = arith.addf %6, %7 : vector<1x256xf32>
    %c0_9 = arith.constant 0 : index
    %c0_10 = arith.constant 0 : index
    %9 = vector.load %arg6[%c0_9, %c0_10] : memref<8x256xf32, #tpu.memory_space<vmem>>, vector<8x256xf32>
    %10 = vector.broadcast %8 : vector<1x256xf32> to vector<8x256xf32>
    %11 = arith.mulf %10, %9 : vector<8x256xf32>
    %12 = arith.addf %5, %11 : vector<8x256xf32>
    %c0_11 = arith.constant 0 : index
    %c0_12 = arith.constant 0 : index
    %13 = vector.load %arg4[%c0_11, %c0_12] : memref<1x256xf32, #tpu.memory_space<vmem>>, vector<1x256xf32>
    %14 = vector.broadcast %13 : vector<1x256xf32> to vector<8x256xf32>
    %15 = arith.addf %12, %14 : vector<8x256xf32>
    %c0_13 = arith.constant 0 : index
    %c0_14 = arith.constant 0 : index
    %16 = vector.load %arg7[%c0_13, %c0_14] : memref<8x256xf32, #tpu.memory_space<vmem>>, vector<8x256xf32>
    %c0_15 = arith.constant 0 : index
    %c0_16 = arith.constant 0 : index
    %17 = vector.load %arg8[%c0_15, %c0_16] : memref<8x8xf32, #tpu.memory_space<vmem>>, vector<8x8xf32>
    %cst = arith.constant dense<0.000000e+00> : vector<8x256xf32>
    %18 = tpu.matmul %17, %15, %cst {dimension_numbers = #tpu.dot_dimension_numbers<[1], [0], [0], [1], [0, 0, 1, 1], [], []>} : vector<8x8xf32>, vector<8x256xf32>, vector<8x256xf32> -> vector<8x256xf32>
    %cst_17 = arith.constant 1.000000e+00 : f32
    %19 = vector.broadcast %cst_17 : f32 to vector<8x256xf32>
    %20 = arith.mulf %19, %18 : vector<8x256xf32>
    %21 = arith.subf %16, %20 : vector<8x256xf32>
    %c0_18 = arith.constant 0 : index
    %c0_19 = arith.constant 0 : index
    %22 = vector.load %arg10[%c0_18, %c0_19] : memref<8x256xf32, #tpu.memory_space<vmem>>, vector<8x256xf32>
    tpu.vector_store %arg10[%c0_18, %c0_19], %21 {strides = array<i32>} : memref<8x256xf32, #tpu.memory_space<vmem>>, vector<8x256xf32>,
    %c0_20 = arith.constant 0 : index
    %c0_21 = arith.constant 0 : index
    %23 = vector.load %arg7[%c0_20, %c0_21] : memref<8x256xf32, #tpu.memory_space<vmem>>, vector<8x256xf32>
    %c0_22 = arith.constant 0 : index
    %c0_23 = arith.constant 0 : index
    %24 = vector.load %arg9[%c0_22, %c0_23] : memref<8x8xf32, #tpu.memory_space<vmem>>, vector<8x8xf32>
    %cst_24 = arith.constant dense<0.000000e+00> : vector<8x256xf32>
    %25 = tpu.matmul %24, %15, %cst_24 {dimension_numbers = #tpu.dot_dimension_numbers<[1], [0], [0], [1], [0, 0, 1, 1], [], []>} : vector<8x8xf32>, vector<8x256xf32>, vector<8x256xf32> -> vector<8x256xf32>
    %cst_25 = arith.constant 1.000000e+00 : f32
    %26 = vector.broadcast %cst_25 : f32 to vector<8x256xf32>
    %27 = arith.mulf %26, %25 : vector<8x256xf32>
    %28 = arith.subf %23, %27 : vector<8x256xf32>
    %c0_26 = arith.constant 0 : index
    %c0_27 = arith.constant 0 : index
    %29 = vector.load %arg11[%c0_26, %c0_27] : memref<8x256xf32, #tpu.memory_space<vmem>>, vector<8x256xf32>
    tpu.vector_store %arg11[%c0_26, %c0_27], %28 {strides = array<i32>} : memref<8x256xf32, #tpu.memory_space<vmem>>, vector<8x256xf32>,
    return
  }
}

</mosaic_0001>

<llo_original>
// kernel: forward.12
$region0: #{forward.12}
  #allocation0 [shape = 'u32[]', space=smem, size = 0x4, offset = 0x4, fixed_abs, tag = 'smem constant byte address 0x4 - core index']
  #allocation1 [shape = 'u32[144,128]{1,0:T(1,128)}', space=vmem, size = 0x12000, scoped, tag = 'internal scratch']
  %s0 = inlined_call_operand.vmem [shape: f32[24,54,256], index: 0, kind: input, shape index: {}]
  %s1 = inlined_call_operand.vmem [shape: f32[54,256], index: 1, kind: input, shape index: {}]
  %s2 = inlined_call_operand.vmem [shape: f32[24,256], index: 2, kind: input, shape index: {}]
  %s3 = inlined_call_operand.vmem [shape: f32[24,256], index: 3, kind: output, shape index: {0}]
  %s4 = inlined_call_operand.vmem [shape: f32[24,256], index: 4, kind: output, shape index: {1}]
  %5 = xla_tuple %s3, %s4
  %s6 = sld [smem:[#allocation0]]
  $region30: #{forward.12} parent=0
    _
  %s8 = ssub.s32 1, %s6
  %s9 = scalar_select 0, %s8, %s6
  // Predicated region
  $region2: #{forward.12} parent=0 // pred_check
    _
  $region3: #{forward.12} parent=0 // pred_check_branch
    %11 = sbr.rel (0) target = $region5
  $region4: #{forward.12} parent=0 // pred_region
    _
  $region5: #{forward.12} parent=0 // pred_fallthru
    _
  // Predicated region
  $region6: #{forward.12} parent=0 // pred_check
    _
  $region7: #{forward.12} parent=0 // pred_check_branch
    %13 = sbr.rel (0) target = $region9
  $region8: #{forward.12} parent=0 // pred_region
    _
  $region9: #{forward.12} parent=0 // pred_fallthru
    _
  // Predicated region
  $region10: #{forward.12} parent=0 // pred_check
    _
  $region11: #{forward.12} parent=0 // pred_check_branch
    %15 = sbr.rel (0) target = $region13
  $region12: #{forward.12} parent=0 // pred_region
    _
  $region13: #{forward.12} parent=0 // pred_fallthru
    _
  %v16 = vld [vmem:[%s0] sm:$0xff]
  %v17 = vld [vmem:[%s0 + $0x8] sm:$0xff]
  %v18 = vld [vmem:[%s0 + $0x10] sm:$0xff]
  %v19 = vld [vmem:[%s0 + $0x18] sm:$0xff]
  %v20 = vld [vmem:[%s0 + $0x20] sm:$0xff]
  %v21 = vld [vmem:[%s0 + $0x28] sm:$0xff]
  %v22 = vld [vmem:[%s0 + $0x30] sm:$0xff]
  %v23 = vld [vmem:[%s0 + $0x38] sm:$0xff]
  %v24 = vld [vmem:[%s0 + $0x40] sm:$0xff]
  %v25 = vld [vmem:[%s0 + $0x48] sm:$0xff]
  %v26 = vld [vmem:[%s0 + $0x50] sm:$0xff]
  %v27 = vld [vmem:[%s0 + $0x58] sm:$0xff]
  %v28 = vld [vmem:[%s0 + $0x60] sm:$0x3f]
  %v29 = vld [vmem:[%s0 + $0x68] sm:$0x3f]
  %v30 = vld [vmem:[%s0 + $0x70] sm:$0xff]
  %v31 = vld [vmem:[%s0 + $0x78] sm:$0xff]
  %v32 = vld [vmem:[%s0 + $0x80] sm:$0xff]
  %v33 = vld [vmem:[%s0 + $0x88] sm:$0xff]
  %v34 = vld [vmem:[%s0 + $0x90] sm:$0xff]
  %v35 = vld [vmem:[%s0 + $0x98] sm:$0xff]
  %v36 = vld [vmem:[%s0 + $0xa0] sm:$0xff]
  %v37 = vld [vmem:[%s0 + $0xa8] sm:$0xff]
  %v38 = vld [vmem:[%s0 + $0xb0] sm:$0xff]
  %v39 = vld [vmem:[%s0 + $0xb8] sm:$0xff]
  %v40 = vld [vmem:[%s0 + $0xc0] sm:$0xff]
  %v41 = vld [vmem:[%s0 + $0xc8] sm:$0xff]
  %v42 = vld [vmem:[%s0 + $0xd0] sm:$0x3f]
  %v43 = vld [vmem:[%s0 + $0xd8] sm:$0x3f]
  %v44 = vld [vmem:[%s0 + $0xe0] sm:$0xff]
  %v45 = vld [vmem:[%s0 + $0xe8] sm:$0xff]
  %v46 = vld [vmem:[%s0 + $0xf0] sm:$0xff]
  %v47 = vld [vmem:[%s0 + $0xf8] sm:$0xff]
  %v48 = vld [vmem:[%s0 + $0x100] sm:$0xff]
  %v49 = vld [vmem:[%s0 + $0x108] sm:$0xff]
  %v50 = vld [vmem:[%s0 + $0x110] sm:$0xff]
  %v51 = vld [vmem:[%s0 + $0x118] sm:$0xff]
  %v52 = vld [vmem:[%s0 + $0x120] sm:$0xff]
  %v53 = vld [vmem:[%s0 + $0x128] sm:$0xff]
  %v54 = vld [vmem:[%s0 + $0x130] sm:$0xff]
  %v55 = vld [vmem:[%s0 + $0x138] sm:$0xff]
  %v56 = vld [vmem:[%s0 + $0x140] sm:$0x3f]
  %v57 = vld [vmem:[%s0 + $0x148] sm:$0x3f]
  %v58 = vld [vmem:[%s0 + $0x150] sm:$0xff]
  %v59 = vld [vmem:[%s0 + $0x158] sm:$0xff]
  %v60 = vld [vmem:[%s0 + $0x160] sm:$0xff]
  %v61 = vld [vmem:[%s0 + $0x168] sm:$0xff]
  %v62 = vld [vmem:[%s0 + $0x170] sm:$0xff]
  %v63 = vld [vmem:[%s0 + $0x178] sm:$0xff]
  %v64 = vld [vmem:[%s0 + $0x180] sm:$0xff]
  %v65 = vld [vmem:[%s0 + $0x188] sm:$0xff]
  %v66 = vld [vmem:[%s0 + $0x190] sm:$0xff]
  %v67 = vld [vmem:[%s0 + $0x198] sm:$0xff]
  %v68 = vld [vmem:[%s0 + $0x1a0] sm:$0xff]
  %v69 = vld [vmem:[%s0 + $0x1a8] sm:$0xff]
  %v70 = vld [vmem:[%s0 + $0x1b0] sm:$0x3f]
  %v71 = vld [vmem:[%s0 + $0x1b8] sm:$0x3f]
  %v72 = vld [vmem:[%s0 + $0x1c0] sm:$0xff]
  %v73 = vld [vmem:[%s0 + $0x1c8] sm:$0xff]
  %v74 = vld [vmem:[%s0 + $0x1d0] sm:$0xff]
  %v75 = vld [vmem:[%s0 + $0x1d8] sm:$0xff]
  %v76 = vld [vmem:[%s0 + $0x1e0] sm:$0xff]
  %v77 = vld [vmem:[%s0 + $0x1e8] sm:$0xff]
  %v78 = vld [vmem:[%s0 + $0x1f0] sm:$0xff]
  %v79 = vld [vmem:[%s0 + $0x1f8] sm:$0xff]
  %v80 = vld [vmem:[%s0 + $0x200] sm:$0xff]
  %v81 = vld [vmem:[%s0 + $0x208] sm:$0xff]
  %v82 = vld [vmem:[%s0 + $0x210] sm:$0xff]
  %v83 = vld [vmem:[%s0 + $0x218] sm:$0xff]
  %v84 = vld [vmem:[%s0 + $0x220] sm:$0x3f]
  %v85 = vld [vmem:[%s0 + $0x228] sm:$0x3f]
  %v86 = vld [vmem:[%s0 + $0x230] sm:$0xff]
  %v87 = vld [vmem:[%s0 + $0x238] sm:$0xff]
  %v88 = vld [vmem:[%s0 + $0x240] sm:$0xff]
  %v89 = vld [vmem:[%s0 + $0x248] sm:$0xff]
  %v90 = vld [vmem:[%s0 + $0x250] sm:$0xff]
  %v91 = vld [vmem:[%s0 + $0x258] sm:$0xff]
  %v92 = vld [vmem:[%s0 + $0x260] sm:$0xff]
  %v93 = vld [vmem:[%s0 + $0x268] sm:$0xff]
  %v94 = vld [vmem:[%s0 + $0x270] sm:$0xff]
  %v95 = vld [vmem:[%s0 + $0x278] sm:$0xff]
  %v96 = vld [vmem:[%s0 + $0x280] sm:$0xff]
  %v97 = vld [vmem:[%s0 + $0x288] sm:$0xff]
  %v98 = vld [vmem:[%s0 + $0x290] sm:$0x3f]
  %v99 = vld [vmem:[%s0 + $0x298] sm:$0x3f]
  %v100 = vld [vmem:[%s0 + $0x2a0] sm:$0xff]
  %v101 = vld [vmem:[%s0 + $0x2a8] sm:$0xff]
  %v102 = vld [vmem:[%s0 + $0x2b0] sm:$0xff]
  %v103 = vld [vmem:[%s0 + $0x2b8] sm:$0xff]
  %v104 = vld [vmem:[%s0 + $0x2c0] sm:$0xff]
  %v105 = vld [vmem:[%s0 + $0x2c8] sm:$0xff]
  %v106 = vld [vmem:[%s0 + $0x2d0] sm:$0xff]
  %v107 = vld [vmem:[%s0 + $0x2d8] sm:$0xff]
  %v108 = vld [vmem:[%s0 + $0x2e0] sm:$0xff]
  %v109 = vld [vmem:[%s0 + $0x2e8] sm:$0xff]
  %v110 = vld [vmem:[%s0 + $0x2f0] sm:$0xff]
  %v111 = vld [vmem:[%s0 + $0x2f8] sm:$0xff]
  %v112 = vld [vmem:[%s0 + $0x300] sm:$0x3f]
  %v113 = vld [vmem:[%s0 + $0x308] sm:$0x3f]
  %v114 = vld [vmem:[%s0 + $0x310] sm:$0xff]
  %v115 = vld [vmem:[%s0 + $0x318] sm:$0xff]
  %v116 = vld [vmem:[%s0 + $0x320] sm:$0xff]
  %v117 = vld [vmem:[%s0 + $0x328] sm:$0xff]
  %v118 = vld [vmem:[%s0 + $0x330] sm:$0xff]
  %v119 = vld [vmem:[%s0 + $0x338] sm:$0xff]
  %v120 = vld [vmem:[%s0 + $0x340] sm:$0xff]
  %v121 = vld [vmem:[%s0 + $0x348] sm:$0xff]
  %v122 = vld [vmem:[%s0 + $0x350] sm:$0xff]
  %v123 = vld [vmem:[%s0 + $0x358] sm:$0xff]
  %v124 = vld [vmem:[%s0 + $0x360] sm:$0xff]
  %v125 = vld [vmem:[%s0 + $0x368] sm:$0xff]
  %v126 = vld [vmem:[%s0 + $0x370] sm:$0x3f]
  %v127 = vld [vmem:[%s0 + $0x378] sm:$0x3f]
  %v128 = vld [vmem:[%s0 + $0x380] sm:$0xff]
  %v129 = vld [vmem:[%s0 + $0x388] sm:$0xff]
  %v130 = vld [vmem:[%s0 + $0x390] sm:$0xff]
  %v131 = vld [vmem:[%s0 + $0x398] sm:$0xff]
  %v132 = vld [vmem:[%s0 + $0x3a0] sm:$0xff]
  %v133 = vld [vmem:[%s0 + $0x3a8] sm:$0xff]
  %v134 = vld [vmem:[%s0 + $0x3b0] sm:$0xff]
  %v135 = vld [vmem:[%s0 + $0x3b8] sm:$0xff]
  %v136 = vld [vmem:[%s0 + $0x3c0] sm:$0xff]
  %v137 = vld [vmem:[%s0 + $0x3c8] sm:$0xff]
  %v138 = vld [vmem:[%s0 + $0x3d0] sm:$0xff]
  %v139 = vld [vmem:[%s0 + $0x3d8] sm:$0xff]
  %v140 = vld [vmem:[%s0 + $0x3e0] sm:$0x3f]
  %v141 = vld [vmem:[%s0 + $0x3e8] sm:$0x3f]
  %v142 = vld [vmem:[%s0 + $0x3f0] sm:$0xff]
  %v143 = vld [vmem:[%s0 + $0x3f8] sm:$0xff]
  %v144 = vld [vmem:[%s0 + $0x400] sm:$0xff]
  %v145 = vld [vmem:[%s0 + $0x408] sm:$0xff]
  %v146 = vld [vmem:[%s0 + $0x410] sm:$0xff]
  %v147 = vld [vmem:[%s0 + $0x418] sm:$0xff]
  %v148 = vld [vmem:[%s0 + $0x420] sm:$0xff]
  %v149 = vld [vmem:[%s0 + $0x428] sm:$0xff]
  %v150 = vld [vmem:[%s0 + $0x430] sm:$0xff]
  %v151 = vld [vmem:[%s0 + $0x438] sm:$0xff]
  %v152 = vld [vmem:[%s0 + $0x440] sm:$0xff]
  %v153 = vld [vmem:[%s0 + $0x448] sm:$0xff]
  %v154 = vld [vmem:[%s0 + $0x450] sm:$0x3f]
  %v155 = vld [vmem:[%s0 + $0x458] sm:$0x3f]
  %v156 = vld [vmem:[%s0 + $0x460] sm:$0xff]
  %v157 = vld [vmem:[%s0 + $0x468] sm:$0xff]
  %v158 = vld [vmem:[%s0 + $0x470] sm:$0xff]
  %v159 = vld [vmem:[%s0 + $0x478] sm:$0xff]
  %v160 = vld [vmem:[%s0 + $0x480] sm:$0xff]
  %v161 = vld [vmem:[%s0 + $0x488] sm:$0xff]
  %v162 = vld [vmem:[%s0 + $0x490] sm:$0xff]
  %v163 = vld [vmem:[%s0 + $0x498] sm:$0xff]
  %v164 = vld [vmem:[%s0 + $0x4a0] sm:$0xff]
  %v165 = vld [vmem:[%s0 + $0x4a8] sm:$0xff]
  %v166 = vld [vmem:[%s0 + $0x4b0] sm:$0xff]
  %v167 = vld [vmem:[%s0 + $0x4b8] sm:$0xff]
  %v168 = vld [vmem:[%s0 + $0x4c0] sm:$0x3f]
  %v169 = vld [vmem:[%s0 + $0x4c8] sm:$0x3f]
  %v170 = vld [vmem:[%s0 + $0x4d0] sm:$0xff]
  %v171 = vld [vmem:[%s0 + $0x4d8] sm:$0xff]
  %v172 = vld [vmem:[%s0 + $0x4e0] sm:$0xff]
  %v173 = vld [vmem:[%s0 + $0x4e8] sm:$0xff]
  %v174 = vld [vmem:[%s0 + $0x4f0] sm:$0xff]
  %v175 = vld [vmem:[%s0 + $0x4f8] sm:$0xff]
  %v176 = vld [vmem:[%s0 + $0x500] sm:$0xff]
  %v177 = vld [vmem:[%s0 + $0x508] sm:$0xff]
  %v178 = vld [vmem:[%s0 + $0x510] sm:$0xff]
  %v179 = vld [vmem:[%s0 + $0x518] sm:$0xff]
  %v180 = vld [vmem:[%s0 + $0x520] sm:$0xff]
  %v181 = vld [vmem:[%s0 + $0x528] sm:$0xff]
  %v182 = vld [vmem:[%s0 + $0x530] sm:$0x3f]
  %v183 = vld [vmem:[%s0 + $0x538] sm:$0x3f]
  %v184 = vld [vmem:[%s0 + $0x540] sm:$0xff]
  %v185 = vld [vmem:[%s0 + $0x548] sm:$0xff]
  %v186 = vld [vmem:[%s0 + $0x550] sm:$0xff]
  %v187 = vld [vmem:[%s0 + $0x558] sm:$0xff]
  %v188 = vld [vmem:[%s0 + $0x560] sm:$0xff]
  %v189 = vld [vmem:[%s0 + $0x568] sm:$0xff]
  %v190 = vld [vmem:[%s0 + $0x570] sm:$0xff]
  %v191 = vld [vmem:[%s0 + $0x578] sm:$0xff]
  %v192 = vld [vmem:[%s0 + $0x580] sm:$0xff]
  %v193 = vld [vmem:[%s0 + $0x588] sm:$0xff]
  %v194 = vld [vmem:[%s0 + $0x590] sm:$0xff]
  %v195 = vld [vmem:[%s0 + $0x598] sm:$0xff]
  %v196 = vld [vmem:[%s0 + $0x5a0] sm:$0x3f]
  %v197 = vld [vmem:[%s0 + $0x5a8] sm:$0x3f]
  %v198 = vld [vmem:[%s0 + $0x5b0] sm:$0xff]
  %v199 = vld [vmem:[%s0 + $0x5b8] sm:$0xff]
  %v200 = vld [vmem:[%s0 + $0x5c0] sm:$0xff]
  %v201 = vld [vmem:[%s0 + $0x5c8] sm:$0xff]
  %v202 = vld [vmem:[%s0 + $0x5d0] sm:$0xff]
  %v203 = vld [vmem:[%s0 + $0x5d8] sm:$0xff]
  %v204 = vld [vmem:[%s0 + $0x5e0] sm:$0xff]
  %v205 = vld [vmem:[%s0 + $0x5e8] sm:$0xff]
  %v206 = vld [vmem:[%s0 + $0x5f0] sm:$0xff]
  %v207 = vld [vmem:[%s0 + $0x5f8] sm:$0xff]
  %v208 = vld [vmem:[%s0 + $0x600] sm:$0xff]
  %v209 = vld [vmem:[%s0 + $0x608] sm:$0xff]
  %v210 = vld [vmem:[%s0 + $0x610] sm:$0x3f]
  %v211 = vld [vmem:[%s0 + $0x618] sm:$0x3f]
  %v212 = vld [vmem:[%s0 + $0x620] sm:$0xff]
  %v213 = vld [vmem:[%s0 + $0x628] sm:$0xff]
  %v214 = vld [vmem:[%s0 + $0x630] sm:$0xff]
  %v215 = vld [vmem:[%s0 + $0x638] sm:$0xff]
  %v216 = vld [vmem:[%s0 + $0x640] sm:$0xff]
  %v217 = vld [vmem:[%s0 + $0x648] sm:$0xff]
  %v218 = vld [vmem:[%s0 + $0x650] sm:$0xff]
  %v219 = vld [vmem:[%s0 + $0x658] sm:$0xff]
  %v220 = vld [vmem:[%s0 + $0x660] sm:$0xff]
  %v221 = vld [vmem:[%s0 + $0x668] sm:$0xff]
  %v222 = vld [vmem:[%s0 + $0x670] sm:$0xff]
  %v223 = vld [vmem:[%s0 + $0x678] sm:$0xff]
  %v224 = vld [vmem:[%s0 + $0x680] sm:$0x3f]
  %v225 = vld [vmem:[%s0 + $0x688] sm:$0x3f]
  %v226 = vld [vmem:[%s0 + $0x690] sm:$0xff]
  %v227 = vld [vmem:[%s0 + $0x698] sm:$0xff]
  %v228 = vld [vmem:[%s0 + $0x6a0] sm:$0xff]
  %v229 = vld [vmem:[%s0 + $0x6a8] sm:$0xff]
  %v230 = vld [vmem:[%s0 + $0x6b0] sm:$0xff]
  %v231 = vld [vmem:[%s0 + $0x6b8] sm:$0xff]
  %v232 = vld [vmem:[%s0 + $0x6c0] sm:$0xff]
  %v233 = vld [vmem:[%s0 + $0x6c8] sm:$0xff]
  %v234 = vld [vmem:[%s0 + $0x6d0] sm:$0xff]
  %v235 = vld [vmem:[%s0 + $0x6d8] sm:$0xff]
  %v236 = vld [vmem:[%s0 + $0x6e0] sm:$0xff]
  %v237 = vld [vmem:[%s0 + $0x6e8] sm:$0xff]
  %v238 = vld [vmem:[%s0 + $0x6f0] sm:$0x3f]
  %v239 = vld [vmem:[%s0 + $0x6f8] sm:$0x3f]
  %v240 = vld [vmem:[%s0 + $0x700] sm:$0xff]
  %v241 = vld [vmem:[%s0 + $0x708] sm:$0xff]
  %v242 = vld [vmem:[%s0 + $0x710] sm:$0xff]
  %v243 = vld [vmem:[%s0 + $0x718] sm:$0xff]
  %v244 = vld [vmem:[%s0 + $0x720] sm:$0xff]
  %v245 = vld [vmem:[%s0 + $0x728] sm:$0xff]
  %v246 = vld [vmem:[%s0 + $0x730] sm:$0xff]
  %v247 = vld [vmem:[%s0 + $0x738] sm:$0xff]
  %v248 = vld [vmem:[%s0 + $0x740] sm:$0xff]
  %v249 = vld [vmem:[%s0 + $0x748] sm:$0xff]
  %v250 = vld [vmem:[%s0 + $0x750] sm:$0xff]
  %v251 = vld [vmem:[%s0 + $0x758] sm:$0xff]
  %v252 = vld [vmem:[%s0 + $0x760] sm:$0x3f]
  %v253 = vld [vmem:[%s0 + $0x768] sm:$0x3f]
  %v254 = vld [vmem:[%s0 + $0x770] sm:$0xff]
  %v255 = vld [vmem:[%s0 + $0x778] sm:$0xff]
  %v256 = vld [vmem:[%s0 + $0x780] sm:$0xff]
  %v257 = vld [vmem:[%s0 + $0x788] sm:$0xff]
  %v258 = vld [vmem:[%s0 + $0x790] sm:$0xff]
  %v259 = vld [vmem:[%s0 + $0x798] sm:$0xff]
  %v260 = vld [vmem:[%s0 + $0x7a0] sm:$0xff]
  %v261 = vld [vmem:[%s0 + $0x7a8] sm:$0xff]
  %v262 = vld [vmem:[%s0 + $0x7b0] sm:$0xff]
  %v263 = vld [vmem:[%s0 + $0x7b8] sm:$0xff]
  %v264 = vld [vmem:[%s0 + $0x7c0] sm:$0xff]
  %v265 = vld [vmem:[%s0 + $0x7c8] sm:$0xff]
  %v266 = vld [vmem:[%s0 + $0x7d0] sm:$0x3f]
  %v267 = vld [vmem:[%s0 + $0x7d8] sm:$0x3f]
  %v268 = vld [vmem:[%s0 + $0x7e0] sm:$0xff]
  %v269 = vld [vmem:[%s0 + $0x7e8] sm:$0xff]
  %v270 = vld [vmem:[%s0 + $0x7f0] sm:$0xff]
  %v271 = vld [vmem:[%s0 + $0x7f8] sm:$0xff]
  %v272 = vld [vmem:[%s0 + $0x800] sm:$0xff]
  %v273 = vld [vmem:[%s0 + $0x808] sm:$0xff]
  %v274 = vld [vmem:[%s0 + $0x810] sm:$0xff]
  %v275 = vld [vmem:[%s0 + $0x818] sm:$0xff]
  %v276 = vld [vmem:[%s0 + $0x820] sm:$0xff]
  %v277 = vld [vmem:[%s0 + $0x828] sm:$0xff]
  %v278 = vld [vmem:[%s0 + $0x830] sm:$0xff]
  %v279 = vld [vmem:[%s0 + $0x838] sm:$0xff]
  %v280 = vld [vmem:[%s0 + $0x840] sm:$0x3f]
  %v281 = vld [vmem:[%s0 + $0x848] sm:$0x3f]
  %v282 = vld [vmem:[%s0 + $0x850] sm:$0xff]
  %v283 = vld [vmem:[%s0 + $0x858] sm:$0xff]
  %v284 = vld [vmem:[%s0 + $0x860] sm:$0xff]
  %v285 = vld [vmem:[%s0 + $0x868] sm:$0xff]
  %v286 = vld [vmem:[%s0 + $0x870] sm:$0xff]
  %v287 = vld [vmem:[%s0 + $0x878] sm:$0xff]
  %v288 = vld [vmem:[%s0 + $0x880] sm:$0xff]
  %v289 = vld [vmem:[%s0 + $0x888] sm:$0xff]
  %v290 = vld [vmem:[%s0 + $0x890] sm:$0xff]
  %v291 = vld [vmem:[%s0 + $0x898] sm:$0xff]
  %v292 = vld [vmem:[%s0 + $0x8a0] sm:$0xff]
  %v293 = vld [vmem:[%s0 + $0x8a8] sm:$0xff]
  %v294 = vld [vmem:[%s0 + $0x8b0] sm:$0x3f]
  %v295 = vld [vmem:[%s0 + $0x8b8] sm:$0x3f]
  %v296 = vld [vmem:[%s0 + $0x8c0] sm:$0xff]
  %v297 = vld [vmem:[%s0 + $0x8c8] sm:$0xff]
  %v298 = vld [vmem:[%s0 + $0x8d0] sm:$0xff]
  %v299 = vld [vmem:[%s0 + $0x8d8] sm:$0xff]
  %v300 = vld [vmem:[%s0 + $0x8e0] sm:$0xff]
  %v301 = vld [vmem:[%s0 + $0x8e8] sm:$0xff]
  %v302 = vld [vmem:[%s0 + $0x8f0] sm:$0xff]
  %v303 = vld [vmem:[%s0 + $0x8f8] sm:$0xff]
  %v304 = vld [vmem:[%s0 + $0x900] sm:$0xff]
  %v305 = vld [vmem:[%s0 + $0x908] sm:$0xff]
  %v306 = vld [vmem:[%s0 + $0x910] sm:$0xff]
  %v307 = vld [vmem:[%s0 + $0x918] sm:$0xff]
  %v308 = vld [vmem:[%s0 + $0x920] sm:$0x3f]
  %v309 = vld [vmem:[%s0 + $0x928] sm:$0x3f]
  %v310 = vld [vmem:[%s0 + $0x930] sm:$0xff]
  %v311 = vld [vmem:[%s0 + $0x938] sm:$0xff]
  %v312 = vld [vmem:[%s0 + $0x940] sm:$0xff]
  %v313 = vld [vmem:[%s0 + $0x948] sm:$0xff]
  %v314 = vld [vmem:[%s0 + $0x950] sm:$0xff]
  %v315 = vld [vmem:[%s0 + $0x958] sm:$0xff]
  %v316 = vld [vmem:[%s0 + $0x960] sm:$0xff]
  %v317 = vld [vmem:[%s0 + $0x968] sm:$0xff]
  %v318 = vld [vmem:[%s0 + $0x970] sm:$0xff]
  %v319 = vld [vmem:[%s0 + $0x978] sm:$0xff]
  %v320 = vld [vmem:[%s0 + $0x980] sm:$0xff]
  %v321 = vld [vmem:[%s0 + $0x988] sm:$0xff]
  %v322 = vld [vmem:[%s0 + $0x990] sm:$0x3f]
  %v323 = vld [vmem:[%s0 + $0x998] sm:$0x3f]
  %v324 = vld [vmem:[%s0 + $0x9a0] sm:$0xff]
  %v325 = vld [vmem:[%s0 + $0x9a8] sm:$0xff]
  %v326 = vld [vmem:[%s0 + $0x9b0] sm:$0xff]
  %v327 = vld [vmem:[%s0 + $0x9b8] sm:$0xff]
  %v328 = vld [vmem:[%s0 + $0x9c0] sm:$0xff]
  %v329 = vld [vmem:[%s0 + $0x9c8] sm:$0xff]
  %v330 = vld [vmem:[%s0 + $0x9d0] sm:$0xff]
  %v331 = vld [vmem:[%s0 + $0x9d8] sm:$0xff]
  %v332 = vld [vmem:[%s0 + $0x9e0] sm:$0xff]
  %v333 = vld [vmem:[%s0 + $0x9e8] sm:$0xff]
  %v334 = vld [vmem:[%s0 + $0x9f0] sm:$0xff]
  %v335 = vld [vmem:[%s0 + $0x9f8] sm:$0xff]
  %v336 = vld [vmem:[%s0 + $0xa00] sm:$0x3f]
  %v337 = vld [vmem:[%s0 + $0xa08] sm:$0x3f]
  %v338 = vld [vmem:[%s0 + $0xa10] sm:$0xff]
  %v339 = vld [vmem:[%s0 + $0xa18] sm:$0xff]
  %v340 = vld [vmem:[%s0 + $0xa20] sm:$0xff]
  %v341 = vld [vmem:[%s0 + $0xa28] sm:$0xff]
  %v342 = vld [vmem:[%s0 + $0xa30] sm:$0xff]
  %v343 = vld [vmem:[%s0 + $0xa38] sm:$0xff]
  %v344 = vld [vmem:[%s0 + $0xa40] sm:$0xff]
  %v345 = vld [vmem:[%s0 + $0xa48] sm:$0xff]
  %v346 = vld [vmem:[%s0 + $0xa50] sm:$0xff]
  %v347 = vld [vmem:[%s0 + $0xa58] sm:$0xff]
  %v348 = vld [vmem:[%s0 + $0xa60] sm:$0xff]
  %v349 = vld [vmem:[%s0 + $0xa68] sm:$0xff]
  %v350 = vld [vmem:[%s0 + $0xa70] sm:$0x3f]
  %v351 = vld [vmem:[%s0 + $0xa78] sm:$0x3f]
  %v352 = vld [vmem:[%s1] sm:$0xff]
  %v353 = vld [vmem:[%s1 + $0x8] sm:$0xff]
  %v354 = vld [vmem:[%s1 + $0x10] sm:$0xff]
  %v355 = vld [vmem:[%s1 + $0x18] sm:$0xff]
  %v356 = vld [vmem:[%s1 + $0x20] sm:$0xff]
  %v357 = vld [vmem:[%s1 + $0x28] sm:$0xff]
  %v358 = vld [vmem:[%s1 + $0x30] sm:$0xff]
  %v359 = vld [vmem:[%s1 + $0x38] sm:$0xff]
  %v360 = vld [vmem:[%s1 + $0x40] sm:$0xff]
  %v361 = vld [vmem:[%s1 + $0x48] sm:$0xff]
  %v362 = vld [vmem:[%s1 + $0x50] sm:$0xff]
  %v363 = vld [vmem:[%s1 + $0x58] sm:$0xff]
  %v364 = vld [vmem:[%s1 + $0x60] sm:$0x3f]
  %v365 = vld [vmem:[%s1 + $0x68] sm:$0x3f]
  %v366 = vmul.f32 %v16, %v352
  %v367 = vmul.f32 %v17, %v353
  %v368 = vmul.f32 %v18, %v354
  %v369 = vmul.f32 %v19, %v355
  %v370 = vmul.f32 %v20, %v356
  %v371 = vmul.f32 %v21, %v357
  %v372 = vmul.f32 %v22, %v358
  %v373 = vmul.f32 %v23, %v359
  %v374 = vmul.f32 %v24, %v360
  %v375 = vmul.f32 %v25, %v361
  %v376 = vmul.f32 %v26, %v362
  %v377 = vmul.f32 %v27, %v363
  %v378 = vmul.f32 %v28, %v364
  %v379 = vmul.f32 %v29, %v365
  %v380 = vmul.f32 %v30, %v352
  %v381 = vmul.f32 %v31, %v353
  %v382 = vmul.f32 %v32, %v354
  %v383 = vmul.f32 %v33, %v355
  %v384 = vmul.f32 %v34, %v356
  %v385 = vmul.f32 %v35, %v357
  %v386 = vmul.f32 %v36, %v358
  %v387 = vmul.f32 %v37, %v359
  %v388 = vmul.f32 %v38, %v360
  %v389 = vmul.f32 %v39, %v361
  %v390 = vmul.f32 %v40, %v362
  %v391 = vmul.f32 %v41, %v363
  %v392 = vmul.f32 %v42, %v364
  %v393 = vmul.f32 %v43, %v365
  %v394 = vmul.f32 %v44, %v352
  %v395 = vmul.f32 %v45, %v353
  %v396 = vmul.f32 %v46, %v354
  %v397 = vmul.f32 %v47, %v355
  %v398 = vmul.f32 %v48, %v356
  %v399 = vmul.f32 %v49, %v357
  %v400 = vmul.f32 %v50, %v358
  %v401 = vmul.f32 %v51, %v359
  %v402 = vmul.f32 %v52, %v360
  %v403 = vmul.f32 %v53, %v361
  %v404 = vmul.f32 %v54, %v362
  %v405 = vmul.f32 %v55, %v363
  %v406 = vmul.f32 %v56, %v364
  %v407 = vmul.f32 %v57, %v365
  %v408 = vmul.f32 %v58, %v352
  %v409 = vmul.f32 %v59, %v353
  %v410 = vmul.f32 %v60, %v354
  %v411 = vmul.f32 %v61, %v355
  %v412 = vmul.f32 %v62, %v356
  %v413 = vmul.f32 %v63, %v357
  %v414 = vmul.f32 %v64, %v358
  %v415 = vmul.f32 %v65, %v359
  %v416 = vmul.f32 %v66, %v360
  %v417 = vmul.f32 %v67, %v361
  %v418 = vmul.f32 %v68, %v362
  %v419 = vmul.f32 %v69, %v363
  %v420 = vmul.f32 %v70, %v364
  %v421 = vmul.f32 %v71, %v365
  %v422 = vmul.f32 %v72, %v352
  %v423 = vmul.f32 %v73, %v353
  %v424 = vmul.f32 %v74, %v354
  %v425 = vmul.f32 %v75, %v355
  %v426 = vmul.f32 %v76, %v356
  %v427 = vmul.f32 %v77, %v357
  %v428 = vmul.f32 %v78, %v358
  %v429 = vmul.f32 %v79, %v359
  %v430 = vmul.f32 %v80, %v360
  %v431 = vmul.f32 %v81, %v361
  %v432 = vmul.f32 %v82, %v362
  %v433 = vmul.f32 %v83, %v363
  %v434 = vmul.f32 %v84, %v364
  %v435 = vmul.f32 %v85, %v365
  %v436 = vmul.f32 %v86, %v352
  %v437 = vmul.f32 %v87, %v353
  %v438 = vmul.f32 %v88, %v354
  %v439 = vmul.f32 %v89, %v355
  %v440 = vmul.f32 %v90, %v356
  %v441 = vmul.f32 %v91, %v357
  %v442 = vmul.f32 %v92, %v358
  %v443 = vmul.f32 %v93, %v359
  %v444 = vmul.f32 %v94, %v360
  %v445 = vmul.f32 %v95, %v361
  %v446 = vmul.f32 %v96, %v362
  %v447 = vmul.f32 %v97, %v363
  %v448 = vmul.f32 %v98, %v364
  %v449 = vmul.f32 %v99, %v365
  %v450 = vmul.f32 %v100, %v352
  %v451 = vmul.f32 %v101, %v353
  %v452 = vmul.f32 %v102, %v354
  %v453 = vmul.f32 %v103, %v355
  %v454 = vmul.f32 %v104, %v356
  %v455 = vmul.f32 %v105, %v357
  %v456 = vmul.f32 %v106, %v358
  %v457 = vmul.f32 %v107, %v359
  %v458 = vmul.f32 %v108, %v360
  %v459 = vmul.f32 %v109, %v361
  %v460 = vmul.f32 %v110, %v362
  %v461 = vmul.f32 %v111, %v363
  %v462 = vmul.f32 %v112, %v364
  %v463 = vmul.f32 %v113, %v365
  %v464 = vmul.f32 %v114, %v352
  %v465 = vmul.f32 %v115, %v353
  %v466 = vmul.f32 %v116, %v354
  %v467 = vmul.f32 %v117, %v355
  %v468 = vmul.f32 %v118, %v356
  %v469 = vmul.f32 %v119, %v357
  %v470 = vmul.f32 %v120, %v358
  %v471 = vmul.f32 %v121, %v359
  %v472 = vmul.f32 %v122, %v360
  %v473 = vmul.f32 %v123, %v361
  %v474 = vmul.f32 %v124, %v362
  %v475 = vmul.f32 %v125, %v363
  %v476 = vmul.f32 %v126, %v364
  %v477 = vmul.f32 %v127, %v365
  %v478 = vmul.f32 %v128, %v352
  %v479 = vmul.f32 %v129, %v353
  %v480 = vmul.f32 %v130, %v354
  %v481 = vmul.f32 %v131, %v355
  %v482 = vmul.f32 %v132, %v356
  %v483 = vmul.f32 %v133, %v357
  %v484 = vmul.f32 %v134, %v358
  %v485 = vmul.f32 %v135, %v359
  %v486 = vmul.f32 %v136, %v360
  %v487 = vmul.f32 %v137, %v361
  %v488 = vmul.f32 %v138, %v362
  %v489 = vmul.f32 %v139, %v363
  %v490 = vmul.f32 %v140, %v364
  %v491 = vmul.f32 %v141, %v365
  %v492 = vmul.f32 %v142, %v352
  %v493 = vmul.f32 %v143, %v353
  %v494 = vmul.f32 %v144, %v354
  %v495 = vmul.f32 %v145, %v355
  %v496 = vmul.f32 %v146, %v356
  %v497 = vmul.f32 %v147, %v357
  %v498 = vmul.f32 %v148, %v358
  %v499 = vmul.f32 %v149, %v359
  %v500 = vmul.f32 %v150, %v360
  %v501 = vmul.f32 %v151, %v361
  %v502 = vmul.f32 %v152, %v362
  %v503 = vmul.f32 %v153, %v363
  %v504 = vmul.f32 %v154, %v364
  %v505 = vmul.f32 %v155, %v365
  %v506 = vmul.f32 %v156, %v352
  %v507 = vmul.f32 %v157, %v353
  %v508 = vmul.f32 %v158, %v354
  %v509 = vmul.f32 %v159, %v355
  %v510 = vmul.f32 %v160, %v356
  %v511 = vmul.f32 %v161, %v357
  %v512 = vmul.f32 %v162, %v358
  %v513 = vmul.f32 %v163, %v359
  %v514 = vmul.f32 %v164, %v360
  %v515 = vmul.f32 %v165, %v361
  %v516 = vmul.f32 %v166, %v362
  %v517 = vmul.f32 %v167, %v363
  %v518 = vmul.f32 %v168, %v364
  %v519 = vmul.f32 %v169, %v365
  %v520 = vmul.f32 %v170, %v352
  %v521 = vmul.f32 %v171, %v353
  %v522 = vmul.f32 %v172, %v354
  %v523 = vmul.f32 %v173, %v355
  %v524 = vmul.f32 %v174, %v356
  %v525 = vmul.f32 %v175, %v357
  %v526 = vmul.f32 %v176, %v358
  %v527 = vmul.f32 %v177, %v359
  %v528 = vmul.f32 %v178, %v360
  %v529 = vmul.f32 %v179, %v361
  %v530 = vmul.f32 %v180, %v362
  %v531 = vmul.f32 %v181, %v363
  %v532 = vmul.f32 %v182, %v364
  %v533 = vmul.f32 %v183, %v365
  %v534 = vmul.f32 %v184, %v352
  %v535 = vmul.f32 %v185, %v353
  %v536 = vmul.f32 %v186, %v354
  %v537 = vmul.f32 %v187, %v355
  %v538 = vmul.f32 %v188, %v356
  %v539 = vmul.f32 %v189, %v357
  %v540 = vmul.f32 %v190, %v358
  %v541 = vmul.f32 %v191, %v359
  %v542 = vmul.f32 %v192, %v360
  %v543 = vmul.f32 %v193, %v361
  %v544 = vmul.f32 %v194, %v362
  %v545 = vmul.f32 %v195, %v363
  %v546 = vmul.f32 %v196, %v364
  %v547 = vmul.f32 %v197, %v365
  %v548 = vmul.f32 %v198, %v352
  %v549 = vmul.f32 %v199, %v353
  %v550 = vmul.f32 %v200, %v354
  %v551 = vmul.f32 %v201, %v355
  %v552 = vmul.f32 %v202, %v356
  %v553 = vmul.f32 %v203, %v357
  %v554 = vmul.f32 %v204, %v358
  %v555 = vmul.f32 %v205, %v359
  %v556 = vmul.f32 %v206, %v360
  %v557 = vmul.f32 %v207, %v361
  %v558 = vmul.f32 %v208, %v362
  %v559 = vmul.f32 %v209, %v363
  %v560 = vmul.f32 %v210, %v364
  %v561 = vmul.f32 %v211, %v365
  %v562 = vmul.f32 %v212, %v352
  %v563 = vmul.f32 %v213, %v353
  %v564 = vmul.f32 %v214, %v354
  %v565 = vmul.f32 %v215, %v355
  %v566 = vmul.f32 %v216, %v356
  %v567 = vmul.f32 %v217, %v357
  %v568 = vmul.f32 %v218, %v358
  %v569 = vmul.f32 %v219, %v359
  %v570 = vmul.f32 %v220, %v360
  %v571 = vmul.f32 %v221, %v361
  %v572 = vmul.f32 %v222, %v362
  %v573 = vmul.f32 %v223, %v363
  %v574 = vmul.f32 %v224, %v364
  %v575 = vmul.f32 %v225, %v365
  %v576 = vmul.f32 %v226, %v352
  %v577 = vmul.f32 %v227, %v353
  %v578 = vmul.f32 %v228, %v354
  %v579 = vmul.f32 %v229, %v355
  %v580 = vmul.f32 %v230, %v356
  %v581 = vmul.f32 %v231, %v357
  %v582 = vmul.f32 %v232, %v358
  %v583 = vmul.f32 %v233, %v359
  %v584 = vmul.f32 %v234, %v360
  %v585 = vmul.f32 %v235, %v361
  %v586 = vmul.f32 %v236, %v362
  %v587 = vmul.f32 %v237, %v363
  %v588 = vmul.f32 %v238, %v364
  %v589 = vmul.f32 %v239, %v365
  %v590 = vmul.f32 %v240, %v352
  %v591 = vmul.f32 %v241, %v353
  %v592 = vmul.f32 %v242, %v354
  %v593 = vmul.f32 %v243, %v355
  %v594 = vmul.f32 %v244, %v356
  %v595 = vmul.f32 %v245, %v357
  %v596 = vmul.f32 %v246, %v358
  %v597 = vmul.f32 %v247, %v359
  %v598 = vmul.f32 %v248, %v360
  %v599 = vmul.f32 %v249, %v361
  %v600 = vmul.f32 %v250, %v362
  %v601 = vmul.f32 %v251, %v363
  %v602 = vmul.f32 %v252, %v364
  %v603 = vmul.f32 %v253, %v365
  %v604 = vmul.f32 %v254, %v352
  %v605 = vmul.f32 %v255, %v353
  %v606 = vmul.f32 %v256, %v354
  %v607 = vmul.f32 %v257, %v355
  %v608 = vmul.f32 %v258, %v356
  %v609 = vmul.f32 %v259, %v357
  %v610 = vmul.f32 %v260, %v358
  %v611 = vmul.f32 %v261, %v359
  %v612 = vmul.f32 %v262, %v360
  %v613 = vmul.f32 %v263, %v361
  %v614 = vmul.f32 %v264, %v362
  %v615 = vmul.f32 %v265, %v363
  %v616 = vmul.f32 %v266, %v364
  %v617 = vmul.f32 %v267, %v365
  %v618 = vmul.f32 %v268, %v352
  %v619 = vmul.f32 %v269, %v353
  %v620 = vmul.f32 %v270, %v354
  %v621 = vmul.f32 %v271, %v355
  %v622 = vmul.f32 %v272, %v356
  %v623 = vmul.f32 %v273, %v357
  %v624 = vmul.f32 %v274, %v358
  %v625 = vmul.f32 %v275, %v359
  %v626 = vmul.f32 %v276, %v360
  %v627 = vmul.f32 %v277, %v361
  %v628 = vmul.f32 %v278, %v362
  %v629 = vmul.f32 %v279, %v363
  %v630 = vmul.f32 %v280, %v364
  %v631 = vmul.f32 %v281, %v365
  %v632 = vmul.f32 %v282, %v352
  %v633 = vmul.f32 %v283, %v353
  %v634 = vmul.f32 %v284, %v354
  %v635 = vmul.f32 %v285, %v355
  %v636 = vmul.f32 %v286, %v356
  %v637 = vmul.f32 %v287, %v357
  %v638 = vmul.f32 %v288, %v358
  %v639 = vmul.f32 %v289, %v359
  %v640 = vmul.f32 %v290, %v360
  %v641 = vmul.f32 %v291, %v361
  %v642 = vmul.f32 %v292, %v362
  %v643 = vmul.f32 %v293, %v363
  %v644 = vmul.f32 %v294, %v364
  %v645 = vmul.f32 %v295, %v365
  %v646 = vmul.f32 %v296, %v352
  %v647 = vmul.f32 %v297, %v353
  %v648 = vmul.f32 %v298, %v354
  %v649 = vmul.f32 %v299, %v355
  %v650 = vmul.f32 %v300, %v356
  %v651 = vmul.f32 %v301, %v357
  %v652 = vmul.f32 %v302, %v358
  %v653 = vmul.f32 %v303, %v359
  %v654 = vmul.f32 %v304, %v360
  %v655 = vmul.f32 %v305, %v361
  %v656 = vmul.f32 %v306, %v362
  %v657 = vmul.f32 %v307, %v363
  %v658 = vmul.f32 %v308, %v364
  %v659 = vmul.f32 %v309, %v365
  %v660 = vmul.f32 %v310, %v352
  %v661 = vmul.f32 %v311, %v353
  %v662 = vmul.f32 %v312, %v354
  %v663 = vmul.f32 %v313, %v355
  %v664 = vmul.f32 %v314, %v356
  %v665 = vmul.f32 %v315, %v357
  %v666 = vmul.f32 %v316, %v358
  %v667 = vmul.f32 %v317, %v359
  %v668 = vmul.f32 %v318, %v360
  %v669 = vmul.f32 %v319, %v361
  %v670 = vmul.f32 %v320, %v362
  %v671 = vmul.f32 %v321, %v363
  %v672 = vmul.f32 %v322, %v364
  %v673 = vmul.f32 %v323, %v365
  %v674 = vmul.f32 %v324, %v352
  %v675 = vmul.f32 %v325, %v353
  %v676 = vmul.f32 %v326, %v354
  %v677 = vmul.f32 %v327, %v355
  %v678 = vmul.f32 %v328, %v356
  %v679 = vmul.f32 %v329, %v357
  %v680 = vmul.f32 %v330, %v358
  %v681 = vmul.f32 %v331, %v359
  %v682 = vmul.f32 %v332, %v360
  %v683 = vmul.f32 %v333, %v361
  %v684 = vmul.f32 %v334, %v362
  %v685 = vmul.f32 %v335, %v363
  %v686 = vmul.f32 %v336, %v364
  %v687 = vmul.f32 %v337, %v365
  %v688 = vmul.f32 %v338, %v352
  %v689 = vmul.f32 %v339, %v353
  %v690 = vmul.f32 %v340, %v354
  %v691 = vmul.f32 %v341, %v355
  %v692 = vmul.f32 %v342, %v356
  %v693 = vmul.f32 %v343, %v357
  %v694 = vmul.f32 %v344, %v358
  %v695 = vmul.f32 %v345, %v359
  %v696 = vmul.f32 %v346, %v360
  %v697 = vmul.f32 %v347, %v361
  %v698 = vmul.f32 %v348, %v362
  %v699 = vmul.f32 %v349, %v363
  %v700 = vmul.f32 %v350, %v364
  %v701 = vmul.f32 %v351, %v365
  %v702 = vadd.f32 %v366, %v368
  %v703 = vadd.f32 %v702, %v370
  %v704 = vadd.f32 %v703, %v372
  %v705 = vadd.f32 %v704, %v374
  %v706 = vadd.f32 %v705, %v376
  %vm707 = vcmask 1045504
  %v708 = vsel %vm707, %v378, 0.0
  %v709 = vadd.f32 %v706, %v708
  %v710 = vrot.slane %v709, 4
  %v711 = vadd.f32 %v709, %v710
  %v712 = vrot.slane %v711, 2
  %v713 = vadd.f32 %v711, %v712
  %v714 = vrot.slane %v713, 1
  %v715 = vadd.f32 %v713, %v714
  %v716 = vadd.f32 %v367, %v369
  %v717 = vadd.f32 %v716, %v371
  %v718 = vadd.f32 %v717, %v373
  %v719 = vadd.f32 %v718, %v375
  %v720 = vadd.f32 %v719, %v377
  %v721 = vsel %vm707, %v379, 0.0
  %v722 = vadd.f32 %v720, %v721
  %v723 = vrot.slane %v722, 4
  %v724 = vadd.f32 %v722, %v723
  %v725 = vrot.slane %v724, 2
  %v726 = vadd.f32 %v724, %v725
  %v727 = vrot.slane %v726, 1
  %v728 = vadd.f32 %v726, %v727
  %v729 = vadd.f32 %v380, %v382
  %v730 = vadd.f32 %v729, %v384
  %v731 = vadd.f32 %v730, %v386
  %v732 = vadd.f32 %v731, %v388
  %v733 = vadd.f32 %v732, %v390
  %v734 = vsel %vm707, %v392, 0.0
  %v735 = vadd.f32 %v733, %v734
  %v736 = vrot.slane %v735, 4
  %v737 = vadd.f32 %v735, %v736
  %v738 = vrot.slane %v737, 2
  %v739 = vadd.f32 %v737, %v738
  %v740 = vrot.slane %v739, 1
  %v741 = vadd.f32 %v739, %v740
  %v742 = vadd.f32 %v381, %v383
  %v743 = vadd.f32 %v742, %v385
  %v744 = vadd.f32 %v743, %v387
  %v745 = vadd.f32 %v744, %v389
  %v746 = vadd.f32 %v745, %v391
  %v747 = vsel %vm707, %v393, 0.0
  %v748 = vadd.f32 %v746, %v747
  %v749 = vrot.slane %v748, 4
  %v750 = vadd.f32 %v748, %v749
  %v751 = vrot.slane %v750, 2
  %v752 = vadd.f32 %v750, %v751
  %v753 = vrot.slane %v752, 1
  %v754 = vadd.f32 %v752, %v753
  %v755 = vadd.f32 %v394, %v396
  %v756 = vadd.f32 %v755, %v398
  %v757 = vadd.f32 %v756, %v400
  %v758 = vadd.f32 %v757, %v402
  %v759 = vadd.f32 %v758, %v404
  %v760 = vsel %vm707, %v406, 0.0
  %v761 = vadd.f32 %v759, %v760
  %v762 = vrot.slane %v761, 4
  %v763 = vadd.f32 %v761, %v762
  %v764 = vrot.slane %v763, 2
  %v765 = vadd.f32 %v763, %v764
  %v766 = vrot.slane %v765, 1
  %v767 = vadd.f32 %v765, %v766
  %v768 = vadd.f32 %v395, %v397
  %v769 = vadd.f32 %v768, %v399
  %v770 = vadd.f32 %v769, %v401
  %v771 = vadd.f32 %v770, %v403
  %v772 = vadd.f32 %v771, %v405
  %v773 = vsel %vm707, %v407, 0.0
  %v774 = vadd.f32 %v772, %v773
  %v775 = vrot.slane %v774, 4
  %v776 = vadd.f32 %v774, %v775
  %v777 = vrot.slane %v776, 2
  %v778 = vadd.f32 %v776, %v777
  %v779 = vrot.slane %v778, 1
  %v780 = vadd.f32 %v778, %v779
  %v781 = vadd.f32 %v408, %v410
  %v782 = vadd.f32 %v781, %v412
  %v783 = vadd.f32 %v782, %v414
  %v784 = vadd.f32 %v783, %v416
  %v785 = vadd.f32 %v784, %v418
  %v786 = vsel %vm707, %v420, 0.0
  %v787 = vadd.f32 %v785, %v786
  %v788 = vrot.slane %v787, 4
  %v789 = vadd.f32 %v787, %v788
  %v790 = vrot.slane %v789, 2
  %v791 = vadd.f32 %v789, %v790
  %v792 = vrot.slane %v791, 1
  %v793 = vadd.f32 %v791, %v792
  %v794 = vadd.f32 %v409, %v411
  %v795 = vadd.f32 %v794, %v413
  %v796 = vadd.f32 %v795, %v415
  %v797 = vadd.f32 %v796, %v417
  %v798 = vadd.f32 %v797, %v419
  %v799 = vsel %vm707, %v421, 0.0
  %v800 = vadd.f32 %v798, %v799
  %v801 = vrot.slane %v800, 4
  %v802 = vadd.f32 %v800, %v801
  %v803 = vrot.slane %v802, 2
  %v804 = vadd.f32 %v802, %v803
  %v805 = vrot.slane %v804, 1
  %v806 = vadd.f32 %v804, %v805
  %v807 = vadd.f32 %v422, %v424
  %v808 = vadd.f32 %v807, %v426
  %v809 = vadd.f32 %v808, %v428
  %v810 = vadd.f32 %v809, %v430
  %v811 = vadd.f32 %v810, %v432
  %v812 = vsel %vm707, %v434, 0.0
  %v813 = vadd.f32 %v811, %v812
  %v814 = vrot.slane %v813, 4
  %v815 = vadd.f32 %v813, %v814
  %v816 = vrot.slane %v815, 2
  %v817 = vadd.f32 %v815, %v816
  %v818 = vrot.slane %v817, 1
  %v819 = vadd.f32 %v817, %v818
  %v820 = vadd.f32 %v423, %v425
  %v821 = vadd.f32 %v820, %v427
  %v822 = vadd.f32 %v821, %v429
  %v823 = vadd.f32 %v822, %v431
  %v824 = vadd.f32 %v823, %v433
  %v825 = vsel %vm707, %v435, 0.0
  %v826 = vadd.f32 %v824, %v825
  %v827 = vrot.slane %v826, 4
  %v828 = vadd.f32 %v826, %v827
  %v829 = vrot.slane %v828, 2
  %v830 = vadd.f32 %v828, %v829
  %v831 = vrot.slane %v830, 1
  %v832 = vadd.f32 %v830, %v831
  %v833 = vadd.f32 %v436, %v438
  %v834 = vadd.f32 %v833, %v440
  %v835 = vadd.f32 %v834, %v442
  %v836 = vadd.f32 %v835, %v444
  %v837 = vadd.f32 %v836, %v446
  %v838 = vsel %vm707, %v448, 0.0
  %v839 = vadd.f32 %v837, %v838
  %v840 = vrot.slane %v839, 4
  %v841 = vadd.f32 %v839, %v840
  %v842 = vrot.slane %v841, 2
  %v843 = vadd.f32 %v841, %v842
  %v844 = vrot.slane %v843, 1
  %v845 = vadd.f32 %v843, %v844
  %v846 = vadd.f32 %v437, %v439
  %v847 = vadd.f32 %v846, %v441
  %v848 = vadd.f32 %v847, %v443
  %v849 = vadd.f32 %v848, %v445
  %v850 = vadd.f32 %v849, %v447
  %v851 = vsel %vm707, %v449, 0.0
  %v852 = vadd.f32 %v850, %v851
  %v853 = vrot.slane %v852, 4
  %v854 = vadd.f32 %v852, %v853
  %v855 = vrot.slane %v854, 2
  %v856 = vadd.f32 %v854, %v855
  %v857 = vrot.slane %v856, 1
  %v858 = vadd.f32 %v856, %v857
  %v859 = vadd.f32 %v450, %v452
  %v860 = vadd.f32 %v859, %v454
  %v861 = vadd.f32 %v860, %v456
  %v862 = vadd.f32 %v861, %v458
  %v863 = vadd.f32 %v862, %v460
  %v864 = vsel %vm707, %v462, 0.0
  %v865 = vadd.f32 %v863, %v864
  %v866 = vrot.slane %v865, 4
  %v867 = vadd.f32 %v865, %v866
  %v868 = vrot.slane %v867, 2
  %v869 = vadd.f32 %v867, %v868
  %v870 = vrot.slane %v869, 1
  %v871 = vadd.f32 %v869, %v870
  %v872 = vadd.f32 %v451, %v453
  %v873 = vadd.f32 %v872, %v455
  %v874 = vadd.f32 %v873, %v457
  %v875 = vadd.f32 %v874, %v459
  %v876 = vadd.f32 %v875, %v461
  %v877 = vsel %vm707, %v463, 0.0
  %v878 = vadd.f32 %v876, %v877
  %v879 = vrot.slane %v878, 4
  %v880 = vadd.f32 %v878, %v879
  %v881 = vrot.slane %v880, 2
  %v882 = vadd.f32 %v880, %v881
  %v883 = vrot.slane %v882, 1
  %v884 = vadd.f32 %v882, %v883
  %v885 = vadd.f32 %v464, %v466
  %v886 = vadd.f32 %v885, %v468
  %v887 = vadd.f32 %v886, %v470
  %v888 = vadd.f32 %v887, %v472
  %v889 = vadd.f32 %v888, %v474
  %v890 = vsel %vm707, %v476, 0.0
  %v891 = vadd.f32 %v889, %v890
  %v892 = vrot.slane %v891, 4
  %v893 = vadd.f32 %v891, %v892
  %v894 = vrot.slane %v893, 2
  %v895 = vadd.f32 %v893, %v894
  %v896 = vrot.slane %v895, 1
  %v897 = vadd.f32 %v895, %v896
  %v898 = vadd.f32 %v465, %v467
  %v899 = vadd.f32 %v898, %v469
  %v900 = vadd.f32 %v899, %v471
  %v901 = vadd.f32 %v900, %v473
  %v902 = vadd.f32 %v901, %v475
  %v903 = vsel %vm707, %v477, 0.0
  %v904 = vadd.f32 %v902, %v903
  %v905 = vrot.slane %v904, 4
  %v906 = vadd.f32 %v904, %v905
  %v907 = vrot.slane %v906, 2
  %v908 = vadd.f32 %v906, %v907
  %v909 = vrot.slane %v908, 1
  %v910 = vadd.f32 %v908, %v909
  %v911 = vadd.f32 %v478, %v480
  %v912 = vadd.f32 %v911, %v482
  %v913 = vadd.f32 %v912, %v484
  %v914 = vadd.f32 %v913, %v486
  %v915 = vadd.f32 %v914, %v488
  %v916 = vsel %vm707, %v490, 0.0
  %v917 = vadd.f32 %v915, %v916
  %v918 = vrot.slane %v917, 4
  %v919 = vadd.f32 %v917, %v918
  %v920 = vrot.slane %v919, 2
  %v921 = vadd.f32 %v919, %v920
  %v922 = vrot.slane %v921, 1
  %v923 = vadd.f32 %v921, %v922
  %v924 = vadd.f32 %v479, %v481
  %v925 = vadd.f32 %v924, %v483
  %v926 = vadd.f32 %v925, %v485
  %v927 = vadd.f32 %v926, %v487
  %v928 = vadd.f32 %v927, %v489
  %v929 = vsel %vm707, %v491, 0.0
  %v930 = vadd.f32 %v928, %v929
  %v931 = vrot.slane %v930, 4
  %v932 = vadd.f32 %v930, %v931
  %v933 = vrot.slane %v932, 2
  %v934 = vadd.f32 %v932, %v933
  %v935 = vrot.slane %v934, 1
  %v936 = vadd.f32 %v934, %v935
  %v937 = vadd.f32 %v492, %v494
  %v938 = vadd.f32 %v937, %v496
  %v939 = vadd.f32 %v938, %v498
  %v940 = vadd.f32 %v939, %v500
  %v941 = vadd.f32 %v940, %v502
  %v942 = vsel %vm707, %v504, 0.0
  %v943 = vadd.f32 %v941, %v942
  %v944 = vrot.slane %v943, 4
  %v945 = vadd.f32 %v943, %v944
  %v946 = vrot.slane %v945, 2
  %v947 = vadd.f32 %v945, %v946
  %v948 = vrot.slane %v947, 1
  %v949 = vadd.f32 %v947, %v948
  %v950 = vadd.f32 %v493, %v495
  %v951 = vadd.f32 %v950, %v497
  %v952 = vadd.f32 %v951, %v499
  %v953 = vadd.f32 %v952, %v501
  %v954 = vadd.f32 %v953, %v503
  %v955 = vsel %vm707, %v505, 0.0
  %v956 = vadd.f32 %v954, %v955
  %v957 = vrot.slane %v956, 4
  %v958 = vadd.f32 %v956, %v957
  %v959 = vrot.slane %v958, 2
  %v960 = vadd.f32 %v958, %v959
  %v961 = vrot.slane %v960, 1
  %v962 = vadd.f32 %v960, %v961
  %v963 = vadd.f32 %v506, %v508
  %v964 = vadd.f32 %v963, %v510
  %v965 = vadd.f32 %v964, %v512
  %v966 = vadd.f32 %v965, %v514
  %v967 = vadd.f32 %v966, %v516
  %v968 = vsel %vm707, %v518, 0.0
  %v969 = vadd.f32 %v967, %v968
  %v970 = vrot.slane %v969, 4
  %v971 = vadd.f32 %v969, %v970
  %v972 = vrot.slane %v971, 2
  %v973 = vadd.f32 %v971, %v972
  %v974 = vrot.slane %v973, 1
  %v975 = vadd.f32 %v973, %v974
  %v976 = vadd.f32 %v507, %v509
  %v977 = vadd.f32 %v976, %v511
  %v978 = vadd.f32 %v977, %v513
  %v979 = vadd.f32 %v978, %v515
  %v980 = vadd.f32 %v979, %v517
  %v981 = vsel %vm707, %v519, 0.0
  %v982 = vadd.f32 %v980, %v981
  %v983 = vrot.slane %v982, 4
  %v984 = vadd.f32 %v982, %v983
  %v985 = vrot.slane %v984, 2
  %v986 = vadd.f32 %v984, %v985
  %v987 = vrot.slane %v986, 1
  %v988 = vadd.f32 %v986, %v987
  %v989 = vadd.f32 %v520, %v522
  %v990 = vadd.f32 %v989, %v524
  %v991 = vadd.f32 %v990, %v526
  %v992 = vadd.f32 %v991, %v528
  %v993 = vadd.f32 %v992, %v530
  %v994 = vsel %vm707, %v532, 0.0
  %v995 = vadd.f32 %v993, %v994
  %v996 = vrot.slane %v995, 4
  %v997 = vadd.f32 %v995, %v996
  %v998 = vrot.slane %v997, 2
  %v999 = vadd.f32 %v997, %v998
  %v1000 = vrot.slane %v999, 1
  %v1001 = vadd.f32 %v999, %v1000
  %v1002 = vadd.f32 %v521, %v523
  %v1003 = vadd.f32 %v1002, %v525
  %v1004 = vadd.f32 %v1003, %v527
  %v1005 = vadd.f32 %v1004, %v529
  %v1006 = vadd.f32 %v1005, %v531
  %v1007 = vsel %vm707, %v533, 0.0
  %v1008 = vadd.f32 %v1006, %v1007
  %v1009 = vrot.slane %v1008, 4
  %v1010 = vadd.f32 %v1008, %v1009
  %v1011 = vrot.slane %v1010, 2
  %v1012 = vadd.f32 %v1010, %v1011
  %v1013 = vrot.slane %v1012, 1
  %v1014 = vadd.f32 %v1012, %v1013
  %v1015 = vadd.f32 %v534, %v536
  %v1016 = vadd.f32 %v1015, %v538
  %v1017 = vadd.f32 %v1016, %v540
  %v1018 = vadd.f32 %v1017, %v542
  %v1019 = vadd.f32 %v1018, %v544
  %v1020 = vsel %vm707, %v546, 0.0
  %v1021 = vadd.f32 %v1019, %v1020
  %v1022 = vrot.slane %v1021, 4
  %v1023 = vadd.f32 %v1021, %v1022
  %v1024 = vrot.slane %v1023, 2
  %v1025 = vadd.f32 %v1023, %v1024
  %v1026 = vrot.slane %v1025, 1
  %v1027 = vadd.f32 %v1025, %v1026
  %v1028 = vadd.f32 %v535, %v537
  %v1029 = vadd.f32 %v1028, %v539
  %v1030 = vadd.f32 %v1029, %v541
  %v1031 = vadd.f32 %v1030, %v543
  %v1032 = vadd.f32 %v1031, %v545
  %v1033 = vsel %vm707, %v547, 0.0
  %v1034 = vadd.f32 %v1032, %v1033
  %v1035 = vrot.slane %v1034, 4
  %v1036 = vadd.f32 %v1034, %v1035
  %v1037 = vrot.slane %v1036, 2
  %v1038 = vadd.f32 %v1036, %v1037
  %v1039 = vrot.slane %v1038, 1
  %v1040 = vadd.f32 %v1038, %v1039
  %v1041 = vadd.f32 %v548, %v550
  %v1042 = vadd.f32 %v1041, %v552
  %v1043 = vadd.f32 %v1042, %v554
  %v1044 = vadd.f32 %v1043, %v556
  %v1045 = vadd.f32 %v1044, %v558
  %v1046 = vsel %vm707, %v560, 0.0
  %v1047 = vadd.f32 %v1045, %v1046
  %v1048 = vrot.slane %v1047, 4
  %v1049 = vadd.f32 %v1047, %v1048
  %v1050 = vrot.slane %v1049, 2
  %v1051 = vadd.f32 %v1049, %v1050
  %v1052 = vrot.slane %v1051, 1
  %v1053 = vadd.f32 %v1051, %v1052
  %v1054 = vadd.f32 %v549, %v551
  %v1055 = vadd.f32 %v1054, %v553
  %v1056 = vadd.f32 %v1055, %v555
  %v1057 = vadd.f32 %v1056, %v557
  %v1058 = vadd.f32 %v1057, %v559
  %v1059 = vsel %vm707, %v561, 0.0
  %v1060 = vadd.f32 %v1058, %v1059
  %v1061 = vrot.slane %v1060, 4
  %v1062 = vadd.f32 %v1060, %v1061
  %v1063 = vrot.slane %v1062, 2
  %v1064 = vadd.f32 %v1062, %v1063
  %v1065 = vrot.slane %v1064, 1
  %v1066 = vadd.f32 %v1064, %v1065
  %v1067 = vadd.f32 %v562, %v564
  %v1068 = vadd.f32 %v1067, %v566
  %v1069 = vadd.f32 %v1068, %v568
  %v1070 = vadd.f32 %v1069, %v570
  %v1071 = vadd.f32 %v1070, %v572
  %v1072 = vsel %vm707, %v574, 0.0
  %v1073 = vadd.f32 %v1071, %v1072
  %v1074 = vrot.slane %v1073, 4
  %v1075 = vadd.f32 %v1073, %v1074
  %v1076 = vrot.slane %v1075, 2
  %v1077 = vadd.f32 %v1075, %v1076
  %v1078 = vrot.slane %v1077, 1
  %v1079 = vadd.f32 %v1077, %v1078
  %v1080 = vadd.f32 %v563, %v565
  %v1081 = vadd.f32 %v1080, %v567
  %v1082 = vadd.f32 %v1081, %v569
  %v1083 = vadd.f32 %v1082, %v571
  %v1084 = vadd.f32 %v1083, %v573
  %v1085 = vsel %vm707, %v575, 0.0
  %v1086 = vadd.f32 %v1084, %v1085
  %v1087 = vrot.slane %v1086, 4
  %v1088 = vadd.f32 %v1086, %v1087
  %v1089 = vrot.slane %v1088, 2
  %v1090 = vadd.f32 %v1088, %v1089
  %v1091 = vrot.slane %v1090, 1
  %v1092 = vadd.f32 %v1090, %v1091
  %v1093 = vadd.f32 %v576, %v578
  %v1094 = vadd.f32 %v1093, %v580
  %v1095 = vadd.f32 %v1094, %v582
  %v1096 = vadd.f32 %v1095, %v584
  %v1097 = vadd.f32 %v1096, %v586
  %v1098 = vsel %vm707, %v588, 0.0
  %v1099 = vadd.f32 %v1097, %v1098
  %v1100 = vrot.slane %v1099, 4
  %v1101 = vadd.f32 %v1099, %v1100
  %v1102 = vrot.slane %v1101, 2
  %v1103 = vadd.f32 %v1101, %v1102
  %v1104 = vrot.slane %v1103, 1
  %v1105 = vadd.f32 %v1103, %v1104
  %v1106 = vadd.f32 %v577, %v579
  %v1107 = vadd.f32 %v1106, %v581
  %v1108 = vadd.f32 %v1107, %v583
  %v1109 = vadd.f32 %v1108, %v585
  %v1110 = vadd.f32 %v1109, %v587
  %v1111 = vsel %vm707, %v589, 0.0
  %v1112 = vadd.f32 %v1110, %v1111
  %v1113 = vrot.slane %v1112, 4
  %v1114 = vadd.f32 %v1112, %v1113
  %v1115 = vrot.slane %v1114, 2
  %v1116 = vadd.f32 %v1114, %v1115
  %v1117 = vrot.slane %v1116, 1
  %v1118 = vadd.f32 %v1116, %v1117
  %v1119 = vadd.f32 %v590, %v592
  %v1120 = vadd.f32 %v1119, %v594
  %v1121 = vadd.f32 %v1120, %v596
  %v1122 = vadd.f32 %v1121, %v598
  %v1123 = vadd.f32 %v1122, %v600
  %v1124 = vsel %vm707, %v602, 0.0
  %v1125 = vadd.f32 %v1123, %v1124
  %v1126 = vrot.slane %v1125, 4
  %v1127 = vadd.f32 %v1125, %v1126
  %v1128 = vrot.slane %v1127, 2
  %v1129 = vadd.f32 %v1127, %v1128
  %v1130 = vrot.slane %v1129, 1
  %v1131 = vadd.f32 %v1129, %v1130
  %v1132 = vadd.f32 %v591, %v593
  %v1133 = vadd.f32 %v1132, %v595
  %v1134 = vadd.f32 %v1133, %v597
  %v1135 = vadd.f32 %v1134, %v599
  %v1136 = vadd.f32 %v1135, %v601
  %v1137 = vsel %vm707, %v603, 0.0
  %v1138 = vadd.f32 %v1136, %v1137
  %v1139 = vrot.slane %v1138, 4
  %v1140 = vadd.f32 %v1138, %v1139
  %v1141 = vrot.slane %v1140, 2
  %v1142 = vadd.f32 %v1140, %v1141
  %v1143 = vrot.slane %v1142, 1
  %v1144 = vadd.f32 %v1142, %v1143
  %v1145 = vadd.f32 %v604, %v606
  %v1146 = vadd.f32 %v1145, %v608
  %v1147 = vadd.f32 %v1146, %v610
  %v1148 = vadd.f32 %v1147, %v612
  %v1149 = vadd.f32 %v1148, %v614
  %v1150 = vsel %vm707, %v616, 0.0
  %v1151 = vadd.f32 %v1149, %v1150
  %v1152 = vrot.slane %v1151, 4
  %v1153 = vadd.f32 %v1151, %v1152
  %v1154 = vrot.slane %v1153, 2
  %v1155 = vadd.f32 %v1153, %v1154
  %v1156 = vrot.slane %v1155, 1
  %v1157 = vadd.f32 %v1155, %v1156
  %v1158 = vadd.f32 %v605, %v607
  %v1159 = vadd.f32 %v1158, %v609
  %v1160 = vadd.f32 %v1159, %v611
  %v1161 = vadd.f32 %v1160, %v613
  %v1162 = vadd.f32 %v1161, %v615
  %v1163 = vsel %vm707, %v617, 0.0
  %v1164 = vadd.f32 %v1162, %v1163
  %v1165 = vrot.slane %v1164, 4
  %v1166 = vadd.f32 %v1164, %v1165
  %v1167 = vrot.slane %v1166, 2
  %v1168 = vadd.f32 %v1166, %v1167
  %v1169 = vrot.slane %v1168, 1
  %v1170 = vadd.f32 %v1168, %v1169
  %v1171 = vadd.f32 %v618, %v620
  %v1172 = vadd.f32 %v1171, %v622
  %v1173 = vadd.f32 %v1172, %v624
  %v1174 = vadd.f32 %v1173, %v626
  %v1175 = vadd.f32 %v1174, %v628
  %v1176 = vsel %vm707, %v630, 0.0
  %v1177 = vadd.f32 %v1175, %v1176
  %v1178 = vrot.slane %v1177, 4
  %v1179 = vadd.f32 %v1177, %v1178
  %v1180 = vrot.slane %v1179, 2
  %v1181 = vadd.f32 %v1179, %v1180
  %v1182 = vrot.slane %v1181, 1
  %v1183 = vadd.f32 %v1181, %v1182
  %v1184 = vadd.f32 %v619, %v621
  %v1185 = vadd.f32 %v1184, %v623
  %v1186 = vadd.f32 %v1185, %v625
  %v1187 = vadd.f32 %v1186, %v627
  %v1188 = vadd.f32 %v1187, %v629
  %v1189 = vsel %vm707, %v631, 0.0
  %v1190 = vadd.f32 %v1188, %v1189
  %v1191 = vrot.slane %v1190, 4
  %v1192 = vadd.f32 %v1190, %v1191
  %v1193 = vrot.slane %v1192, 2
  %v1194 = vadd.f32 %v1192, %v1193
  %v1195 = vrot.slane %v1194, 1
  %v1196 = vadd.f32 %v1194, %v1195
  %v1197 = vadd.f32 %v632, %v634
  %v1198 = vadd.f32 %v1197, %v636
  %v1199 = vadd.f32 %v1198, %v638
  %v1200 = vadd.f32 %v1199, %v640
  %v1201 = vadd.f32 %v1200, %v642
  %v1202 = vsel %vm707, %v644, 0.0
  %v1203 = vadd.f32 %v1201, %v1202
  %v1204 = vrot.slane %v1203, 4
  %v1205 = vadd.f32 %v1203, %v1204
  %v1206 = vrot.slane %v1205, 2
  %v1207 = vadd.f32 %v1205, %v1206
  %v1208 = vrot.slane %v1207, 1
  %v1209 = vadd.f32 %v1207, %v1208
  %v1210 = vadd.f32 %v633, %v635
  %v1211 = vadd.f32 %v1210, %v637
  %v1212 = vadd.f32 %v1211, %v639
  %v1213 = vadd.f32 %v1212, %v641
  %v1214 = vadd.f32 %v1213, %v643
  %v1215 = vsel %vm707, %v645, 0.0
  %v1216 = vadd.f32 %v1214, %v1215
  %v1217 = vrot.slane %v1216, 4
  %v1218 = vadd.f32 %v1216, %v1217
  %v1219 = vrot.slane %v1218, 2
  %v1220 = vadd.f32 %v1218, %v1219
  %v1221 = vrot.slane %v1220, 1
  %v1222 = vadd.f32 %v1220, %v1221
  %v1223 = vadd.f32 %v646, %v648
  %v1224 = vadd.f32 %v1223, %v650
  %v1225 = vadd.f32 %v1224, %v652
  %v1226 = vadd.f32 %v1225, %v654
  %v1227 = vadd.f32 %v1226, %v656
  %v1228 = vsel %vm707, %v658, 0.0
  %v1229 = vadd.f32 %v1227, %v1228
  %v1230 = vrot.slane %v1229, 4
  %v1231 = vadd.f32 %v1229, %v1230
  %v1232 = vrot.slane %v1231, 2
  %v1233 = vadd.f32 %v1231, %v1232
  %v1234 = vrot.slane %v1233, 1
  %v1235 = vadd.f32 %v1233, %v1234
  %v1236 = vadd.f32 %v647, %v649
  %v1237 = vadd.f32 %v1236, %v651
  %v1238 = vadd.f32 %v1237, %v653
  %v1239 = vadd.f32 %v1238, %v655
  %v1240 = vadd.f32 %v1239, %v657
  %v1241 = vsel %vm707, %v659, 0.0
  %v1242 = vadd.f32 %v1240, %v1241
  %v1243 = vrot.slane %v1242, 4
  %v1244 = vadd.f32 %v1242, %v1243
  %v1245 = vrot.slane %v1244, 2
  %v1246 = vadd.f32 %v1244, %v1245
  %v1247 = vrot.slane %v1246, 1
  %v1248 = vadd.f32 %v1246, %v1247
  %v1249 = vadd.f32 %v660, %v662
  %v1250 = vadd.f32 %v1249, %v664
  %v1251 = vadd.f32 %v1250, %v666
  %v1252 = vadd.f32 %v1251, %v668
  %v1253 = vadd.f32 %v1252, %v670
  %v1254 = vsel %vm707, %v672, 0.0
  %v1255 = vadd.f32 %v1253, %v1254
  %v1256 = vrot.slane %v1255, 4
  %v1257 = vadd.f32 %v1255, %v1256
  %v1258 = vrot.slane %v1257, 2
  %v1259 = vadd.f32 %v1257, %v1258
  %v1260 = vrot.slane %v1259, 1
  %v1261 = vadd.f32 %v1259, %v1260
  %v1262 = vadd.f32 %v661, %v663
  %v1263 = vadd.f32 %v1262, %v665
  %v1264 = vadd.f32 %v1263, %v667
  %v1265 = vadd.f32 %v1264, %v669
  %v1266 = vadd.f32 %v1265, %v671
  %v1267 = vsel %vm707, %v673, 0.0
  %v1268 = vadd.f32 %v1266, %v1267
  %v1269 = vrot.slane %v1268, 4
  %v1270 = vadd.f32 %v1268, %v1269
  %v1271 = vrot.slane %v1270, 2
  %v1272 = vadd.f32 %v1270, %v1271
  %v1273 = vrot.slane %v1272, 1
  %v1274 = vadd.f32 %v1272, %v1273
  %v1275 = vadd.f32 %v674, %v676
  %v1276 = vadd.f32 %v1275, %v678
  %v1277 = vadd.f32 %v1276, %v680
  %v1278 = vadd.f32 %v1277, %v682
  %v1279 = vadd.f32 %v1278, %v684
  %v1280 = vsel %vm707, %v686, 0.0
  %v1281 = vadd.f32 %v1279, %v1280
  %v1282 = vrot.slane %v1281, 4
  %v1283 = vadd.f32 %v1281, %v1282
  %v1284 = vrot.slane %v1283, 2
  %v1285 = vadd.f32 %v1283, %v1284
  %v1286 = vrot.slane %v1285, 1
  %v1287 = vadd.f32 %v1285, %v1286
  %v1288 = vadd.f32 %v675, %v677
  %v1289 = vadd.f32 %v1288, %v679
  %v1290 = vadd.f32 %v1289, %v681
  %v1291 = vadd.f32 %v1290, %v683
  %v1292 = vadd.f32 %v1291, %v685
  %v1293 = vsel %vm707, %v687, 0.0
  %v1294 = vadd.f32 %v1292, %v1293
  %v1295 = vrot.slane %v1294, 4
  %v1296 = vadd.f32 %v1294, %v1295
  %v1297 = vrot.slane %v1296, 2
  %v1298 = vadd.f32 %v1296, %v1297
  %v1299 = vrot.slane %v1298, 1
  %v1300 = vadd.f32 %v1298, %v1299
  %v1301 = vadd.f32 %v688, %v690
  %v1302 = vadd.f32 %v1301, %v692
  %v1303 = vadd.f32 %v1302, %v694
  %v1304 = vadd.f32 %v1303, %v696
  %v1305 = vadd.f32 %v1304, %v698
  %v1306 = vsel %vm707, %v700, 0.0
  %v1307 = vadd.f32 %v1305, %v1306
  %v1308 = vrot.slane %v1307, 4
  %v1309 = vadd.f32 %v1307, %v1308
  %v1310 = vrot.slane %v1309, 2
  %v1311 = vadd.f32 %v1309, %v1310
  %v1312 = vrot.slane %v1311, 1
  %v1313 = vadd.f32 %v1311, %v1312
  %v1314 = vadd.f32 %v689, %v691
  %v1315 = vadd.f32 %v1314, %v693
  %v1316 = vadd.f32 %v1315, %v695
  %v1317 = vadd.f32 %v1316, %v697
  %v1318 = vadd.f32 %v1317, %v699
  %v1319 = vsel %vm707, %v701, 0.0
  %v1320 = vadd.f32 %v1318, %v1319
  %v1321 = vrot.slane %v1320, 4
  %v1322 = vadd.f32 %v1320, %v1321
  %v1323 = vrot.slane %v1322, 2
  %v1324 = vadd.f32 %v1322, %v1323
  %v1325 = vrot.slane %v1324, 1
  %v1326 = vadd.f32 %v1324, %v1325
  %v1327 = vld [vmem:[%s2] sm:$0xff]
  %v1328 = vld [vmem:[%s2 + $0x8] sm:$0xff]
  %v1329 = vld [vmem:[%s2 + $0x10] sm:$0xff]
  %v1330 = vld [vmem:[%s2 + $0x18] sm:$0xff]
  %v1331 = vld [vmem:[%s2 + $0x20] sm:$0xff]
  %v1332 = vld [vmem:[%s2 + $0x28] sm:$0xff]
  %v1339 = vrot.slane %v1327, 1
  %v1340 = vrot.slane %v1328, 1
  %v1341 = vrot.slane %v1327, 2
  %v1342 = vrot.slane %v1328, 2
  %v1343 = vrot.slane %v1327, 3
  %v1344 = vrot.slane %v1328, 3
  %v1345 = vrot.slane %v1327, 4
  %v1346 = vrot.slane %v1328, 4
  %v1347 = vrot.slane %v1327, 5
  %v1348 = vrot.slane %v1328, 5
  %v1349 = vrot.slane %v1327, 6
  %v1350 = vrot.slane %v1328, 6
  %v1351 = vrot.slane %v1327, 7
  %v1352 = vrot.slane %v1328, 7
  %v1353 = vrot.slane %v1329, 1
  %v1354 = vrot.slane %v1330, 1
  %v1355 = vrot.slane %v1329, 2
  %v1356 = vrot.slane %v1330, 2
  %v1357 = vrot.slane %v1329, 3
  %v1358 = vrot.slane %v1330, 3
  %v1359 = vrot.slane %v1329, 4
  %v1360 = vrot.slane %v1330, 4
  %v1361 = vrot.slane %v1329, 5
  %v1362 = vrot.slane %v1330, 5
  %v1363 = vrot.slane %v1329, 6
  %v1364 = vrot.slane %v1330, 6
  %v1365 = vrot.slane %v1329, 7
  %v1366 = vrot.slane %v1330, 7
  %v1367 = vrot.slane %v1331, 1
  %v1368 = vrot.slane %v1332, 1
  %v1369 = vrot.slane %v1331, 2
  %v1370 = vrot.slane %v1332, 2
  %v1371 = vrot.slane %v1331, 3
  %v1372 = vrot.slane %v1332, 3
  %v1373 = vrot.slane %v1331, 4
  %v1374 = vrot.slane %v1332, 4
  %v1375 = vrot.slane %v1331, 5
  %v1376 = vrot.slane %v1332, 5
  %v1377 = vrot.slane %v1331, 6
  %v1378 = vrot.slane %v1332, 6
  %v1379 = vrot.slane %v1331, 7
  %v1380 = vrot.slane %v1332, 7
  %v1429 = vadd.f32 %v715, %v1327
  %v1430 = vadd.f32 %v728, %v1328
  %v1431 = vadd.f32 %v741, %v1339
  %v1432 = vadd.f32 %v754, %v1340
  %v1433 = vadd.f32 %v767, %v1341
  %v1434 = vadd.f32 %v780, %v1342
  %v1435 = vadd.f32 %v793, %v1343
  %v1436 = vadd.f32 %v806, %v1344
  %v1437 = vadd.f32 %v819, %v1345
  %v1438 = vadd.f32 %v832, %v1346
  %v1439 = vadd.f32 %v845, %v1347
  %v1440 = vadd.f32 %v858, %v1348
  %v1441 = vadd.f32 %v871, %v1349
  %v1442 = vadd.f32 %v884, %v1350
  %v1443 = vadd.f32 %v897, %v1351
  %v1444 = vadd.f32 %v910, %v1352
  %v1445 = vadd.f32 %v923, %v1329
  %v1446 = vadd.f32 %v936, %v1330
  %v1447 = vadd.f32 %v949, %v1353
  %v1448 = vadd.f32 %v962, %v1354
  %v1449 = vadd.f32 %v975, %v1355
  %v1450 = vadd.f32 %v988, %v1356
  %v1451 = vadd.f32 %v1001, %v1357
  %v1452 = vadd.f32 %v1014, %v1358
  %v1453 = vadd.f32 %v1027, %v1359
  %v1454 = vadd.f32 %v1040, %v1360
  %v1455 = vadd.f32 %v1053, %v1361
  %v1456 = vadd.f32 %v1066, %v1362
  %v1457 = vadd.f32 %v1079, %v1363
  %v1458 = vadd.f32 %v1092, %v1364
  %v1459 = vadd.f32 %v1105, %v1365
  %v1460 = vadd.f32 %v1118, %v1366
  %v1461 = vadd.f32 %v1131, %v1331
  %v1462 = vadd.f32 %v1144, %v1332
  %v1463 = vadd.f32 %v1157, %v1367
  %v1464 = vadd.f32 %v1170, %v1368
  %v1465 = vadd.f32 %v1183, %v1369
  %v1466 = vadd.f32 %v1196, %v1370
  %v1467 = vadd.f32 %v1209, %v1371
  %v1468 = vadd.f32 %v1222, %v1372
  %v1469 = vadd.f32 %v1235, %v1373
  %v1470 = vadd.f32 %v1248, %v1374
  %v1471 = vadd.f32 %v1261, %v1375
  %v1472 = vadd.f32 %v1274, %v1376
  %v1473 = vadd.f32 %v1287, %v1377
  %v1474 = vadd.f32 %v1300, %v1378
  %v1475 = vadd.f32 %v1313, %v1379
  %v1476 = vadd.f32 %v1326, %v1380
  %v1525 = vrot.slane %v1431, 7
  %vm1526 = vcmask 1041409
  %v1527 = vsel %vm1526, %v1525, %v1429
  %v1528 = vrot.slane %v1433, 6
  %vm1529 = vcmask 1042434
  %v1530 = vsel %vm1529, %v1528, %v1527
  %v1531 = vrot.slane %v1435, 5
  %vm1532 = vcmask 1043459
  %v1533 = vsel %vm1532, %v1531, %v1530
  %v1534 = vrot.slane %v1437, 4
  %vm1535 = vcmask 1044484
  %v1536 = vsel %vm1535, %v1534, %v1533
  %v1537 = vrot.slane %v1439, 3
  %vm1538 = vcmask 1045509
  %v1539 = vsel %vm1538, %v1537, %v1536
  %v1540 = vrot.slane %v1441, 2
  %vm1541 = vcmask 1046534
  %v1542 = vsel %vm1541, %v1540, %v1539
  %v1543 = vrot.slane %v1443, 1
  %vm1544 = vcmask 1047559
  %v1545 = vsel %vm1544, %v1543, %v1542
  %v1546 = vrot.slane %v1432, 7
  %v1547 = vsel %vm1526, %v1546, %v1430
  %v1548 = vrot.slane %v1434, 6
  %v1549 = vsel %vm1529, %v1548, %v1547
  %v1550 = vrot.slane %v1436, 5
  %v1551 = vsel %vm1532, %v1550, %v1549
  %v1552 = vrot.slane %v1438, 4
  %v1553 = vsel %vm1535, %v1552, %v1551
  %v1554 = vrot.slane %v1440, 3
  %v1555 = vsel %vm1538, %v1554, %v1553
  %v1556 = vrot.slane %v1442, 2
  %v1557 = vsel %vm1541, %v1556, %v1555
  %v1558 = vrot.slane %v1444, 1
  %v1559 = vsel %vm1544, %v1558, %v1557
  %v1560 = vrot.slane %v1447, 7
  %v1561 = vsel %vm1526, %v1560, %v1445
  %v1562 = vrot.slane %v1449, 6
  %v1563 = vsel %vm1529, %v1562, %v1561
  %v1564 = vrot.slane %v1451, 5
  %v1565 = vsel %vm1532, %v1564, %v1563
  %v1566 = vrot.slane %v1453, 4
  %v1567 = vsel %vm1535, %v1566, %v1565
  %v1568 = vrot.slane %v1455, 3
  %v1569 = vsel %vm1538, %v1568, %v1567
  %v1570 = vrot.slane %v1457, 2
  %v1571 = vsel %vm1541, %v1570, %v1569
  %v1572 = vrot.slane %v1459, 1
  %v1573 = vsel %vm1544, %v1572, %v1571
  %v1574 = vrot.slane %v1448, 7
  %v1575 = vsel %vm1526, %v1574, %v1446
  %v1576 = vrot.slane %v1450, 6
  %v1577 = vsel %vm1529, %v1576, %v1575
  %v1578 = vrot.slane %v1452, 5
  %v1579 = vsel %vm1532, %v1578, %v1577
  %v1580 = vrot.slane %v1454, 4
  %v1581 = vsel %vm1535, %v1580, %v1579
  %v1582 = vrot.slane %v1456, 3
  %v1583 = vsel %vm1538, %v1582, %v1581
  %v1584 = vrot.slane %v1458, 2
  %v1585 = vsel %vm1541, %v1584, %v1583
  %v1586 = vrot.slane %v1460, 1
  %v1587 = vsel %vm1544, %v1586, %v1585
  %v1588 = vrot.slane %v1463, 7
  %v1589 = vsel %vm1526, %v1588, %v1461
  %v1590 = vrot.slane %v1465, 6
  %v1591 = vsel %vm1529, %v1590, %v1589
  %v1592 = vrot.slane %v1467, 5
  %v1593 = vsel %vm1532, %v1592, %v1591
  %v1594 = vrot.slane %v1469, 4
  %v1595 = vsel %vm1535, %v1594, %v1593
  %v1596 = vrot.slane %v1471, 3
  %v1597 = vsel %vm1538, %v1596, %v1595
  %v1598 = vrot.slane %v1473, 2
  %v1599 = vsel %vm1541, %v1598, %v1597
  %v1600 = vrot.slane %v1475, 1
  %v1601 = vsel %vm1544, %v1600, %v1599
  %v1602 = vrot.slane %v1464, 7
  %v1603 = vsel %vm1526, %v1602, %v1462
  %v1604 = vrot.slane %v1466, 6
  %v1605 = vsel %vm1529, %v1604, %v1603
  %v1606 = vrot.slane %v1468, 5
  %v1607 = vsel %vm1532, %v1606, %v1605
  %v1608 = vrot.slane %v1470, 4
  %v1609 = vsel %vm1535, %v1608, %v1607
  %v1610 = vrot.slane %v1472, 3
  %v1611 = vsel %vm1538, %v1610, %v1609
  %v1612 = vrot.slane %v1474, 2
  %v1613 = vsel %vm1541, %v1612, %v1611
  %v1614 = vrot.slane %v1476, 1
  %v1615 = vsel %vm1544, %v1614, %v1613
  %1622 = vst [vmem:[%s3] sm:$0xff] %v1545
  %1623 = vst [vmem:[%s3 + $0x8] sm:$0xff] %v1559
  %1624 = vst [vmem:[%s3 + $0x10] sm:$0xff] %v1573
  %1625 = vst [vmem:[%s3 + $0x18] sm:$0xff] %v1587
  %1626 = vst [vmem:[%s3 + $0x20] sm:$0xff] %v1601
  %1627 = vst [vmem:[%s3 + $0x28] sm:$0xff] %v1615
  %v1628 = vmax.f32 %v1429, 0.0
  %v1629 = vmax.f32 %v1430, 0.0
  %v1630 = vmax.f32 %v1431, 0.0
  %v1631 = vmax.f32 %v1432, 0.0
  %v1632 = vmax.f32 %v1433, 0.0
  %v1633 = vmax.f32 %v1434, 0.0
  %v1634 = vmax.f32 %v1435, 0.0
  %v1635 = vmax.f32 %v1436, 0.0
  %v1636 = vmax.f32 %v1437, 0.0
  %v1637 = vmax.f32 %v1438, 0.0
  %v1638 = vmax.f32 %v1439, 0.0
  %v1639 = vmax.f32 %v1440, 0.0
  %v1640 = vmax.f32 %v1441, 0.0
  %v1641 = vmax.f32 %v1442, 0.0
  %v1642 = vmax.f32 %v1443, 0.0
  %v1643 = vmax.f32 %v1444, 0.0
  %v1644 = vmax.f32 %v1445, 0.0
  %v1645 = vmax.f32 %v1446, 0.0
  %v1646 = vmax.f32 %v1447, 0.0
  %v1647 = vmax.f32 %v1448, 0.0
  %v1648 = vmax.f32 %v1449, 0.0
  %v1649 = vmax.f32 %v1450, 0.0
  %v1650 = vmax.f32 %v1451, 0.0
  %v1651 = vmax.f32 %v1452, 0.0
  %v1652 = vmax.f32 %v1453, 0.0
  %v1653 = vmax.f32 %v1454, 0.0
  %v1654 = vmax.f32 %v1455, 0.0
  %v1655 = vmax.f32 %v1456, 0.0
  %v1656 = vmax.f32 %v1457, 0.0
  %v1657 = vmax.f32 %v1458, 0.0
  %v1658 = vmax.f32 %v1459, 0.0
  %v1659 = vmax.f32 %v1460, 0.0
  %v1660 = vmax.f32 %v1461, 0.0
  %v1661 = vmax.f32 %v1462, 0.0
  %v1662 = vmax.f32 %v1463, 0.0
  %v1663 = vmax.f32 %v1464, 0.0
  %v1664 = vmax.f32 %v1465, 0.0
  %v1665 = vmax.f32 %v1466, 0.0
  %v1666 = vmax.f32 %v1467, 0.0
  %v1667 = vmax.f32 %v1468, 0.0
  %v1668 = vmax.f32 %v1469, 0.0
  %v1669 = vmax.f32 %v1470, 0.0
  %v1670 = vmax.f32 %v1471, 0.0
  %v1671 = vmax.f32 %v1472, 0.0
  %v1672 = vmax.f32 %v1473, 0.0
  %v1673 = vmax.f32 %v1474, 0.0
  %v1674 = vmax.f32 %v1475, 0.0
  %v1675 = vmax.f32 %v1476, 0.0
  %v1724 = vrot.slane %v1630, 7
  %v1725 = vsel %vm1526, %v1724, %v1628
  %v1726 = vrot.slane %v1632, 6
  %v1727 = vsel %vm1529, %v1726, %v1725
  %v1728 = vrot.slane %v1634, 5
  %v1729 = vsel %vm1532, %v1728, %v1727
  %v1730 = vrot.slane %v1636, 4
  %v1731 = vsel %vm1535, %v1730, %v1729
  %v1732 = vrot.slane %v1638, 3
  %v1733 = vsel %vm1538, %v1732, %v1731
  %v1734 = vrot.slane %v1640, 2
  %v1735 = vsel %vm1541, %v1734, %v1733
  %v1736 = vrot.slane %v1642, 1
  %v1737 = vsel %vm1544, %v1736, %v1735
  %v1738 = vrot.slane %v1631, 7
  %v1739 = vsel %vm1526, %v1738, %v1629
  %v1740 = vrot.slane %v1633, 6
  %v1741 = vsel %vm1529, %v1740, %v1739
  %v1742 = vrot.slane %v1635, 5
  %v1743 = vsel %vm1532, %v1742, %v1741
  %v1744 = vrot.slane %v1637, 4
  %v1745 = vsel %vm1535, %v1744, %v1743
  %v1746 = vrot.slane %v1639, 3
  %v1747 = vsel %vm1538, %v1746, %v1745
  %v1748 = vrot.slane %v1641, 2
  %v1749 = vsel %vm1541, %v1748, %v1747
  %v1750 = vrot.slane %v1643, 1
  %v1751 = vsel %vm1544, %v1750, %v1749
  %v1752 = vrot.slane %v1646, 7
  %v1753 = vsel %vm1526, %v1752, %v1644
  %v1754 = vrot.slane %v1648, 6
  %v1755 = vsel %vm1529, %v1754, %v1753
  %v1756 = vrot.slane %v1650, 5
  %v1757 = vsel %vm1532, %v1756, %v1755
  %v1758 = vrot.slane %v1652, 4
  %v1759 = vsel %vm1535, %v1758, %v1757
  %v1760 = vrot.slane %v1654, 3
  %v1761 = vsel %vm1538, %v1760, %v1759
  %v1762 = vrot.slane %v1656, 2
  %v1763 = vsel %vm1541, %v1762, %v1761
  %v1764 = vrot.slane %v1658, 1
  %v1765 = vsel %vm1544, %v1764, %v1763
  %v1766 = vrot.slane %v1647, 7
  %v1767 = vsel %vm1526, %v1766, %v1645
  %v1768 = vrot.slane %v1649, 6
  %v1769 = vsel %vm1529, %v1768, %v1767
  %v1770 = vrot.slane %v1651, 5
  %v1771 = vsel %vm1532, %v1770, %v1769
  %v1772 = vrot.slane %v1653, 4
  %v1773 = vsel %vm1535, %v1772, %v1771
  %v1774 = vrot.slane %v1655, 3
  %v1775 = vsel %vm1538, %v1774, %v1773
  %v1776 = vrot.slane %v1657, 2
  %v1777 = vsel %vm1541, %v1776, %v1775
  %v1778 = vrot.slane %v1659, 1
  %v1779 = vsel %vm1544, %v1778, %v1777
  %v1780 = vrot.slane %v1662, 7
  %v1781 = vsel %vm1526, %v1780, %v1660
  %v1782 = vrot.slane %v1664, 6
  %v1783 = vsel %vm1529, %v1782, %v1781
  %v1784 = vrot.slane %v1666, 5
  %v1785 = vsel %vm1532, %v1784, %v1783
  %v1786 = vrot.slane %v1668, 4
  %v1787 = vsel %vm1535, %v1786, %v1785
  %v1788 = vrot.slane %v1670, 3
  %v1789 = vsel %vm1538, %v1788, %v1787
  %v1790 = vrot.slane %v1672, 2
  %v1791 = vsel %vm1541, %v1790, %v1789
  %v1792 = vrot.slane %v1674, 1
  %v1793 = vsel %vm1544, %v1792, %v1791
  %v1794 = vrot.slane %v1663, 7
  %v1795 = vsel %vm1526, %v1794, %v1661
  %v1796 = vrot.slane %v1665, 6
  %v1797 = vsel %vm1529, %v1796, %v1795
  %v1798 = vrot.slane %v1667, 5
  %v1799 = vsel %vm1532, %v1798, %v1797
  %v1800 = vrot.slane %v1669, 4
  %v1801 = vsel %vm1535, %v1800, %v1799
  %v1802 = vrot.slane %v1671, 3
  %v1803 = vsel %vm1538, %v1802, %v1801
  %v1804 = vrot.slane %v1673, 2
  %v1805 = vsel %vm1541, %v1804, %v1803
  %v1806 = vrot.slane %v1675, 1
  %v1807 = vsel %vm1544, %v1806, %v1805
  %1814 = vst [vmem:[%s4] sm:$0xff] %v1737
  %1815 = vst [vmem:[%s4 + $0x8] sm:$0xff] %v1751
  %1816 = vst [vmem:[%s4 + $0x10] sm:$0xff] %v1765
  %1817 = vst [vmem:[%s4 + $0x18] sm:$0xff] %v1779
  %1818 = vst [vmem:[%s4 + $0x20] sm:$0xff] %v1793
  %1819 = vst [vmem:[%s4 + $0x28] sm:$0xff] %v1807
  // Predicated region
  $region14: #{forward.12} parent=0 // pred_check
    _
  $region15: #{forward.12} parent=0 // pred_check_branch
    %1821 = sbr.rel (0) target = $region17
  $region16: #{forward.12} parent=0 // pred_region
    _
  $region17: #{forward.12} parent=0 // pred_fallthru
    _
  // Predicated region
  $region18: #{forward.12} parent=0 // pred_check
    _
  $region19: #{forward.12} parent=0 // pred_check_branch
    %1823 = sbr.rel (0) target = $region21
  $region20: #{forward.12} parent=0 // pred_region
    _
  $region21: #{forward.12} parent=0 // pred_fallthru
    _
  // Predicated region
  $region22: #{forward.12} parent=0 // pred_check
    _
  $region23: #{forward.12} parent=0 // pred_check_branch
    %1825 = sbr.rel (0) target = $region25
  $region24: #{forward.12} parent=0 // pred_region
    _
  $region25: #{forward.12} parent=0 // pred_fallthru
    _
  // Predicated region
  $region26: #{forward.12} parent=0 // pred_check
    _
  $region27: #{forward.12} parent=0 // pred_check_branch
    %1827 = sbr.rel (0) target = $region29
  $region28: #{forward.12} parent=0 // pred_region
    _
  $region29: #{forward.12} parent=0 // pred_fallthru
    _

// kernel: forward.13
$region0: #{forward.13}
  #allocation0 [shape = 'u32[]', space=smem, size = 0x4, offset = 0x4, fixed_abs, tag = 'smem constant byte address 0x4 - core index']
  #allocation1 [shape = 'u32[144,128]{1,0:T(1,128)}', space=vmem, size = 0x12000, scoped, tag = 'internal scratch']
  %s0 = inlined_call_operand.vmem [shape: f32[24,216], index: 0, kind: input, shape index: {}]
  %s1 = inlined_call_operand.vmem [shape: f32[216,256], index: 1, kind: input, shape index: {}]
  %s2 = inlined_call_operand.vmem [shape: f32[24,1], index: 2, kind: input, shape index: {}]
  %s3 = inlined_call_operand.vmem [shape: f32[24,256], index: 3, kind: output, shape index: {0}]
  %s4 = inlined_call_operand.vmem [shape: f32[24,256], index: 4, kind: output, shape index: {1}]
  %5 = xla_tuple %s3, %s4
  %s6 = sld [smem:[#allocation0]]
  $region30: #{forward.13} parent=0
    _
  %s8 = ssub.s32 1, %s6
  %s9 = scalar_select 0, %s8, %s6
  // Predicated region
  $region2: #{forward.13} parent=0 // pred_check
    _
  $region3: #{forward.13} parent=0 // pred_check_branch
    %11 = sbr.rel (0) target = $region5
  $region4: #{forward.13} parent=0 // pred_region
    _
  $region5: #{forward.13} parent=0 // pred_fallthru
    _
  // Predicated region
  $region6: #{forward.13} parent=0 // pred_check
    _
  $region7: #{forward.13} parent=0 // pred_check_branch
    %13 = sbr.rel (0) target = $region9
  $region8: #{forward.13} parent=0 // pred_region
    _
  $region9: #{forward.13} parent=0 // pred_fallthru
    _
  // Predicated region
  $region10: #{forward.13} parent=0 // pred_check
    _
  $region11: #{forward.13} parent=0 // pred_check_branch
    %15 = sbr.rel (0) target = $region13
  $region12: #{forward.13} parent=0 // pred_region
    _
  $region13: #{forward.13} parent=0 // pred_fallthru
    _
  %v16 = vld [vmem:[%s0] sm:$0xff]
  %v17 = vld [vmem:[%s0 + $0x8] sm:$0xff]
  %v18 = vld [vmem:[%s0 + $0x10] sm:$0xff]
  %v19 = vld [vmem:[%s0 + $0x18] sm:$0xff]
  %v20 = vld [vmem:[%s0 + $0x20] sm:$0xff]
  %v21 = vld [vmem:[%s0 + $0x28] sm:$0xff]
  %v22 = vld [vmem:[%s1] sm:$0xff]
  %v23 = vld [vmem:[%s1 + $0x8] sm:$0xff]
  %v24 = vld [vmem:[%s1 + $0x10] sm:$0xff]
  %v25 = vld [vmem:[%s1 + $0x18] sm:$0xff]
  %v26 = vld [vmem:[%s1 + $0x20] sm:$0xff]
  %v27 = vld [vmem:[%s1 + $0x28] sm:$0xff]
  %v28 = vld [vmem:[%s1 + $0x30] sm:$0xff]
  %v29 = vld [vmem:[%s1 + $0x38] sm:$0xff]
  %v30 = vld [vmem:[%s1 + $0x40] sm:$0xff]
  %v31 = vld [vmem:[%s1 + $0x48] sm:$0xff]
  %v32 = vld [vmem:[%s1 + $0x50] sm:$0xff]
  %v33 = vld [vmem:[%s1 + $0x58] sm:$0xff]
  %v34 = vld [vmem:[%s1 + $0x60] sm:$0xff]
  %v35 = vld [vmem:[%s1 + $0x68] sm:$0xff]
  %v36 = vld [vmem:[%s1 + $0x70] sm:$0xff]
  %v37 = vld [vmem:[%s1 + $0x78] sm:$0xff]
  %v38 = vld [vmem:[%s1 + $0x80] sm:$0xff]
  %v39 = vld [vmem:[%s1 + $0x88] sm:$0xff]
  %v40 = vld [vmem:[%s1 + $0x90] sm:$0xff]
  %v41 = vld [vmem:[%s1 + $0x98] sm:$0xff]
  %v42 = vld [vmem:[%s1 + $0xa0] sm:$0xff]
  %v43 = vld [vmem:[%s1 + $0xa8] sm:$0xff]
  %v44 = vld [vmem:[%s1 + $0xb0] sm:$0xff]
  %v45 = vld [vmem:[%s1 + $0xb8] sm:$0xff]
  %v46 = vld [vmem:[%s1 + $0xc0] sm:$0xff]
  %v47 = vld [vmem:[%s1 + $0xc8] sm:$0xff]
  %v48 = vld [vmem:[%s1 + $0xd0] sm:$0xff]
  %v49 = vld [vmem:[%s1 + $0xd8] sm:$0xff]
  %v50 = vld [vmem:[%s1 + $0xe0] sm:$0xff]
  %v51 = vld [vmem:[%s1 + $0xe8] sm:$0xff]
  %v52 = vld [vmem:[%s1 + $0xf0] sm:$0xff]
  %v53 = vld [vmem:[%s1 + $0xf8] sm:$0xff]
  %v54 = vld [vmem:[%s1 + $0x100] sm:$0xff]
  %v55 = vld [vmem:[%s1 + $0x108] sm:$0xff]
  %v56 = vld [vmem:[%s1 + $0x110] sm:$0xff]
  %v57 = vld [vmem:[%s1 + $0x118] sm:$0xff]
  %v58 = vld [vmem:[%s1 + $0x120] sm:$0xff]
  %v59 = vld [vmem:[%s1 + $0x128] sm:$0xff]
  %v60 = vld [vmem:[%s1 + $0x130] sm:$0xff]
  %v61 = vld [vmem:[%s1 + $0x138] sm:$0xff]
  %v62 = vld [vmem:[%s1 + $0x140] sm:$0xff]
  %v63 = vld [vmem:[%s1 + $0x148] sm:$0xff]
  %v64 = vld [vmem:[%s1 + $0x150] sm:$0xff]
  %v65 = vld [vmem:[%s1 + $0x158] sm:$0xff]
  %v66 = vld [vmem:[%s1 + $0x160] sm:$0xff]
  %v67 = vld [vmem:[%s1 + $0x168] sm:$0xff]
  %v68 = vld [vmem:[%s1 + $0x170] sm:$0xff]
  %v69 = vld [vmem:[%s1 + $0x178] sm:$0xff]
  %v70 = vld [vmem:[%s1 + $0x180] sm:$0xff]
  %v71 = vld [vmem:[%s1 + $0x188] sm:$0xff]
  %v72 = vld [vmem:[%s1 + $0x190] sm:$0xff]
  %v73 = vld [vmem:[%s1 + $0x198] sm:$0xff]
  %v74 = vld [vmem:[%s1 + $0x1a0] sm:$0xff]
  %v75 = vld [vmem:[%s1 + $0x1a8] sm:$0xff]
  %v76 = vld [vmem:[%s2] sm:$0xff]
  %v77 = vld [vmem:[%s2 + $0x8] sm:$0xff]
  %v78 = vld [vmem:[%s2 + $0x10] sm:$0xff]
  %80 = vset.pattern.permute.xlu0 0
  %81 = vperm.xlu0 %80, %v76
  %v82 = vpop.permute.xlu0 %81
  %85 = vset.pattern.permute.xlu0 0
  %86 = vperm.xlu0 %85, %v77
  %v87 = vpop.permute.xlu0 %86
  %90 = vset.pattern.permute.xlu0 0
  %91 = vperm.xlu0 %90, %v78
  %v92 = vpop.permute.xlu0 %91
  %vm94 = vcmask 719872
  %v96 = vsel %vm94, %v17, 0
  %v99 = vsel %vm94, %v19, 0
  %v102 = vsel %vm94, %v21, 0
  %104 = vmatprep.subr.mxu0 %v23
  %105 = vmatpush1.msra.mxu0 %v22
  %106 = vmatprep.subr.mxu0 %v25
  %107 = vmatpush1.msra.mxu0 %v24
  %108 = vmatprep.subr.mxu0 %v27
  %109 = vmatpush1.msra.mxu0 %v26
  %110 = vmatprep.subr.mxu0 %v29
  %111 = vmatpush1.msra.mxu0 %v28
  %112 = vmatprep.subr.mxu0 %v31
  %113 = vmatpush1.msra.mxu0 %v30
  %114 = vmatprep.subr.mxu0 %v33
  %115 = vmatpush1.msra.mxu0 %v32
  %116 = vmatprep.subr.mxu0 %v35
  %117 = vmatpush1.msra.mxu0 %v34
  %118 = vmatprep.subr.mxu0 %v37
  %119 = vmatpush1.msra.mxu0 %v36
  %120 = vmatprep.subr.mxu0 %v39
  %121 = vmatpush1.msra.mxu0 %v38
  %122 = vmatprep.subr.mxu0 %v41
  %123 = vmatpush1.msra.mxu0 %v40
  %124 = vmatprep.subr.mxu0 %v43
  %125 = vmatpush1.msra.mxu0 %v42
  %126 = vmatprep.subr.mxu0 %v45
  %127 = vmatpush1.msra.mxu0 %v44
  %128 = vmatprep.subr.mxu0 %v47
  %129 = vmatpush1.msra.mxu0 %v46
  %130 = vmatprep.subr.mxu0 %v49
  %131 = vmatpush1.msra.mxu0 %v48
  %132 = vmatprep.subr.mxu0 %v51
  %133 = vmatpush1.msra.mxu0 %v50
  %134 = vmatprep.subr.mxu0 %v53
  %135 = vmatpush1.msra.mxu0 %v52
  %136 = vmatprep.subr.mxu0 %v55
  %137 = vmatpush1.msra.mxu0 %v54
  %138 = vmatprep.subr.mxu0 %v57
  %139 = vmatpush1.msra.mxu0 %v56
  %140 = vmatprep.subr.mxu0 %v59
  %141 = vmatpush1.msra.mxu0 %v58
  %142 = vmatprep.subr.mxu0 %v61
  %143 = vmatpush1.msra.mxu0 %v60
  %144 = vmatprep.subr.mxu0 %v63
  %145 = vmatpush1.msra.mxu0 %v62
  %146 = vmatprep.subr.mxu0 %v65
  %147 = vmatpush1.msra.mxu0 %v64
  %148 = vmatprep.subr.mxu0 %v67
  %149 = vmatpush1.msra.mxu0 %v66
  %150 = vmatprep.subr.mxu0 %v69
  %151 = vmatpush1.msra.mxu0 %v68
  %152 = vmatprep.subr.mxu0 %v71
  %153 = vmatpush1.msra.mxu0 %v70
  %154 = vmatprep.subr.mxu0 %v73
  %155 = vmatpush1.msra.mxu0 %v72
  %156 = vmatprep.subr.mxu0 %v75
  %157 = vmatpush1.msra.mxu0 %v74
  %158 = vmatprep.subr.mxu0 0.0
  %159 = vmatpush1.msra.mxu0 0.0
  %160 = vmatprep.subr.mxu0 0.0
  %161 = vmatpush1.msra.mxu0 0.0
  %162 = vmatprep.subr.mxu0 0.0
  %163 = vmatpush1.msra.mxu0 0.0
  %164 = vmatprep.subr.mxu0 0.0
  %165 = vmatpush1.msra.mxu0 0.0
  %166 = vmatprep.subr.mxu0 0.0
  %167 = vmatpush1.msra.mxu0 0.0
  %168 = vmatprep.mubr.f32.mxu0 %v96
  %169 = vmatmul.mubr.f32.gmra.mrb[0].mxu0 %v16
  %v170 = vpop.f32.mrb[0].mxu0
  %v171 = vadd.f32 %v82, %v170
  %v172 = vpop.f32.mrb[0].mxu0
  %v173 = vadd.f32 %v82, %v172
  %174 = vmatprep.mubr.f32.mxu0 %v99
  %175 = vmatmul.mubr.f32.gmra.mrb[0].mxu0 %v18
  %v176 = vpop.f32.mrb[0].mxu0
  %v177 = vadd.f32 %v87, %v176
  %v178 = vpop.f32.mrb[0].mxu0
  %v179 = vadd.f32 %v87, %v178
  %180 = vmatprep.mubr.f32.mxu0 %v102
  %181 = vmatmul.mubr.f32.gmra.mrb[0].mxu0 %v20
  %v182 = vpop.f32.mrb[0].mxu0
  %v183 = vadd.f32 %v92, %v182
  %v184 = vpop.f32.mrb[0].mxu0
  %v185 = vadd.f32 %v92, %v184
  %186 = vdwg.mxu0
  %187 = vst [vmem:[%s3] sm:$0xff] %v171
  %188 = vst [vmem:[%s3 + $0x8] sm:$0xff] %v173
  %189 = vst [vmem:[%s3 + $0x10] sm:$0xff] %v177
  %190 = vst [vmem:[%s3 + $0x18] sm:$0xff] %v179
  %191 = vst [vmem:[%s3 + $0x20] sm:$0xff] %v183
  %192 = vst [vmem:[%s3 + $0x28] sm:$0xff] %v185
  %v193 = vmax.f32 %v171, 0.0
  %v194 = vmax.f32 %v173, 0.0
  %v195 = vmax.f32 %v177, 0.0
  %v196 = vmax.f32 %v179, 0.0
  %v197 = vmax.f32 %v183, 0.0
  %v198 = vmax.f32 %v185, 0.0
  %199 = vst [vmem:[%s4] sm:$0xff] %v193
  %200 = vst [vmem:[%s4 + $0x8] sm:$0xff] %v194
  %201 = vst [vmem:[%s4 + $0x10] sm:$0xff] %v195
  %202 = vst [vmem:[%s4 + $0x18] sm:$0xff] %v196
  %203 = vst [vmem:[%s4 + $0x20] sm:$0xff] %v197
  %204 = vst [vmem:[%s4 + $0x28] sm:$0xff] %v198
  // Predicated region
  $region14: #{forward.13} parent=0 // pred_check
    _
  $region15: #{forward.13} parent=0 // pred_check_branch
    %206 = sbr.rel (0) target = $region17
  $region16: #{forward.13} parent=0 // pred_region
    _
  $region17: #{forward.13} parent=0 // pred_fallthru
    _
  // Predicated region
  $region18: #{forward.13} parent=0 // pred_check
    _
  $region19: #{forward.13} parent=0 // pred_check_branch
    %208 = sbr.rel (0) target = $region21
  $region20: #{forward.13} parent=0 // pred_region
    _
  $region21: #{forward.13} parent=0 // pred_fallthru
    _
  // Predicated region
  $region22: #{forward.13} parent=0 // pred_check
    _
  $region23: #{forward.13} parent=0 // pred_check_branch
    %210 = sbr.rel (0) target = $region25
  $region24: #{forward.13} parent=0 // pred_region
    _
  $region25: #{forward.13} parent=0 // pred_fallthru
    _
  // Predicated region
  $region26: #{forward.13} parent=0 // pred_check
    _
  $region27: #{forward.13} parent=0 // pred_check_branch
    %212 = sbr.rel (0) target = $region29
  $region28: #{forward.13} parent=0 // pred_region
    _
  $region29: #{forward.13} parent=0 // pred_fallthru
    _

// kernel: forward.18
$region0: #{forward.18}
  #allocation0 [shape = 'u32[]', space=smem, size = 0x4, offset = 0x4, fixed_abs, tag = 'smem constant byte address 0x4 - core index']
  #allocation1 [shape = 'u32[144,128]{1,0:T(1,128)}', space=vmem, size = 0x12000, scoped, tag = 'internal scratch']
  %s0 = inlined_call_operand.vmem [shape: f32[24,216], index: 0, kind: input, shape index: {}]
  %s1 = inlined_call_operand.vmem [shape: f32[216,2816], index: 1, kind: input, shape index: {}]
  %s2 = inlined_call_operand.vmem [shape: f32[24,2816], index: 2, kind: input, shape index: {}]
  %s3 = inlined_call_operand.vmem [shape: f32[24,2816], index: 3, kind: output, shape index: {}]
  %s4 = sld [smem:[#allocation0]]
  $region22: #{forward.18} parent=0
    _
  %s6 = ssub.s32 1, %s4
  %s7 = scalar_select 0, %s6, %s4
  // Predicated region
  $region2: #{forward.18} parent=0 // pred_check
    _
  $region3: #{forward.18} parent=0 // pred_check_branch
    %9 = sbr.rel (0) target = $region5
  $region4: #{forward.18} parent=0 // pred_region
    _
  $region5: #{forward.18} parent=0 // pred_fallthru
    _
  // Predicated region
  $region6: #{forward.18} parent=0 // pred_check
    _
  $region7: #{forward.18} parent=0 // pred_check_branch
    %11 = sbr.rel (0) target = $region9
  $region8: #{forward.18} parent=0 // pred_region
    _
  $region9: #{forward.18} parent=0 // pred_fallthru
    _
  // Predicated region
  $region10: #{forward.18} parent=0 // pred_check
    _
  $region11: #{forward.18} parent=0 // pred_check_branch
    %13 = sbr.rel (0) target = $region13
  $region12: #{forward.18} parent=0 // pred_region
    _
  $region13: #{forward.18} parent=0 // pred_fallthru
    _
  %v14 = vld [vmem:[%s0] sm:$0xff]
  %v15 = vld [vmem:[%s0 + $0x8] sm:$0xff]
  %v16 = vld [vmem:[%s0 + $0x10] sm:$0xff]
  %v17 = vld [vmem:[%s0 + $0x18] sm:$0xff]
  %v18 = vld [vmem:[%s0 + $0x20] sm:$0xff]
  %v19 = vld [vmem:[%s0 + $0x28] sm:$0xff]
  %v20 = vld [vmem:[%s1] sm:$0xff]
  %v21 = vld [vmem:[%s1 + $0x8] sm:$0xff]
  %v22 = vld [vmem:[%s1 + $0x10] sm:$0xff]
  %v23 = vld [vmem:[%s1 + $0x18] sm:$0xff]
  %v24 = vld [vmem:[%s1 + $0x20] sm:$0xff]
  %v25 = vld [vmem:[%s1 + $0x28] sm:$0xff]
  %v26 = vld [vmem:[%s1 + $0x30] sm:$0xff]
  %v27 = vld [vmem:[%s1 + $0x38] sm:$0xff]
  %v28 = vld [vmem:[%s1 + $0x40] sm:$0xff]
  %v29 = vld [vmem:[%s1 + $0x48] sm:$0xff]
  %v30 = vld [vmem:[%s1 + $0x50] sm:$0xff]
  %v31 = vld [vmem:[%s1 + $0x58] sm:$0xff]
  %v32 = vld [vmem:[%s1 + $0x60] sm:$0xff]
  %v33 = vld [vmem:[%s1 + $0x68] sm:$0xff]
  %v34 = vld [vmem:[%s1 + $0x70] sm:$0xff]
  %v35 = vld [vmem:[%s1 + $0x78] sm:$0xff]
  %v36 = vld [vmem:[%s1 + $0x80] sm:$0xff]
  %v37 = vld [vmem:[%s1 + $0x88] sm:$0xff]
  %v38 = vld [vmem:[%s1 + $0x90] sm:$0xff]
  %v39 = vld [vmem:[%s1 + $0x98] sm:$0xff]
  %v40 = vld [vmem:[%s1 + $0xa0] sm:$0xff]
  %v41 = vld [vmem:[%s1 + $0xa8] sm:$0xff]
  %v42 = vld [vmem:[%s1 + $0xb0] sm:$0xff]
  %v43 = vld [vmem:[%s1 + $0xb8] sm:$0xff]
  %v44 = vld [vmem:[%s1 + $0xc0] sm:$0xff]
  %v45 = vld [vmem:[%s1 + $0xc8] sm:$0xff]
  %v46 = vld [vmem:[%s1 + $0xd0] sm:$0xff]
  %v47 = vld [vmem:[%s1 + $0xd8] sm:$0xff]
  %v48 = vld [vmem:[%s1 + $0xe0] sm:$0xff]
  %v49 = vld [vmem:[%s1 + $0xe8] sm:$0xff]
  %v50 = vld [vmem:[%s1 + $0xf0] sm:$0xff]
  %v51 = vld [vmem:[%s1 + $0xf8] sm:$0xff]
  %v52 = vld [vmem:[%s1 + $0x100] sm:$0xff]
  %v53 = vld [vmem:[%s1 + $0x108] sm:$0xff]
  %v54 = vld [vmem:[%s1 + $0x110] sm:$0xff]
  %v55 = vld [vmem:[%s1 + $0x118] sm:$0xff]
  %v56 = vld [vmem:[%s1 + $0x120] sm:$0xff]
  %v57 = vld [vmem:[%s1 + $0x128] sm:$0xff]
  %v58 = vld [vmem:[%s1 + $0x130] sm:$0xff]
  %v59 = vld [vmem:[%s1 + $0x138] sm:$0xff]
  %v60 = vld [vmem:[%s1 + $0x140] sm:$0xff]
  %v61 = vld [vmem:[%s1 + $0x148] sm:$0xff]
  %v62 = vld [vmem:[%s1 + $0x150] sm:$0xff]
  %v63 = vld [vmem:[%s1 + $0x158] sm:$0xff]
  %v64 = vld [vmem:[%s1 + $0x160] sm:$0xff]
  %v65 = vld [vmem:[%s1 + $0x168] sm:$0xff]
  %v66 = vld [vmem:[%s1 + $0x170] sm:$0xff]
  %v67 = vld [vmem:[%s1 + $0x178] sm:$0xff]
  %v68 = vld [vmem:[%s1 + $0x180] sm:$0xff]
  %v69 = vld [vmem:[%s1 + $0x188] sm:$0xff]
  %v70 = vld [vmem:[%s1 + $0x190] sm:$0xff]
  %v71 = vld [vmem:[%s1 + $0x198] sm:$0xff]
  %v72 = vld [vmem:[%s1 + $0x1a0] sm:$0xff]
  %v73 = vld [vmem:[%s1 + $0x1a8] sm:$0xff]
  %v74 = vld [vmem:[%s1 + $0x1b0] sm:$0xff]
  %v75 = vld [vmem:[%s1 + $0x1b8] sm:$0xff]
  %v76 = vld [vmem:[%s1 + $0x1c0] sm:$0xff]
  %v77 = vld [vmem:[%s1 + $0x1c8] sm:$0xff]
  %v78 = vld [vmem:[%s1 + $0x1d0] sm:$0xff]
  %v79 = vld [vmem:[%s1 + $0x1d8] sm:$0xff]
  %v80 = vld [vmem:[%s1 + $0x1e0] sm:$0xff]
  %v81 = vld [vmem:[%s1 + $0x1e8] sm:$0xff]
  %v82 = vld [vmem:[%s1 + $0x1f0] sm:$0xff]
  %v83 = vld [vmem:[%s1 + $0x1f8] sm:$0xff]
  %v84 = vld [vmem:[%s1 + $0x200] sm:$0xff]
  %v85 = vld [vmem:[%s1 + $0x208] sm:$0xff]
  %v86 = vld [vmem:[%s1 + $0x210] sm:$0xff]
  %v87 = vld [vmem:[%s1 + $0x218] sm:$0xff]
  %v88 = vld [vmem:[%s1 + $0x220] sm:$0xff]
  %v89 = vld [vmem:[%s1 + $0x228] sm:$0xff]
  %v90 = vld [vmem:[%s1 + $0x230] sm:$0xff]
  %v91 = vld [vmem:[%s1 + $0x238] sm:$0xff]
  %v92 = vld [vmem:[%s1 + $0x240] sm:$0xff]
  %v93 = vld [vmem:[%s1 + $0x248] sm:$0xff]
  %v94 = vld [vmem:[%s1 + $0x250] sm:$0xff]
  %v95 = vld [vmem:[%s1 + $0x258] sm:$0xff]
  %v96 = vld [vmem:[%s1 + $0x260] sm:$0xff]
  %v97 = vld [vmem:[%s1 + $0x268] sm:$0xff]
  %v98 = vld [vmem:[%s1 + $0x270] sm:$0xff]
  %v99 = vld [vmem:[%s1 + $0x278] sm:$0xff]
  %v100 = vld [vmem:[%s1 + $0x280] sm:$0xff]
  %v101 = vld [vmem:[%s1 + $0x288] sm:$0xff]
  %v102 = vld [vmem:[%s1 + $0x290] sm:$0xff]
  %v103 = vld [vmem:[%s1 + $0x298] sm:$0xff]
  %v104 = vld [vmem:[%s1 + $0x2a0] sm:$0xff]
  %v105 = vld [vmem:[%s1 + $0x2a8] sm:$0xff]
  %v106 = vld [vmem:[%s1 + $0x2b0] sm:$0xff]
  %v107 = vld [vmem:[%s1 + $0x2b8] sm:$0xff]
  %v108 = vld [vmem:[%s1 + $0x2c0] sm:$0xff]
  %v109 = vld [vmem:[%s1 + $0x2c8] sm:$0xff]
  %v110 = vld [vmem:[%s1 + $0x2d0] sm:$0xff]
  %v111 = vld [vmem:[%s1 + $0x2d8] sm:$0xff]
  %v112 = vld [vmem:[%s1 + $0x2e0] sm:$0xff]
  %v113 = vld [vmem:[%s1 + $0x2e8] sm:$0xff]
  %v114 = vld [vmem:[%s1 + $0x2f0] sm:$0xff]
  %v115 = vld [vmem:[%s1 + $0x2f8] sm:$0xff]
  %v116 = vld [vmem:[%s1 + $0x300] sm:$0xff]
  %v117 = vld [vmem:[%s1 + $0x308] sm:$0xff]
  %v118 = vld [vmem:[%s1 + $0x310] sm:$0xff]
  %v119 = vld [vmem:[%s1 + $0x318] sm:$0xff]
  %v120 = vld [vmem:[%s1 + $0x320] sm:$0xff]
  %v121 = vld [vmem:[%s1 + $0x328] sm:$0xff]
  %v122 = vld [vmem:[%s1 + $0x330] sm:$0xff]
  %v123 = vld [vmem:[%s1 + $0x338] sm:$0xff]
  %v124 = vld [vmem:[%s1 + $0x340] sm:$0xff]
  %v125 = vld [vmem:[%s1 + $0x348] sm:$0xff]
  %v126 = vld [vmem:[%s1 + $0x350] sm:$0xff]
  %v127 = vld [vmem:[%s1 + $0x358] sm:$0xff]
  %v128 = vld [vmem:[%s1 + $0x360] sm:$0xff]
  %v129 = vld [vmem:[%s1 + $0x368] sm:$0xff]
  %v130 = vld [vmem:[%s1 + $0x370] sm:$0xff]
  %v131 = vld [vmem:[%s1 + $0x378] sm:$0xff]
  %v132 = vld [vmem:[%s1 + $0x380] sm:$0xff]
  %v133 = vld [vmem:[%s1 + $0x388] sm:$0xff]
  %v134 = vld [vmem:[%s1 + $0x390] sm:$0xff]
  %v135 = vld [vmem:[%s1 + $0x398] sm:$0xff]
  %v136 = vld [vmem:[%s1 + $0x3a0] sm:$0xff]
  %v137 = vld [vmem:[%s1 + $0x3a8] sm:$0xff]
  %v138 = vld [vmem:[%s1 + $0x3b0] sm:$0xff]
  %v139 = vld [vmem:[%s1 + $0x3b8] sm:$0xff]
  %v140 = vld [vmem:[%s1 + $0x3c0] sm:$0xff]
  %v141 = vld [vmem:[%s1 + $0x3c8] sm:$0xff]
  %v142 = vld [vmem:[%s1 + $0x3d0] sm:$0xff]
  %v143 = vld [vmem:[%s1 + $0x3d8] sm:$0xff]
  %v144 = vld [vmem:[%s1 + $0x3e0] sm:$0xff]
  %v145 = vld [vmem:[%s1 + $0x3e8] sm:$0xff]
  %v146 = vld [vmem:[%s1 + $0x3f0] sm:$0xff]
  %v147 = vld [vmem:[%s1 + $0x3f8] sm:$0xff]
  %v148 = vld [vmem:[%s1 + $0x400] sm:$0xff]
  %v149 = vld [vmem:[%s1 + $0x408] sm:$0xff]
  %v150 = vld [vmem:[%s1 + $0x410] sm:$0xff]
  %v151 = vld [vmem:[%s1 + $0x418] sm:$0xff]
  %v152 = vld [vmem:[%s1 + $0x420] sm:$0xff]
  %v153 = vld [vmem:[%s1 + $0x428] sm:$0xff]
  %v154 = vld [vmem:[%s1 + $0x430] sm:$0xff]
  %v155 = vld [vmem:[%s1 + $0x438] sm:$0xff]
  %v156 = vld [vmem:[%s1 + $0x440] sm:$0xff]
  %v157 = vld [vmem:[%s1 + $0x448] sm:$0xff]
  %v158 = vld [vmem:[%s1 + $0x450] sm:$0xff]
  %v159 = vld [vmem:[%s1 + $0x458] sm:$0xff]
  %v160 = vld [vmem:[%s1 + $0x460] sm:$0xff]
  %v161 = vld [vmem:[%s1 + $0x468] sm:$0xff]
  %v162 = vld [vmem:[%s1 + $0x470] sm:$0xff]
  %v163 = vld [vmem:[%s1 + $0x478] sm:$0xff]
  %v164 = vld [vmem:[%s1 + $0x480] sm:$0xff]
  %v165 = vld [vmem:[%s1 + $0x488] sm:$0xff]
  %v166 = vld [vmem:[%s1 + $0x490] sm:$0xff]
  %v167 = vld [vmem:[%s1 + $0x498] sm:$0xff]
  %v168 = vld [vmem:[%s1 + $0x4a0] sm:$0xff]
  %v169 = vld [vmem:[%s1 + $0x4a8] sm:$0xff]
  %v170 = vld [vmem:[%s1 + $0x4b0] sm:$0xff]
  %v171 = vld [vmem:[%s1 + $0x4b8] sm:$0xff]
  %v172 = vld [vmem:[%s1 + $0x4c0] sm:$0xff]
  %v173 = vld [vmem:[%s1 + $0x4c8] sm:$0xff]
  %v174 = vld [vmem:[%s1 + $0x4d0] sm:$0xff]
  %v175 = vld [vmem:[%s1 + $0x4d8] sm:$0xff]
  %v176 = vld [vmem:[%s1 + $0x4e0] sm:$0xff]
  %v177 = vld [vmem:[%s1 + $0x4e8] sm:$0xff]
  %v178 = vld [vmem:[%s1 + $0x4f0] sm:$0xff]
  %v179 = vld [vmem:[%s1 + $0x4f8] sm:$0xff]
  %v180 = vld [vmem:[%s1 + $0x500] sm:$0xff]
  %v181 = vld [vmem:[%s1 + $0x508] sm:$0xff]
  %v182 = vld [vmem:[%s1 + $0x510] sm:$0xff]
  %v183 = vld [vmem:[%s1 + $0x518] sm:$0xff]
  %v184 = vld [vmem:[%s1 + $0x520] sm:$0xff]
  %v185 = vld [vmem:[%s1 + $0x528] sm:$0xff]
  %v186 = vld [vmem:[%s1 + $0x530] sm:$0xff]
  %v187 = vld [vmem:[%s1 + $0x538] sm:$0xff]
  %v188 = vld [vmem:[%s1 + $0x540] sm:$0xff]
  %v189 = vld [vmem:[%s1 + $0x548] sm:$0xff]
  %v190 = vld [vmem:[%s1 + $0x550] sm:$0xff]
  %v191 = vld [vmem:[%s1 + $0x558] sm:$0xff]
  %v192 = vld [vmem:[%s1 + $0x560] sm:$0xff]
  %v193 = vld [vmem:[%s1 + $0x568] sm:$0xff]
  %v194 = vld [vmem:[%s1 + $0x570] sm:$0xff]
  %v195 = vld [vmem:[%s1 + $0x578] sm:$0xff]
  %v196 = vld [vmem:[%s1 + $0x580] sm:$0xff]
  %v197 = vld [vmem:[%s1 + $0x588] sm:$0xff]
  %v198 = vld [vmem:[%s1 + $0x590] sm:$0xff]
  %v199 = vld [vmem:[%s1 + $0x598] sm:$0xff]
  %v200 = vld [vmem:[%s1 + $0x5a0] sm:$0xff]
  %v201 = vld [vmem:[%s1 + $0x5a8] sm:$0xff]
  %v202 = vld [vmem:[%s1 + $0x5b0] sm:$0xff]
  %v203 = vld [vmem:[%s1 + $0x5b8] sm:$0xff]
  %v204 = vld [vmem:[%s1 + $0x5c0] sm:$0xff]
  %v205 = vld [vmem:[%s1 + $0x5c8] sm:$0xff]
  %v206 = vld [vmem:[%s1 + $0x5d0] sm:$0xff]
  %v207 = vld [vmem:[%s1 + $0x5d8] sm:$0xff]
  %v208 = vld [vmem:[%s1 + $0x5e0] sm:$0xff]
  %v209 = vld [vmem:[%s1 + $0x5e8] sm:$0xff]
  %v210 = vld [vmem:[%s1 + $0x5f0] sm:$0xff]
  %v211 = vld [vmem:[%s1 + $0x5f8] sm:$0xff]
  %v212 = vld [vmem:[%s1 + $0x600] sm:$0xff]
  %v213 = vld [vmem:[%s1 + $0x608] sm:$0xff]
  %v214 = vld [vmem:[%s1 + $0x610] sm:$0xff]
  %v215 = vld [vmem:[%s1 + $0x618] sm:$0xff]
  %v216 = vld [vmem:[%s1 + $0x620] sm:$0xff]
  %v217 = vld [vmem:[%s1 + $0x628] sm:$0xff]
  %v218 = vld [vmem:[%s1 + $0x630] sm:$0xff]
  %v219 = vld [vmem:[%s1 + $0x638] sm:$0xff]
  %v220 = vld [vmem:[%s1 + $0x640] sm:$0xff]
  %v221 = vld [vmem:[%s1 + $0x648] sm:$0xff]
  %v222 = vld [vmem:[%s1 + $0x650] sm:$0xff]
  %v223 = vld [vmem:[%s1 + $0x658] sm:$0xff]
  %v224 = vld [vmem:[%s1 + $0x660] sm:$0xff]
  %v225 = vld [vmem:[%s1 + $0x668] sm:$0xff]
  %v226 = vld [vmem:[%s1 + $0x670] sm:$0xff]
  %v227 = vld [vmem:[%s1 + $0x678] sm:$0xff]
  %v228 = vld [vmem:[%s1 + $0x680] sm:$0xff]
  %v229 = vld [vmem:[%s1 + $0x688] sm:$0xff]
  %v230 = vld [vmem:[%s1 + $0x690] sm:$0xff]
  %v231 = vld [vmem:[%s1 + $0x698] sm:$0xff]
  %v232 = vld [vmem:[%s1 + $0x6a0] sm:$0xff]
  %v233 = vld [vmem:[%s1 + $0x6a8] sm:$0xff]
  %v234 = vld [vmem:[%s1 + $0x6b0] sm:$0xff]
  %v235 = vld [vmem:[%s1 + $0x6b8] sm:$0xff]
  %v236 = vld [vmem:[%s1 + $0x6c0] sm:$0xff]
  %v237 = vld [vmem:[%s1 + $0x6c8] sm:$0xff]
  %v238 = vld [vmem:[%s1 + $0x6d0] sm:$0xff]
  %v239 = vld [vmem:[%s1 + $0x6d8] sm:$0xff]
  %v240 = vld [vmem:[%s1 + $0x6e0] sm:$0xff]
  %v241 = vld [vmem:[%s1 + $0x6e8] sm:$0xff]
  %v242 = vld [vmem:[%s1 + $0x6f0] sm:$0xff]
  %v243 = vld [vmem:[%s1 + $0x6f8] sm:$0xff]
  %v244 = vld [vmem:[%s1 + $0x700] sm:$0xff]
  %v245 = vld [vmem:[%s1 + $0x708] sm:$0xff]
  %v246 = vld [vmem:[%s1 + $0x710] sm:$0xff]
  %v247 = vld [vmem:[%s1 + $0x718] sm:$0xff]
  %v248 = vld [vmem:[%s1 + $0x720] sm:$0xff]
  %v249 = vld [vmem:[%s1 + $0x728] sm:$0xff]
  %v250 = vld [vmem:[%s1 + $0x730] sm:$0xff]
  %v251 = vld [vmem:[%s1 + $0x738] sm:$0xff]
  %v252 = vld [vmem:[%s1 + $0x740] sm:$0xff]
  %v253 = vld [vmem:[%s1 + $0x748] sm:$0xff]
  %v254 = vld [vmem:[%s1 + $0x750] sm:$0xff]
  %v255 = vld [vmem:[%s1 + $0x758] sm:$0xff]
  %v256 = vld [vmem:[%s1 + $0x760] sm:$0xff]
  %v257 = vld [vmem:[%s1 + $0x768] sm:$0xff]
  %v258 = vld [vmem:[%s1 + $0x770] sm:$0xff]
  %v259 = vld [vmem:[%s1 + $0x778] sm:$0xff]
  %v260 = vld [vmem:[%s1 + $0x780] sm:$0xff]
  %v261 = vld [vmem:[%s1 + $0x788] sm:$0xff]
  %v262 = vld [vmem:[%s1 + $0x790] sm:$0xff]
  %v263 = vld [vmem:[%s1 + $0x798] sm:$0xff]
  %v264 = vld [vmem:[%s1 + $0x7a0] sm:$0xff]
  %v265 = vld [vmem:[%s1 + $0x7a8] sm:$0xff]
  %v266 = vld [vmem:[%s1 + $0x7b0] sm:$0xff]
  %v267 = vld [vmem:[%s1 + $0x7b8] sm:$0xff]
  %v268 = vld [vmem:[%s1 + $0x7c0] sm:$0xff]
  %v269 = vld [vmem:[%s1 + $0x7c8] sm:$0xff]
  %v270 = vld [vmem:[%s1 + $0x7d0] sm:$0xff]
  %v271 = vld [vmem:[%s1 + $0x7d8] sm:$0xff]
  %v272 = vld [vmem:[%s1 + $0x7e0] sm:$0xff]
  %v273 = vld [vmem:[%s1 + $0x7e8] sm:$0xff]
  %v274 = vld [vmem:[%s1 + $0x7f0] sm:$0xff]
  %v275 = vld [vmem:[%s1 + $0x7f8] sm:$0xff]
  %v276 = vld [vmem:[%s1 + $0x800] sm:$0xff]
  %v277 = vld [vmem:[%s1 + $0x808] sm:$0xff]
  %v278 = vld [vmem:[%s1 + $0x810] sm:$0xff]
  %v279 = vld [vmem:[%s1 + $0x818] sm:$0xff]
  %v280 = vld [vmem:[%s1 + $0x820] sm:$0xff]
  %v281 = vld [vmem:[%s1 + $0x828] sm:$0xff]
  %v282 = vld [vmem:[%s1 + $0x830] sm:$0xff]
  %v283 = vld [vmem:[%s1 + $0x838] sm:$0xff]
  %v284 = vld [vmem:[%s1 + $0x840] sm:$0xff]
  %v285 = vld [vmem:[%s1 + $0x848] sm:$0xff]
  %v286 = vld [vmem:[%s1 + $0x850] sm:$0xff]
  %v287 = vld [vmem:[%s1 + $0x858] sm:$0xff]
  %v288 = vld [vmem:[%s1 + $0x860] sm:$0xff]
  %v289 = vld [vmem:[%s1 + $0x868] sm:$0xff]
  %v290 = vld [vmem:[%s1 + $0x870] sm:$0xff]
  %v291 = vld [vmem:[%s1 + $0x878] sm:$0xff]
  %v292 = vld [vmem:[%s1 + $0x880] sm:$0xff]
  %v293 = vld [vmem:[%s1 + $0x888] sm:$0xff]
  %v294 = vld [vmem:[%s1 + $0x890] sm:$0xff]
  %v295 = vld [vmem:[%s1 + $0x898] sm:$0xff]
  %v296 = vld [vmem:[%s1 + $0x8a0] sm:$0xff]
  %v297 = vld [vmem:[%s1 + $0x8a8] sm:$0xff]
  %v298 = vld [vmem:[%s1 + $0x8b0] sm:$0xff]
  %v299 = vld [vmem:[%s1 + $0x8b8] sm:$0xff]
  %v300 = vld [vmem:[%s1 + $0x8c0] sm:$0xff]
  %v301 = vld [vmem:[%s1 + $0x8c8] sm:$0xff]
  %v302 = vld [vmem:[%s1 + $0x8d0] sm:$0xff]
  %v303 = vld [vmem:[%s1 + $0x8d8] sm:$0xff]
  %v304 = vld [vmem:[%s1 + $0x8e0] sm:$0xff]
  %v305 = vld [vmem:[%s1 + $0x8e8] sm:$0xff]
  %v306 = vld [vmem:[%s1 + $0x8f0] sm:$0xff]
  %v307 = vld [vmem:[%s1 + $0x8f8] sm:$0xff]
  %v308 = vld [vmem:[%s1 + $0x900] sm:$0xff]
  %v309 = vld [vmem:[%s1 + $0x908] sm:$0xff]
  %v310 = vld [vmem:[%s1 + $0x910] sm:$0xff]
  %v311 = vld [vmem:[%s1 + $0x918] sm:$0xff]
  %v312 = vld [vmem:[%s1 + $0x920] sm:$0xff]
  %v313 = vld [vmem:[%s1 + $0x928] sm:$0xff]
  %v314 = vld [vmem:[%s1 + $0x930] sm:$0xff]
  %v315 = vld [vmem:[%s1 + $0x938] sm:$0xff]
  %v316 = vld [vmem:[%s1 + $0x940] sm:$0xff]
  %v317 = vld [vmem:[%s1 + $0x948] sm:$0xff]
  %v318 = vld [vmem:[%s1 + $0x950] sm:$0xff]
  %v319 = vld [vmem:[%s1 + $0x958] sm:$0xff]
  %v320 = vld [vmem:[%s1 + $0x960] sm:$0xff]
  %v321 = vld [vmem:[%s1 + $0x968] sm:$0xff]
  %v322 = vld [vmem:[%s1 + $0x970] sm:$0xff]
  %v323 = vld [vmem:[%s1 + $0x978] sm:$0xff]
  %v324 = vld [vmem:[%s1 + $0x980] sm:$0xff]
  %v325 = vld [vmem:[%s1 + $0x988] sm:$0xff]
  %v326 = vld [vmem:[%s1 + $0x990] sm:$0xff]
  %v327 = vld [vmem:[%s1 + $0x998] sm:$0xff]
  %v328 = vld [vmem:[%s1 + $0x9a0] sm:$0xff]
  %v329 = vld [vmem:[%s1 + $0x9a8] sm:$0xff]
  %v330 = vld [vmem:[%s1 + $0x9b0] sm:$0xff]
  %v331 = vld [vmem:[%s1 + $0x9b8] sm:$0xff]
  %v332 = vld [vmem:[%s1 + $0x9c0] sm:$0xff]
  %v333 = vld [vmem:[%s1 + $0x9c8] sm:$0xff]
  %v334 = vld [vmem:[%s1 + $0x9d0] sm:$0xff]
  %v335 = vld [vmem:[%s1 + $0x9d8] sm:$0xff]
  %v336 = vld [vmem:[%s1 + $0x9e0] sm:$0xff]
  %v337 = vld [vmem:[%s1 + $0x9e8] sm:$0xff]
  %v338 = vld [vmem:[%s1 + $0x9f0] sm:$0xff]
  %v339 = vld [vmem:[%s1 + $0x9f8] sm:$0xff]
  %v340 = vld [vmem:[%s1 + $0xa00] sm:$0xff]
  %v341 = vld [vmem:[%s1 + $0xa08] sm:$0xff]
  %v342 = vld [vmem:[%s1 + $0xa10] sm:$0xff]
  %v343 = vld [vmem:[%s1 + $0xa18] sm:$0xff]
  %v344 = vld [vmem:[%s1 + $0xa20] sm:$0xff]
  %v345 = vld [vmem:[%s1 + $0xa28] sm:$0xff]
  %v346 = vld [vmem:[%s1 + $0xa30] sm:$0xff]
  %v347 = vld [vmem:[%s1 + $0xa38] sm:$0xff]
  %v348 = vld [vmem:[%s1 + $0xa40] sm:$0xff]
  %v349 = vld [vmem:[%s1 + $0xa48] sm:$0xff]
  %v350 = vld [vmem:[%s1 + $0xa50] sm:$0xff]
  %v351 = vld [vmem:[%s1 + $0xa58] sm:$0xff]
  %v352 = vld [vmem:[%s1 + $0xa60] sm:$0xff]
  %v353 = vld [vmem:[%s1 + $0xa68] sm:$0xff]
  %v354 = vld [vmem:[%s1 + $0xa70] sm:$0xff]
  %v355 = vld [vmem:[%s1 + $0xa78] sm:$0xff]
  %v356 = vld [vmem:[%s1 + $0xa80] sm:$0xff]
  %v357 = vld [vmem:[%s1 + $0xa88] sm:$0xff]
  %v358 = vld [vmem:[%s1 + $0xa90] sm:$0xff]
  %v359 = vld [vmem:[%s1 + $0xa98] sm:$0xff]
  %v360 = vld [vmem:[%s1 + $0xaa0] sm:$0xff]
  %v361 = vld [vmem:[%s1 + $0xaa8] sm:$0xff]
  %v362 = vld [vmem:[%s1 + $0xab0] sm:$0xff]
  %v363 = vld [vmem:[%s1 + $0xab8] sm:$0xff]
  %v364 = vld [vmem:[%s1 + $0xac0] sm:$0xff]
  %v365 = vld [vmem:[%s1 + $0xac8] sm:$0xff]
  %v366 = vld [vmem:[%s1 + $0xad0] sm:$0xff]
  %v367 = vld [vmem:[%s1 + $0xad8] sm:$0xff]
  %v368 = vld [vmem:[%s1 + $0xae0] sm:$0xff]
  %v369 = vld [vmem:[%s1 + $0xae8] sm:$0xff]
  %v370 = vld [vmem:[%s1 + $0xaf0] sm:$0xff]
  %v371 = vld [vmem:[%s1 + $0xaf8] sm:$0xff]
  %v372 = vld [vmem:[%s1 + $0xb00] sm:$0xff]
  %v373 = vld [vmem:[%s1 + $0xb08] sm:$0xff]
  %v374 = vld [vmem:[%s1 + $0xb10] sm:$0xff]
  %v375 = vld [vmem:[%s1 + $0xb18] sm:$0xff]
  %v376 = vld [vmem:[%s1 + $0xb20] sm:$0xff]
  %v377 = vld [vmem:[%s1 + $0xb28] sm:$0xff]
  %v378 = vld [vmem:[%s1 + $0xb30] sm:$0xff]
  %v379 = vld [vmem:[%s1 + $0xb38] sm:$0xff]
  %v380 = vld [vmem:[%s1 + $0xb40] sm:$0xff]
  %v381 = vld [vmem:[%s1 + $0xb48] sm:$0xff]
  %v382 = vld [vmem:[%s1 + $0xb50] sm:$0xff]
  %v383 = vld [vmem:[%s1 + $0xb58] sm:$0xff]
  %v384 = vld [vmem:[%s1 + $0xb60] sm:$0xff]
  %v385 = vld [vmem:[%s1 + $0xb68] sm:$0xff]
  %v386 = vld [vmem:[%s1 + $0xb70] sm:$0xff]
  %v387 = vld [vmem:[%s1 + $0xb78] sm:$0xff]
  %v388 = vld [vmem:[%s1 + $0xb80] sm:$0xff]
  %v389 = vld [vmem:[%s1 + $0xb88] sm:$0xff]
  %v390 = vld [vmem:[%s1 + $0xb90] sm:$0xff]
  %v391 = vld [vmem:[%s1 + $0xb98] sm:$0xff]
  %v392 = vld [vmem:[%s1 + $0xba0] sm:$0xff]
  %v393 = vld [vmem:[%s1 + $0xba8] sm:$0xff]
  %v394 = vld [vmem:[%s1 + $0xbb0] sm:$0xff]
  %v395 = vld [vmem:[%s1 + $0xbb8] sm:$0xff]
  %v396 = vld [vmem:[%s1 + $0xbc0] sm:$0xff]
  %v397 = vld [vmem:[%s1 + $0xbc8] sm:$0xff]
  %v398 = vld [vmem:[%s1 + $0xbd0] sm:$0xff]
  %v399 = vld [vmem:[%s1 + $0xbd8] sm:$0xff]
  %v400 = vld [vmem:[%s1 + $0xbe0] sm:$0xff]
  %v401 = vld [vmem:[%s1 + $0xbe8] sm:$0xff]
  %v402 = vld [vmem:[%s1 + $0xbf0] sm:$0xff]
  %v403 = vld [vmem:[%s1 + $0xbf8] sm:$0xff]
  %v404 = vld [vmem:[%s1 + $0xc00] sm:$0xff]
  %v405 = vld [vmem:[%s1 + $0xc08] sm:$0xff]
  %v406 = vld [vmem:[%s1 + $0xc10] sm:$0xff]
  %v407 = vld [vmem:[%s1 + $0xc18] sm:$0xff]
  %v408 = vld [vmem:[%s1 + $0xc20] sm:$0xff]
  %v409 = vld [vmem:[%s1 + $0xc28] sm:$0xff]
  %v410 = vld [vmem:[%s1 + $0xc30] sm:$0xff]
  %v411 = vld [vmem:[%s1 + $0xc38] sm:$0xff]
  %v412 = vld [vmem:[%s1 + $0xc40] sm:$0xff]
  %v413 = vld [vmem:[%s1 + $0xc48] sm:$0xff]
  %v414 = vld [vmem:[%s1 + $0xc50] sm:$0xff]
  %v415 = vld [vmem:[%s1 + $0xc58] sm:$0xff]
  %v416 = vld [vmem:[%s1 + $0xc60] sm:$0xff]
  %v417 = vld [vmem:[%s1 + $0xc68] sm:$0xff]
  %v418 = vld [vmem:[%s1 + $0xc70] sm:$0xff]
  %v419 = vld [vmem:[%s1 + $0xc78] sm:$0xff]
  %v420 = vld [vmem:[%s1 + $0xc80] sm:$0xff]
  %v421 = vld [vmem:[%s1 + $0xc88] sm:$0xff]
  %v422 = vld [vmem:[%s1 + $0xc90] sm:$0xff]
  %v423 = vld [vmem:[%s1 + $0xc98] sm:$0xff]
  %v424 = vld [vmem:[%s1 + $0xca0] sm:$0xff]
  %v425 = vld [vmem:[%s1 + $0xca8] sm:$0xff]
  %v426 = vld [vmem:[%s1 + $0xcb0] sm:$0xff]
  %v427 = vld [vmem:[%s1 + $0xcb8] sm:$0xff]
  %v428 = vld [vmem:[%s1 + $0xcc0] sm:$0xff]
  %v429 = vld [vmem:[%s1 + $0xcc8] sm:$0xff]
  %v430 = vld [vmem:[%s1 + $0xcd0] sm:$0xff]
  %v431 = vld [vmem:[%s1 + $0xcd8] sm:$0xff]
  %v432 = vld [vmem:[%s1 + $0xce0] sm:$0xff]
  %v433 = vld [vmem:[%s1 + $0xce8] sm:$0xff]
  %v434 = vld [vmem:[%s1 + $0xcf0] sm:$0xff]
  %v435 = vld [vmem:[%s1 + $0xcf8] sm:$0xff]
  %v436 = vld [vmem:[%s1 + $0xd00] sm:$0xff]
  %v437 = vld [vmem:[%s1 + $0xd08] sm:$0xff]
  %v438 = vld [vmem:[%s1 + $0xd10] sm:$0xff]
  %v439 = vld [vmem:[%s1 + $0xd18] sm:$0xff]
  %v440 = vld [vmem:[%s1 + $0xd20] sm:$0xff]
  %v441 = vld [vmem:[%s1 + $0xd28] sm:$0xff]
  %v442 = vld [vmem:[%s1 + $0xd30] sm:$0xff]
  %v443 = vld [vmem:[%s1 + $0xd38] sm:$0xff]
  %v444 = vld [vmem:[%s1 + $0xd40] sm:$0xff]
  %v445 = vld [vmem:[%s1 + $0xd48] sm:$0xff]
  %v446 = vld [vmem:[%s1 + $0xd50] sm:$0xff]
  %v447 = vld [vmem:[%s1 + $0xd58] sm:$0xff]
  %v448 = vld [vmem:[%s1 + $0xd60] sm:$0xff]
  %v449 = vld [vmem:[%s1 + $0xd68] sm:$0xff]
  %v450 = vld [vmem:[%s1 + $0xd70] sm:$0xff]
  %v451 = vld [vmem:[%s1 + $0xd78] sm:$0xff]
  %v452 = vld [vmem:[%s1 + $0xd80] sm:$0xff]
  %v453 = vld [vmem:[%s1 + $0xd88] sm:$0xff]
  %v454 = vld [vmem:[%s1 + $0xd90] sm:$0xff]
  %v455 = vld [vmem:[%s1 + $0xd98] sm:$0xff]
  %v456 = vld [vmem:[%s1 + $0xda0] sm:$0xff]
  %v457 = vld [vmem:[%s1 + $0xda8] sm:$0xff]
  %v458 = vld [vmem:[%s1 + $0xdb0] sm:$0xff]
  %v459 = vld [vmem:[%s1 + $0xdb8] sm:$0xff]
  %v460 = vld [vmem:[%s1 + $0xdc0] sm:$0xff]
  %v461 = vld [vmem:[%s1 + $0xdc8] sm:$0xff]
  %v462 = vld [vmem:[%s1 + $0xdd0] sm:$0xff]
  %v463 = vld [vmem:[%s1 + $0xdd8] sm:$0xff]
  %v464 = vld [vmem:[%s1 + $0xde0] sm:$0xff]
  %v465 = vld [vmem:[%s1 + $0xde8] sm:$0xff]
  %v466 = vld [vmem:[%s1 + $0xdf0] sm:$0xff]
  %v467 = vld [vmem:[%s1 + $0xdf8] sm:$0xff]
  %v468 = vld [vmem:[%s1 + $0xe00] sm:$0xff]
  %v469 = vld [vmem:[%s1 + $0xe08] sm:$0xff]
  %v470 = vld [vmem:[%s1 + $0xe10] sm:$0xff]
  %v471 = vld [vmem:[%s1 + $0xe18] sm:$0xff]
  %v472 = vld [vmem:[%s1 + $0xe20] sm:$0xff]
  %v473 = vld [vmem:[%s1 + $0xe28] sm:$0xff]
  %v474 = vld [vmem:[%s1 + $0xe30] sm:$0xff]
  %v475 = vld [vmem:[%s1 + $0xe38] sm:$0xff]
  %v476 = vld [vmem:[%s1 + $0xe40] sm:$0xff]
  %v477 = vld [vmem:[%s1 + $0xe48] sm:$0xff]
  %v478 = vld [vmem:[%s1 + $0xe50] sm:$0xff]
  %v479 = vld [vmem:[%s1 + $0xe58] sm:$0xff]
  %v480 = vld [vmem:[%s1 + $0xe60] sm:$0xff]
  %v481 = vld [vmem:[%s1 + $0xe68] sm:$0xff]
  %v482 = vld [vmem:[%s1 + $0xe70] sm:$0xff]
  %v483 = vld [vmem:[%s1 + $0xe78] sm:$0xff]
  %v484 = vld [vmem:[%s1 + $0xe80] sm:$0xff]
  %v485 = vld [vmem:[%s1 + $0xe88] sm:$0xff]
  %v486 = vld [vmem:[%s1 + $0xe90] sm:$0xff]
  %v487 = vld [vmem:[%s1 + $0xe98] sm:$0xff]
  %v488 = vld [vmem:[%s1 + $0xea0] sm:$0xff]
  %v489 = vld [vmem:[%s1 + $0xea8] sm:$0xff]
  %v490 = vld [vmem:[%s1 + $0xeb0] sm:$0xff]
  %v491 = vld [vmem:[%s1 + $0xeb8] sm:$0xff]
  %v492 = vld [vmem:[%s1 + $0xec0] sm:$0xff]
  %v493 = vld [vmem:[%s1 + $0xec8] sm:$0xff]
  %v494 = vld [vmem:[%s1 + $0xed0] sm:$0xff]
  %v495 = vld [vmem:[%s1 + $0xed8] sm:$0xff]
  %v496 = vld [vmem:[%s1 + $0xee0] sm:$0xff]
  %v497 = vld [vmem:[%s1 + $0xee8] sm:$0xff]
  %v498 = vld [vmem:[%s1 + $0xef0] sm:$0xff]
  %v499 = vld [vmem:[%s1 + $0xef8] sm:$0xff]
  %v500 = vld [vmem:[%s1 + $0xf00] sm:$0xff]
  %v501 = vld [vmem:[%s1 + $0xf08] sm:$0xff]
  %v502 = vld [vmem:[%s1 + $0xf10] sm:$0xff]
  %v503 = vld [vmem:[%s1 + $0xf18] sm:$0xff]
  %v504 = vld [vmem:[%s1 + $0xf20] sm:$0xff]
  %v505 = vld [vmem:[%s1 + $0xf28] sm:$0xff]
  %v506 = vld [vmem:[%s1 + $0xf30] sm:$0xff]
  %v507 = vld [vmem:[%s1 + $0xf38] sm:$0xff]
  %v508 = vld [vmem:[%s1 + $0xf40] sm:$0xff]
  %v509 = vld [vmem:[%s1 + $0xf48] sm:$0xff]
  %v510 = vld [vmem:[%s1 + $0xf50] sm:$0xff]
  %v511 = vld [vmem:[%s1 + $0xf58] sm:$0xff]
  %v512 = vld [vmem:[%s1 + $0xf60] sm:$0xff]
  %v513 = vld [vmem:[%s1 + $0xf68] sm:$0xff]
  %v514 = vld [vmem:[%s1 + $0xf70] sm:$0xff]
  %v515 = vld [vmem:[%s1 + $0xf78] sm:$0xff]
  %v516 = vld [vmem:[%s1 + $0xf80] sm:$0xff]
  %v517 = vld [vmem:[%s1 + $0xf88] sm:$0xff]
  %v518 = vld [vmem:[%s1 + $0xf90] sm:$0xff]
  %v519 = vld [vmem:[%s1 + $0xf98] sm:$0xff]
  %v520 = vld [vmem:[%s1 + $0xfa0] sm:$0xff]
  %v521 = vld [vmem:[%s1 + $0xfa8] sm:$0xff]
  %v522 = vld [vmem:[%s1 + $0xfb0] sm:$0xff]
  %v523 = vld [vmem:[%s1 + $0xfb8] sm:$0xff]
  %v524 = vld [vmem:[%s1 + $0xfc0] sm:$0xff]
  %v525 = vld [vmem:[%s1 + $0xfc8] sm:$0xff]
  %v526 = vld [vmem:[%s1 + $0xfd0] sm:$0xff]
  %v527 = vld [vmem:[%s1 + $0xfd8] sm:$0xff]
  %v528 = vld [vmem:[%s1 + $0xfe0] sm:$0xff]
  %v529 = vld [vmem:[%s1 + $0xfe8] sm:$0xff]
  %v530 = vld [vmem:[%s1 + $0xff0] sm:$0xff]
  %v531 = vld [vmem:[%s1 + $0xff8] sm:$0xff]
  %v532 = vld [vmem:[%s1 + $0x1000] sm:$0xff]
  %v533 = vld [vmem:[%s1 + $0x1008] sm:$0xff]
  %v534 = vld [vmem:[%s1 + $0x1010] sm:$0xff]
  %v535 = vld [vmem:[%s1 + $0x1018] sm:$0xff]
  %v536 = vld [vmem:[%s1 + $0x1020] sm:$0xff]
  %v537 = vld [vmem:[%s1 + $0x1028] sm:$0xff]
  %v538 = vld [vmem:[%s1 + $0x1030] sm:$0xff]
  %v539 = vld [vmem:[%s1 + $0x1038] sm:$0xff]
  %v540 = vld [vmem:[%s1 + $0x1040] sm:$0xff]
  %v541 = vld [vmem:[%s1 + $0x1048] sm:$0xff]
  %v542 = vld [vmem:[%s1 + $0x1050] sm:$0xff]
  %v543 = vld [vmem:[%s1 + $0x1058] sm:$0xff]
  %v544 = vld [vmem:[%s1 + $0x1060] sm:$0xff]
  %v545 = vld [vmem:[%s1 + $0x1068] sm:$0xff]
  %v546 = vld [vmem:[%s1 + $0x1070] sm:$0xff]
  %v547 = vld [vmem:[%s1 + $0x1078] sm:$0xff]
  %v548 = vld [vmem:[%s1 + $0x1080] sm:$0xff]
  %v549 = vld [vmem:[%s1 + $0x1088] sm:$0xff]
  %v550 = vld [vmem:[%s1 + $0x1090] sm:$0xff]
  %v551 = vld [vmem:[%s1 + $0x1098] sm:$0xff]
  %v552 = vld [vmem:[%s1 + $0x10a0] sm:$0xff]
  %v553 = vld [vmem:[%s1 + $0x10a8] sm:$0xff]
  %v554 = vld [vmem:[%s1 + $0x10b0] sm:$0xff]
  %v555 = vld [vmem:[%s1 + $0x10b8] sm:$0xff]
  %v556 = vld [vmem:[%s1 + $0x10c0] sm:$0xff]
  %v557 = vld [vmem:[%s1 + $0x10c8] sm:$0xff]
  %v558 = vld [vmem:[%s1 + $0x10d0] sm:$0xff]
  %v559 = vld [vmem:[%s1 + $0x10d8] sm:$0xff]
  %v560 = vld [vmem:[%s1 + $0x10e0] sm:$0xff]
  %v561 = vld [vmem:[%s1 + $0x10e8] sm:$0xff]
  %v562 = vld [vmem:[%s1 + $0x10f0] sm:$0xff]
  %v563 = vld [vmem:[%s1 + $0x10f8] sm:$0xff]
  %v564 = vld [vmem:[%s1 + $0x1100] sm:$0xff]
  %v565 = vld [vmem:[%s1 + $0x1108] sm:$0xff]
  %v566 = vld [vmem:[%s1 + $0x1110] sm:$0xff]
  %v567 = vld [vmem:[%s1 + $0x1118] sm:$0xff]
  %v568 = vld [vmem:[%s1 + $0x1120] sm:$0xff]
  %v569 = vld [vmem:[%s1 + $0x1128] sm:$0xff]
  %v570 = vld [vmem:[%s1 + $0x1130] sm:$0xff]
  %v571 = vld [vmem:[%s1 + $0x1138] sm:$0xff]
  %v572 = vld [vmem:[%s1 + $0x1140] sm:$0xff]
  %v573 = vld [vmem:[%s1 + $0x1148] sm:$0xff]
  %v574 = vld [vmem:[%s1 + $0x1150] sm:$0xff]
  %v575 = vld [vmem:[%s1 + $0x1158] sm:$0xff]
  %v576 = vld [vmem:[%s1 + $0x1160] sm:$0xff]
  %v577 = vld [vmem:[%s1 + $0x1168] sm:$0xff]
  %v578 = vld [vmem:[%s1 + $0x1170] sm:$0xff]
  %v579 = vld [vmem:[%s1 + $0x1178] sm:$0xff]
  %v580 = vld [vmem:[%s1 + $0x1180] sm:$0xff]
  %v581 = vld [vmem:[%s1 + $0x1188] sm:$0xff]
  %v582 = vld [vmem:[%s1 + $0x1190] sm:$0xff]
  %v583 = vld [vmem:[%s1 + $0x1198] sm:$0xff]
  %v584 = vld [vmem:[%s1 + $0x11a0] sm:$0xff]
  %v585 = vld [vmem:[%s1 + $0x11a8] sm:$0xff]
  %v586 = vld [vmem:[%s1 + $0x11b0] sm:$0xff]
  %v587 = vld [vmem:[%s1 + $0x11b8] sm:$0xff]
  %v588 = vld [vmem:[%s1 + $0x11c0] sm:$0xff]
  %v589 = vld [vmem:[%s1 + $0x11c8] sm:$0xff]
  %v590 = vld [vmem:[%s1 + $0x11d0] sm:$0xff]
  %v591 = vld [vmem:[%s1 + $0x11d8] sm:$0xff]
  %v592 = vld [vmem:[%s1 + $0x11e0] sm:$0xff]
  %v593 = vld [vmem:[%s1 + $0x11e8] sm:$0xff]
  %v594 = vld [vmem:[%s1 + $0x11f0] sm:$0xff]
  %v595 = vld [vmem:[%s1 + $0x11f8] sm:$0xff]
  %v596 = vld [vmem:[%s1 + $0x1200] sm:$0xff]
  %v597 = vld [vmem:[%s1 + $0x1208] sm:$0xff]
  %v598 = vld [vmem:[%s1 + $0x1210] sm:$0xff]
  %v599 = vld [vmem:[%s1 + $0x1218] sm:$0xff]
  %v600 = vld [vmem:[%s1 + $0x1220] sm:$0xff]
  %v601 = vld [vmem:[%s1 + $0x1228] sm:$0xff]
  %v602 = vld [vmem:[%s1 + $0x1230] sm:$0xff]
  %v603 = vld [vmem:[%s1 + $0x1238] sm:$0xff]
  %v604 = vld [vmem:[%s1 + $0x1240] sm:$0xff]
  %v605 = vld [vmem:[%s1 + $0x1248] sm:$0xff]
  %v606 = vld [vmem:[%s1 + $0x1250] sm:$0xff]
  %v607 = vld [vmem:[%s1 + $0x1258] sm:$0xff]
  %v608 = vld [vmem:[%s1 + $0x1260] sm:$0xff]
  %v609 = vld [vmem:[%s1 + $0x1268] sm:$0xff]
  %v610 = vld [vmem:[%s1 + $0x1270] sm:$0xff]
  %v611 = vld [vmem:[%s1 + $0x1278] sm:$0xff]
  %v612 = vld [vmem:[%s1 + $0x1280] sm:$0xff]
  %v613 = vld [vmem:[%s1 + $0x1288] sm:$0xff]
  %vm614 = vcmask 719872
  %v616 = vsel %vm614, %v15, 0
  %v619 = vsel %vm614, %v17, 0
  %v622 = vsel %vm614, %v19, 0
  %624 = vmatprep.subr.mxu0 %v21
  %625 = vmatpush1.msra.mxu0 %v20
  %626 = vmatprep.subr.mxu0 %v43
  %627 = vmatpush1.msra.mxu0 %v42
  %628 = vmatprep.subr.mxu0 %v65
  %629 = vmatpush1.msra.mxu0 %v64
  %630 = vmatprep.subr.mxu0 %v87
  %631 = vmatpush1.msra.mxu0 %v86
  %632 = vmatprep.subr.mxu0 %v109
  %633 = vmatpush1.msra.mxu0 %v108
  %634 = vmatprep.subr.mxu0 %v131
  %635 = vmatpush1.msra.mxu0 %v130
  %636 = vmatprep.subr.mxu0 %v153
  %637 = vmatpush1.msra.mxu0 %v152
  %638 = vmatprep.subr.mxu0 %v175
  %639 = vmatpush1.msra.mxu0 %v174
  %640 = vmatprep.subr.mxu0 %v197
  %641 = vmatpush1.msra.mxu0 %v196
  %642 = vmatprep.subr.mxu0 %v219
  %643 = vmatpush1.msra.mxu0 %v218
  %644 = vmatprep.subr.mxu0 %v241
  %645 = vmatpush1.msra.mxu0 %v240
  %646 = vmatprep.subr.mxu0 %v263
  %647 = vmatpush1.msra.mxu0 %v262
  %648 = vmatprep.subr.mxu0 %v285
  %649 = vmatpush1.msra.mxu0 %v284
  %650 = vmatprep.subr.mxu0 %v307
  %651 = vmatpush1.msra.mxu0 %v306
  %652 = vmatprep.subr.mxu0 %v329
  %653 = vmatpush1.msra.mxu0 %v328
  %654 = vmatprep.subr.mxu0 %v351
  %655 = vmatpush1.msra.mxu0 %v350
  %656 = vmatprep.subr.mxu0 %v373
  %657 = vmatpush1.msra.mxu0 %v372
  %658 = vmatprep.subr.mxu0 %v395
  %659 = vmatpush1.msra.mxu0 %v394
  %660 = vmatprep.subr.mxu0 %v417
  %661 = vmatpush1.msra.mxu0 %v416
  %662 = vmatprep.subr.mxu0 %v439
  %663 = vmatpush1.msra.mxu0 %v438
  %664 = vmatprep.subr.mxu0 %v461
  %665 = vmatpush1.msra.mxu0 %v460
  %666 = vmatprep.subr.mxu0 %v483
  %667 = vmatpush1.msra.mxu0 %v482
  %668 = vmatprep.subr.mxu0 %v505
  %669 = vmatpush1.msra.mxu0 %v504
  %670 = vmatprep.subr.mxu0 %v527
  %671 = vmatpush1.msra.mxu0 %v526
  %672 = vmatprep.subr.mxu0 %v549
  %673 = vmatpush1.msra.mxu0 %v548
  %674 = vmatprep.subr.mxu0 %v571
  %675 = vmatpush1.msra.mxu0 %v570
  %676 = vmatprep.subr.mxu0 %v593
  %677 = vmatpush1.msra.mxu0 %v592
  %678 = vmatprep.subr.mxu0 0.0
  %679 = vmatpush1.msra.mxu0 0.0
  %680 = vmatprep.subr.mxu0 0.0
  %681 = vmatpush1.msra.mxu0 0.0
  %682 = vmatprep.subr.mxu0 0.0
  %683 = vmatpush1.msra.mxu0 0.0
  %684 = vmatprep.subr.mxu0 0.0
  %685 = vmatpush1.msra.mxu0 0.0
  %686 = vmatprep.subr.mxu0 0.0
  %687 = vmatpush1.msra.mxu0 0.0
  %688 = vmatprep.mubr.f32.mxu0 %v616
  %689 = vmatmul.mubr.f32.gmra.mrb[0].mxu0 %v14
  %v690 = vpop.f32.mrb[0].mxu0
  %v691 = vadd.f32 0.0, %v690
  %v692 = vpop.f32.mrb[0].mxu0
  %v693 = vadd.f32 0.0, %v692
  %694 = vmatprep.mubr.f32.mxu0 %v619
  %695 = vmatmul.mubr.f32.gmra.mrb[0].mxu0 %v16
  %v696 = vpop.f32.mrb[0].mxu0
  %v697 = vadd.f32 0.0, %v696
  %v698 = vpop.f32.mrb[0].mxu0
  %v699 = vadd.f32 0.0, %v698
  %700 = vmatprep.mubr.f32.mxu0 %v622
  %701 = vmatmul.mubr.f32.gmra.mrb[0].mxu0 %v18
  %v702 = vpop.f32.mrb[0].mxu0
  %v703 = vadd.f32 0.0, %v702
  %v704 = vpop.f32.mrb[0].mxu0
  %v705 = vadd.f32 0.0, %v704
  %706 = vdwg.mxu0
  %707 = vmatprep.subr.mxu0 %v23
  %708 = vmatpush1.msra.mxu0 %v22
  %709 = vmatprep.subr.mxu0 %v45
  %710 = vmatpush1.msra.mxu0 %v44
  %711 = vmatprep.subr.mxu0 %v67
  %712 = vmatpush1.msra.mxu0 %v66
  %713 = vmatprep.subr.mxu0 %v89
  %714 = vmatpush1.msra.mxu0 %v88
  %715 = vmatprep.subr.mxu0 %v111
  %716 = vmatpush1.msra.mxu0 %v110
  %717 = vmatprep.subr.mxu0 %v133
  %718 = vmatpush1.msra.mxu0 %v132
  %719 = vmatprep.subr.mxu0 %v155
  %720 = vmatpush1.msra.mxu0 %v154
  %721 = vmatprep.subr.mxu0 %v177
  %722 = vmatpush1.msra.mxu0 %v176
  %723 = vmatprep.subr.mxu0 %v199
  %724 = vmatpush1.msra.mxu0 %v198
  %725 = vmatprep.subr.mxu0 %v221
  %726 = vmatpush1.msra.mxu0 %v220
  %727 = vmatprep.subr.mxu0 %v243
  %728 = vmatpush1.msra.mxu0 %v242
  %729 = vmatprep.subr.mxu0 %v265
  %730 = vmatpush1.msra.mxu0 %v264
  %731 = vmatprep.subr.mxu0 %v287
  %732 = vmatpush1.msra.mxu0 %v286
  %733 = vmatprep.subr.mxu0 %v309
  %734 = vmatpush1.msra.mxu0 %v308
  %735 = vmatprep.subr.mxu0 %v331
  %736 = vmatpush1.msra.mxu0 %v330
  %737 = vmatprep.subr.mxu0 %v353
  %738 = vmatpush1.msra.mxu0 %v352
  %739 = vmatprep.subr.mxu0 %v375
  %740 = vmatpush1.msra.mxu0 %v374
  %741 = vmatprep.subr.mxu0 %v397
  %742 = vmatpush1.msra.mxu0 %v396
  %743 = vmatprep.subr.mxu0 %v419
  %744 = vmatpush1.msra.mxu0 %v418
  %745 = vmatprep.subr.mxu0 %v441
  %746 = vmatpush1.msra.mxu0 %v440
  %747 = vmatprep.subr.mxu0 %v463
  %748 = vmatpush1.msra.mxu0 %v462
  %749 = vmatprep.subr.mxu0 %v485
  %750 = vmatpush1.msra.mxu0 %v484
  %751 = vmatprep.subr.mxu0 %v507
  %752 = vmatpush1.msra.mxu0 %v506
  %753 = vmatprep.subr.mxu0 %v529
  %754 = vmatpush1.msra.mxu0 %v528
  %755 = vmatprep.subr.mxu0 %v551
  %756 = vmatpush1.msra.mxu0 %v550
  %757 = vmatprep.subr.mxu0 %v573
  %758 = vmatpush1.msra.mxu0 %v572
  %759 = vmatprep.subr.mxu0 %v595
  %760 = vmatpush1.msra.mxu0 %v594
  %761 = vmatprep.subr.mxu0 0.0
  %762 = vmatpush1.msra.mxu0 0.0
  %763 = vmatprep.subr.mxu0 0.0
  %764 = vmatpush1.msra.mxu0 0.0
  %765 = vmatprep.subr.mxu0 0.0
  %766 = vmatpush1.msra.mxu0 0.0
  %767 = vmatprep.subr.mxu0 0.0
  %768 = vmatpush1.msra.mxu0 0.0
  %769 = vmatprep.subr.mxu0 0.0
  %770 = vmatpush1.msra.mxu0 0.0
  %771 = vmatprep.mubr.f32.mxu0 %v616
  %772 = vmatmul.mubr.f32.gmra.mrb[0].mxu0 %v14
  %v773 = vpop.f32.mrb[0].mxu0
  %v774 = vadd.f32 0.0, %v773
  %v775 = vpop.f32.mrb[0].mxu0
  %v776 = vadd.f32 0.0, %v775
  %777 = vmatprep.mubr.f32.mxu0 %v619
  %778 = vmatmul.mubr.f32.gmra.mrb[0].mxu0 %v16
  %v779 = vpop.f32.mrb[0].mxu0
  %v780 = vadd.f32 0.0, %v779
  %v781 = vpop.f32.mrb[0].mxu0
  %v782 = vadd.f32 0.0, %v781
  %783 = vmatprep.mubr.f32.mxu0 %v622
  %784 = vmatmul.mubr.f32.gmra.mrb[0].mxu0 %v18
  %v785 = vpop.f32.mrb[0].mxu0
  %v786 = vadd.f32 0.0, %v785
  %v787 = vpop.f32.mrb[0].mxu0
  %v788 = vadd.f32 0.0, %v787
  %789 = vdwg.mxu0
  %790 = vmatprep.subr.mxu0 %v25
  %791 = vmatpush1.msra.mxu0 %v24
  %792 = vmatprep.subr.mxu0 %v47
  %793 = vmatpush1.msra.mxu0 %v46
  %794 = vmatprep.subr.mxu0 %v69
  %795 = vmatpush1.msra.mxu0 %v68
  %796 = vmatprep.subr.mxu0 %v91
  %797 = vmatpush1.msra.mxu0 %v90
  %798 = vmatprep.subr.mxu0 %v113
  %799 = vmatpush1.msra.mxu0 %v112
  %800 = vmatprep.subr.mxu0 %v135
  %801 = vmatpush1.msra.mxu0 %v134
  %802 = vmatprep.subr.mxu0 %v157
  %803 = vmatpush1.msra.mxu0 %v156
  %804 = vmatprep.subr.mxu0 %v179
  %805 = vmatpush1.msra.mxu0 %v178
  %806 = vmatprep.subr.mxu0 %v201
  %807 = vmatpush1.msra.mxu0 %v200
  %808 = vmatprep.subr.mxu0 %v223
  %809 = vmatpush1.msra.mxu0 %v222
  %810 = vmatprep.subr.mxu0 %v245
  %811 = vmatpush1.msra.mxu0 %v244
  %812 = vmatprep.subr.mxu0 %v267
  %813 = vmatpush1.msra.mxu0 %v266
  %814 = vmatprep.subr.mxu0 %v289
  %815 = vmatpush1.msra.mxu0 %v288
  %816 = vmatprep.subr.mxu0 %v311
  %817 = vmatpush1.msra.mxu0 %v310
  %818 = vmatprep.subr.mxu0 %v333
  %819 = vmatpush1.msra.mxu0 %v332
  %820 = vmatprep.subr.mxu0 %v355
  %821 = vmatpush1.msra.mxu0 %v354
  %822 = vmatprep.subr.mxu0 %v377
  %823 = vmatpush1.msra.mxu0 %v376
  %824 = vmatprep.subr.mxu0 %v399
  %825 = vmatpush1.msra.mxu0 %v398
  %826 = vmatprep.subr.mxu0 %v421
  %827 = vmatpush1.msra.mxu0 %v420
  %828 = vmatprep.subr.mxu0 %v443
  %829 = vmatpush1.msra.mxu0 %v442
  %830 = vmatprep.subr.mxu0 %v465
  %831 = vmatpush1.msra.mxu0 %v464
  %832 = vmatprep.subr.mxu0 %v487
  %833 = vmatpush1.msra.mxu0 %v486
  %834 = vmatprep.subr.mxu0 %v509
  %835 = vmatpush1.msra.mxu0 %v508
  %836 = vmatprep.subr.mxu0 %v531
  %837 = vmatpush1.msra.mxu0 %v530
  %838 = vmatprep.subr.mxu0 %v553
  %839 = vmatpush1.msra.mxu0 %v552
  %840 = vmatprep.subr.mxu0 %v575
  %841 = vmatpush1.msra.mxu0 %v574
  %842 = vmatprep.subr.mxu0 %v597
  %843 = vmatpush1.msra.mxu0 %v596
  %844 = vmatprep.subr.mxu0 0.0
  %845 = vmatpush1.msra.mxu0 0.0
  %846 = vmatprep.subr.mxu0 0.0
  %847 = vmatpush1.msra.mxu0 0.0
  %848 = vmatprep.subr.mxu0 0.0
  %849 = vmatpush1.msra.mxu0 0.0
  %850 = vmatprep.subr.mxu0 0.0
  %851 = vmatpush1.msra.mxu0 0.0
  %852 = vmatprep.subr.mxu0 0.0
  %853 = vmatpush1.msra.mxu0 0.0
  %854 = vmatprep.mubr.f32.mxu0 %v616
  %855 = vmatmul.mubr.f32.gmra.mrb[0].mxu0 %v14
  %v856 = vpop.f32.mrb[0].mxu0
  %v857 = vadd.f32 0.0, %v856
  %v858 = vpop.f32.mrb[0].mxu0
  %v859 = vadd.f32 0.0, %v858
  %860 = vmatprep.mubr.f32.mxu0 %v619
  %861 = vmatmul.mubr.f32.gmra.mrb[0].mxu0 %v16
  %v862 = vpop.f32.mrb[0].mxu0
  %v863 = vadd.f32 0.0, %v862
  %v864 = vpop.f32.mrb[0].mxu0
  %v865 = vadd.f32 0.0, %v864
  %866 = vmatprep.mubr.f32.mxu0 %v622
  %867 = vmatmul.mubr.f32.gmra.mrb[0].mxu0 %v18
  %v868 = vpop.f32.mrb[0].mxu0
  %v869 = vadd.f32 0.0, %v868
  %v870 = vpop.f32.mrb[0].mxu0
  %v871 = vadd.f32 0.0, %v870
  %872 = vdwg.mxu0
  %873 = vmatprep.subr.mxu0 %v27
  %874 = vmatpush1.msra.mxu0 %v26
  %875 = vmatprep.subr.mxu0 %v49
  %876 = vmatpush1.msra.mxu0 %v48
  %877 = vmatprep.subr.mxu0 %v71
  %878 = vmatpush1.msra.mxu0 %v70
  %879 = vmatprep.subr.mxu0 %v93
  %880 = vmatpush1.msra.mxu0 %v92
  %881 = vmatprep.subr.mxu0 %v115
  %882 = vmatpush1.msra.mxu0 %v114
  %883 = vmatprep.subr.mxu0 %v137
  %884 = vmatpush1.msra.mxu0 %v136
  %885 = vmatprep.subr.mxu0 %v159
  %886 = vmatpush1.msra.mxu0 %v158
  %887 = vmatprep.subr.mxu0 %v181
  %888 = vmatpush1.msra.mxu0 %v180
  %889 = vmatprep.subr.mxu0 %v203
  %890 = vmatpush1.msra.mxu0 %v202
  %891 = vmatprep.subr.mxu0 %v225
  %892 = vmatpush1.msra.mxu0 %v224
  %893 = vmatprep.subr.mxu0 %v247
  %894 = vmatpush1.msra.mxu0 %v246
  %895 = vmatprep.subr.mxu0 %v269
  %896 = vmatpush1.msra.mxu0 %v268
  %897 = vmatprep.subr.mxu0 %v291
  %898 = vmatpush1.msra.mxu0 %v290
  %899 = vmatprep.subr.mxu0 %v313
  %900 = vmatpush1.msra.mxu0 %v312
  %901 = vmatprep.subr.mxu0 %v335
  %902 = vmatpush1.msra.mxu0 %v334
  %903 = vmatprep.subr.mxu0 %v357
  %904 = vmatpush1.msra.mxu0 %v356
  %905 = vmatprep.subr.mxu0 %v379
  %906 = vmatpush1.msra.mxu0 %v378
  %907 = vmatprep.subr.mxu0 %v401
  %908 = vmatpush1.msra.mxu0 %v400
  %909 = vmatprep.subr.mxu0 %v423
  %910 = vmatpush1.msra.mxu0 %v422
  %911 = vmatprep.subr.mxu0 %v445
  %912 = vmatpush1.msra.mxu0 %v444
  %913 = vmatprep.subr.mxu0 %v467
  %914 = vmatpush1.msra.mxu0 %v466
  %915 = vmatprep.subr.mxu0 %v489
  %916 = vmatpush1.msra.mxu0 %v488
  %917 = vmatprep.subr.mxu0 %v511
  %918 = vmatpush1.msra.mxu0 %v510
  %919 = vmatprep.subr.mxu0 %v533
  %920 = vmatpush1.msra.mxu0 %v532
  %921 = vmatprep.subr.mxu0 %v555
  %922 = vmatpush1.msra.mxu0 %v554
  %923 = vmatprep.subr.mxu0 %v577
  %924 = vmatpush1.msra.mxu0 %v576
  %925 = vmatprep.subr.mxu0 %v599
  %926 = vmatpush1.msra.mxu0 %v598
  %927 = vmatprep.subr.mxu0 0.0
  %928 = vmatpush1.msra.mxu0 0.0
  %929 = vmatprep.subr.mxu0 0.0
  %930 = vmatpush1.msra.mxu0 0.0
  %931 = vmatprep.subr.mxu0 0.0
  %932 = vmatpush1.msra.mxu0 0.0
  %933 = vmatprep.subr.mxu0 0.0
  %934 = vmatpush1.msra.mxu0 0.0
  %935 = vmatprep.subr.mxu0 0.0
  %936 = vmatpush1.msra.mxu0 0.0
  %937 = vmatprep.mubr.f32.mxu0 %v616
  %938 = vmatmul.mubr.f32.gmra.mrb[0].mxu0 %v14
  %v939 = vpop.f32.mrb[0].mxu0
  %v940 = vadd.f32 0.0, %v939
  %v941 = vpop.f32.mrb[0].mxu0
  %v942 = vadd.f32 0.0, %v941
  %943 = vmatprep.mubr.f32.mxu0 %v619
  %944 = vmatmul.mubr.f32.gmra.mrb[0].mxu0 %v16
  %v945 = vpop.f32.mrb[0].mxu0
  %v946 = vadd.f32 0.0, %v945
  %v947 = vpop.f32.mrb[0].mxu0
  %v948 = vadd.f32 0.0, %v947
  %949 = vmatprep.mubr.f32.mxu0 %v622
  %950 = vmatmul.mubr.f32.gmra.mrb[0].mxu0 %v18
  %v951 = vpop.f32.mrb[0].mxu0
  %v952 = vadd.f32 0.0, %v951
  %v953 = vpop.f32.mrb[0].mxu0
  %v954 = vadd.f32 0.0, %v953
  %955 = vdwg.mxu0
  %956 = vmatprep.subr.mxu0 %v29
  %957 = vmatpush1.msra.mxu0 %v28
  %958 = vmatprep.subr.mxu0 %v51
  %959 = vmatpush1.msra.mxu0 %v50
  %960 = vmatprep.subr.mxu0 %v73
  %961 = vmatpush1.msra.mxu0 %v72
  %962 = vmatprep.subr.mxu0 %v95
  %963 = vmatpush1.msra.mxu0 %v94
  %964 = vmatprep.subr.mxu0 %v117
  %965 = vmatpush1.msra.mxu0 %v116
  %966 = vmatprep.subr.mxu0 %v139
  %967 = vmatpush1.msra.mxu0 %v138
  %968 = vmatprep.subr.mxu0 %v161
  %969 = vmatpush1.msra.mxu0 %v160
  %970 = vmatprep.subr.mxu0 %v183
  %971 = vmatpush1.msra.mxu0 %v182
  %972 = vmatprep.subr.mxu0 %v205
  %973 = vmatpush1.msra.mxu0 %v204
  %974 = vmatprep.subr.mxu0 %v227
  %975 = vmatpush1.msra.mxu0 %v226
  %976 = vmatprep.subr.mxu0 %v249
  %977 = vmatpush1.msra.mxu0 %v248
  %978 = vmatprep.subr.mxu0 %v271
  %979 = vmatpush1.msra.mxu0 %v270
  %980 = vmatprep.subr.mxu0 %v293
  %981 = vmatpush1.msra.mxu0 %v292
  %982 = vmatprep.subr.mxu0 %v315
  %983 = vmatpush1.msra.mxu0 %v314
  %984 = vmatprep.subr.mxu0 %v337
  %985 = vmatpush1.msra.mxu0 %v336
  %986 = vmatprep.subr.mxu0 %v359
  %987 = vmatpush1.msra.mxu0 %v358
  %988 = vmatprep.subr.mxu0 %v381
  %989 = vmatpush1.msra.mxu0 %v380
  %990 = vmatprep.subr.mxu0 %v403
  %991 = vmatpush1.msra.mxu0 %v402
  %992 = vmatprep.subr.mxu0 %v425
  %993 = vmatpush1.msra.mxu0 %v424
  %994 = vmatprep.subr.mxu0 %v447
  %995 = vmatpush1.msra.mxu0 %v446
  %996 = vmatprep.subr.mxu0 %v469
  %997 = vmatpush1.msra.mxu0 %v468
  %998 = vmatprep.subr.mxu0 %v491
  %999 = vmatpush1.msra.mxu0 %v490
  %1000 = vmatprep.subr.mxu0 %v513
  %1001 = vmatpush1.msra.mxu0 %v512
  %1002 = vmatprep.subr.mxu0 %v535
  %1003 = vmatpush1.msra.mxu0 %v534
  %1004 = vmatprep.subr.mxu0 %v557
  %1005 = vmatpush1.msra.mxu0 %v556
  %1006 = vmatprep.subr.mxu0 %v579
  %1007 = vmatpush1.msra.mxu0 %v578
  %1008 = vmatprep.subr.mxu0 %v601
  %1009 = vmatpush1.msra.mxu0 %v600
  %1010 = vmatprep.subr.mxu0 0.0
  %1011 = vmatpush1.msra.mxu0 0.0
  %1012 = vmatprep.subr.mxu0 0.0
  %1013 = vmatpush1.msra.mxu0 0.0
  %1014 = vmatprep.subr.mxu0 0.0
  %1015 = vmatpush1.msra.mxu0 0.0
  %1016 = vmatprep.subr.mxu0 0.0
  %1017 = vmatpush1.msra.mxu0 0.0
  %1018 = vmatprep.subr.mxu0 0.0
  %1019 = vmatpush1.msra.mxu0 0.0
  %1020 = vmatprep.mubr.f32.mxu0 %v616
  %1021 = vmatmul.mubr.f32.gmra.mrb[0].mxu0 %v14
  %v1022 = vpop.f32.mrb[0].mxu0
  %v1023 = vadd.f32 0.0, %v1022
  %v1024 = vpop.f32.mrb[0].mxu0
  %v1025 = vadd.f32 0.0, %v1024
  %1026 = vmatprep.mubr.f32.mxu0 %v619
  %1027 = vmatmul.mubr.f32.gmra.mrb[0].mxu0 %v16
  %v1028 = vpop.f32.mrb[0].mxu0
  %v1029 = vadd.f32 0.0, %v1028
  %v1030 = vpop.f32.mrb[0].mxu0
  %v1031 = vadd.f32 0.0, %v1030
  %1032 = vmatprep.mubr.f32.mxu0 %v622
  %1033 = vmatmul.mubr.f32.gmra.mrb[0].mxu0 %v18
  %v1034 = vpop.f32.mrb[0].mxu0
  %v1035 = vadd.f32 0.0, %v1034
  %v1036 = vpop.f32.mrb[0].mxu0
  %v1037 = vadd.f32 0.0, %v1036
  %1038 = vdwg.mxu0
  %1039 = vmatprep.subr.mxu0 %v31
  %1040 = vmatpush1.msra.mxu0 %v30
  %1041 = vmatprep.subr.mxu0 %v53
  %1042 = vmatpush1.msra.mxu0 %v52
  %1043 = vmatprep.subr.mxu0 %v75
  %1044 = vmatpush1.msra.mxu0 %v74
  %1045 = vmatprep.subr.mxu0 %v97
  %1046 = vmatpush1.msra.mxu0 %v96
  %1047 = vmatprep.subr.mxu0 %v119
  %1048 = vmatpush1.msra.mxu0 %v118
  %1049 = vmatprep.subr.mxu0 %v141
  %1050 = vmatpush1.msra.mxu0 %v140
  %1051 = vmatprep.subr.mxu0 %v163
  %1052 = vmatpush1.msra.mxu0 %v162
  %1053 = vmatprep.subr.mxu0 %v185
  %1054 = vmatpush1.msra.mxu0 %v184
  %1055 = vmatprep.subr.mxu0 %v207
  %1056 = vmatpush1.msra.mxu0 %v206
  %1057 = vmatprep.subr.mxu0 %v229
  %1058 = vmatpush1.msra.mxu0 %v228
  %1059 = vmatprep.subr.mxu0 %v251
  %1060 = vmatpush1.msra.mxu0 %v250
  %1061 = vmatprep.subr.mxu0 %v273
  %1062 = vmatpush1.msra.mxu0 %v272
  %1063 = vmatprep.subr.mxu0 %v295
  %1064 = vmatpush1.msra.mxu0 %v294
  %1065 = vmatprep.subr.mxu0 %v317
  %1066 = vmatpush1.msra.mxu0 %v316
  %1067 = vmatprep.subr.mxu0 %v339
  %1068 = vmatpush1.msra.mxu0 %v338
  %1069 = vmatprep.subr.mxu0 %v361
  %1070 = vmatpush1.msra.mxu0 %v360
  %1071 = vmatprep.subr.mxu0 %v383
  %1072 = vmatpush1.msra.mxu0 %v382
  %1073 = vmatprep.subr.mxu0 %v405
  %1074 = vmatpush1.msra.mxu0 %v404
  %1075 = vmatprep.subr.mxu0 %v427
  %1076 = vmatpush1.msra.mxu0 %v426
  %1077 = vmatprep.subr.mxu0 %v449
  %1078 = vmatpush1.msra.mxu0 %v448
  %1079 = vmatprep.subr.mxu0 %v471
  %1080 = vmatpush1.msra.mxu0 %v470
  %1081 = vmatprep.subr.mxu0 %v493
  %1082 = vmatpush1.msra.mxu0 %v492
  %1083 = vmatprep.subr.mxu0 %v515
  %1084 = vmatpush1.msra.mxu0 %v514
  %1085 = vmatprep.subr.mxu0 %v537
  %1086 = vmatpush1.msra.mxu0 %v536
  %1087 = vmatprep.subr.mxu0 %v559
  %1088 = vmatpush1.msra.mxu0 %v558
  %1089 = vmatprep.subr.mxu0 %v581
  %1090 = vmatpush1.msra.mxu0 %v580
  %1091 = vmatprep.subr.mxu0 %v603
  %1092 = vmatpush1.msra.mxu0 %v602
  %1093 = vmatprep.subr.mxu0 0.0
  %1094 = vmatpush1.msra.mxu0 0.0
  %1095 = vmatprep.subr.mxu0 0.0
  %1096 = vmatpush1.msra.mxu0 0.0
  %1097 = vmatprep.subr.mxu0 0.0
  %1098 = vmatpush1.msra.mxu0 0.0
  %1099 = vmatprep.subr.mxu0 0.0
  %1100 = vmatpush1.msra.mxu0 0.0
  %1101 = vmatprep.subr.mxu0 0.0
  %1102 = vmatpush1.msra.mxu0 0.0
  %1103 = vmatprep.mubr.f32.mxu0 %v616
  %1104 = vmatmul.mubr.f32.gmra.mrb[0].mxu0 %v14
  %v1105 = vpop.f32.mrb[0].mxu0
  %v1106 = vadd.f32 0.0, %v1105
  %v1107 = vpop.f32.mrb[0].mxu0
  %v1108 = vadd.f32 0.0, %v1107
  %1109 = vmatprep.mubr.f32.mxu0 %v619
  %1110 = vmatmul.mubr.f32.gmra.mrb[0].mxu0 %v16
  %v1111 = vpop.f32.mrb[0].mxu0
  %v1112 = vadd.f32 0.0, %v1111
  %v1113 = vpop.f32.mrb[0].mxu0
  %v1114 = vadd.f32 0.0, %v1113
  %1115 = vmatprep.mubr.f32.mxu0 %v622
  %1116 = vmatmul.mubr.f32.gmra.mrb[0].mxu0 %v18
  %v1117 = vpop.f32.mrb[0].mxu0
  %v1118 = vadd.f32 0.0, %v1117
  %v1119 = vpop.f32.mrb[0].mxu0
  %v1120 = vadd.f32 0.0, %v1119
  %1121 = vdwg.mxu0
  %1122 = vmatprep.subr.mxu0 %v33
  %1123 = vmatpush1.msra.mxu0 %v32
  %1124 = vmatprep.subr.mxu0 %v55
  %1125 = vmatpush1.msra.mxu0 %v54
  %1126 = vmatprep.subr.mxu0 %v77
  %1127 = vmatpush1.msra.mxu0 %v76
  %1128 = vmatprep.subr.mxu0 %v99
  %1129 = vmatpush1.msra.mxu0 %v98
  %1130 = vmatprep.subr.mxu0 %v121
  %1131 = vmatpush1.msra.mxu0 %v120
  %1132 = vmatprep.subr.mxu0 %v143
  %1133 = vmatpush1.msra.mxu0 %v142
  %1134 = vmatprep.subr.mxu0 %v165
  %1135 = vmatpush1.msra.mxu0 %v164
  %1136 = vmatprep.subr.mxu0 %v187
  %1137 = vmatpush1.msra.mxu0 %v186
  %1138 = vmatprep.subr.mxu0 %v209
  %1139 = vmatpush1.msra.mxu0 %v208
  %1140 = vmatprep.subr.mxu0 %v231
  %1141 = vmatpush1.msra.mxu0 %v230
  %1142 = vmatprep.subr.mxu0 %v253
  %1143 = vmatpush1.msra.mxu0 %v252
  %1144 = vmatprep.subr.mxu0 %v275
  %1145 = vmatpush1.msra.mxu0 %v274
  %1146 = vmatprep.subr.mxu0 %v297
  %1147 = vmatpush1.msra.mxu0 %v296
  %1148 = vmatprep.subr.mxu0 %v319
  %1149 = vmatpush1.msra.mxu0 %v318
  %1150 = vmatprep.subr.mxu0 %v341
  %1151 = vmatpush1.msra.mxu0 %v340
  %1152 = vmatprep.subr.mxu0 %v363
  %1153 = vmatpush1.msra.mxu0 %v362
  %1154 = vmatprep.subr.mxu0 %v385
  %1155 = vmatpush1.msra.mxu0 %v384
  %1156 = vmatprep.subr.mxu0 %v407
  %1157 = vmatpush1.msra.mxu0 %v406
  %1158 = vmatprep.subr.mxu0 %v429
  %1159 = vmatpush1.msra.mxu0 %v428
  %1160 = vmatprep.subr.mxu0 %v451
  %1161 = vmatpush1.msra.mxu0 %v450
  %1162 = vmatprep.subr.mxu0 %v473
  %1163 = vmatpush1.msra.mxu0 %v472
  %1164 = vmatprep.subr.mxu0 %v495
  %1165 = vmatpush1.msra.mxu0 %v494
  %1166 = vmatprep.subr.mxu0 %v517
  %1167 = vmatpush1.msra.mxu0 %v516
  %1168 = vmatprep.subr.mxu0 %v539
  %1169 = vmatpush1.msra.mxu0 %v538
  %1170 = vmatprep.subr.mxu0 %v561
  %1171 = vmatpush1.msra.mxu0 %v560
  %1172 = vmatprep.subr.mxu0 %v583
  %1173 = vmatpush1.msra.mxu0 %v582
  %1174 = vmatprep.subr.mxu0 %v605
  %1175 = vmatpush1.msra.mxu0 %v604
  %1176 = vmatprep.subr.mxu0 0.0
  %1177 = vmatpush1.msra.mxu0 0.0
  %1178 = vmatprep.subr.mxu0 0.0
  %1179 = vmatpush1.msra.mxu0 0.0
  %1180 = vmatprep.subr.mxu0 0.0
  %1181 = vmatpush1.msra.mxu0 0.0
  %1182 = vmatprep.subr.mxu0 0.0
  %1183 = vmatpush1.msra.mxu0 0.0
  %1184 = vmatprep.subr.mxu0 0.0
  %1185 = vmatpush1.msra.mxu0 0.0
  %1186 = vmatprep.mubr.f32.mxu0 %v616
  %1187 = vmatmul.mubr.f32.gmra.mrb[0].mxu0 %v14
  %v1188 = vpop.f32.mrb[0].mxu0
  %v1189 = vadd.f32 0.0, %v1188
  %v1190 = vpop.f32.mrb[0].mxu0
  %v1191 = vadd.f32 0.0, %v1190
  %1192 = vmatprep.mubr.f32.mxu0 %v619
  %1193 = vmatmul.mubr.f32.gmra.mrb[0].mxu0 %v16
  %v1194 = vpop.f32.mrb[0].mxu0
  %v1195 = vadd.f32 0.0, %v1194
  %v1196 = vpop.f32.mrb[0].mxu0
  %v1197 = vadd.f32 0.0, %v1196
  %1198 = vmatprep.mubr.f32.mxu0 %v622
  %1199 = vmatmul.mubr.f32.gmra.mrb[0].mxu0 %v18
  %v1200 = vpop.f32.mrb[0].mxu0
  %v1201 = vadd.f32 0.0, %v1200
  %v1202 = vpop.f32.mrb[0].mxu0
  %v1203 = vadd.f32 0.0, %v1202
  %1204 = vdwg.mxu0
  %1205 = vmatprep.subr.mxu0 %v35
  %1206 = vmatpush1.msra.mxu0 %v34
  %1207 = vmatprep.subr.mxu0 %v57
  %1208 = vmatpush1.msra.mxu0 %v56
  %1209 = vmatprep.subr.mxu0 %v79
  %1210 = vmatpush1.msra.mxu0 %v78
  %1211 = vmatprep.subr.mxu0 %v101
  %1212 = vmatpush1.msra.mxu0 %v100
  %1213 = vmatprep.subr.mxu0 %v123
  %1214 = vmatpush1.msra.mxu0 %v122
  %1215 = vmatprep.subr.mxu0 %v145
  %1216 = vmatpush1.msra.mxu0 %v144
  %1217 = vmatprep.subr.mxu0 %v167
  %1218 = vmatpush1.msra.mxu0 %v166
  %1219 = vmatprep.subr.mxu0 %v189
  %1220 = vmatpush1.msra.mxu0 %v188
  %1221 = vmatprep.subr.mxu0 %v211
  %1222 = vmatpush1.msra.mxu0 %v210
  %1223 = vmatprep.subr.mxu0 %v233
  %1224 = vmatpush1.msra.mxu0 %v232
  %1225 = vmatprep.subr.mxu0 %v255
  %1226 = vmatpush1.msra.mxu0 %v254
  %1227 = vmatprep.subr.mxu0 %v277
  %1228 = vmatpush1.msra.mxu0 %v276
  %1229 = vmatprep.subr.mxu0 %v299
  %1230 = vmatpush1.msra.mxu0 %v298
  %1231 = vmatprep.subr.mxu0 %v321
  %1232 = vmatpush1.msra.mxu0 %v320
  %1233 = vmatprep.subr.mxu0 %v343
  %1234 = vmatpush1.msra.mxu0 %v342
  %1235 = vmatprep.subr.mxu0 %v365
  %1236 = vmatpush1.msra.mxu0 %v364
  %1237 = vmatprep.subr.mxu0 %v387
  %1238 = vmatpush1.msra.mxu0 %v386
  %1239 = vmatprep.subr.mxu0 %v409
  %1240 = vmatpush1.msra.mxu0 %v408
  %1241 = vmatprep.subr.mxu0 %v431
  %1242 = vmatpush1.msra.mxu0 %v430
  %1243 = vmatprep.subr.mxu0 %v453
  %1244 = vmatpush1.msra.mxu0 %v452
  %1245 = vmatprep.subr.mxu0 %v475
  %1246 = vmatpush1.msra.mxu0 %v474
  %1247 = vmatprep.subr.mxu0 %v497
  %1248 = vmatpush1.msra.mxu0 %v496
  %1249 = vmatprep.subr.mxu0 %v519
  %1250 = vmatpush1.msra.mxu0 %v518
  %1251 = vmatprep.subr.mxu0 %v541
  %1252 = vmatpush1.msra.mxu0 %v540
  %1253 = vmatprep.subr.mxu0 %v563
  %1254 = vmatpush1.msra.mxu0 %v562
  %1255 = vmatprep.subr.mxu0 %v585
  %1256 = vmatpush1.msra.mxu0 %v584
  %1257 = vmatprep.subr.mxu0 %v607
  %1258 = vmatpush1.msra.mxu0 %v606
  %1259 = vmatprep.subr.mxu0 0.0
  %1260 = vmatpush1.msra.mxu0 0.0
  %1261 = vmatprep.subr.mxu0 0.0
  %1262 = vmatpush1.msra.mxu0 0.0
  %1263 = vmatprep.subr.mxu0 0.0
  %1264 = vmatpush1.msra.mxu0 0.0
  %1265 = vmatprep.subr.mxu0 0.0
  %1266 = vmatpush1.msra.mxu0 0.0
  %1267 = vmatprep.subr.mxu0 0.0
  %1268 = vmatpush1.msra.mxu0 0.0
  %1269 = vmatprep.mubr.f32.mxu0 %v616
  %1270 = vmatmul.mubr.f32.gmra.mrb[0].mxu0 %v14
  %v1271 = vpop.f32.mrb[0].mxu0
  %v1272 = vadd.f32 0.0, %v1271
  %v1273 = vpop.f32.mrb[0].mxu0
  %v1274 = vadd.f32 0.0, %v1273
  %1275 = vmatprep.mubr.f32.mxu0 %v619
  %1276 = vmatmul.mubr.f32.gmra.mrb[0].mxu0 %v16
  %v1277 = vpop.f32.mrb[0].mxu0
  %v1278 = vadd.f32 0.0, %v1277
  %v1279 = vpop.f32.mrb[0].mxu0
  %v1280 = vadd.f32 0.0, %v1279
  %1281 = vmatprep.mubr.f32.mxu0 %v622
  %1282 = vmatmul.mubr.f32.gmra.mrb[0].mxu0 %v18
  %v1283 = vpop.f32.mrb[0].mxu0
  %v1284 = vadd.f32 0.0, %v1283
  %v1285 = vpop.f32.mrb[0].mxu0
  %v1286 = vadd.f32 0.0, %v1285
  %1287 = vdwg.mxu0
  %1288 = vmatprep.subr.mxu0 %v37
  %1289 = vmatpush1.msra.mxu0 %v36
  %1290 = vmatprep.subr.mxu0 %v59
  %1291 = vmatpush1.msra.mxu0 %v58
  %1292 = vmatprep.subr.mxu0 %v81
  %1293 = vmatpush1.msra.mxu0 %v80
  %1294 = vmatprep.subr.mxu0 %v103
  %1295 = vmatpush1.msra.mxu0 %v102
  %1296 = vmatprep.subr.mxu0 %v125
  %1297 = vmatpush1.msra.mxu0 %v124
  %1298 = vmatprep.subr.mxu0 %v147
  %1299 = vmatpush1.msra.mxu0 %v146
  %1300 = vmatprep.subr.mxu0 %v169
  %1301 = vmatpush1.msra.mxu0 %v168
  %1302 = vmatprep.subr.mxu0 %v191
  %1303 = vmatpush1.msra.mxu0 %v190
  %1304 = vmatprep.subr.mxu0 %v213
  %1305 = vmatpush1.msra.mxu0 %v212
  %1306 = vmatprep.subr.mxu0 %v235
  %1307 = vmatpush1.msra.mxu0 %v234
  %1308 = vmatprep.subr.mxu0 %v257
  %1309 = vmatpush1.msra.mxu0 %v256
  %1310 = vmatprep.subr.mxu0 %v279
  %1311 = vmatpush1.msra.mxu0 %v278
  %1312 = vmatprep.subr.mxu0 %v301
  %1313 = vmatpush1.msra.mxu0 %v300
  %1314 = vmatprep.subr.mxu0 %v323
  %1315 = vmatpush1.msra.mxu0 %v322
  %1316 = vmatprep.subr.mxu0 %v345
  %1317 = vmatpush1.msra.mxu0 %v344
  %1318 = vmatprep.subr.mxu0 %v367
  %1319 = vmatpush1.msra.mxu0 %v366
  %1320 = vmatprep.subr.mxu0 %v389
  %1321 = vmatpush1.msra.mxu0 %v388
  %1322 = vmatprep.subr.mxu0 %v411
  %1323 = vmatpush1.msra.mxu0 %v410
  %1324 = vmatprep.subr.mxu0 %v433
  %1325 = vmatpush1.msra.mxu0 %v432
  %1326 = vmatprep.subr.mxu0 %v455
  %1327 = vmatpush1.msra.mxu0 %v454
  %1328 = vmatprep.subr.mxu0 %v477
  %1329 = vmatpush1.msra.mxu0 %v476
  %1330 = vmatprep.subr.mxu0 %v499
  %1331 = vmatpush1.msra.mxu0 %v498
  %1332 = vmatprep.subr.mxu0 %v521
  %1333 = vmatpush1.msra.mxu0 %v520
  %1334 = vmatprep.subr.mxu0 %v543
  %1335 = vmatpush1.msra.mxu0 %v542
  %1336 = vmatprep.subr.mxu0 %v565
  %1337 = vmatpush1.msra.mxu0 %v564
  %1338 = vmatprep.subr.mxu0 %v587
  %1339 = vmatpush1.msra.mxu0 %v586
  %1340 = vmatprep.subr.mxu0 %v609
  %1341 = vmatpush1.msra.mxu0 %v608
  %1342 = vmatprep.subr.mxu0 0.0
  %1343 = vmatpush1.msra.mxu0 0.0
  %1344 = vmatprep.subr.mxu0 0.0
  %1345 = vmatpush1.msra.mxu0 0.0
  %1346 = vmatprep.subr.mxu0 0.0
  %1347 = vmatpush1.msra.mxu0 0.0
  %1348 = vmatprep.subr.mxu0 0.0
  %1349 = vmatpush1.msra.mxu0 0.0
  %1350 = vmatprep.subr.mxu0 0.0
  %1351 = vmatpush1.msra.mxu0 0.0
  %1352 = vmatprep.mubr.f32.mxu0 %v616
  %1353 = vmatmul.mubr.f32.gmra.mrb[0].mxu0 %v14
  %v1354 = vpop.f32.mrb[0].mxu0
  %v1355 = vadd.f32 0.0, %v1354
  %v1356 = vpop.f32.mrb[0].mxu0
  %v1357 = vadd.f32 0.0, %v1356
  %1358 = vmatprep.mubr.f32.mxu0 %v619
  %1359 = vmatmul.mubr.f32.gmra.mrb[0].mxu0 %v16
  %v1360 = vpop.f32.mrb[0].mxu0
  %v1361 = vadd.f32 0.0, %v1360
  %v1362 = vpop.f32.mrb[0].mxu0
  %v1363 = vadd.f32 0.0, %v1362
  %1364 = vmatprep.mubr.f32.mxu0 %v622
  %1365 = vmatmul.mubr.f32.gmra.mrb[0].mxu0 %v18
  %v1366 = vpop.f32.mrb[0].mxu0
  %v1367 = vadd.f32 0.0, %v1366
  %v1368 = vpop.f32.mrb[0].mxu0
  %v1369 = vadd.f32 0.0, %v1368
  %1370 = vdwg.mxu0
  %1371 = vmatprep.subr.mxu0 %v39
  %1372 = vmatpush1.msra.mxu0 %v38
  %1373 = vmatprep.subr.mxu0 %v61
  %1374 = vmatpush1.msra.mxu0 %v60
  %1375 = vmatprep.subr.mxu0 %v83
  %1376 = vmatpush1.msra.mxu0 %v82
  %1377 = vmatprep.subr.mxu0 %v105
  %1378 = vmatpush1.msra.mxu0 %v104
  %1379 = vmatprep.subr.mxu0 %v127
  %1380 = vmatpush1.msra.mxu0 %v126
  %1381 = vmatprep.subr.mxu0 %v149
  %1382 = vmatpush1.msra.mxu0 %v148
  %1383 = vmatprep.subr.mxu0 %v171
  %1384 = vmatpush1.msra.mxu0 %v170
  %1385 = vmatprep.subr.mxu0 %v193
  %1386 = vmatpush1.msra.mxu0 %v192
  %1387 = vmatprep.subr.mxu0 %v215
  %1388 = vmatpush1.msra.mxu0 %v214
  %1389 = vmatprep.subr.mxu0 %v237
  %1390 = vmatpush1.msra.mxu0 %v236
  %1391 = vmatprep.subr.mxu0 %v259
  %1392 = vmatpush1.msra.mxu0 %v258
  %1393 = vmatprep.subr.mxu0 %v281
  %1394 = vmatpush1.msra.mxu0 %v280
  %1395 = vmatprep.subr.mxu0 %v303
  %1396 = vmatpush1.msra.mxu0 %v302
  %1397 = vmatprep.subr.mxu0 %v325
  %1398 = vmatpush1.msra.mxu0 %v324
  %1399 = vmatprep.subr.mxu0 %v347
  %1400 = vmatpush1.msra.mxu0 %v346
  %1401 = vmatprep.subr.mxu0 %v369
  %1402 = vmatpush1.msra.mxu0 %v368
  %1403 = vmatprep.subr.mxu0 %v391
  %1404 = vmatpush1.msra.mxu0 %v390
  %1405 = vmatprep.subr.mxu0 %v413
  %1406 = vmatpush1.msra.mxu0 %v412
  %1407 = vmatprep.subr.mxu0 %v435
  %1408 = vmatpush1.msra.mxu0 %v434
  %1409 = vmatprep.subr.mxu0 %v457
  %1410 = vmatpush1.msra.mxu0 %v456
  %1411 = vmatprep.subr.mxu0 %v479
  %1412 = vmatpush1.msra.mxu0 %v478
  %1413 = vmatprep.subr.mxu0 %v501
  %1414 = vmatpush1.msra.mxu0 %v500
  %1415 = vmatprep.subr.mxu0 %v523
  %1416 = vmatpush1.msra.mxu0 %v522
  %1417 = vmatprep.subr.mxu0 %v545
  %1418 = vmatpush1.msra.mxu0 %v544
  %1419 = vmatprep.subr.mxu0 %v567
  %1420 = vmatpush1.msra.mxu0 %v566
  %1421 = vmatprep.subr.mxu0 %v589
  %1422 = vmatpush1.msra.mxu0 %v588
  %1423 = vmatprep.subr.mxu0 %v611
  %1424 = vmatpush1.msra.mxu0 %v610
  %1425 = vmatprep.subr.mxu0 0.0
  %1426 = vmatpush1.msra.mxu0 0.0
  %1427 = vmatprep.subr.mxu0 0.0
  %1428 = vmatpush1.msra.mxu0 0.0
  %1429 = vmatprep.subr.mxu0 0.0
  %1430 = vmatpush1.msra.mxu0 0.0
  %1431 = vmatprep.subr.mxu0 0.0
  %1432 = vmatpush1.msra.mxu0 0.0
  %1433 = vmatprep.subr.mxu0 0.0
  %1434 = vmatpush1.msra.mxu0 0.0
  %1435 = vmatprep.mubr.f32.mxu0 %v616
  %1436 = vmatmul.mubr.f32.gmra.mrb[0].mxu0 %v14
  %v1437 = vpop.f32.mrb[0].mxu0
  %v1438 = vadd.f32 0.0, %v1437
  %v1439 = vpop.f32.mrb[0].mxu0
  %v1440 = vadd.f32 0.0, %v1439
  %1441 = vmatprep.mubr.f32.mxu0 %v619
  %1442 = vmatmul.mubr.f32.gmra.mrb[0].mxu0 %v16
  %v1443 = vpop.f32.mrb[0].mxu0
  %v1444 = vadd.f32 0.0, %v1443
  %v1445 = vpop.f32.mrb[0].mxu0
  %v1446 = vadd.f32 0.0, %v1445
  %1447 = vmatprep.mubr.f32.mxu0 %v622
  %1448 = vmatmul.mubr.f32.gmra.mrb[0].mxu0 %v18
  %v1449 = vpop.f32.mrb[0].mxu0
  %v1450 = vadd.f32 0.0, %v1449
  %v1451 = vpop.f32.mrb[0].mxu0
  %v1452 = vadd.f32 0.0, %v1451
  %1453 = vdwg.mxu0
  %1454 = vmatprep.subr.mxu0 %v41
  %1455 = vmatpush1.msra.mxu0 %v40
  %1456 = vmatprep.subr.mxu0 %v63
  %1457 = vmatpush1.msra.mxu0 %v62
  %1458 = vmatprep.subr.mxu0 %v85
  %1459 = vmatpush1.msra.mxu0 %v84
  %1460 = vmatprep.subr.mxu0 %v107
  %1461 = vmatpush1.msra.mxu0 %v106
  %1462 = vmatprep.subr.mxu0 %v129
  %1463 = vmatpush1.msra.mxu0 %v128
  %1464 = vmatprep.subr.mxu0 %v151
  %1465 = vmatpush1.msra.mxu0 %v150
  %1466 = vmatprep.subr.mxu0 %v173
  %1467 = vmatpush1.msra.mxu0 %v172
  %1468 = vmatprep.subr.mxu0 %v195
  %1469 = vmatpush1.msra.mxu0 %v194
  %1470 = vmatprep.subr.mxu0 %v217
  %1471 = vmatpush1.msra.mxu0 %v216
  %1472 = vmatprep.subr.mxu0 %v239
  %1473 = vmatpush1.msra.mxu0 %v238
  %1474 = vmatprep.subr.mxu0 %v261
  %1475 = vmatpush1.msra.mxu0 %v260
  %1476 = vmatprep.subr.mxu0 %v283
  %1477 = vmatpush1.msra.mxu0 %v282
  %1478 = vmatprep.subr.mxu0 %v305
  %1479 = vmatpush1.msra.mxu0 %v304
  %1480 = vmatprep.subr.mxu0 %v327
  %1481 = vmatpush1.msra.mxu0 %v326
  %1482 = vmatprep.subr.mxu0 %v349
  %1483 = vmatpush1.msra.mxu0 %v348
  %1484 = vmatprep.subr.mxu0 %v371
  %1485 = vmatpush1.msra.mxu0 %v370
  %1486 = vmatprep.subr.mxu0 %v393
  %1487 = vmatpush1.msra.mxu0 %v392
  %1488 = vmatprep.subr.mxu0 %v415
  %1489 = vmatpush1.msra.mxu0 %v414
  %1490 = vmatprep.subr.mxu0 %v437
  %1491 = vmatpush1.msra.mxu0 %v436
  %1492 = vmatprep.subr.mxu0 %v459
  %1493 = vmatpush1.msra.mxu0 %v458
  %1494 = vmatprep.subr.mxu0 %v481
  %1495 = vmatpush1.msra.mxu0 %v480
  %1496 = vmatprep.subr.mxu0 %v503
  %1497 = vmatpush1.msra.mxu0 %v502
  %1498 = vmatprep.subr.mxu0 %v525
  %1499 = vmatpush1.msra.mxu0 %v524
  %1500 = vmatprep.subr.mxu0 %v547
  %1501 = vmatpush1.msra.mxu0 %v546
  %1502 = vmatprep.subr.mxu0 %v569
  %1503 = vmatpush1.msra.mxu0 %v568
  %1504 = vmatprep.subr.mxu0 %v591
  %1505 = vmatpush1.msra.mxu0 %v590
  %1506 = vmatprep.subr.mxu0 %v613
  %1507 = vmatpush1.msra.mxu0 %v612
  %1508 = vmatprep.subr.mxu0 0.0
  %1509 = vmatpush1.msra.mxu0 0.0
  %1510 = vmatprep.subr.mxu0 0.0
  %1511 = vmatpush1.msra.mxu0 0.0
  %1512 = vmatprep.subr.mxu0 0.0
  %1513 = vmatpush1.msra.mxu0 0.0
  %1514 = vmatprep.subr.mxu0 0.0
  %1515 = vmatpush1.msra.mxu0 0.0
  %1516 = vmatprep.subr.mxu0 0.0
  %1517 = vmatpush1.msra.mxu0 0.0
  %1518 = vmatprep.mubr.f32.mxu0 %v616
  %1519 = vmatmul.mubr.f32.gmra.mrb[0].mxu0 %v14
  %v1520 = vpop.f32.mrb[0].mxu0
  %v1521 = vadd.f32 0.0, %v1520
  %v1522 = vpop.f32.mrb[0].mxu0
  %v1523 = vadd.f32 0.0, %v1522
  %1524 = vmatprep.mubr.f32.mxu0 %v619
  %1525 = vmatmul.mubr.f32.gmra.mrb[0].mxu0 %v16
  %v1526 = vpop.f32.mrb[0].mxu0
  %v1527 = vadd.f32 0.0, %v1526
  %v1528 = vpop.f32.mrb[0].mxu0
  %v1529 = vadd.f32 0.0, %v1528
  %1530 = vmatprep.mubr.f32.mxu0 %v622
  %1531 = vmatmul.mubr.f32.gmra.mrb[0].mxu0 %v18
  %v1532 = vpop.f32.mrb[0].mxu0
  %v1533 = vadd.f32 0.0, %v1532
  %v1534 = vpop.f32.mrb[0].mxu0
  %v1535 = vadd.f32 0.0, %v1534
  %1536 = vdwg.mxu0
  %v1537 = vld [vmem:[%s2] sm:$0xff]
  %v1538 = vld [vmem:[%s2 + $0x8] sm:$0xff]
  %v1539 = vld [vmem:[%s2 + $0x10] sm:$0xff]
  %v1540 = vld [vmem:[%s2 + $0x18] sm:$0xff]
  %v1541 = vld [vmem:[%s2 + $0x20] sm:$0xff]
  %v1542 = vld [vmem:[%s2 + $0x28] sm:$0xff]
  %v1543 = vld [vmem:[%s2 + $0x30] sm:$0xff]
  %v1544 = vld [vmem:[%s2 + $0x38] sm:$0xff]
  %v1545 = vld [vmem:[%s2 + $0x40] sm:$0xff]
  %v1546 = vld [vmem:[%s2 + $0x48] sm:$0xff]
  %v1547 = vld [vmem:[%s2 + $0x50] sm:$0xff]
  %v1548 = vld [vmem:[%s2 + $0x58] sm:$0xff]
  %v1549 = vld [vmem:[%s2 + $0x60] sm:$0xff]
  %v1550 = vld [vmem:[%s2 + $0x68] sm:$0xff]
  %v1551 = vld [vmem:[%s2 + $0x70] sm:$0xff]
  %v1552 = vld [vmem:[%s2 + $0x78] sm:$0xff]
  %v1553 = vld [vmem:[%s2 + $0x80] sm:$0xff]
  %v1554 = vld [vmem:[%s2 + $0x88] sm:$0xff]
  %v1555 = vld [vmem:[%s2 + $0x90] sm:$0xff]
  %v1556 = vld [vmem:[%s2 + $0x98] sm:$0xff]
  %v1557 = vld [vmem:[%s2 + $0xa0] sm:$0xff]
  %v1558 = vld [vmem:[%s2 + $0xa8] sm:$0xff]
  %v1559 = vld [vmem:[%s2 + $0xb0] sm:$0xff]
  %v1560 = vld [vmem:[%s2 + $0xb8] sm:$0xff]
  %v1561 = vld [vmem:[%s2 + $0xc0] sm:$0xff]
  %v1562 = vld [vmem:[%s2 + $0xc8] sm:$0xff]
  %v1563 = vld [vmem:[%s2 + $0xd0] sm:$0xff]
  %v1564 = vld [vmem:[%s2 + $0xd8] sm:$0xff]
  %v1565 = vld [vmem:[%s2 + $0xe0] sm:$0xff]
  %v1566 = vld [vmem:[%s2 + $0xe8] sm:$0xff]
  %v1567 = vld [vmem:[%s2 + $0xf0] sm:$0xff]
  %v1568 = vld [vmem:[%s2 + $0xf8] sm:$0xff]
  %v1569 = vld [vmem:[%s2 + $0x100] sm:$0xff]
  %v1570 = vld [vmem:[%s2 + $0x108] sm:$0xff]
  %v1571 = vld [vmem:[%s2 + $0x110] sm:$0xff]
  %v1572 = vld [vmem:[%s2 + $0x118] sm:$0xff]
  %v1573 = vld [vmem:[%s2 + $0x120] sm:$0xff]
  %v1574 = vld [vmem:[%s2 + $0x128] sm:$0xff]
  %v1575 = vld [vmem:[%s2 + $0x130] sm:$0xff]
  %v1576 = vld [vmem:[%s2 + $0x138] sm:$0xff]
  %v1577 = vld [vmem:[%s2 + $0x140] sm:$0xff]
  %v1578 = vld [vmem:[%s2 + $0x148] sm:$0xff]
  %v1579 = vld [vmem:[%s2 + $0x150] sm:$0xff]
  %v1580 = vld [vmem:[%s2 + $0x158] sm:$0xff]
  %v1581 = vld [vmem:[%s2 + $0x160] sm:$0xff]
  %v1582 = vld [vmem:[%s2 + $0x168] sm:$0xff]
  %v1583 = vld [vmem:[%s2 + $0x170] sm:$0xff]
  %v1584 = vld [vmem:[%s2 + $0x178] sm:$0xff]
  %v1585 = vld [vmem:[%s2 + $0x180] sm:$0xff]
  %v1586 = vld [vmem:[%s2 + $0x188] sm:$0xff]
  %v1587 = vld [vmem:[%s2 + $0x190] sm:$0xff]
  %v1588 = vld [vmem:[%s2 + $0x198] sm:$0xff]
  %v1589 = vld [vmem:[%s2 + $0x1a0] sm:$0xff]
  %v1590 = vld [vmem:[%s2 + $0x1a8] sm:$0xff]
  %v1591 = vld [vmem:[%s2 + $0x1b0] sm:$0xff]
  %v1592 = vld [vmem:[%s2 + $0x1b8] sm:$0xff]
  %v1593 = vld [vmem:[%s2 + $0x1c0] sm:$0xff]
  %v1594 = vld [vmem:[%s2 + $0x1c8] sm:$0xff]
  %v1595 = vld [vmem:[%s2 + $0x1d0] sm:$0xff]
  %v1596 = vld [vmem:[%s2 + $0x1d8] sm:$0xff]
  %v1597 = vld [vmem:[%s2 + $0x1e0] sm:$0xff]
  %v1598 = vld [vmem:[%s2 + $0x1e8] sm:$0xff]
  %v1599 = vld [vmem:[%s2 + $0x1f0] sm:$0xff]
  %v1600 = vld [vmem:[%s2 + $0x1f8] sm:$0xff]
  %v1601 = vld [vmem:[%s2 + $0x200] sm:$0xff]
  %v1602 = vld [vmem:[%s2 + $0x208] sm:$0xff]
  %vm1603 = vcmp.gt.f32.partialorder %v1537, 0.0
  %vm1604 = vcmp.gt.f32.partialorder %v1538, 0.0
  %vm1605 = vcmp.gt.f32.partialorder %v1539, 0.0
  %vm1606 = vcmp.gt.f32.partialorder %v1540, 0.0
  %vm1607 = vcmp.gt.f32.partialorder %v1541, 0.0
  %vm1608 = vcmp.gt.f32.partialorder %v1542, 0.0
  %vm1609 = vcmp.gt.f32.partialorder %v1543, 0.0
  %vm1610 = vcmp.gt.f32.partialorder %v1544, 0.0
  %vm1611 = vcmp.gt.f32.partialorder %v1545, 0.0
  %vm1612 = vcmp.gt.f32.partialorder %v1546, 0.0
  %vm1613 = vcmp.gt.f32.partialorder %v1547, 0.0
  %vm1614 = vcmp.gt.f32.partialorder %v1548, 0.0
  %vm1615 = vcmp.gt.f32.partialorder %v1549, 0.0
  %vm1616 = vcmp.gt.f32.partialorder %v1550, 0.0
  %vm1617 = vcmp.gt.f32.partialorder %v1551, 0.0
  %vm1618 = vcmp.gt.f32.partialorder %v1552, 0.0
  %vm1619 = vcmp.gt.f32.partialorder %v1553, 0.0
  %vm1620 = vcmp.gt.f32.partialorder %v1554, 0.0
  %vm1621 = vcmp.gt.f32.partialorder %v1555, 0.0
  %vm1622 = vcmp.gt.f32.partialorder %v1556, 0.0
  %vm1623 = vcmp.gt.f32.partialorder %v1557, 0.0
  %vm1624 = vcmp.gt.f32.partialorder %v1558, 0.0
  %vm1625 = vcmp.gt.f32.partialorder %v1559, 0.0
  %vm1626 = vcmp.gt.f32.partialorder %v1560, 0.0
  %vm1627 = vcmp.gt.f32.partialorder %v1561, 0.0
  %vm1628 = vcmp.gt.f32.partialorder %v1562, 0.0
  %vm1629 = vcmp.gt.f32.partialorder %v1563, 0.0
  %vm1630 = vcmp.gt.f32.partialorder %v1564, 0.0
  %vm1631 = vcmp.gt.f32.partialorder %v1565, 0.0
  %vm1632 = vcmp.gt.f32.partialorder %v1566, 0.0
  %vm1633 = vcmp.gt.f32.partialorder %v1567, 0.0
  %vm1634 = vcmp.gt.f32.partialorder %v1568, 0.0
  %vm1635 = vcmp.gt.f32.partialorder %v1569, 0.0
  %vm1636 = vcmp.gt.f32.partialorder %v1570, 0.0
  %vm1637 = vcmp.gt.f32.partialorder %v1571, 0.0
  %vm1638 = vcmp.gt.f32.partialorder %v1572, 0.0
  %vm1639 = vcmp.gt.f32.partialorder %v1573, 0.0
  %vm1640 = vcmp.gt.f32.partialorder %v1574, 0.0
  %vm1641 = vcmp.gt.f32.partialorder %v1575, 0.0
  %vm1642 = vcmp.gt.f32.partialorder %v1576, 0.0
  %vm1643 = vcmp.gt.f32.partialorder %v1577, 0.0
  %vm1644 = vcmp.gt.f32.partialorder %v1578, 0.0
  %vm1645 = vcmp.gt.f32.partialorder %v1579, 0.0
  %vm1646 = vcmp.gt.f32.partialorder %v1580, 0.0
  %vm1647 = vcmp.gt.f32.partialorder %v1581, 0.0
  %vm1648 = vcmp.gt.f32.partialorder %v1582, 0.0
  %vm1649 = vcmp.gt.f32.partialorder %v1583, 0.0
  %vm1650 = vcmp.gt.f32.partialorder %v1584, 0.0
  %vm1651 = vcmp.gt.f32.partialorder %v1585, 0.0
  %vm1652 = vcmp.gt.f32.partialorder %v1586, 0.0
  %vm1653 = vcmp.gt.f32.partialorder %v1587, 0.0
  %vm1654 = vcmp.gt.f32.partialorder %v1588, 0.0
  %vm1655 = vcmp.gt.f32.partialorder %v1589, 0.0
  %vm1656 = vcmp.gt.f32.partialorder %v1590, 0.0
  %vm1657 = vcmp.gt.f32.partialorder %v1591, 0.0
  %vm1658 = vcmp.gt.f32.partialorder %v1592, 0.0
  %vm1659 = vcmp.gt.f32.partialorder %v1593, 0.0
  %vm1660 = vcmp.gt.f32.partialorder %v1594, 0.0
  %vm1661 = vcmp.gt.f32.partialorder %v1595, 0.0
  %vm1662 = vcmp.gt.f32.partialorder %v1596, 0.0
  %vm1663 = vcmp.gt.f32.partialorder %v1597, 0.0
  %vm1664 = vcmp.gt.f32.partialorder %v1598, 0.0
  %vm1665 = vcmp.gt.f32.partialorder %v1599, 0.0
  %vm1666 = vcmp.gt.f32.partialorder %v1600, 0.0
  %vm1667 = vcmp.gt.f32.partialorder %v1601, 0.0
  %vm1668 = vcmp.gt.f32.partialorder %v1602, 0.0
  %v1669 = vsel %vm1603, %v691, 0.0
  %v1670 = vsel %vm1604, %v693, 0.0
  %v1671 = vsel %vm1605, %v774, 0.0
  %v1672 = vsel %vm1606, %v776, 0.0
  %v1673 = vsel %vm1607, %v857, 0.0
  %v1674 = vsel %vm1608, %v859, 0.0
  %v1675 = vsel %vm1609, %v940, 0.0
  %v1676 = vsel %vm1610, %v942, 0.0
  %v1677 = vsel %vm1611, %v1023, 0.0
  %v1678 = vsel %vm1612, %v1025, 0.0
  %v1679 = vsel %vm1613, %v1106, 0.0
  %v1680 = vsel %vm1614, %v1108, 0.0
  %v1681 = vsel %vm1615, %v1189, 0.0
  %v1682 = vsel %vm1616, %v1191, 0.0
  %v1683 = vsel %vm1617, %v1272, 0.0
  %v1684 = vsel %vm1618, %v1274, 0.0
  %v1685 = vsel %vm1619, %v1355, 0.0
  %v1686 = vsel %vm1620, %v1357, 0.0
  %v1687 = vsel %vm1621, %v1438, 0.0
  %v1688 = vsel %vm1622, %v1440, 0.0
  %v1689 = vsel %vm1623, %v1521, 0.0
  %v1690 = vsel %vm1624, %v1523, 0.0
  %v1691 = vsel %vm1625, %v697, 0.0
  %v1692 = vsel %vm1626, %v699, 0.0
  %v1693 = vsel %vm1627, %v780, 0.0
  %v1694 = vsel %vm1628, %v782, 0.0
  %v1695 = vsel %vm1629, %v863, 0.0
  %v1696 = vsel %vm1630, %v865, 0.0
  %v1697 = vsel %vm1631, %v946, 0.0
  %v1698 = vsel %vm1632, %v948, 0.0
  %v1699 = vsel %vm1633, %v1029, 0.0
  %v1700 = vsel %vm1634, %v1031, 0.0
  %v1701 = vsel %vm1635, %v1112, 0.0
  %v1702 = vsel %vm1636, %v1114, 0.0
  %v1703 = vsel %vm1637, %v1195, 0.0
  %v1704 = vsel %vm1638, %v1197, 0.0
  %v1705 = vsel %vm1639, %v1278, 0.0
  %v1706 = vsel %vm1640, %v1280, 0.0
  %v1707 = vsel %vm1641, %v1361, 0.0
  %v1708 = vsel %vm1642, %v1363, 0.0
  %v1709 = vsel %vm1643, %v1444, 0.0
  %v1710 = vsel %vm1644, %v1446, 0.0
  %v1711 = vsel %vm1645, %v1527, 0.0
  %v1712 = vsel %vm1646, %v1529, 0.0
  %v1713 = vsel %vm1647, %v703, 0.0
  %v1714 = vsel %vm1648, %v705, 0.0
  %v1715 = vsel %vm1649, %v786, 0.0
  %v1716 = vsel %vm1650, %v788, 0.0
  %v1717 = vsel %vm1651, %v869, 0.0
  %v1718 = vsel %vm1652, %v871, 0.0
  %v1719 = vsel %vm1653, %v952, 0.0
  %v1720 = vsel %vm1654, %v954, 0.0
  %v1721 = vsel %vm1655, %v1035, 0.0
  %v1722 = vsel %vm1656, %v1037, 0.0
  %v1723 = vsel %vm1657, %v1118, 0.0
  %v1724 = vsel %vm1658, %v1120, 0.0
  %v1725 = vsel %vm1659, %v1201, 0.0
  %v1726 = vsel %vm1660, %v1203, 0.0
  %v1727 = vsel %vm1661, %v1284, 0.0
  %v1728 = vsel %vm1662, %v1286, 0.0
  %v1729 = vsel %vm1663, %v1367, 0.0
  %v1730 = vsel %vm1664, %v1369, 0.0
  %v1731 = vsel %vm1665, %v1450, 0.0
  %v1732 = vsel %vm1666, %v1452, 0.0
  %v1733 = vsel %vm1667, %v1533, 0.0
  %v1734 = vsel %vm1668, %v1535, 0.0
  %1735 = vst [vmem:[%s3] sm:$0xff] %v1669
  %1736 = vst [vmem:[%s3 + $0x8] sm:$0xff] %v1670
  %1737 = vst [vmem:[%s3 + $0x10] sm:$0xff] %v1671
  %1738 = vst [vmem:[%s3 + $0x18] sm:$0xff] %v1672
  %1739 = vst [vmem:[%s3 + $0x20] sm:$0xff] %v1673
  %1740 = vst [vmem:[%s3 + $0x28] sm:$0xff] %v1674
  %1741 = vst [vmem:[%s3 + $0x30] sm:$0xff] %v1675
  %1742 = vst [vmem:[%s3 + $0x38] sm:$0xff] %v1676
  %1743 = vst [vmem:[%s3 + $0x40] sm:$0xff] %v1677
  %1744 = vst [vmem:[%s3 + $0x48] sm:$0xff] %v1678
  %1745 = vst [vmem:[%s3 + $0x50] sm:$0xff] %v1679
  %1746 = vst [vmem:[%s3 + $0x58] sm:$0xff] %v1680
  %1747 = vst [vmem:[%s3 + $0x60] sm:$0xff] %v1681
  %1748 = vst [vmem:[%s3 + $0x68] sm:$0xff] %v1682
  %1749 = vst [vmem:[%s3 + $0x70] sm:$0xff] %v1683
  %1750 = vst [vmem:[%s3 + $0x78] sm:$0xff] %v1684
  %1751 = vst [vmem:[%s3 + $0x80] sm:$0xff] %v1685
  %1752 = vst [vmem:[%s3 + $0x88] sm:$0xff] %v1686
  %1753 = vst [vmem:[%s3 + $0x90] sm:$0xff] %v1687
  %1754 = vst [vmem:[%s3 + $0x98] sm:$0xff] %v1688
  %1755 = vst [vmem:[%s3 + $0xa0] sm:$0xff] %v1689
  %1756 = vst [vmem:[%s3 + $0xa8] sm:$0xff] %v1690
  %1757 = vst [vmem:[%s3 + $0xb0] sm:$0xff] %v1691
  %1758 = vst [vmem:[%s3 + $0xb8] sm:$0xff] %v1692
  %1759 = vst [vmem:[%s3 + $0xc0] sm:$0xff] %v1693
  %1760 = vst [vmem:[%s3 + $0xc8] sm:$0xff] %v1694
  %1761 = vst [vmem:[%s3 + $0xd0] sm:$0xff] %v1695
  %1762 = vst [vmem:[%s3 + $0xd8] sm:$0xff] %v1696
  %1763 = vst [vmem:[%s3 + $0xe0] sm:$0xff] %v1697
  %1764 = vst [vmem:[%s3 + $0xe8] sm:$0xff] %v1698
  %1765 = vst [vmem:[%s3 + $0xf0] sm:$0xff] %v1699
  %1766 = vst [vmem:[%s3 + $0xf8] sm:$0xff] %v1700
  %1767 = vst [vmem:[%s3 + $0x100] sm:$0xff] %v1701
  %1768 = vst [vmem:[%s3 + $0x108] sm:$0xff] %v1702
  %1769 = vst [vmem:[%s3 + $0x110] sm:$0xff] %v1703
  %1770 = vst [vmem:[%s3 + $0x118] sm:$0xff] %v1704
  %1771 = vst [vmem:[%s3 + $0x120] sm:$0xff] %v1705
  %1772 = vst [vmem:[%s3 + $0x128] sm:$0xff] %v1706
  %1773 = vst [vmem:[%s3 + $0x130] sm:$0xff] %v1707
  %1774 = vst [vmem:[%s3 + $0x138] sm:$0xff] %v1708
  %1775 = vst [vmem:[%s3 + $0x140] sm:$0xff] %v1709
  %1776 = vst [vmem:[%s3 + $0x148] sm:$0xff] %v1710
  %1777 = vst [vmem:[%s3 + $0x150] sm:$0xff] %v1711
  %1778 = vst [vmem:[%s3 + $0x158] sm:$0xff] %v1712
  %1779 = vst [vmem:[%s3 + $0x160] sm:$0xff] %v1713
  %1780 = vst [vmem:[%s3 + $0x168] sm:$0xff] %v1714
  %1781 = vst [vmem:[%s3 + $0x170] sm:$0xff] %v1715
  %1782 = vst [vmem:[%s3 + $0x178] sm:$0xff] %v1716
  %1783 = vst [vmem:[%s3 + $0x180] sm:$0xff] %v1717
  %1784 = vst [vmem:[%s3 + $0x188] sm:$0xff] %v1718
  %1785 = vst [vmem:[%s3 + $0x190] sm:$0xff] %v1719
  %1786 = vst [vmem:[%s3 + $0x198] sm:$0xff] %v1720
  %1787 = vst [vmem:[%s3 + $0x1a0] sm:$0xff] %v1721
  %1788 = vst [vmem:[%s3 + $0x1a8] sm:$0xff] %v1722
  %1789 = vst [vmem:[%s3 + $0x1b0] sm:$0xff] %v1723
  %1790 = vst [vmem:[%s3 + $0x1b8] sm:$0xff] %v1724
  %1791 = vst [vmem:[%s3 + $0x1c0] sm:$0xff] %v1725
  %1792 = vst [vmem:[%s3 + $0x1c8] sm:$0xff] %v1726
  %1793 = vst [vmem:[%s3 + $0x1d0] sm:$0xff] %v1727
  %1794 = vst [vmem:[%s3 + $0x1d8] sm:$0xff] %v1728
  %1795 = vst [vmem:[%s3 + $0x1e0] sm:$0xff] %v1729
  %1796 = vst [vmem:[%s3 + $0x1e8] sm:$0xff] %v1730
  %1797 = vst [vmem:[%s3 + $0x1f0] sm:$0xff] %v1731
  %1798 = vst [vmem:[%s3 + $0x1f8] sm:$0xff] %v1732
  %1799 = vst [vmem:[%s3 + $0x200] sm:$0xff] %v1733
  %1800 = vst [vmem:[%s3 + $0x208] sm:$0xff] %v1734
  // Predicated region
  $region14: #{forward.18} parent=0 // pred_check
    _
  $region15: #{forward.18} parent=0 // pred_check_branch
    %1802 = sbr.rel (0) target = $region17
  $region16: #{forward.18} parent=0 // pred_region
    _
  $region17: #{forward.18} parent=0 // pred_fallthru
    _
  // Predicated region
  $region18: #{forward.18} parent=0 // pred_check
    _
  $region19: #{forward.18} parent=0 // pred_check_branch
    %1804 = sbr.rel (0) target = $region21
  $region20: #{forward.18} parent=0 // pred_region
    _
  $region21: #{forward.18} parent=0 // pred_fallthru
    _

// kernel: forward.22
$region0: #{forward.22}
  #allocation0 [shape = 'u32[]', space=smem, size = 0x4, offset = 0x4, fixed_abs, tag = 'smem constant byte address 0x4 - core index']
  #allocation1 [shape = 'u32[144,128]{1,0:T(1,128)}', space=vmem, size = 0x12000, scoped, tag = 'internal scratch']
  %s0 = inlined_call_operand.vmem [shape: f32[24,18,256], index: 0, kind: input, shape index: {}]
  %s1 = inlined_call_operand.vmem [shape: f32[11,24,256], index: 1, kind: input, shape index: {}]
  %s2 = inlined_call_operand.vmem [shape: f32[11,18,256], index: 2, kind: output, shape index: {}]
  %s3 = sld [smem:[#allocation0]]
  $region41: #{forward.22} parent=0
    _
  %s5 = ssub.s32 1, %s3
  %s6 = scalar_select 0, %s5, %s3
  loop: start=0, step=1, limit=13
  $region2: #{forward.22} parent=0 // loop_pre_header
    _
  $region3: #{forward.22} parent=0 // loop_header
    %s8 = sphi 0, %s12
    %p9 = scmp.ge.s32.totalorder %s8, 13
    %s16 = sphi 0, %s16
    %s18 = sphi 0, %s16
    %s19 = sphi 0, %s18
    %s33 = sphi 0, %s19
    %s39 = sphi 0, %s41
    %s42 = sphi 0, %s39
    %s43 = sphi 0, %s42
    %s59 = sphi 0, %s43
    %s65 = sphi 0, %s67
    %s68 = sphi 0, %s65
    %s69 = sphi 0, %s68
    %s85 = sphi 0, %s69
  $region4: #{forward.22} parent=0 // loop_header_branch
    %11 = sbr.rel (%p9) target = $region8
  $region5: #{forward.22} parent=0 // loop_body
    %s13 = ssub.s32 %s8, 1
    %s14 = ssub.s32 %s8, 2
    %s15 = sadd.s32 %s8, 1
    %s17 = sadd.s32 %s16, 1
    %p20 = scmp.eq.s32.totalorder %s8, 10
    %p21 = scmp.ne.s32.totalorder %s16, %s18
    %p22 = scmp.eq.s32.totalorder %s8, 0
    %p23 = por %p21, %p22
    %p24 = scmp.ne.s32.totalorder %s16, %s18
    %p25 = scmp.eq.s32.totalorder %s13, 10
    %p26 = por %p24, %p25
    %p27 = scmp.ne.s32.totalorder %s18, %s19
    %p28 = scmp.eq.s32.totalorder %s13, 0
    %p29 = por %p27, %p28
    %p30 = scmp.ne.s32.totalorder %s18, %s19
    %p31 = scmp.eq.s32.totalorder %s14, 10
    %p32 = por %p30, %p31
    %p34 = scmp.ne.s32.totalorder %s19, %s33
    %p35 = scmp.eq.s32.totalorder %s14, 0
    %p36 = por %p34, %p35
    %s37 = ssub.s32 %s8, %s15
    %p38 = scmp.eq.s32.totalorder %s37, 0
    %s40 = sadd.s32 %s39, 1
    %s41 = scalar_select %p38, %s39, %s40
    %p44 = pneg %p38
    %p45 = scmp.eq.s32.totalorder %s8, 10
    %p46 = por %p44, %p45
    %p47 = scmp.ne.s32.totalorder %s39, %s42
    %p48 = scmp.eq.s32.totalorder %s8, 0
    %p49 = por %p47, %p48
    %p50 = scmp.ne.s32.totalorder %s39, %s42
    %p51 = scmp.eq.s32.totalorder %s13, 10
    %p52 = por %p50, %p51
    %p53 = scmp.ne.s32.totalorder %s42, %s43
    %p54 = scmp.eq.s32.totalorder %s13, 0
    %p55 = por %p53, %p54
    %p56 = scmp.ne.s32.totalorder %s42, %s43
    %p57 = scmp.eq.s32.totalorder %s14, 10
    %p58 = por %p56, %p57
    %p60 = scmp.ne.s32.totalorder %s43, %s59
    %p61 = scmp.eq.s32.totalorder %s14, 0
    %p62 = por %p60, %p61
    %s63 = ssub.s32 %s8, %s15
    %p64 = scmp.eq.s32.totalorder %s63, 0
    %s66 = sadd.s32 %s65, 1
    %s67 = scalar_select %p64, %s65, %s66
    %p70 = pneg %p64
    %p71 = scmp.eq.s32.totalorder %s8, 10
    %p72 = por %p70, %p71
    %p73 = scmp.ne.s32.totalorder %s65, %s68
    %p74 = scmp.eq.s32.totalorder %s8, 0
    %p75 = por %p73, %p74
    %p76 = scmp.ne.s32.totalorder %s65, %s68
    %p77 = scmp.eq.s32.totalorder %s13, 10
    %p78 = por %p76, %p77
    %p79 = scmp.ne.s32.totalorder %s68, %s69
    %p80 = scmp.eq.s32.totalorder %s13, 0
    %p81 = por %p79, %p80
    %p82 = scmp.ne.s32.totalorder %s68, %s69
    %p83 = scmp.eq.s32.totalorder %s14, 10
    %p84 = por %p82, %p83
    %p86 = scmp.ne.s32.totalorder %s69, %s85
    %p87 = scmp.eq.s32.totalorder %s14, 0
    %p88 = por %p86, %p87
    %p89 = scmp.le.s32.totalorder 1, %s8
    %p90 = scmp.lt.s32.totalorder %s8, 12
    %p91 = pnand %p89, %p90
    %p92 = pneg %p91
    // Predicated region
    $region9: #{forward.22} parent=5 // pred_check
      _
    $region10: #{forward.22} parent=5 // pred_check_branch
      %94 = sbr.rel (%p91) target = $region12
    $region11: #{forward.22} parent=5 // pred_region
      %s95 = ssub.s32 %s8, 1
      // Predicated region
      $region13: #{forward.22} parent=11 // pred_check
        %p96 = pneg %p29
      $region14: #{forward.22} parent=11 // pred_check_branch
        %98 = sbr.rel (%p96) target = $region16
      $region15: #{forward.22} parent=11 // pred_region
        _
      $region16: #{forward.22} parent=11 // pred_fallthru
        _
    $region12: #{forward.22} parent=5 // pred_fallthru
      _
    %p99 = scmp.lt.s32.totalorder %s8, 11
    // Predicated region
    $region17: #{forward.22} parent=5 // pred_check
      %p100 = pneg %p99
    $region18: #{forward.22} parent=5 // pred_check_branch
      %102 = sbr.rel (%p100) target = $region20
    $region19: #{forward.22} parent=5 // pred_region
      // Predicated region
      $region21: #{forward.22} parent=19 // pred_check
        %p103 = pneg %p49
      $region22: #{forward.22} parent=19 // pred_check_branch
        %105 = sbr.rel (%p103) target = $region24
      $region23: #{forward.22} parent=19 // pred_region
        %p106 = scmp.lt.s32.totalorder %s8, 10
        %s107 = scalar_select %p106, %s8, 10
        %s108 = smul.addr %s107, 6
        %s109 = smul.addr %s108, 8
        %s110 = scalar_lea.vmem %s1, %s109
      $region24: #{forward.22} parent=19 // pred_fallthru
        _
    $region20: #{forward.22} parent=5 // pred_fallthru
      _
    %p111 = scmp.le.s32.totalorder 1, %s8
    %p112 = scmp.lt.s32.totalorder %s8, 12
    %p113 = pnand %p111, %p112
    %p114 = pneg %p113
    // Predicated region
    $region25: #{forward.22} parent=5 // pred_check
      _
    $region26: #{forward.22} parent=5 // pred_check_branch
      %116 = sbr.rel (%p113) target = $region28
    $region27: #{forward.22} parent=5 // pred_region
      %s117 = ssub.s32 %s8, 1
      %p118 = pneg %p29
      %p119 = pneg %p26
      %p120 = scmp.lt.s32.totalorder %s13, 10
      %s121 = scalar_select %p120, %s13, 10
      %s122 = smul.addr %s121, 6
      %s123 = smul.addr %s122, 8
      %s124 = scalar_lea.vmem %s1, %s123
      %p125 = pneg %p55
      %p126 = pneg %p52
      %p127 = pneg %p81
      %p128 = pneg %p78
      %p129 = scmp.lt.s32.totalorder %s13, 10
      %s130 = scalar_select %p129, %s13, 10
      %s131 = smul.addr %s130, 6
      %s132 = smul.addr %s131, 8
      %s133 = scalar_lea.vmem %s2, %s132
      %p134 = scmp.lt.s32.totalorder %s13, 10
      %s135 = scalar_select %p134, %s13, 10
      %s136 = smul.addr %s135, 6
      %s137 = smul.addr %s136, 8
      %s138 = scalar_lea.vmem %s1, %s137
      %p139 = scmp.lt.s32.totalorder %s13, 10
      %s140 = scalar_select %p139, %s13, 10
      %s141 = smul.addr %s140, 6
      %s142 = smul.addr %s141, 8
      %s143 = scalar_lea.vmem %s2, %s142
      %v144 = vld [vmem:[%s0] sm:$0xff]
      %v145 = vld [vmem:[%s0 + $0x8] sm:$0xff]
      %v146 = vld [vmem:[%s0 + $0x10] sm:$0xff]
      %v147 = vld [vmem:[%s0 + $0x18] sm:$0xff]
      %v148 = vld [vmem:[%s0 + $0x20] sm:$0x3]
      %v149 = vld [vmem:[%s0 + $0x28] sm:$0x3]
      %v150 = vld [vmem:[%s0 + $0x30] sm:$0xff]
      %v151 = vld [vmem:[%s0 + $0x38] sm:$0xff]
      %v152 = vld [vmem:[%s0 + $0x40] sm:$0xff]
      %v153 = vld [vmem:[%s0 + $0x48] sm:$0xff]
      %v154 = vld [vmem:[%s0 + $0x50] sm:$0x3]
      %v155 = vld [vmem:[%s0 + $0x58] sm:$0x3]
      %v156 = vld [vmem:[%s0 + $0x60] sm:$0xff]
      %v157 = vld [vmem:[%s0 + $0x68] sm:$0xff]
      %v158 = vld [vmem:[%s0 + $0x70] sm:$0xff]
      %v159 = vld [vmem:[%s0 + $0x78] sm:$0xff]
      %v160 = vld [vmem:[%s0 + $0x80] sm:$0x3]
      %v161 = vld [vmem:[%s0 + $0x88] sm:$0x3]
      %v162 = vld [vmem:[%s0 + $0x90] sm:$0xff]
      %v163 = vld [vmem:[%s0 + $0x98] sm:$0xff]
      %v164 = vld [vmem:[%s0 + $0xa0] sm:$0xff]
      %v165 = vld [vmem:[%s0 + $0xa8] sm:$0xff]
      %v166 = vld [vmem:[%s0 + $0xb0] sm:$0x3]
      %v167 = vld [vmem:[%s0 + $0xb8] sm:$0x3]
      %v168 = vld [vmem:[%s0 + $0xc0] sm:$0xff]
      %v169 = vld [vmem:[%s0 + $0xc8] sm:$0xff]
      %v170 = vld [vmem:[%s0 + $0xd0] sm:$0xff]
      %v171 = vld [vmem:[%s0 + $0xd8] sm:$0xff]
      %v172 = vld [vmem:[%s0 + $0xe0] sm:$0x3]
      %v173 = vld [vmem:[%s0 + $0xe8] sm:$0x3]
      %v174 = vld [vmem:[%s0 + $0xf0] sm:$0xff]
      %v175 = vld [vmem:[%s0 + $0xf8] sm:$0xff]
      %v176 = vld [vmem:[%s0 + $0x100] sm:$0xff]
      %v177 = vld [vmem:[%s0 + $0x108] sm:$0xff]
      %v178 = vld [vmem:[%s0 + $0x110] sm:$0x3]
      %v179 = vld [vmem:[%s0 + $0x118] sm:$0x3]
      %v180 = vld [vmem:[%s0 + $0x120] sm:$0xff]
      %v181 = vld [vmem:[%s0 + $0x128] sm:$0xff]
      %v182 = vld [vmem:[%s0 + $0x130] sm:$0xff]
      %v183 = vld [vmem:[%s0 + $0x138] sm:$0xff]
      %v184 = vld [vmem:[%s0 + $0x140] sm:$0x3]
      %v185 = vld [vmem:[%s0 + $0x148] sm:$0x3]
      %v186 = vld [vmem:[%s0 + $0x150] sm:$0xff]
      %v187 = vld [vmem:[%s0 + $0x158] sm:$0xff]
      %v188 = vld [vmem:[%s0 + $0x160] sm:$0xff]
      %v189 = vld [vmem:[%s0 + $0x168] sm:$0xff]
      %v190 = vld [vmem:[%s0 + $0x170] sm:$0x3]
      %v191 = vld [vmem:[%s0 + $0x178] sm:$0x3]
      %v192 = vld [vmem:[%s0 + $0x180] sm:$0xff]
      %v193 = vld [vmem:[%s0 + $0x188] sm:$0xff]
      %v194 = vld [vmem:[%s0 + $0x190] sm:$0xff]
      %v195 = vld [vmem:[%s0 + $0x198] sm:$0xff]
      %v196 = vld [vmem:[%s0 + $0x1a0] sm:$0x3]
      %v197 = vld [vmem:[%s0 + $0x1a8] sm:$0x3]
      %v198 = vld [vmem:[%s0 + $0x1b0] sm:$0xff]
      %v199 = vld [vmem:[%s0 + $0x1b8] sm:$0xff]
      %v200 = vld [vmem:[%s0 + $0x1c0] sm:$0xff]
      %v201 = vld [vmem:[%s0 + $0x1c8] sm:$0xff]
      %v202 = vld [vmem:[%s0 + $0x1d0] sm:$0x3]
      %v203 = vld [vmem:[%s0 + $0x1d8] sm:$0x3]
      %v204 = vld [vmem:[%s0 + $0x1e0] sm:$0xff]
      %v205 = vld [vmem:[%s0 + $0x1e8] sm:$0xff]
      %v206 = vld [vmem:[%s0 + $0x1f0] sm:$0xff]
      %v207 = vld [vmem:[%s0 + $0x1f8] sm:$0xff]
      %v208 = vld [vmem:[%s0 + $0x200] sm:$0x3]
      %v209 = vld [vmem:[%s0 + $0x208] sm:$0x3]
      %v210 = vld [vmem:[%s0 + $0x210] sm:$0xff]
      %v211 = vld [vmem:[%s0 + $0x218] sm:$0xff]
      %v212 = vld [vmem:[%s0 + $0x220] sm:$0xff]
      %v213 = vld [vmem:[%s0 + $0x228] sm:$0xff]
      %v214 = vld [vmem:[%s0 + $0x230] sm:$0x3]
      %v215 = vld [vmem:[%s0 + $0x238] sm:$0x3]
      %v216 = vld [vmem:[%s0 + $0x240] sm:$0xff]
      %v217 = vld [vmem:[%s0 + $0x248] sm:$0xff]
      %v218 = vld [vmem:[%s0 + $0x250] sm:$0xff]
      %v219 = vld [vmem:[%s0 + $0x258] sm:$0xff]
      %v220 = vld [vmem:[%s0 + $0x260] sm:$0x3]
      %v221 = vld [vmem:[%s0 + $0x268] sm:$0x3]
      %v222 = vld [vmem:[%s0 + $0x270] sm:$0xff]
      %v223 = vld [vmem:[%s0 + $0x278] sm:$0xff]
      %v224 = vld [vmem:[%s0 + $0x280] sm:$0xff]
      %v225 = vld [vmem:[%s0 + $0x288] sm:$0xff]
      %v226 = vld [vmem:[%s0 + $0x290] sm:$0x3]
      %v227 = vld [vmem:[%s0 + $0x298] sm:$0x3]
      %v228 = vld [vmem:[%s0 + $0x2a0] sm:$0xff]
      %v229 = vld [vmem:[%s0 + $0x2a8] sm:$0xff]
      %v230 = vld [vmem:[%s0 + $0x2b0] sm:$0xff]
      %v231 = vld [vmem:[%s0 + $0x2b8] sm:$0xff]
      %v232 = vld [vmem:[%s0 + $0x2c0] sm:$0x3]
      %v233 = vld [vmem:[%s0 + $0x2c8] sm:$0x3]
      %v234 = vld [vmem:[%s0 + $0x2d0] sm:$0xff]
      %v235 = vld [vmem:[%s0 + $0x2d8] sm:$0xff]
      %v236 = vld [vmem:[%s0 + $0x2e0] sm:$0xff]
      %v237 = vld [vmem:[%s0 + $0x2e8] sm:$0xff]
      %v238 = vld [vmem:[%s0 + $0x2f0] sm:$0x3]
      %v239 = vld [vmem:[%s0 + $0x2f8] sm:$0x3]
      %v240 = vld [vmem:[%s0 + $0x300] sm:$0xff]
      %v241 = vld [vmem:[%s0 + $0x308] sm:$0xff]
      %v242 = vld [vmem:[%s0 + $0x310] sm:$0xff]
      %v243 = vld [vmem:[%s0 + $0x318] sm:$0xff]
      %v244 = vld [vmem:[%s0 + $0x320] sm:$0x3]
      %v245 = vld [vmem:[%s0 + $0x328] sm:$0x3]
      %v246 = vld [vmem:[%s0 + $0x330] sm:$0xff]
      %v247 = vld [vmem:[%s0 + $0x338] sm:$0xff]
      %v248 = vld [vmem:[%s0 + $0x340] sm:$0xff]
      %v249 = vld [vmem:[%s0 + $0x348] sm:$0xff]
      %v250 = vld [vmem:[%s0 + $0x350] sm:$0x3]
      %v251 = vld [vmem:[%s0 + $0x358] sm:$0x3]
      %v252 = vld [vmem:[%s0 + $0x360] sm:$0xff]
      %v253 = vld [vmem:[%s0 + $0x368] sm:$0xff]
      %v254 = vld [vmem:[%s0 + $0x370] sm:$0xff]
      %v255 = vld [vmem:[%s0 + $0x378] sm:$0xff]
      %v256 = vld [vmem:[%s0 + $0x380] sm:$0x3]
      %v257 = vld [vmem:[%s0 + $0x388] sm:$0x3]
      %v258 = vld [vmem:[%s0 + $0x390] sm:$0xff]
      %v259 = vld [vmem:[%s0 + $0x398] sm:$0xff]
      %v260 = vld [vmem:[%s0 + $0x3a0] sm:$0xff]
      %v261 = vld [vmem:[%s0 + $0x3a8] sm:$0xff]
      %v262 = vld [vmem:[%s0 + $0x3b0] sm:$0x3]
      %v263 = vld [vmem:[%s0 + $0x3b8] sm:$0x3]
      %v264 = vld [vmem:[%s0 + $0x3c0] sm:$0xff]
      %v265 = vld [vmem:[%s0 + $0x3c8] sm:$0xff]
      %v266 = vld [vmem:[%s0 + $0x3d0] sm:$0xff]
      %v267 = vld [vmem:[%s0 + $0x3d8] sm:$0xff]
      %v268 = vld [vmem:[%s0 + $0x3e0] sm:$0x3]
      %v269 = vld [vmem:[%s0 + $0x3e8] sm:$0x3]
      %v270 = vld [vmem:[%s0 + $0x3f0] sm:$0xff]
      %v271 = vld [vmem:[%s0 + $0x3f8] sm:$0xff]
      %v272 = vld [vmem:[%s0 + $0x400] sm:$0xff]
      %v273 = vld [vmem:[%s0 + $0x408] sm:$0xff]
      %v274 = vld [vmem:[%s0 + $0x410] sm:$0x3]
      %v275 = vld [vmem:[%s0 + $0x418] sm:$0x3]
      %v276 = vld [vmem:[%s0 + $0x420] sm:$0xff]
      %v277 = vld [vmem:[%s0 + $0x428] sm:$0xff]
      %v278 = vld [vmem:[%s0 + $0x430] sm:$0xff]
      %v279 = vld [vmem:[%s0 + $0x438] sm:$0xff]
      %v280 = vld [vmem:[%s0 + $0x440] sm:$0x3]
      %v281 = vld [vmem:[%s0 + $0x448] sm:$0x3]
      %v282 = vld [vmem:[%s0 + $0x450] sm:$0xff]
      %v283 = vld [vmem:[%s0 + $0x458] sm:$0xff]
      %v284 = vld [vmem:[%s0 + $0x460] sm:$0xff]
      %v285 = vld [vmem:[%s0 + $0x468] sm:$0xff]
      %v286 = vld [vmem:[%s0 + $0x470] sm:$0x3]
      %v287 = vld [vmem:[%s0 + $0x478] sm:$0x3]
      %v288 = vld [vmem:[%s138] sm:$0xff]
      %v289 = vld [vmem:[%s138 + $0x8] sm:$0xff]
      %v290 = vld [vmem:[%s138 + $0x10] sm:$0xff]
      %v291 = vld [vmem:[%s138 + $0x18] sm:$0xff]
      %v292 = vld [vmem:[%s138 + $0x20] sm:$0xff]
      %v293 = vld [vmem:[%s138 + $0x28] sm:$0xff]
      %v300 = vcombine.low %v288, %v289
      %v301 = vcombine.high %v288, %v289
      %v303 = vunpack.c.l.s4 1966171168
      %v304 = vunpack.c.0.s8 %v303
      %v305 = vlaneseq
      %v306 = vshrl.u32 %v305, 7
      %v307 = vsub.s32 %v304, %v306
      %v308 = vrot.slane %v300, %v307
      %v310 = vunpack.c.l.s4 1966171168
      %v311 = vunpack.c.0.s8 %v310
      %v312 = vlaneseq
      %v313 = vshrl.u32 %v312, 7
      %v314 = vsub.s32 %v311, %v313
      %v315 = vrot.slane %v301, %v314
      %v316 = vcombine.high %v308, %v308
      %v317 = vcombine.high %v315, %v315
      %v319 = vunpack.c.l.s4 1966171168
      %v320 = vunpack.c.0.s8 %v319
      %v321 = vlaneseq
      %v322 = vshrl.u32 %v321, 7
      %v323 = vsub.s32 %v320, %v322
      %v324 = vrot.slane %v308, %v323
      %v326 = vunpack.c.l.s4 1966171168
      %v327 = vunpack.c.0.s8 %v326
      %v328 = vlaneseq
      %v329 = vshrl.u32 %v328, 7
      %v330 = vsub.s32 %v327, %v329
      %v331 = vrot.slane %v315, %v330
      %v333 = vunpack.c.l.s4 1966171168
      %v334 = vunpack.c.0.s8 %v333
      %v335 = vlaneseq
      %v336 = vshrl.u32 %v335, 7
      %v337 = vsub.s32 %v334, %v336
      %v338 = vrot.slane %v316, %v337
      %v340 = vunpack.c.l.s4 1966171168
      %v341 = vunpack.c.0.s8 %v340
      %v342 = vlaneseq
      %v343 = vshrl.u32 %v342, 7
      %v344 = vsub.s32 %v341, %v343
      %v345 = vrot.slane %v317, %v344
      %v346 = vcombine.high %v324, %v324
      %v347 = vcombine.high %v331, %v331
      %v348 = vcombine.high %v338, %v338
      %v349 = vcombine.high %v345, %v345
      %v350 = vcombine.low %v290, %v291
      %v351 = vcombine.high %v290, %v291
      %v353 = vunpack.c.l.s4 1966171168
      %v354 = vunpack.c.0.s8 %v353
      %v355 = vlaneseq
      %v356 = vshrl.u32 %v355, 7
      %v357 = vsub.s32 %v354, %v356
      %v358 = vrot.slane %v350, %v357
      %v360 = vunpack.c.l.s4 1966171168
      %v361 = vunpack.c.0.s8 %v360
      %v362 = vlaneseq
      %v363 = vshrl.u32 %v362, 7
      %v364 = vsub.s32 %v361, %v363
      %v365 = vrot.slane %v351, %v364
      %v366 = vcombine.high %v358, %v358
      %v367 = vcombine.high %v365, %v365
      %v369 = vunpack.c.l.s4 1966171168
      %v370 = vunpack.c.0.s8 %v369
      %v371 = vlaneseq
      %v372 = vshrl.u32 %v371, 7
      %v373 = vsub.s32 %v370, %v372
      %v374 = vrot.slane %v358, %v373
      %v376 = vunpack.c.l.s4 1966171168
      %v377 = vunpack.c.0.s8 %v376
      %v378 = vlaneseq
      %v379 = vshrl.u32 %v378, 7
      %v380 = vsub.s32 %v377, %v379
      %v381 = vrot.slane %v365, %v380
      %v383 = vunpack.c.l.s4 1966171168
      %v384 = vunpack.c.0.s8 %v383
      %v385 = vlaneseq
      %v386 = vshrl.u32 %v385, 7
      %v387 = vsub.s32 %v384, %v386
      %v388 = vrot.slane %v366, %v387
      %v390 = vunpack.c.l.s4 1966171168
      %v391 = vunpack.c.0.s8 %v390
      %v392 = vlaneseq
      %v393 = vshrl.u32 %v392, 7
      %v394 = vsub.s32 %v391, %v393
      %v395 = vrot.slane %v367, %v394
      %v396 = vcombine.high %v374, %v374
      %v397 = vcombine.high %v381, %v381
      %v398 = vcombine.high %v388, %v388
      %v399 = vcombine.high %v395, %v395
      %v400 = vcombine.low %v292, %v293
      %v401 = vcombine.high %v292, %v293
      %v403 = vunpack.c.l.s4 1966171168
      %v404 = vunpack.c.0.s8 %v403
      %v405 = vlaneseq
      %v406 = vshrl.u32 %v405, 7
      %v407 = vsub.s32 %v404, %v406
      %v408 = vrot.slane %v400, %v407
      %v410 = vunpack.c.l.s4 1966171168
      %v411 = vunpack.c.0.s8 %v410
      %v412 = vlaneseq
      %v413 = vshrl.u32 %v412, 7
      %v414 = vsub.s32 %v411, %v413
      %v415 = vrot.slane %v401, %v414
      %v416 = vcombine.high %v408, %v408
      %v417 = vcombine.high %v415, %v415
      %v419 = vunpack.c.l.s4 1966171168
      %v420 = vunpack.c.0.s8 %v419
      %v421 = vlaneseq
      %v422 = vshrl.u32 %v421, 7
      %v423 = vsub.s32 %v420, %v422
      %v424 = vrot.slane %v408, %v423
      %v426 = vunpack.c.l.s4 1966171168
      %v427 = vunpack.c.0.s8 %v426
      %v428 = vlaneseq
      %v429 = vshrl.u32 %v428, 7
      %v430 = vsub.s32 %v427, %v429
      %v431 = vrot.slane %v415, %v430
      %v433 = vunpack.c.l.s4 1966171168
      %v434 = vunpack.c.0.s8 %v433
      %v435 = vlaneseq
      %v436 = vshrl.u32 %v435, 7
      %v437 = vsub.s32 %v434, %v436
      %v438 = vrot.slane %v416, %v437
      %v440 = vunpack.c.l.s4 1966171168
      %v441 = vunpack.c.0.s8 %v440
      %v442 = vlaneseq
      %v443 = vshrl.u32 %v442, 7
      %v444 = vsub.s32 %v441, %v443
      %v445 = vrot.slane %v417, %v444
      %v446 = vcombine.high %v424, %v424
      %v447 = vcombine.high %v431, %v431
      %v448 = vcombine.high %v438, %v438
      %v449 = vcombine.high %v445, %v445
      %v450 = vlaneseq
      %v451 = vshrl.u32 %v450, 7
      %v452 = vsub.s32 0, %v451
      %v453 = vrot.slane %v324, %v452
      %v454 = vlaneseq
      %v455 = vshrl.u32 %v454, 7
      %v456 = vsub.s32 1, %v455
      %v457 = vrot.slane %v324, %v456
      %v458 = vlaneseq
      %v459 = vshrl.u32 %v458, 7
      %v460 = vsub.s32 0, %v459
      %v461 = vrot.slane %v338, %v460
      %v462 = vlaneseq
      %v463 = vshrl.u32 %v462, 7
      %v464 = vsub.s32 1, %v463
      %v465 = vrot.slane %v338, %v464
      %v466 = vlaneseq
      %v467 = vshrl.u32 %v466, 7
      %v468 = vsub.s32 0, %v467
      %v469 = vrot.slane %v346, %v468
      %v470 = vlaneseq
      %v471 = vshrl.u32 %v470, 7
      %v472 = vsub.s32 1, %v471
      %v473 = vrot.slane %v346, %v472
      %v474 = vlaneseq
      %v475 = vshrl.u32 %v474, 7
      %v476 = vsub.s32 0, %v475
      %v477 = vrot.slane %v348, %v476
      %v478 = vlaneseq
      %v479 = vshrl.u32 %v478, 7
      %v480 = vsub.s32 1, %v479
      %v481 = vrot.slane %v348, %v480
      %v482 = vlaneseq
      %v483 = vshrl.u32 %v482, 7
      %v484 = vsub.s32 0, %v483
      %v485 = vrot.slane %v331, %v484
      %v486 = vlaneseq
      %v487 = vshrl.u32 %v486, 7
      %v488 = vsub.s32 1, %v487
      %v489 = vrot.slane %v331, %v488
      %v490 = vlaneseq
      %v491 = vshrl.u32 %v490, 7
      %v492 = vsub.s32 0, %v491
      %v493 = vrot.slane %v345, %v492
      %v494 = vlaneseq
      %v495 = vshrl.u32 %v494, 7
      %v496 = vsub.s32 1, %v495
      %v497 = vrot.slane %v345, %v496
      %v498 = vlaneseq
      %v499 = vshrl.u32 %v498, 7
      %v500 = vsub.s32 0, %v499
      %v501 = vrot.slane %v347, %v500
      %v502 = vlaneseq
      %v503 = vshrl.u32 %v502, 7
      %v504 = vsub.s32 1, %v503
      %v505 = vrot.slane %v347, %v504
      %v506 = vlaneseq
      %v507 = vshrl.u32 %v506, 7
      %v508 = vsub.s32 0, %v507
      %v509 = vrot.slane %v349, %v508
      %v510 = vlaneseq
      %v511 = vshrl.u32 %v510, 7
      %v512 = vsub.s32 1, %v511
      %v513 = vrot.slane %v349, %v512
      %v514 = vlaneseq
      %v515 = vshrl.u32 %v514, 7
      %v516 = vsub.s32 0, %v515
      %v517 = vrot.slane %v374, %v516
      %v518 = vlaneseq
      %v519 = vshrl.u32 %v518, 7
      %v520 = vsub.s32 1, %v519
      %v521 = vrot.slane %v374, %v520
      %v522 = vlaneseq
      %v523 = vshrl.u32 %v522, 7
      %v524 = vsub.s32 0, %v523
      %v525 = vrot.slane %v388, %v524
      %v526 = vlaneseq
      %v527 = vshrl.u32 %v526, 7
      %v528 = vsub.s32 1, %v527
      %v529 = vrot.slane %v388, %v528
      %v530 = vlaneseq
      %v531 = vshrl.u32 %v530, 7
      %v532 = vsub.s32 0, %v531
      %v533 = vrot.slane %v396, %v532
      %v534 = vlaneseq
      %v535 = vshrl.u32 %v534, 7
      %v536 = vsub.s32 1, %v535
      %v537 = vrot.slane %v396, %v536
      %v538 = vlaneseq
      %v539 = vshrl.u32 %v538, 7
      %v540 = vsub.s32 0, %v539
      %v541 = vrot.slane %v398, %v540
      %v542 = vlaneseq
      %v543 = vshrl.u32 %v542, 7
      %v544 = vsub.s32 1, %v543
      %v545 = vrot.slane %v398, %v544
      %v546 = vlaneseq
      %v547 = vshrl.u32 %v546, 7
      %v548 = vsub.s32 0, %v547
      %v549 = vrot.slane %v381, %v548
      %v550 = vlaneseq
      %v551 = vshrl.u32 %v550, 7
      %v552 = vsub.s32 1, %v551
      %v553 = vrot.slane %v381, %v552
      %v554 = vlaneseq
      %v555 = vshrl.u32 %v554, 7
      %v556 = vsub.s32 0, %v555
      %v557 = vrot.slane %v395, %v556
      %v558 = vlaneseq
      %v559 = vshrl.u32 %v558, 7
      %v560 = vsub.s32 1, %v559
      %v561 = vrot.slane %v395, %v560
      %v562 = vlaneseq
      %v563 = vshrl.u32 %v562, 7
      %v564 = vsub.s32 0, %v563
      %v565 = vrot.slane %v397, %v564
      %v566 = vlaneseq
      %v567 = vshrl.u32 %v566, 7
      %v568 = vsub.s32 1, %v567
      %v569 = vrot.slane %v397, %v568
      %v570 = vlaneseq
      %v571 = vshrl.u32 %v570, 7
      %v572 = vsub.s32 0, %v571
      %v573 = vrot.slane %v399, %v572
      %v574 = vlaneseq
      %v575 = vshrl.u32 %v574, 7
      %v576 = vsub.s32 1, %v575
      %v577 = vrot.slane %v399, %v576
      %v578 = vlaneseq
      %v579 = vshrl.u32 %v578, 7
      %v580 = vsub.s32 0, %v579
      %v581 = vrot.slane %v424, %v580
      %v582 = vlaneseq
      %v583 = vshrl.u32 %v582, 7
      %v584 = vsub.s32 1, %v583
      %v585 = vrot.slane %v424, %v584
      %v586 = vlaneseq
      %v587 = vshrl.u32 %v586, 7
      %v588 = vsub.s32 0, %v587
      %v589 = vrot.slane %v438, %v588
      %v590 = vlaneseq
      %v591 = vshrl.u32 %v590, 7
      %v592 = vsub.s32 1, %v591
      %v593 = vrot.slane %v438, %v592
      %v594 = vlaneseq
      %v595 = vshrl.u32 %v594, 7
      %v596 = vsub.s32 0, %v595
      %v597 = vrot.slane %v446, %v596
      %v598 = vlaneseq
      %v599 = vshrl.u32 %v598, 7
      %v600 = vsub.s32 1, %v599
      %v601 = vrot.slane %v446, %v600
      %v602 = vlaneseq
      %v603 = vshrl.u32 %v602, 7
      %v604 = vsub.s32 0, %v603
      %v605 = vrot.slane %v448, %v604
      %v606 = vlaneseq
      %v607 = vshrl.u32 %v606, 7
      %v608 = vsub.s32 1, %v607
      %v609 = vrot.slane %v448, %v608
      %v610 = vlaneseq
      %v611 = vshrl.u32 %v610, 7
      %v612 = vsub.s32 0, %v611
      %v613 = vrot.slane %v431, %v612
      %v614 = vlaneseq
      %v615 = vshrl.u32 %v614, 7
      %v616 = vsub.s32 1, %v615
      %v617 = vrot.slane %v431, %v616
      %v618 = vlaneseq
      %v619 = vshrl.u32 %v618, 7
      %v620 = vsub.s32 0, %v619
      %v621 = vrot.slane %v445, %v620
      %v622 = vlaneseq
      %v623 = vshrl.u32 %v622, 7
      %v624 = vsub.s32 1, %v623
      %v625 = vrot.slane %v445, %v624
      %v626 = vlaneseq
      %v627 = vshrl.u32 %v626, 7
      %v628 = vsub.s32 0, %v627
      %v629 = vrot.slane %v447, %v628
      %v630 = vlaneseq
      %v631 = vshrl.u32 %v630, 7
      %v632 = vsub.s32 1, %v631
      %v633 = vrot.slane %v447, %v632
      %v634 = vlaneseq
      %v635 = vshrl.u32 %v634, 7
      %v636 = vsub.s32 0, %v635
      %v637 = vrot.slane %v449, %v636
      %v638 = vlaneseq
      %v639 = vshrl.u32 %v638, 7
      %v640 = vsub.s32 1, %v639
      %v641 = vrot.slane %v449, %v640
      %v690 = vmul.f32 %v144, %v453
      %v691 = vmul.f32 %v145, %v457
      %v692 = vmul.f32 %v146, %v453
      %v693 = vmul.f32 %v147, %v457
      %v694 = vmul.f32 %v148, %v453
      %v695 = vmul.f32 %v149, %v457
      %v696 = vmul.f32 %v150, %v461
      %v697 = vmul.f32 %v151, %v465
      %v698 = vmul.f32 %v152, %v461
      %v699 = vmul.f32 %v153, %v465
      %v700 = vmul.f32 %v154, %v461
      %v701 = vmul.f32 %v155, %v465
      %v702 = vmul.f32 %v156, %v469
      %v703 = vmul.f32 %v157, %v473
      %v704 = vmul.f32 %v158, %v469
      %v705 = vmul.f32 %v159, %v473
      %v706 = vmul.f32 %v160, %v469
      %v707 = vmul.f32 %v161, %v473
      %v708 = vmul.f32 %v162, %v477
      %v709 = vmul.f32 %v163, %v481
      %v710 = vmul.f32 %v164, %v477
      %v711 = vmul.f32 %v165, %v481
      %v712 = vmul.f32 %v166, %v477
      %v713 = vmul.f32 %v167, %v481
      %v714 = vmul.f32 %v168, %v485
      %v715 = vmul.f32 %v169, %v489
      %v716 = vmul.f32 %v170, %v485
      %v717 = vmul.f32 %v171, %v489
      %v718 = vmul.f32 %v172, %v485
      %v719 = vmul.f32 %v173, %v489
      %v720 = vmul.f32 %v174, %v493
      %v721 = vmul.f32 %v175, %v497
      %v722 = vmul.f32 %v176, %v493
      %v723 = vmul.f32 %v177, %v497
      %v724 = vmul.f32 %v178, %v493
      %v725 = vmul.f32 %v179, %v497
      %v726 = vmul.f32 %v180, %v501
      %v727 = vmul.f32 %v181, %v505
      %v728 = vmul.f32 %v182, %v501
      %v729 = vmul.f32 %v183, %v505
      %v730 = vmul.f32 %v184, %v501
      %v731 = vmul.f32 %v185, %v505
      %v732 = vmul.f32 %v186, %v509
      %v733 = vmul.f32 %v187, %v513
      %v734 = vmul.f32 %v188, %v509
      %v735 = vmul.f32 %v189, %v513
      %v736 = vmul.f32 %v190, %v509
      %v737 = vmul.f32 %v191, %v513
      %v738 = vmul.f32 %v192, %v517
      %v739 = vmul.f32 %v193, %v521
      %v740 = vmul.f32 %v194, %v517
      %v741 = vmul.f32 %v195, %v521
      %v742 = vmul.f32 %v196, %v517
      %v743 = vmul.f32 %v197, %v521
      %v744 = vmul.f32 %v198, %v525
      %v745 = vmul.f32 %v199, %v529
      %v746 = vmul.f32 %v200, %v525
      %v747 = vmul.f32 %v201, %v529
      %v748 = vmul.f32 %v202, %v525
      %v749 = vmul.f32 %v203, %v529
      %v750 = vmul.f32 %v204, %v533
      %v751 = vmul.f32 %v205, %v537
      %v752 = vmul.f32 %v206, %v533
      %v753 = vmul.f32 %v207, %v537
      %v754 = vmul.f32 %v208, %v533
      %v755 = vmul.f32 %v209, %v537
      %v756 = vmul.f32 %v210, %v541
      %v757 = vmul.f32 %v211, %v545
      %v758 = vmul.f32 %v212, %v541
      %v759 = vmul.f32 %v213, %v545
      %v760 = vmul.f32 %v214, %v541
      %v761 = vmul.f32 %v215, %v545
      %v762 = vmul.f32 %v216, %v549
      %v763 = vmul.f32 %v217, %v553
      %v764 = vmul.f32 %v218, %v549
      %v765 = vmul.f32 %v219, %v553
      %v766 = vmul.f32 %v220, %v549
      %v767 = vmul.f32 %v221, %v553
      %v768 = vmul.f32 %v222, %v557
      %v769 = vmul.f32 %v223, %v561
      %v770 = vmul.f32 %v224, %v557
      %v771 = vmul.f32 %v225, %v561
      %v772 = vmul.f32 %v226, %v557
      %v773 = vmul.f32 %v227, %v561
      %v774 = vmul.f32 %v228, %v565
      %v775 = vmul.f32 %v229, %v569
      %v776 = vmul.f32 %v230, %v565
      %v777 = vmul.f32 %v231, %v569
      %v778 = vmul.f32 %v232, %v565
      %v779 = vmul.f32 %v233, %v569
      %v780 = vmul.f32 %v234, %v573
      %v781 = vmul.f32 %v235, %v577
      %v782 = vmul.f32 %v236, %v573
      %v783 = vmul.f32 %v237, %v577
      %v784 = vmul.f32 %v238, %v573
      %v785 = vmul.f32 %v239, %v577
      %v786 = vmul.f32 %v240, %v581
      %v787 = vmul.f32 %v241, %v585
      %v788 = vmul.f32 %v242, %v581
      %v789 = vmul.f32 %v243, %v585
      %v790 = vmul.f32 %v244, %v581
      %v791 = vmul.f32 %v245, %v585
      %v792 = vmul.f32 %v246, %v589
      %v793 = vmul.f32 %v247, %v593
      %v794 = vmul.f32 %v248, %v589
      %v795 = vmul.f32 %v249, %v593
      %v796 = vmul.f32 %v250, %v589
      %v797 = vmul.f32 %v251, %v593
      %v798 = vmul.f32 %v252, %v597
      %v799 = vmul.f32 %v253, %v601
      %v800 = vmul.f32 %v254, %v597
      %v801 = vmul.f32 %v255, %v601
      %v802 = vmul.f32 %v256, %v597
      %v803 = vmul.f32 %v257, %v601
      %v804 = vmul.f32 %v258, %v605
      %v805 = vmul.f32 %v259, %v609
      %v806 = vmul.f32 %v260, %v605
      %v807 = vmul.f32 %v261, %v609
      %v808 = vmul.f32 %v262, %v605
      %v809 = vmul.f32 %v263, %v609
      %v810 = vmul.f32 %v264, %v613
      %v811 = vmul.f32 %v265, %v617
      %v812 = vmul.f32 %v266, %v613
      %v813 = vmul.f32 %v267, %v617
      %v814 = vmul.f32 %v268, %v613
      %v815 = vmul.f32 %v269, %v617
      %v816 = vmul.f32 %v270, %v621
      %v817 = vmul.f32 %v271, %v625
      %v818 = vmul.f32 %v272, %v621
      %v819 = vmul.f32 %v273, %v625
      %v820 = vmul.f32 %v274, %v621
      %v821 = vmul.f32 %v275, %v625
      %v822 = vmul.f32 %v276, %v629
      %v823 = vmul.f32 %v277, %v633
      %v824 = vmul.f32 %v278, %v629
      %v825 = vmul.f32 %v279, %v633
      %v826 = vmul.f32 %v280, %v629
      %v827 = vmul.f32 %v281, %v633
      %v828 = vmul.f32 %v282, %v637
      %v829 = vmul.f32 %v283, %v641
      %v830 = vmul.f32 %v284, %v637
      %v831 = vmul.f32 %v285, %v641
      %v832 = vmul.f32 %v286, %v637
      %v833 = vmul.f32 %v287, %v641
      %v834 = vadd.f32 %v690, %v696
      %v835 = vadd.f32 %v834, %v702
      %v836 = vadd.f32 %v835, %v708
      %v837 = vadd.f32 %v836, %v714
      %v838 = vadd.f32 %v837, %v720
      %v839 = vadd.f32 %v838, %v726
      %v840 = vadd.f32 %v839, %v732
      %v841 = vadd.f32 %v840, %v738
      %v842 = vadd.f32 %v841, %v744
      %v843 = vadd.f32 %v842, %v750
      %v844 = vadd.f32 %v843, %v756
      %v845 = vadd.f32 %v844, %v762
      %v846 = vadd.f32 %v845, %v768
      %v847 = vadd.f32 %v846, %v774
      %v848 = vadd.f32 %v847, %v780
      %v849 = vadd.f32 %v848, %v786
      %v850 = vadd.f32 %v849, %v792
      %v851 = vadd.f32 %v850, %v798
      %v852 = vadd.f32 %v851, %v804
      %v853 = vadd.f32 %v852, %v810
      %v854 = vadd.f32 %v853, %v816
      %v855 = vadd.f32 %v854, %v822
      %v856 = vadd.f32 %v855, %v828
      %v857 = vadd.f32 %v691, %v697
      %v858 = vadd.f32 %v857, %v703
      %v859 = vadd.f32 %v858, %v709
      %v860 = vadd.f32 %v859, %v715
      %v861 = vadd.f32 %v860, %v721
      %v862 = vadd.f32 %v861, %v727
      %v863 = vadd.f32 %v862, %v733
      %v864 = vadd.f32 %v863, %v739
      %v865 = vadd.f32 %v864, %v745
      %v866 = vadd.f32 %v865, %v751
      %v867 = vadd.f32 %v866, %v757
      %v868 = vadd.f32 %v867, %v763
      %v869 = vadd.f32 %v868, %v769
      %v870 = vadd.f32 %v869, %v775
      %v871 = vadd.f32 %v870, %v781
      %v872 = vadd.f32 %v871, %v787
      %v873 = vadd.f32 %v872, %v793
      %v874 = vadd.f32 %v873, %v799
      %v875 = vadd.f32 %v874, %v805
      %v876 = vadd.f32 %v875, %v811
      %v877 = vadd.f32 %v876, %v817
      %v878 = vadd.f32 %v877, %v823
      %v879 = vadd.f32 %v878, %v829
      %v880 = vadd.f32 %v692, %v698
      %v881 = vadd.f32 %v880, %v704
      %v882 = vadd.f32 %v881, %v710
      %v883 = vadd.f32 %v882, %v716
      %v884 = vadd.f32 %v883, %v722
      %v885 = vadd.f32 %v884, %v728
      %v886 = vadd.f32 %v885, %v734
      %v887 = vadd.f32 %v886, %v740
      %v888 = vadd.f32 %v887, %v746
      %v889 = vadd.f32 %v888, %v752
      %v890 = vadd.f32 %v889, %v758
      %v891 = vadd.f32 %v890, %v764
      %v892 = vadd.f32 %v891, %v770
      %v893 = vadd.f32 %v892, %v776
      %v894 = vadd.f32 %v893, %v782
      %v895 = vadd.f32 %v894, %v788
      %v896 = vadd.f32 %v895, %v794
      %v897 = vadd.f32 %v896, %v800
      %v898 = vadd.f32 %v897, %v806
      %v899 = vadd.f32 %v898, %v812
      %v900 = vadd.f32 %v899, %v818
      %v901 = vadd.f32 %v900, %v824
      %v902 = vadd.f32 %v901, %v830
      %v903 = vadd.f32 %v693, %v699
      %v904 = vadd.f32 %v903, %v705
      %v905 = vadd.f32 %v904, %v711
      %v906 = vadd.f32 %v905, %v717
      %v907 = vadd.f32 %v906, %v723
      %v908 = vadd.f32 %v907, %v729
      %v909 = vadd.f32 %v908, %v735
      %v910 = vadd.f32 %v909, %v741
      %v911 = vadd.f32 %v910, %v747
      %v912 = vadd.f32 %v911, %v753
      %v913 = vadd.f32 %v912, %v759
      %v914 = vadd.f32 %v913, %v765
      %v915 = vadd.f32 %v914, %v771
      %v916 = vadd.f32 %v915, %v777
      %v917 = vadd.f32 %v916, %v783
      %v918 = vadd.f32 %v917, %v789
      %v919 = vadd.f32 %v918, %v795
      %v920 = vadd.f32 %v919, %v801
      %v921 = vadd.f32 %v920, %v807
      %v922 = vadd.f32 %v921, %v813
      %v923 = vadd.f32 %v922, %v819
      %v924 = vadd.f32 %v923, %v825
      %v925 = vadd.f32 %v924, %v831
      %vm926 = vcmask 1041408
      %v927 = vsel %vm926, %v694, 0.0
      %v928 = vsel %vm926, %v700, 0.0
      %v929 = vadd.f32 %v927, %v928
      %v930 = vsel %vm926, %v706, 0.0
      %v931 = vadd.f32 %v929, %v930
      %v932 = vsel %vm926, %v712, 0.0
      %v933 = vadd.f32 %v931, %v932
      %v934 = vsel %vm926, %v718, 0.0
      %v935 = vadd.f32 %v933, %v934
      %v936 = vsel %vm926, %v724, 0.0
      %v937 = vadd.f32 %v935, %v936
      %v938 = vsel %vm926, %v730, 0.0
      %v939 = vadd.f32 %v937, %v938
      %v940 = vsel %vm926, %v736, 0.0
      %v941 = vadd.f32 %v939, %v940
      %v942 = vsel %vm926, %v742, 0.0
      %v943 = vadd.f32 %v941, %v942
      %v944 = vsel %vm926, %v748, 0.0
      %v945 = vadd.f32 %v943, %v944
      %v946 = vsel %vm926, %v754, 0.0
      %v947 = vadd.f32 %v945, %v946
      %v948 = vsel %vm926, %v760, 0.0
      %v949 = vadd.f32 %v947, %v948
      %v950 = vsel %vm926, %v766, 0.0
      %v951 = vadd.f32 %v949, %v950
      %v952 = vsel %vm926, %v772, 0.0
      %v953 = vadd.f32 %v951, %v952
      %v954 = vsel %vm926, %v778, 0.0
      %v955 = vadd.f32 %v953, %v954
      %v956 = vsel %vm926, %v784, 0.0
      %v957 = vadd.f32 %v955, %v956
      %v958 = vsel %vm926, %v790, 0.0
      %v959 = vadd.f32 %v957, %v958
      %v960 = vsel %vm926, %v796, 0.0
      %v961 = vadd.f32 %v959, %v960
      %v962 = vsel %vm926, %v802, 0.0
      %v963 = vadd.f32 %v961, %v962
      %v964 = vsel %vm926, %v808, 0.0
      %v965 = vadd.f32 %v963, %v964
      %v966 = vsel %vm926, %v814, 0.0
      %v967 = vadd.f32 %v965, %v966
      %v968 = vsel %vm926, %v820, 0.0
      %v969 = vadd.f32 %v967, %v968
      %v970 = vsel %vm926, %v826, 0.0
      %v971 = vadd.f32 %v969, %v970
      %v972 = vsel %vm926, %v832, 0.0
      %v973 = vadd.f32 %v971, %v972
      %v974 = vsel %vm926, %v695, 0.0
      %v975 = vsel %vm926, %v701, 0.0
      %v976 = vadd.f32 %v974, %v975
      %v977 = vsel %vm926, %v707, 0.0
      %v978 = vadd.f32 %v976, %v977
      %v979 = vsel %vm926, %v713, 0.0
      %v980 = vadd.f32 %v978, %v979
      %v981 = vsel %vm926, %v719, 0.0
      %v982 = vadd.f32 %v980, %v981
      %v983 = vsel %vm926, %v725, 0.0
      %v984 = vadd.f32 %v982, %v983
      %v985 = vsel %vm926, %v731, 0.0
      %v986 = vadd.f32 %v984, %v985
      %v987 = vsel %vm926, %v737, 0.0
      %v988 = vadd.f32 %v986, %v987
      %v989 = vsel %vm926, %v743, 0.0
      %v990 = vadd.f32 %v988, %v989
      %v991 = vsel %vm926, %v749, 0.0
      %v992 = vadd.f32 %v990, %v991
      %v993 = vsel %vm926, %v755, 0.0
      %v994 = vadd.f32 %v992, %v993
      %v995 = vsel %vm926, %v761, 0.0
      %v996 = vadd.f32 %v994, %v995
      %v997 = vsel %vm926, %v767, 0.0
      %v998 = vadd.f32 %v996, %v997
      %v999 = vsel %vm926, %v773, 0.0
      %v1000 = vadd.f32 %v998, %v999
      %v1001 = vsel %vm926, %v779, 0.0
      %v1002 = vadd.f32 %v1000, %v1001
      %v1003 = vsel %vm926, %v785, 0.0
      %v1004 = vadd.f32 %v1002, %v1003
      %v1005 = vsel %vm926, %v791, 0.0
      %v1006 = vadd.f32 %v1004, %v1005
      %v1007 = vsel %vm926, %v797, 0.0
      %v1008 = vadd.f32 %v1006, %v1007
      %v1009 = vsel %vm926, %v803, 0.0
      %v1010 = vadd.f32 %v1008, %v1009
      %v1011 = vsel %vm926, %v809, 0.0
      %v1012 = vadd.f32 %v1010, %v1011
      %v1013 = vsel %vm926, %v815, 0.0
      %v1014 = vadd.f32 %v1012, %v1013
      %v1015 = vsel %vm926, %v821, 0.0
      %v1016 = vadd.f32 %v1014, %v1015
      %v1017 = vsel %vm926, %v827, 0.0
      %v1018 = vadd.f32 %v1016, %v1017
      %v1019 = vsel %vm926, %v833, 0.0
      %v1020 = vadd.f32 %v1018, %v1019
      %1021 = vst [vmem:[%s143] sm:$0xff] %v856
      %1022 = vst [vmem:[%s143 + $0x8] sm:$0xff] %v879
      %1023 = vst [vmem:[%s143 + $0x10] sm:$0xff] %v902
      %1024 = vst [vmem:[%s143 + $0x18] sm:$0xff] %v925
      %1025 = vst [vmem:[%s143 + $0x20] sm:$0x3] %v973
      %1026 = vst [vmem:[%s143 + $0x28] sm:$0x3] %v1020
      %p1027 = scmp.lt.s32.totalorder %s13, 10
      %s1028 = scalar_select %p1027, %s13, 10
      %s1029 = smul.addr %s1028, 6
      %s1030 = smul.addr %s1029, 8
      %s1031 = scalar_lea.vmem %s2, %s1030
      // Predicated region
      $region29: #{forward.22} parent=27 // pred_check
        %p1032 = pneg %p78
      $region30: #{forward.22} parent=27 // pred_check_branch
        %1034 = sbr.rel (%p1032) target = $region32
      $region31: #{forward.22} parent=27 // pred_region
        _
      $region32: #{forward.22} parent=27 // pred_fallthru
        _
    $region28: #{forward.22} parent=5 // pred_fallthru
      _
    %p1035 = scmp.le.s32.totalorder 2, %s8
    // Predicated region
    $region33: #{forward.22} parent=5 // pred_check
      %p1036 = pneg %p1035
    $region34: #{forward.22} parent=5 // pred_check_branch
      %1038 = sbr.rel (%p1036) target = $region36
    $region35: #{forward.22} parent=5 // pred_region
      %s1039 = ssub.s32 %s8, 2
      // Predicated region
      $region37: #{forward.22} parent=35 // pred_check
        %p1040 = pneg %p84
      $region38: #{forward.22} parent=35 // pred_check_branch
        %1042 = sbr.rel (%p1040) target = $region40
      $region39: #{forward.22} parent=35 // pred_region
        %p1043 = scmp.lt.s32.totalorder %s14, 10
        %s1044 = scalar_select %p1043, %s14, 10
        %s1045 = smul.addr %s1044, 6
        %s1046 = smul.addr %s1045, 8
        %s1047 = scalar_lea.vmem %s2, %s1046
      $region40: #{forward.22} parent=35 // pred_fallthru
        _
    $region36: #{forward.22} parent=5 // pred_fallthru
      _
  $region6: #{forward.22} parent=0 // loop_footer
    %s12 = sadd.s32 1, %s8
  $region7: #{forward.22} parent=0 // loop_footer_branch
    %7 = sbr.rel target = $region3
  $region8: #{forward.22} parent=0 // loop_exit
    _

// kernel: squeeze.30
$region0: #{squeeze.30}
  %s0 = inlined_call_operand.vmem [shape: f32[11,1,16,16], index: 0, kind: input, shape index: {}]
  %s1 = inlined_call_operand.vmem [shape: f32[11,256], index: 1, kind: output, shape index: {}]
  %v2 = vld [vmem:[%s0] ss:$8 sm:$0xf]
  %v3 = vld [vmem:[%s0] ss:$8 sm:$0xf0]
  %vm4 = vcmask 1047556
  %v5 = vsel %vm4, %v3, %v2
  %vm6 = vcmask 130048
  %7 = vst.msk [vmem:[%s1] ss:$8 sm:$0x3] %vm6, %v5
  %s8 = scalar_lea.vmem %s1, 4294967281
  %9 = vst.msk [vmem:[%s8] ss:$8 sm:$0xc] %vm6, %v5
  %s10 = scalar_lea.vmem %s1, 4294967266
  %11 = vst.msk [vmem:[%s10] ss:$8 sm:$0x30] %vm6, %v5
  %s12 = scalar_lea.vmem %s1, 4294967251
  %13 = vst.msk [vmem:[%s12] ss:$8 sm:$0xc0] %vm6, %v5
  %s14 = scalar_lea.vmem %s0, 64
  %v15 = vld [vmem:[%s14] ss:$8 sm:$0xf]
  %s16 = scalar_lea.vmem %s0, 64
  %v17 = vld [vmem:[%s16] ss:$8 sm:$0xf0]
  %vm18 = vcmask 1047556
  %v19 = vsel %vm18, %v17, %v15
  %vm20 = vcmask 130048
  %s21 = scalar_lea.vmem %s1, 4
  %22 = vst.msk [vmem:[%s21] ss:$8 sm:$0x3] %vm20, %v19
  %s23 = scalar_lea.vmem %s1, 4294967285
  %24 = vst.msk [vmem:[%s23] ss:$8 sm:$0xc] %vm20, %v19
  %s25 = scalar_lea.vmem %s1, 4294967270
  %26 = vst.msk [vmem:[%s25] ss:$8 sm:$0x30] %vm20, %v19
  %s27 = scalar_lea.vmem %s1, 4294967255
  %28 = vst.msk [vmem:[%s27] ss:$8 sm:$0xc0] %vm20, %v19
  %s29 = scalar_lea.vmem %s0, 128
  %v30 = vld [vmem:[%s29] ss:$8 sm:$0xf]
  %s31 = scalar_lea.vmem %s0, 128
  %s32 = smov 48
  %v33 = vld [vmem:[%s31] ss:$8 sm:%s32]
  %vm34 = vcmask 1045508
  %v35 = vsel %vm34, %v33, %v30
  %vm36 = vcmask 130048
  %s37 = scalar_lea.vmem %s1, 16
  %38 = vst.msk [vmem:[%s37] ss:$8 sm:$0x3] %vm36, %v35
  %s39 = scalar_lea.vmem %s1, 1
  %40 = vst.msk [vmem:[%s39] ss:$8 sm:$0xc] %vm36, %v35
  %s41 = scalar_lea.vmem %s1, 4294967282
  %42 = vst.msk [vmem:[%s41] ss:$8 sm:$0x30] %vm36, %v35
  %s43 = scalar_lea.vmem %s0, 7
  %s44 = smov 3
  %v45 = vld [vmem:[%s43] ss:$16 sm:%s44]
  %s46 = scalar_lea.vmem %s0, 7
  %s47 = smov 12
  %v48 = vld [vmem:[%s46] ss:$16 sm:%s47]
  %vm49 = vcmask 1043458
  %v50 = vsel %vm49, %v48, %v45
  %s51 = scalar_lea.vmem %s0, 7
  %s52 = smov 48
  %v53 = vld [vmem:[%s51] ss:$16 sm:%s52]
  %vm54 = vcmask 1045508
  %v55 = vsel %vm54, %v53, %v50
  %s56 = scalar_lea.vmem %s0, 7
  %s57 = smov 192
  %v58 = vld [vmem:[%s56] ss:$16 sm:%s57]
  %vm59 = vcmask 1047558
  %v60 = vsel %vm59, %v58, %v55
  %61 = vrot.lane.b32.xlu0 %v60, 112
  %v62 = vpop.permute.xlu0 %61
  %vm63 = vcmask 1048448
  %64 = vst.msk [vmem:[%s1] sm:$0xff] %vm63, %v62
  %s65 = scalar_lea.vmem %s0, 15
  %s66 = smov 3
  %v67 = vld [vmem:[%s65] ss:$16 sm:%s66]
  %s68 = scalar_lea.vmem %s0, 15
  %s69 = smov 12
  %v70 = vld [vmem:[%s68] ss:$16 sm:%s69]
  %vm71 = vcmask 1043458
  %v72 = vsel %vm71, %v70, %v67
  %s73 = scalar_lea.vmem %s0, 15
  %s74 = smov 48
  %v75 = vld [vmem:[%s73] ss:$16 sm:%s74]
  %vm76 = vcmask 1045508
  %v77 = vsel %vm76, %v75, %v72
  %s78 = scalar_lea.vmem %s0, 15
  %s79 = smov 192
  %v80 = vld [vmem:[%s78] ss:$16 sm:%s79]
  %vm81 = vcmask 1047558
  %v82 = vsel %vm81, %v80, %v77
  %83 = vrot.lane.b32.xlu0 %v82, 112
  %v84 = vpop.permute.xlu0 %83
  %vm85 = vcmask 1048448
  %s86 = scalar_lea.vmem %s1, 8
  %87 = vst.msk [vmem:[%s86] sm:$0xff] %vm85, %v84
  %s88 = scalar_lea.vmem %s0, 135
  %s89 = smov 3
  %v90 = vld [vmem:[%s88] ss:$16 sm:%s89]
  %s91 = scalar_lea.vmem %s0, 215
  %s92 = smov 12
  %v93 = vld [vmem:[%s91] ss:$-24 sm:%s92]
  %vm94 = vcmask 1043458
  %v95 = vsel %vm94, %v93, %v90
  %s96 = scalar_lea.vmem %s0, 95
  %s97 = smov 48
  %v98 = vld [vmem:[%s96] ss:$16 sm:%s97]
  %vm99 = vcmask 1045508
  %v100 = vsel %vm99, %v98, %v95
  %101 = vrot.lane.b32.xlu0 %v100, 112
  %v102 = vpop.permute.xlu0 %101
  %vm103 = vcmask 1048448
  %s104 = scalar_lea.vmem %s1, 16
  %105 = vst.msk [vmem:[%s104] sm:$0x7] %vm103, %v102
  %s106 = scalar_lea.vmem %s1, 21
  %107 = vst.msk [vmem:[%s106] sm:$0x38] %vm103, %v102
  %s108 = scalar_lea.vmem %s0, 6
  %s109 = smov 3
  %v110 = vld [vmem:[%s108] ss:$16 sm:%s109]
  %s111 = scalar_lea.vmem %s0, 6
  %s112 = smov 12
  %v113 = vld [vmem:[%s111] ss:$16 sm:%s112]
  %vm114 = vcmask 1043458
  %v115 = vsel %vm114, %v113, %v110
  %s116 = scalar_lea.vmem %s0, 6
  %s117 = smov 48
  %v118 = vld [vmem:[%s116] ss:$16 sm:%s117]
  %vm119 = vcmask 1045508
  %v120 = vsel %vm119, %v118, %v115
  %s121 = scalar_lea.vmem %s0, 6
  %s122 = smov 192
  %v123 = vld [vmem:[%s121] ss:$16 sm:%s122]
  %vm124 = vcmask 1047558
  %v125 = vsel %vm124, %v123, %v120
  %126 = vrot.lane.b32.xlu0 %v125, 96
  %v127 = vpop.permute.xlu0 %126
  %vm128 = vcmask 917248
  %129 = vst.msk [vmem:[%s1] sm:$0xff] %vm128, %v127
  %s130 = scalar_lea.vmem %s0, 14
  %s131 = smov 3
  %v132 = vld [vmem:[%s130] ss:$16 sm:%s131]
  %s133 = scalar_lea.vmem %s0, 14
  %s134 = smov 12
  %v135 = vld [vmem:[%s133] ss:$16 sm:%s134]
  %vm136 = vcmask 1043458
  %v137 = vsel %vm136, %v135, %v132
  %s138 = scalar_lea.vmem %s0, 14
  %s139 = smov 48
  %v140 = vld [vmem:[%s138] ss:$16 sm:%s139]
  %vm141 = vcmask 1045508
  %v142 = vsel %vm141, %v140, %v137
  %s143 = scalar_lea.vmem %s0, 14
  %s144 = smov 192
  %v145 = vld [vmem:[%s143] ss:$16 sm:%s144]
  %vm146 = vcmask 1047558
  %v147 = vsel %vm146, %v145, %v142
  %148 = vrot.lane.b32.xlu0 %v147, 96
  %v149 = vpop.permute.xlu0 %148
  %vm150 = vcmask 917248
  %s151 = scalar_lea.vmem %s1, 8
  %152 = vst.msk [vmem:[%s151] sm:$0xff] %vm150, %v149
  %s153 = scalar_lea.vmem %s0, 134
  %s154 = smov 3
  %v155 = vld [vmem:[%s153] ss:$16 sm:%s154]
  %s156 = scalar_lea.vmem %s0, 214
  %s157 = smov 12
  %v158 = vld [vmem:[%s156] ss:$-24 sm:%s157]
  %vm159 = vcmask 1043458
  %v160 = vsel %vm159, %v158, %v155
  %s161 = scalar_lea.vmem %s0, 94
  %s162 = smov 48
  %v163 = vld [vmem:[%s161] ss:$16 sm:%s162]
  %vm164 = vcmask 1045508
  %v165 = vsel %vm164, %v163, %v160
  %166 = vrot.lane.b32.xlu0 %v165, 96
  %v167 = vpop.permute.xlu0 %166
  %vm168 = vcmask 917248
  %s169 = scalar_lea.vmem %s1, 16
  %170 = vst.msk [vmem:[%s169] sm:$0x7] %vm168, %v167
  %s171 = scalar_lea.vmem %s1, 21
  %172 = vst.msk [vmem:[%s171] sm:$0x38] %vm168, %v167
  %s173 = scalar_lea.vmem %s0, 5
  %s174 = smov 3
  %v175 = vld [vmem:[%s173] ss:$16 sm:%s174]
  %s176 = scalar_lea.vmem %s0, 5
  %s177 = smov 12
  %v178 = vld [vmem:[%s176] ss:$16 sm:%s177]
  %vm179 = vcmask 1043458
  %v180 = vsel %vm179, %v178, %v175
  %s181 = scalar_lea.vmem %s0, 5
  %s182 = smov 48
  %v183 = vld [vmem:[%s181] ss:$16 sm:%s182]
  %vm184 = vcmask 1045508
  %v185 = vsel %vm184, %v183, %v180
  %s186 = scalar_lea.vmem %s0, 5
  %s187 = smov 192
  %v188 = vld [vmem:[%s186] ss:$16 sm:%s187]
  %vm189 = vcmask 1047558
  %v190 = vsel %vm189, %v188, %v185
  %191 = vrot.lane.b32.xlu0 %v190, 80
  %v192 = vpop.permute.xlu0 %191
  %vm193 = vcmask 786048
  %194 = vst.msk [vmem:[%s1] sm:$0xff] %vm193, %v192
  %s195 = scalar_lea.vmem %s0, 13
  %s196 = smov 3
  %v197 = vld [vmem:[%s195] ss:$16 sm:%s196]
  %s198 = scalar_lea.vmem %s0, 13
  %s199 = smov 12
  %v200 = vld [vmem:[%s198] ss:$16 sm:%s199]
  %vm201 = vcmask 1043458
  %v202 = vsel %vm201, %v200, %v197
  %s203 = scalar_lea.vmem %s0, 13
  %s204 = smov 48
  %v205 = vld [vmem:[%s203] ss:$16 sm:%s204]
  %vm206 = vcmask 1045508
  %v207 = vsel %vm206, %v205, %v202
  %s208 = scalar_lea.vmem %s0, 13
  %s209 = smov 192
  %v210 = vld [vmem:[%s208] ss:$16 sm:%s209]
  %vm211 = vcmask 1047558
  %v212 = vsel %vm211, %v210, %v207
  %213 = vrot.lane.b32.xlu0 %v212, 80
  %v214 = vpop.permute.xlu0 %213
  %vm215 = vcmask 786048
  %s216 = scalar_lea.vmem %s1, 8
  %217 = vst.msk [vmem:[%s216] sm:$0xff] %vm215, %v214
  %s218 = scalar_lea.vmem %s0, 133
  %s219 = smov 3
  %v220 = vld [vmem:[%s218] ss:$16 sm:%s219]
  %s221 = scalar_lea.vmem %s0, 213
  %s222 = smov 12
  %v223 = vld [vmem:[%s221] ss:$-24 sm:%s222]
  %vm224 = vcmask 1043458
  %v225 = vsel %vm224, %v223, %v220
  %s226 = scalar_lea.vmem %s0, 93
  %s227 = smov 48
  %v228 = vld [vmem:[%s226] ss:$16 sm:%s227]
  %vm229 = vcmask 1045508
  %v230 = vsel %vm229, %v228, %v225
  %231 = vrot.lane.b32.xlu0 %v230, 80
  %v232 = vpop.permute.xlu0 %231
  %vm233 = vcmask 786048
  %s234 = scalar_lea.vmem %s1, 16
  %235 = vst.msk [vmem:[%s234] sm:$0x7] %vm233, %v232
  %s236 = scalar_lea.vmem %s1, 21
  %237 = vst.msk [vmem:[%s236] sm:$0x38] %vm233, %v232
  %s238 = scalar_lea.vmem %s0, 4
  %s239 = smov 3
  %v240 = vld [vmem:[%s238] ss:$16 sm:%s239]
  %s241 = scalar_lea.vmem %s0, 4
  %s242 = smov 12
  %v243 = vld [vmem:[%s241] ss:$16 sm:%s242]
  %vm244 = vcmask 1043458
  %v245 = vsel %vm244, %v243, %v240
  %s246 = scalar_lea.vmem %s0, 4
  %s247 = smov 48
  %v248 = vld [vmem:[%s246] ss:$16 sm:%s247]
  %vm249 = vcmask 1045508
  %v250 = vsel %vm249, %v248, %v245
  %s251 = scalar_lea.vmem %s0, 4
  %s252 = smov 192
  %v253 = vld [vmem:[%s251] ss:$16 sm:%s252]
  %vm254 = vcmask 1047558
  %v255 = vsel %vm254, %v253, %v250
  %256 = vrot.lane.b32.xlu0 %v255, 64
  %v257 = vpop.permute.xlu0 %256
  %vm258 = vcmask 654848
  %259 = vst.msk [vmem:[%s1] sm:$0xff] %vm258, %v257
  %s260 = scalar_lea.vmem %s0, 12
  %s261 = smov 3
  %v262 = vld [vmem:[%s260] ss:$16 sm:%s261]
  %s263 = scalar_lea.vmem %s0, 12
  %s264 = smov 12
  %v265 = vld [vmem:[%s263] ss:$16 sm:%s264]
  %vm266 = vcmask 1043458
  %v267 = vsel %vm266, %v265, %v262
  %s268 = scalar_lea.vmem %s0, 12
  %s269 = smov 48
  %v270 = vld [vmem:[%s268] ss:$16 sm:%s269]
  %vm271 = vcmask 1045508
  %v272 = vsel %vm271, %v270, %v267
  %s273 = scalar_lea.vmem %s0, 12
  %s274 = smov 192
  %v275 = vld [vmem:[%s273] ss:$16 sm:%s274]
  %vm276 = vcmask 1047558
  %v277 = vsel %vm276, %v275, %v272
  %278 = vrot.lane.b32.xlu0 %v277, 64
  %v279 = vpop.permute.xlu0 %278
  %vm280 = vcmask 654848
  %s281 = scalar_lea.vmem %s1, 8
  %282 = vst.msk [vmem:[%s281] sm:$0xff] %vm280, %v279
  %s283 = scalar_lea.vmem %s0, 132
  %s284 = smov 3
  %v285 = vld [vmem:[%s283] ss:$16 sm:%s284]
  %s286 = scalar_lea.vmem %s0, 212
  %s287 = smov 12
  %v288 = vld [vmem:[%s286] ss:$-24 sm:%s287]
  %vm289 = vcmask 1043458
  %v290 = vsel %vm289, %v288, %v285
  %s291 = scalar_lea.vmem %s0, 92
  %s292 = smov 48
  %v293 = vld [vmem:[%s291] ss:$16 sm:%s292]
  %vm294 = vcmask 1045508
  %v295 = vsel %vm294, %v293, %v290
  %296 = vrot.lane.b32.xlu0 %v295, 64
  %v297 = vpop.permute.xlu0 %296
  %vm298 = vcmask 654848
  %s299 = scalar_lea.vmem %s1, 16
  %300 = vst.msk [vmem:[%s299] sm:$0x7] %vm298, %v297
  %s301 = scalar_lea.vmem %s1, 21
  %302 = vst.msk [vmem:[%s301] sm:$0x38] %vm298, %v297
  %s303 = scalar_lea.vmem %s0, 3
  %s304 = smov 3
  %v305 = vld [vmem:[%s303] ss:$16 sm:%s304]
  %s306 = scalar_lea.vmem %s0, 3
  %s307 = smov 12
  %v308 = vld [vmem:[%s306] ss:$16 sm:%s307]
  %vm309 = vcmask 1043458
  %v310 = vsel %vm309, %v308, %v305
  %s311 = scalar_lea.vmem %s0, 3
  %s312 = smov 48
  %v313 = vld [vmem:[%s311] ss:$16 sm:%s312]
  %vm314 = vcmask 1045508
  %v315 = vsel %vm314, %v313, %v310
  %s316 = scalar_lea.vmem %s0, 3
  %s317 = smov 192
  %v318 = vld [vmem:[%s316] ss:$16 sm:%s317]
  %vm319 = vcmask 1047558
  %v320 = vsel %vm319, %v318, %v315
  %321 = vrot.lane.b32.xlu0 %v320, 48
  %v322 = vpop.permute.xlu0 %321
  %vm323 = vcmask 523648
  %324 = vst.msk [vmem:[%s1] sm:$0xff] %vm323, %v322
  %s325 = scalar_lea.vmem %s0, 11
  %s326 = smov 3
  %v327 = vld [vmem:[%s325] ss:$16 sm:%s326]
  %s328 = scalar_lea.vmem %s0, 11
  %s329 = smov 12
  %v330 = vld [vmem:[%s328] ss:$16 sm:%s329]
  %vm331 = vcmask 1043458
  %v332 = vsel %vm331, %v330, %v327
  %s333 = scalar_lea.vmem %s0, 11
  %s334 = smov 48
  %v335 = vld [vmem:[%s333] ss:$16 sm:%s334]
  %vm336 = vcmask 1045508
  %v337 = vsel %vm336, %v335, %v332
  %s338 = scalar_lea.vmem %s0, 11
  %s339 = smov 192
  %v340 = vld [vmem:[%s338] ss:$16 sm:%s339]
  %vm341 = vcmask 1047558
  %v342 = vsel %vm341, %v340, %v337
  %343 = vrot.lane.b32.xlu0 %v342, 48
  %v344 = vpop.permute.xlu0 %343
  %vm345 = vcmask 523648
  %s346 = scalar_lea.vmem %s1, 8
  %347 = vst.msk [vmem:[%s346] sm:$0xff] %vm345, %v344
  %s348 = scalar_lea.vmem %s0, 131
  %s349 = smov 3
  %v350 = vld [vmem:[%s348] ss:$16 sm:%s349]
  %s351 = scalar_lea.vmem %s0, 211
  %s352 = smov 12
  %v353 = vld [vmem:[%s351] ss:$-24 sm:%s352]
  %vm354 = vcmask 1043458
  %v355 = vsel %vm354, %v353, %v350
  %s356 = scalar_lea.vmem %s0, 91
  %s357 = smov 48
  %v358 = vld [vmem:[%s356] ss:$16 sm:%s357]
  %vm359 = vcmask 1045508
  %v360 = vsel %vm359, %v358, %v355
  %361 = vrot.lane.b32.xlu0 %v360, 48
  %v362 = vpop.permute.xlu0 %361
  %vm363 = vcmask 523648
  %s364 = scalar_lea.vmem %s1, 16
  %365 = vst.msk [vmem:[%s364] sm:$0x7] %vm363, %v362
  %s366 = scalar_lea.vmem %s1, 21
  %367 = vst.msk [vmem:[%s366] sm:$0x38] %vm363, %v362
  %s368 = scalar_lea.vmem %s0, 2
  %s369 = smov 3
  %v370 = vld [vmem:[%s368] ss:$16 sm:%s369]
  %s371 = scalar_lea.vmem %s0, 2
  %s372 = smov 12
  %v373 = vld [vmem:[%s371] ss:$16 sm:%s372]
  %vm374 = vcmask 1043458
  %v375 = vsel %vm374, %v373, %v370
  %s376 = scalar_lea.vmem %s0, 2
  %s377 = smov 48
  %v378 = vld [vmem:[%s376] ss:$16 sm:%s377]
  %vm379 = vcmask 1045508
  %v380 = vsel %vm379, %v378, %v375
  %s381 = scalar_lea.vmem %s0, 2
  %s382 = smov 192
  %v383 = vld [vmem:[%s381] ss:$16 sm:%s382]
  %vm384 = vcmask 1047558
  %v385 = vsel %vm384, %v383, %v380
  %386 = vrot.lane.b32.xlu0 %v385, 32
  %v387 = vpop.permute.xlu0 %386
  %vm388 = vcmask 392448
  %389 = vst.msk [vmem:[%s1] sm:$0xff] %vm388, %v387
  %s390 = scalar_lea.vmem %s0, 10
  %s391 = smov 3
  %v392 = vld [vmem:[%s390] ss:$16 sm:%s391]
  %s393 = scalar_lea.vmem %s0, 10
  %s394 = smov 12
  %v395 = vld [vmem:[%s393] ss:$16 sm:%s394]
  %vm396 = vcmask 1043458
  %v397 = vsel %vm396, %v395, %v392
  %s398 = scalar_lea.vmem %s0, 10
  %s399 = smov 48
  %v400 = vld [vmem:[%s398] ss:$16 sm:%s399]
  %vm401 = vcmask 1045508
  %v402 = vsel %vm401, %v400, %v397
  %s403 = scalar_lea.vmem %s0, 10
  %s404 = smov 192
  %v405 = vld [vmem:[%s403] ss:$16 sm:%s404]
  %vm406 = vcmask 1047558
  %v407 = vsel %vm406, %v405, %v402
  %408 = vrot.lane.b32.xlu0 %v407, 32
  %v409 = vpop.permute.xlu0 %408
  %vm410 = vcmask 392448
  %s411 = scalar_lea.vmem %s1, 8
  %412 = vst.msk [vmem:[%s411] sm:$0xff] %vm410, %v409
  %s413 = scalar_lea.vmem %s0, 130
  %s414 = smov 3
  %v415 = vld [vmem:[%s413] ss:$16 sm:%s414]
  %s416 = scalar_lea.vmem %s0, 210
  %s417 = smov 12
  %v418 = vld [vmem:[%s416] ss:$-24 sm:%s417]
  %vm419 = vcmask 1043458
  %v420 = vsel %vm419, %v418, %v415
  %s421 = scalar_lea.vmem %s0, 90
  %s422 = smov 48
  %v423 = vld [vmem:[%s421] ss:$16 sm:%s422]
  %vm424 = vcmask 1045508
  %v425 = vsel %vm424, %v423, %v420
  %426 = vrot.lane.b32.xlu0 %v425, 32
  %v427 = vpop.permute.xlu0 %426
  %vm428 = vcmask 392448
  %s429 = scalar_lea.vmem %s1, 16
  %430 = vst.msk [vmem:[%s429] sm:$0x7] %vm428, %v427
  %s431 = scalar_lea.vmem %s1, 21
  %432 = vst.msk [vmem:[%s431] sm:$0x38] %vm428, %v427
  %s433 = scalar_lea.vmem %s0, 1
  %s434 = smov 3
  %v435 = vld [vmem:[%s433] ss:$16 sm:%s434]
  %s436 = scalar_lea.vmem %s0, 1
  %s437 = smov 12
  %v438 = vld [vmem:[%s436] ss:$16 sm:%s437]
  %vm439 = vcmask 1043458
  %v440 = vsel %vm439, %v438, %v435
  %s441 = scalar_lea.vmem %s0, 1
  %s442 = smov 48
  %v443 = vld [vmem:[%s441] ss:$16 sm:%s442]
  %vm444 = vcmask 1045508
  %v445 = vsel %vm444, %v443, %v440
  %s446 = scalar_lea.vmem %s0, 1
  %s447 = smov 192
  %v448 = vld [vmem:[%s446] ss:$16 sm:%s447]
  %vm449 = vcmask 1047558
  %v450 = vsel %vm449, %v448, %v445
  %451 = vrot.lane.b32.xlu0 %v450, 16
  %v452 = vpop.permute.xlu0 %451
  %vm453 = vcmask 261248
  %454 = vst.msk [vmem:[%s1] sm:$0xff] %vm453, %v452
  %s455 = scalar_lea.vmem %s0, 9
  %s456 = smov 3
  %v457 = vld [vmem:[%s455] ss:$16 sm:%s456]
  %s458 = scalar_lea.vmem %s0, 9
  %s459 = smov 12
  %v460 = vld [vmem:[%s458] ss:$16 sm:%s459]
  %vm461 = vcmask 1043458
  %v462 = vsel %vm461, %v460, %v457
  %s463 = scalar_lea.vmem %s0, 9
  %s464 = smov 48
  %v465 = vld [vmem:[%s463] ss:$16 sm:%s464]
  %vm466 = vcmask 1045508
  %v467 = vsel %vm466, %v465, %v462
  %s468 = scalar_lea.vmem %s0, 9
  %s469 = smov 192
  %v470 = vld [vmem:[%s468] ss:$16 sm:%s469]
  %vm471 = vcmask 1047558
  %v472 = vsel %vm471, %v470, %v467
  %473 = vrot.lane.b32.xlu0 %v472, 16
  %v474 = vpop.permute.xlu0 %473
  %vm475 = vcmask 261248
  %s476 = scalar_lea.vmem %s1, 8
  %477 = vst.msk [vmem:[%s476] sm:$0xff] %vm475, %v474
  %s478 = scalar_lea.vmem %s0, 129
  %s479 = smov 3
  %v480 = vld [vmem:[%s478] ss:$16 sm:%s479]
  %s481 = scalar_lea.vmem %s0, 209
  %s482 = smov 12
  %v483 = vld [vmem:[%s481] ss:$-24 sm:%s482]
  %vm484 = vcmask 1043458
  %v485 = vsel %vm484, %v483, %v480
  %s486 = scalar_lea.vmem %s0, 89
  %s487 = smov 48
  %v488 = vld [vmem:[%s486] ss:$16 sm:%s487]
  %vm489 = vcmask 1045508
  %v490 = vsel %vm489, %v488, %v485
  %491 = vrot.lane.b32.xlu0 %v490, 16
  %v492 = vpop.permute.xlu0 %491
  %vm493 = vcmask 261248
  %s494 = scalar_lea.vmem %s1, 16
  %495 = vst.msk [vmem:[%s494] sm:$0x7] %vm493, %v492
  %s496 = scalar_lea.vmem %s1, 21
  %497 = vst.msk [vmem:[%s496] sm:$0x38] %vm493, %v492

// kernel: squeeze.36
$region0: #{squeeze.36}
  %s0 = inlined_call_operand.vmem [shape: f32[256], index: 0, kind: input, shape index: {}]
  %s1 = inlined_call_operand.hbm [shape: f32[16,16], index: 1, kind: output, shape index: {}]
  $region1: #{squeeze.36} parent=0
    #allocation0 [shape = 'u8[8192]{0}', space=vmem, size = 0x2000, scoped, tag = 'operand span for operand 1']
    #allocation1 [shape = 's32[1]{0}', space=sflag, size = 0x4, scoped, tag = 'scoped memory for squeeze.36']
    #allocation2 [shape = 'u8[4096]{0}', space=vmem, size = 0x1000, scoped, tag = 'scoped mem for input reshape']
    %2 = vsyncpa [#allocation1], 0
    %s4 = sshllo.u32 0, 2
    %v5 = vld [vmem:[%s0] sm:%s4]
    %6 = vst [vmem:[#allocation2] sm:%s4] %v5
    %v7 = vld [vmem:[#allocation2] sm:$0x3]
    %vm8 = vcmask 130048
    %9 = vst.msk [vmem:[#allocation0] ss:$8 sm:$0x3] %vm8, %v7
    %v10 = vld [vmem:[#allocation2] sm:$0x3]
    %11 = vrot.lane.b32.xlu0 %v10, 112
    %v12 = vpop.permute.xlu0 %11
    %vm13 = vcmask 130048
    %s14 = scalar_lea.vmem [#allocation0], 1
    %15 = vst.msk [vmem:[%s14] ss:$8 sm:$0x3] %vm13, %v12
    %v16 = vld [vmem:[#allocation2] sm:$0x3]
    %17 = vrot.lane.b32.xlu0 %v16, 96
    %v18 = vpop.permute.xlu0 %17
    %vm19 = vcmask 130048
    %s20 = scalar_lea.vmem [#allocation0], 2
    %21 = vst.msk [vmem:[%s20] ss:$8 sm:$0x3] %vm19, %v18
    %v22 = vld [vmem:[#allocation2] sm:$0x3]
    %23 = vrot.lane.b32.xlu0 %v22, 80
    %v24 = vpop.permute.xlu0 %23
    %vm25 = vcmask 130048
    %s26 = scalar_lea.vmem [#allocation0], 3
    %27 = vst.msk [vmem:[%s26] ss:$8 sm:$0x3] %vm25, %v24
    %v28 = vld [vmem:[#allocation2] sm:$0x3]
    %29 = vrot.lane.b32.xlu0 %v28, 64
    %v30 = vpop.permute.xlu0 %29
    %vm31 = vcmask 130048
    %s32 = scalar_lea.vmem [#allocation0], 4
    %33 = vst.msk [vmem:[%s32] ss:$8 sm:$0x3] %vm31, %v30
    %v34 = vld [vmem:[#allocation2] sm:$0x3]
    %35 = vrot.lane.b32.xlu0 %v34, 48
    %v36 = vpop.permute.xlu0 %35
    %vm37 = vcmask 130048
    %s38 = scalar_lea.vmem [#allocation0], 5
    %39 = vst.msk [vmem:[%s38] ss:$8 sm:$0x3] %vm37, %v36
    %v40 = vld [vmem:[#allocation2] sm:$0x3]
    %41 = vrot.lane.b32.xlu0 %v40, 32
    %v42 = vpop.permute.xlu0 %41
    %vm43 = vcmask 130048
    %s44 = scalar_lea.vmem [#allocation0], 6
    %45 = vst.msk [vmem:[%s44] ss:$8 sm:$0x3] %vm43, %v42
    %v46 = vld [vmem:[#allocation2] sm:$0x3]
    %47 = vrot.lane.b32.xlu0 %v46, 16
    %v48 = vpop.permute.xlu0 %47
    %vm49 = vcmask 130048
    %s50 = scalar_lea.vmem [#allocation0], 7
    %51 = vst.msk [vmem:[%s50] ss:$8 sm:$0x3] %vm49, %v48
    %s53 = ssub.s32 256, 256
    %54 = vsyncadd [#allocation1], %s53
    %s56 = sshll.u32 [#allocation0], 4
    %s57 = int_to_ptr.vmem [resolvable:$true] %s56
    %59 = dma.vmem_to_hbm [thread:$0]  %s57, 256, %s1, [#allocation1]
    %60 = dma.done [#allocation1], 256
    %61 = vsyncpa [#allocation1], 1

// kernel: forward.23
$region0: #{forward.23}
  #allocation0 [shape = 'u32[]', space=smem, size = 0x4, offset = 0x4, fixed_abs, tag = 'smem constant byte address 0x4 - core index']
  #allocation1 [shape = 'u32[144,128]{1,0:T(1,128)}', space=vmem, size = 0x12000, scoped, tag = 'internal scratch']
  %s0 = inlined_call_operand.vmem [shape: f32[1,256], index: 0, kind: input, shape index: {}]
  %s1 = inlined_call_operand.vmem [shape: f32[1,256], index: 1, kind: input, shape index: {}]
  %s2 = inlined_call_operand.vmem [shape: f32[1,256], index: 2, kind: input, shape index: {}]
  %s3 = inlined_call_operand.vmem [shape: f32[1,256], index: 3, kind: input, shape index: {}]
  %s4 = inlined_call_operand.vmem [shape: f32[1,256], index: 4, kind: input, shape index: {}]
  %s5 = inlined_call_operand.vmem [shape: f32[8,256], index: 5, kind: input, shape index: {}]
  %s6 = inlined_call_operand.vmem [shape: f32[8,256], index: 6, kind: input, shape index: {}]
  %s7 = inlined_call_operand.vmem [shape: f32[8,256], index: 7, kind: input, shape index: {}]
  %s8 = inlined_call_operand.vmem [shape: f32[8,8], index: 8, kind: input, shape index: {}]
  %s9 = inlined_call_operand.vmem [shape: f32[8,8], index: 9, kind: input, shape index: {}]
  %s10 = inlined_call_operand.vmem [shape: f32[8,256], index: 10, kind: output, shape index: {0}]
  %s11 = inlined_call_operand.vmem [shape: f32[8,256], index: 11, kind: output, shape index: {1}]
  %12 = xla_tuple %s10, %s11
  %s13 = sld [smem:[#allocation0]]
  $region58: #{forward.23} parent=0
    _
  %s15 = ssub.s32 1, %s13
  %s16 = scalar_select 0, %s15, %s13
  // Predicated region
  $region2: #{forward.23} parent=0 // pred_check
    _
  $region3: #{forward.23} parent=0 // pred_check_branch
    %18 = sbr.rel (0) target = $region5
  $region4: #{forward.23} parent=0 // pred_region
    _
  $region5: #{forward.23} parent=0 // pred_fallthru
    _
  // Predicated region
  $region6: #{forward.23} parent=0 // pred_check
    _
  $region7: #{forward.23} parent=0 // pred_check_branch
    %20 = sbr.rel (0) target = $region9
  $region8: #{forward.23} parent=0 // pred_region
    _
  $region9: #{forward.23} parent=0 // pred_fallthru
    _
  // Predicated region
  $region10: #{forward.23} parent=0 // pred_check
    _
  $region11: #{forward.23} parent=0 // pred_check_branch
    %22 = sbr.rel (0) target = $region13
  $region12: #{forward.23} parent=0 // pred_region
    _
  $region13: #{forward.23} parent=0 // pred_fallthru
    _
  // Predicated region
  $region14: #{forward.23} parent=0 // pred_check
    _
  $region15: #{forward.23} parent=0 // pred_check_branch
    %24 = sbr.rel (0) target = $region17
  $region16: #{forward.23} parent=0 // pred_region
    _
  $region17: #{forward.23} parent=0 // pred_fallthru
    _
  // Predicated region
  $region18: #{forward.23} parent=0 // pred_check
    _
  $region19: #{forward.23} parent=0 // pred_check_branch
    %26 = sbr.rel (0) target = $region21
  $region20: #{forward.23} parent=0 // pred_region
    _
  $region21: #{forward.23} parent=0 // pred_fallthru
    _
  // Predicated region
  $region22: #{forward.23} parent=0 // pred_check
    _
  $region23: #{forward.23} parent=0 // pred_check_branch
    %28 = sbr.rel (0) target = $region25
  $region24: #{forward.23} parent=0 // pred_region
    _
  $region25: #{forward.23} parent=0 // pred_fallthru
    _
  // Predicated region
  $region26: #{forward.23} parent=0 // pred_check
    _
  $region27: #{forward.23} parent=0 // pred_check_branch
    %30 = sbr.rel (0) target = $region29
  $region28: #{forward.23} parent=0 // pred_region
    _
  $region29: #{forward.23} parent=0 // pred_fallthru
    _
  // Predicated region
  $region30: #{forward.23} parent=0 // pred_check
    _
  $region31: #{forward.23} parent=0 // pred_check_branch
    %32 = sbr.rel (0) target = $region33
  $region32: #{forward.23} parent=0 // pred_region
    _
  $region33: #{forward.23} parent=0 // pred_fallthru
    _
  // Predicated region
  $region34: #{forward.23} parent=0 // pred_check
    _
  $region35: #{forward.23} parent=0 // pred_check_branch
    %34 = sbr.rel (0) target = $region37
  $region36: #{forward.23} parent=0 // pred_region
    _
  $region37: #{forward.23} parent=0 // pred_fallthru
    _
  // Predicated region
  $region38: #{forward.23} parent=0 // pred_check
    _
  $region39: #{forward.23} parent=0 // pred_check_branch
    %36 = sbr.rel (0) target = $region41
  $region40: #{forward.23} parent=0 // pred_region
    _
  $region41: #{forward.23} parent=0 // pred_fallthru
    _
  %v37 = vld [vmem:[%s0] sm:$0x3]
  %v38 = vld [vmem:[%s2] sm:$0x3]
  %v39 = vadd.f32 %v37, %v38
  %v40 = vld [vmem:[%s5] sm:$0xff]
  %v41 = vld [vmem:[%s5 + $0x8] sm:$0xff]
  %v43 = vlaneseq
  %v44 = vshrl.u32 %v43, 7
  %v45 = vsub.s32 0, %v44
  %v46 = vrot.slane %v39, %v45
  %v47 = vlaneseq
  %v48 = vshrl.u32 %v47, 7
  %v49 = vsub.s32 1, %v48
  %v50 = vrot.slane %v39, %v49
  %v53 = vmul.f32 %v46, %v40
  %v54 = vmul.f32 %v50, %v41
  %v55 = vld [vmem:[%s1] sm:$0x3]
  %v56 = vld [vmem:[%s3] sm:$0x3]
  %v57 = vadd.f32 %v55, %v56
  %v58 = vld [vmem:[%s6] sm:$0xff]
  %v59 = vld [vmem:[%s6 + $0x8] sm:$0xff]
  %v61 = vlaneseq
  %v62 = vshrl.u32 %v61, 7
  %v63 = vsub.s32 0, %v62
  %v64 = vrot.slane %v57, %v63
  %v65 = vlaneseq
  %v66 = vshrl.u32 %v65, 7
  %v67 = vsub.s32 1, %v66
  %v68 = vrot.slane %v57, %v67
  %v71 = vmul.f32 %v64, %v58
  %v72 = vmul.f32 %v68, %v59
  %v73 = vadd.f32 %v53, %v71
  %v74 = vadd.f32 %v54, %v72
  %v75 = vld [vmem:[%s4] sm:$0x3]
  %v77 = vlaneseq
  %v78 = vshrl.u32 %v77, 7
  %v79 = vsub.s32 0, %v78
  %v80 = vrot.slane %v75, %v79
  %v81 = vlaneseq
  %v82 = vshrl.u32 %v81, 7
  %v83 = vsub.s32 1, %v82
  %v84 = vrot.slane %v75, %v83
  %v87 = vadd.f32 %v73, %v80
  %v88 = vadd.f32 %v74, %v84
  %v89 = vld [vmem:[%s7] sm:$0xff]
  %v90 = vld [vmem:[%s7 + $0x8] sm:$0xff]
  %v91 = vld [vmem:[%s8] sm:$0xff]
  %vm92 = vcmask 64512
  %v94 = vsel %vm92, %v91, 0
  %96 = vmatprep.subr.mxu0 %v88
  %97 = vmatpush1.msra.mxu0 %v87
  %98 = vmatprep.subr.mxu0 0.0
  %99 = vmatpush1.msra.mxu0 0.0
  %100 = vmatprep.subr.mxu0 0.0
  %101 = vmatpush1.msra.mxu0 0.0
  %102 = vmatprep.subr.mxu0 0.0
  %103 = vmatpush1.msra.mxu0 0.0
  %104 = vmatprep.subr.mxu0 0.0
  %105 = vmatpush1.msra.mxu0 0.0
  %106 = vmatprep.subr.mxu0 0.0
  %107 = vmatpush1.msra.mxu0 0.0
  %108 = vmatprep.subr.mxu0 0.0
  %109 = vmatpush1.msra.mxu0 0.0
  %110 = vmatprep.subr.mxu0 0.0
  %111 = vmatpush1.msra.mxu0 0.0
  %112 = vmatprep.subr.mxu0 0.0
  %113 = vmatpush1.msra.mxu0 0.0
  %114 = vmatprep.subr.mxu0 0.0
  %115 = vmatpush1.msra.mxu0 0.0
  %116 = vmatprep.subr.mxu0 0.0
  %117 = vmatpush1.msra.mxu0 0.0
  %118 = vmatprep.subr.mxu0 0.0
  %119 = vmatpush1.msra.mxu0 0.0
  %120 = vmatprep.subr.mxu0 0.0
  %121 = vmatpush1.msra.mxu0 0.0
  %122 = vmatprep.subr.mxu0 0.0
  %123 = vmatpush1.msra.mxu0 0.0
  %124 = vmatprep.subr.mxu0 0.0
  %125 = vmatpush1.msra.mxu0 0.0
  %126 = vmatprep.subr.mxu0 0.0
  %127 = vmatpush1.msra.mxu0 0.0
  %128 = vmatprep.subr.mxu0 0.0
  %129 = vmatpush1.msra.mxu0 0.0
  %130 = vmatprep.subr.mxu0 0.0
  %131 = vmatpush1.msra.mxu0 0.0
  %132 = vmatprep.subr.mxu0 0.0
  %133 = vmatpush1.msra.mxu0 0.0
  %134 = vmatprep.subr.mxu0 0.0
  %135 = vmatpush1.msra.mxu0 0.0
  %136 = vmatprep.subr.mxu0 0.0
  %137 = vmatpush1.msra.mxu0 0.0
  %138 = vmatprep.subr.mxu0 0.0
  %139 = vmatpush1.msra.mxu0 0.0
  %140 = vmatprep.subr.mxu0 0.0
  %141 = vmatpush1.msra.mxu0 0.0
  %142 = vmatprep.subr.mxu0 0.0
  %143 = vmatpush1.msra.mxu0 0.0
  %144 = vmatprep.subr.mxu0 0.0
  %145 = vmatpush1.msra.mxu0 0.0
  %146 = vmatprep.subr.mxu0 0.0
  %147 = vmatpush1.msra.mxu0 0.0
  %148 = vmatprep.subr.mxu0 0.0
  %149 = vmatpush1.msra.mxu0 0.0
  %150 = vmatprep.subr.mxu0 0.0
  %151 = vmatpush1.msra.mxu0 0.0
  %152 = vmatprep.subr.mxu0 0.0
  %153 = vmatpush1.msra.mxu0 0.0
  %154 = vmatprep.subr.mxu0 0.0
  %155 = vmatpush1.msra.mxu0 0.0
  %156 = vmatprep.subr.mxu0 0.0
  %157 = vmatpush1.msra.mxu0 0.0
  %158 = vmatprep.subr.mxu0 0.0
  %159 = vmatpush1.msra.mxu0 0.0
  %160 = vmatprep.mubr.f32.mxu0 0.0
  %161 = vmatmul.mubr.f32.gmra.mrb[0].mxu0 %v94
  %v162 = vpop.f32.mrb[0].mxu0
  %v163 = vadd.f32 0.0, %v162
  %v164 = vpop.f32.mrb[0].mxu0
  %v165 = vadd.f32 0.0, %v164
  %166 = vdwg.mxu0
  %v167 = vsub.f32 %v89, %v163
  %v168 = vsub.f32 %v90, %v165
  %169 = vst [vmem:[%s10] sm:$0xff] %v167
  %170 = vst [vmem:[%s10 + $0x8] sm:$0xff] %v168
  %v171 = vld [vmem:[%s7] sm:$0xff]
  %v172 = vld [vmem:[%s7 + $0x8] sm:$0xff]
  %v173 = vld [vmem:[%s9] sm:$0xff]
  %v175 = vsel %vm92, %v173, 0
  %177 = vmatprep.subr.mxu0 %v88
  %178 = vmatpush1.msra.mxu0 %v87
  %179 = vmatprep.subr.mxu0 0.0
  %180 = vmatpush1.msra.mxu0 0.0
  %181 = vmatprep.subr.mxu0 0.0
  %182 = vmatpush1.msra.mxu0 0.0
  %183 = vmatprep.subr.mxu0 0.0
  %184 = vmatpush1.msra.mxu0 0.0
  %185 = vmatprep.subr.mxu0 0.0
  %186 = vmatpush1.msra.mxu0 0.0
  %187 = vmatprep.subr.mxu0 0.0
  %188 = vmatpush1.msra.mxu0 0.0
  %189 = vmatprep.subr.mxu0 0.0
  %190 = vmatpush1.msra.mxu0 0.0
  %191 = vmatprep.subr.mxu0 0.0
  %192 = vmatpush1.msra.mxu0 0.0
  %193 = vmatprep.subr.mxu0 0.0
  %194 = vmatpush1.msra.mxu0 0.0
  %195 = vmatprep.subr.mxu0 0.0
  %196 = vmatpush1.msra.mxu0 0.0
  %197 = vmatprep.subr.mxu0 0.0
  %198 = vmatpush1.msra.mxu0 0.0
  %199 = vmatprep.subr.mxu0 0.0
  %200 = vmatpush1.msra.mxu0 0.0
  %201 = vmatprep.subr.mxu0 0.0
  %202 = vmatpush1.msra.mxu0 0.0
  %203 = vmatprep.subr.mxu0 0.0
  %204 = vmatpush1.msra.mxu0 0.0
  %205 = vmatprep.subr.mxu0 0.0
  %206 = vmatpush1.msra.mxu0 0.0
  %207 = vmatprep.subr.mxu0 0.0
  %208 = vmatpush1.msra.mxu0 0.0
  %209 = vmatprep.subr.mxu0 0.0
  %210 = vmatpush1.msra.mxu0 0.0
  %211 = vmatprep.subr.mxu0 0.0
  %212 = vmatpush1.msra.mxu0 0.0
  %213 = vmatprep.subr.mxu0 0.0
  %214 = vmatpush1.msra.mxu0 0.0
  %215 = vmatprep.subr.mxu0 0.0
  %216 = vmatpush1.msra.mxu0 0.0
  %217 = vmatprep.subr.mxu0 0.0
  %218 = vmatpush1.msra.mxu0 0.0
  %219 = vmatprep.subr.mxu0 0.0
  %220 = vmatpush1.msra.mxu0 0.0
  %221 = vmatprep.subr.mxu0 0.0
  %222 = vmatpush1.msra.mxu0 0.0
  %223 = vmatprep.subr.mxu0 0.0
  %224 = vmatpush1.msra.mxu0 0.0
  %225 = vmatprep.subr.mxu0 0.0
  %226 = vmatpush1.msra.mxu0 0.0
  %227 = vmatprep.subr.mxu0 0.0
  %228 = vmatpush1.msra.mxu0 0.0
  %229 = vmatprep.subr.mxu0 0.0
  %230 = vmatpush1.msra.mxu0 0.0
  %231 = vmatprep.subr.mxu0 0.0
  %232 = vmatpush1.msra.mxu0 0.0
  %233 = vmatprep.subr.mxu0 0.0
  %234 = vmatpush1.msra.mxu0 0.0
  %235 = vmatprep.subr.mxu0 0.0
  %236 = vmatpush1.msra.mxu0 0.0
  %237 = vmatprep.subr.mxu0 0.0
  %238 = vmatpush1.msra.mxu0 0.0
  %239 = vmatprep.subr.mxu0 0.0
  %240 = vmatpush1.msra.mxu0 0.0
  %241 = vmatprep.mubr.f32.mxu0 0.0
  %242 = vmatmul.mubr.f32.gmra.mrb[0].mxu0 %v175
  %v243 = vpop.f32.mrb[0].mxu0
  %v244 = vadd.f32 0.0, %v243
  %v245 = vpop.f32.mrb[0].mxu0
  %v246 = vadd.f32 0.0, %v245
  %247 = vdwg.mxu0
  %v248 = vsub.f32 %v171, %v244
  %v249 = vsub.f32 %v172, %v246
  %250 = vst [vmem:[%s11] sm:$0xff] %v248
  %251 = vst [vmem:[%s11 + $0x8] sm:$0xff] %v249
  // Predicated region
  $region42: #{forward.23} parent=0 // pred_check
    _
  $region43: #{forward.23} parent=0 // pred_check_branch
    %253 = sbr.rel (0) target = $region45
  $region44: #{forward.23} parent=0 // pred_region
    _
  $region45: #{forward.23} parent=0 // pred_fallthru
    _
  // Predicated region
  $region46: #{forward.23} parent=0 // pred_check
    _
  $region47: #{forward.23} parent=0 // pred_check_branch
    %255 = sbr.rel (0) target = $region49
  $region48: #{forward.23} parent=0 // pred_region
    _
  $region49: #{forward.23} parent=0 // pred_fallthru
    _
  // Predicated region
  $region50: #{forward.23} parent=0 // pred_check
    _
  $region51: #{forward.23} parent=0 // pred_check_branch
    %257 = sbr.rel (0) target = $region53
  $region52: #{forward.23} parent=0 // pred_region
    _
  $region53: #{forward.23} parent=0 // pred_fallthru
    _
  // Predicated region
  $region54: #{forward.23} parent=0 // pred_check
    _
  $region55: #{forward.23} parent=0 // pred_check_branch
    %259 = sbr.rel (0) target = $region57
  $region56: #{forward.23} parent=0 // pred_region
    _
  $region57: #{forward.23} parent=0 // pred_fallthru
    _

// kernel: forward.17
$region0: #{forward.17}
  #allocation0 [shape = 'u32[]', space=smem, size = 0x4, offset = 0x4, fixed_abs, tag = 'smem constant byte address 0x4 - core index']
  #allocation1 [shape = 'u32[144,128]{1,0:T(1,128)}', space=vmem, size = 0x12000, scoped, tag = 'internal scratch']
  %s0 = inlined_call_operand.vmem [shape: f32[12,216,256], index: 0, kind: input, shape index: {}]
  %s1 = inlined_call_operand.vmem [shape: f32[216,256], index: 1, kind: input, shape index: {}]
  %s2 = inlined_call_operand.vmem [shape: f32[12,256], index: 2, kind: input, shape index: {}]
  %s3 = inlined_call_operand.vmem [shape: f32[12,256], index: 3, kind: output, shape index: {}]
  %s4 = sld [smem:[#allocation0]]
  $region22: #{forward.17} parent=0
    _
  %s6 = ssub.s32 1, %s4
  %s7 = scalar_select 0, %s6, %s4
  // Predicated region
  $region2: #{forward.17} parent=0 // pred_check
    _
  $region3: #{forward.17} parent=0 // pred_check_branch
    %9 = sbr.rel (0) target = $region5
  $region4: #{forward.17} parent=0 // pred_region
    _
  $region5: #{forward.17} parent=0 // pred_fallthru
    _
  // Predicated region
  $region6: #{forward.17} parent=0 // pred_check
    _
  $region7: #{forward.17} parent=0 // pred_check_branch
    %11 = sbr.rel (0) target = $region9
  $region8: #{forward.17} parent=0 // pred_region
    _
  $region9: #{forward.17} parent=0 // pred_fallthru
    _
  // Predicated region
  $region10: #{forward.17} parent=0 // pred_check
    _
  $region11: #{forward.17} parent=0 // pred_check_branch
    %13 = sbr.rel (0) target = $region13
  $region12: #{forward.17} parent=0 // pred_region
    _
  $region13: #{forward.17} parent=0 // pred_fallthru
    _
  %v14 = vld [vmem:[%s0] sm:$0xff]
  %v15 = vld [vmem:[%s0 + $0x8] sm:$0xff]
  %v16 = vld [vmem:[%s0 + $0x10] sm:$0xff]
  %v17 = vld [vmem:[%s0 + $0x18] sm:$0xff]
  %v18 = vld [vmem:[%s0 + $0x20] sm:$0xff]
  %v19 = vld [vmem:[%s0 + $0x28] sm:$0xff]
  %v20 = vld [vmem:[%s0 + $0x30] sm:$0xff]
  %v21 = vld [vmem:[%s0 + $0x38] sm:$0xff]
  %v22 = vld [vmem:[%s0 + $0x40] sm:$0xff]
  %v23 = vld [vmem:[%s0 + $0x48] sm:$0xff]
  %v24 = vld [vmem:[%s0 + $0x50] sm:$0xff]
  %v25 = vld [vmem:[%s0 + $0x58] sm:$0xff]
  %v26 = vld [vmem:[%s0 + $0x60] sm:$0xff]
  %v27 = vld [vmem:[%s0 + $0x68] sm:$0xff]
  %v28 = vld [vmem:[%s0 + $0x70] sm:$0xff]
  %v29 = vld [vmem:[%s0 + $0x78] sm:$0xff]
  %v30 = vld [vmem:[%s0 + $0x80] sm:$0xff]
  %v31 = vld [vmem:[%s0 + $0x88] sm:$0xff]
  %v32 = vld [vmem:[%s0 + $0x90] sm:$0xff]
  %v33 = vld [vmem:[%s0 + $0x98] sm:$0xff]
  %v34 = vld [vmem:[%s0 + $0xa0] sm:$0xff]
  %v35 = vld [vmem:[%s0 + $0xa8] sm:$0xff]
  %v36 = vld [vmem:[%s0 + $0xb0] sm:$0xff]
  %v37 = vld [vmem:[%s0 + $0xb8] sm:$0xff]
  %v38 = vld [vmem:[%s0 + $0xc0] sm:$0xff]
  %v39 = vld [vmem:[%s0 + $0xc8] sm:$0xff]
  %v40 = vld [vmem:[%s0 + $0xd0] sm:$0xff]
  %v41 = vld [vmem:[%s0 + $0xd8] sm:$0xff]
  %v42 = vld [vmem:[%s0 + $0xe0] sm:$0xff]
  %v43 = vld [vmem:[%s0 + $0xe8] sm:$0xff]
  %v44 = vld [vmem:[%s0 + $0xf0] sm:$0xff]
  %v45 = vld [vmem:[%s0 + $0xf8] sm:$0xff]
  %v46 = vld [vmem:[%s0 + $0x100] sm:$0xff]
  %v47 = vld [vmem:[%s0 + $0x108] sm:$0xff]
  %v48 = vld [vmem:[%s0 + $0x110] sm:$0xff]
  %v49 = vld [vmem:[%s0 + $0x118] sm:$0xff]
  %v50 = vld [vmem:[%s0 + $0x120] sm:$0xff]
  %v51 = vld [vmem:[%s0 + $0x128] sm:$0xff]
  %v52 = vld [vmem:[%s0 + $0x130] sm:$0xff]
  %v53 = vld [vmem:[%s0 + $0x138] sm:$0xff]
  %v54 = vld [vmem:[%s0 + $0x140] sm:$0xff]
  %v55 = vld [vmem:[%s0 + $0x148] sm:$0xff]
  %v56 = vld [vmem:[%s0 + $0x150] sm:$0xff]
  %v57 = vld [vmem:[%s0 + $0x158] sm:$0xff]
  %v58 = vld [vmem:[%s0 + $0x160] sm:$0xff]
  %v59 = vld [vmem:[%s0 + $0x168] sm:$0xff]
  %v60 = vld [vmem:[%s0 + $0x170] sm:$0xff]
  %v61 = vld [vmem:[%s0 + $0x178] sm:$0xff]
  %v62 = vld [vmem:[%s0 + $0x180] sm:$0xff]
  %v63 = vld [vmem:[%s0 + $0x188] sm:$0xff]
  %v64 = vld [vmem:[%s0 + $0x190] sm:$0xff]
  %v65 = vld [vmem:[%s0 + $0x198] sm:$0xff]
  %v66 = vld [vmem:[%s0 + $0x1a0] sm:$0xff]
  %v67 = vld [vmem:[%s0 + $0x1a8] sm:$0xff]
  %v68 = vld [vmem:[%s0 + $0x1b0] sm:$0xff]
  %v69 = vld [vmem:[%s0 + $0x1b8] sm:$0xff]
  %v70 = vld [vmem:[%s0 + $0x1c0] sm:$0xff]
  %v71 = vld [vmem:[%s0 + $0x1c8] sm:$0xff]
  %v72 = vld [vmem:[%s0 + $0x1d0] sm:$0xff]
  %v73 = vld [vmem:[%s0 + $0x1d8] sm:$0xff]
  %v74 = vld [vmem:[%s0 + $0x1e0] sm:$0xff]
  %v75 = vld [vmem:[%s0 + $0x1e8] sm:$0xff]
  %v76 = vld [vmem:[%s0 + $0x1f0] sm:$0xff]
  %v77 = vld [vmem:[%s0 + $0x1f8] sm:$0xff]
  %v78 = vld [vmem:[%s0 + $0x200] sm:$0xff]
  %v79 = vld [vmem:[%s0 + $0x208] sm:$0xff]
  %v80 = vld [vmem:[%s0 + $0x210] sm:$0xff]
  %v81 = vld [vmem:[%s0 + $0x218] sm:$0xff]
  %v82 = vld [vmem:[%s0 + $0x220] sm:$0xff]
  %v83 = vld [vmem:[%s0 + $0x228] sm:$0xff]
  %v84 = vld [vmem:[%s0 + $0x230] sm:$0xff]
  %v85 = vld [vmem:[%s0 + $0x238] sm:$0xff]
  %v86 = vld [vmem:[%s0 + $0x240] sm:$0xff]
  %v87 = vld [vmem:[%s0 + $0x248] sm:$0xff]
  %v88 = vld [vmem:[%s0 + $0x250] sm:$0xff]
  %v89 = vld [vmem:[%s0 + $0x258] sm:$0xff]
  %v90 = vld [vmem:[%s0 + $0x260] sm:$0xff]
  %v91 = vld [vmem:[%s0 + $0x268] sm:$0xff]
  %v92 = vld [vmem:[%s0 + $0x270] sm:$0xff]
  %v93 = vld [vmem:[%s0 + $0x278] sm:$0xff]
  %v94 = vld [vmem:[%s0 + $0x280] sm:$0xff]
  %v95 = vld [vmem:[%s0 + $0x288] sm:$0xff]
  %v96 = vld [vmem:[%s0 + $0x290] sm:$0xff]
  %v97 = vld [vmem:[%s0 + $0x298] sm:$0xff]
  %v98 = vld [vmem:[%s0 + $0x2a0] sm:$0xff]
  %v99 = vld [vmem:[%s0 + $0x2a8] sm:$0xff]
  %v100 = vld [vmem:[%s0 + $0x2b0] sm:$0xff]
  %v101 = vld [vmem:[%s0 + $0x2b8] sm:$0xff]
  %v102 = vld [vmem:[%s0 + $0x2c0] sm:$0xff]
  %v103 = vld [vmem:[%s0 + $0x2c8] sm:$0xff]
  %v104 = vld [vmem:[%s0 + $0x2d0] sm:$0xff]
  %v105 = vld [vmem:[%s0 + $0x2d8] sm:$0xff]
  %v106 = vld [vmem:[%s0 + $0x2e0] sm:$0xff]
  %v107 = vld [vmem:[%s0 + $0x2e8] sm:$0xff]
  %v108 = vld [vmem:[%s0 + $0x2f0] sm:$0xff]
  %v109 = vld [vmem:[%s0 + $0x2f8] sm:$0xff]
  %v110 = vld [vmem:[%s0 + $0x300] sm:$0xff]
  %v111 = vld [vmem:[%s0 + $0x308] sm:$0xff]
  %v112 = vld [vmem:[%s0 + $0x310] sm:$0xff]
  %v113 = vld [vmem:[%s0 + $0x318] sm:$0xff]
  %v114 = vld [vmem:[%s0 + $0x320] sm:$0xff]
  %v115 = vld [vmem:[%s0 + $0x328] sm:$0xff]
  %v116 = vld [vmem:[%s0 + $0x330] sm:$0xff]
  %v117 = vld [vmem:[%s0 + $0x338] sm:$0xff]
  %v118 = vld [vmem:[%s0 + $0x340] sm:$0xff]
  %v119 = vld [vmem:[%s0 + $0x348] sm:$0xff]
  %v120 = vld [vmem:[%s0 + $0x350] sm:$0xff]
  %v121 = vld [vmem:[%s0 + $0x358] sm:$0xff]
  %v122 = vld [vmem:[%s0 + $0x360] sm:$0xff]
  %v123 = vld [vmem:[%s0 + $0x368] sm:$0xff]
  %v124 = vld [vmem:[%s0 + $0x370] sm:$0xff]
  %v125 = vld [vmem:[%s0 + $0x378] sm:$0xff]
  %v126 = vld [vmem:[%s0 + $0x380] sm:$0xff]
  %v127 = vld [vmem:[%s0 + $0x388] sm:$0xff]
  %v128 = vld [vmem:[%s0 + $0x390] sm:$0xff]
  %v129 = vld [vmem:[%s0 + $0x398] sm:$0xff]
  %v130 = vld [vmem:[%s0 + $0x3a0] sm:$0xff]
  %v131 = vld [vmem:[%s0 + $0x3a8] sm:$0xff]
  %v132 = vld [vmem:[%s0 + $0x3b0] sm:$0xff]
  %v133 = vld [vmem:[%s0 + $0x3b8] sm:$0xff]
  %v134 = vld [vmem:[%s0 + $0x3c0] sm:$0xff]
  %v135 = vld [vmem:[%s0 + $0x3c8] sm:$0xff]
  %v136 = vld [vmem:[%s0 + $0x3d0] sm:$0xff]
  %v137 = vld [vmem:[%s0 + $0x3d8] sm:$0xff]
  %v138 = vld [vmem:[%s0 + $0x3e0] sm:$0xff]
  %v139 = vld [vmem:[%s0 + $0x3e8] sm:$0xff]
  %v140 = vld [vmem:[%s0 + $0x3f0] sm:$0xff]
  %v141 = vld [vmem:[%s0 + $0x3f8] sm:$0xff]
  %v142 = vld [vmem:[%s0 + $0x400] sm:$0xff]
  %v143 = vld [vmem:[%s0 + $0x408] sm:$0xff]
  %v144 = vld [vmem:[%s0 + $0x410] sm:$0xff]
  %v145 = vld [vmem:[%s0 + $0x418] sm:$0xff]
  %v146 = vld [vmem:[%s0 + $0x420] sm:$0xff]
  %v147 = vld [vmem:[%s0 + $0x428] sm:$0xff]
  %v148 = vld [vmem:[%s0 + $0x430] sm:$0xff]
  %v149 = vld [vmem:[%s0 + $0x438] sm:$0xff]
  %v150 = vld [vmem:[%s0 + $0x440] sm:$0xff]
  %v151 = vld [vmem:[%s0 + $0x448] sm:$0xff]
  %v152 = vld [vmem:[%s0 + $0x450] sm:$0xff]
  %v153 = vld [vmem:[%s0 + $0x458] sm:$0xff]
  %v154 = vld [vmem:[%s0 + $0x460] sm:$0xff]
  %v155 = vld [vmem:[%s0 + $0x468] sm:$0xff]
  %v156 = vld [vmem:[%s0 + $0x470] sm:$0xff]
  %v157 = vld [vmem:[%s0 + $0x478] sm:$0xff]
  %v158 = vld [vmem:[%s0 + $0x480] sm:$0xff]
  %v159 = vld [vmem:[%s0 + $0x488] sm:$0xff]
  %v160 = vld [vmem:[%s0 + $0x490] sm:$0xff]
  %v161 = vld [vmem:[%s0 + $0x498] sm:$0xff]
  %v162 = vld [vmem:[%s0 + $0x4a0] sm:$0xff]
  %v163 = vld [vmem:[%s0 + $0x4a8] sm:$0xff]
  %v164 = vld [vmem:[%s0 + $0x4b0] sm:$0xff]
  %v165 = vld [vmem:[%s0 + $0x4b8] sm:$0xff]
  %v166 = vld [vmem:[%s0 + $0x4c0] sm:$0xff]
  %v167 = vld [vmem:[%s0 + $0x4c8] sm:$0xff]
  %v168 = vld [vmem:[%s0 + $0x4d0] sm:$0xff]
  %v169 = vld [vmem:[%s0 + $0x4d8] sm:$0xff]
  %v170 = vld [vmem:[%s0 + $0x4e0] sm:$0xff]
  %v171 = vld [vmem:[%s0 + $0x4e8] sm:$0xff]
  %v172 = vld [vmem:[%s0 + $0x4f0] sm:$0xff]
  %v173 = vld [vmem:[%s0 + $0x4f8] sm:$0xff]
  %v174 = vld [vmem:[%s0 + $0x500] sm:$0xff]
  %v175 = vld [vmem:[%s0 + $0x508] sm:$0xff]
  %v176 = vld [vmem:[%s0 + $0x510] sm:$0xff]
  %v177 = vld [vmem:[%s0 + $0x518] sm:$0xff]
  %v178 = vld [vmem:[%s0 + $0x520] sm:$0xff]
  %v179 = vld [vmem:[%s0 + $0x528] sm:$0xff]
  %v180 = vld [vmem:[%s0 + $0x530] sm:$0xff]
  %v181 = vld [vmem:[%s0 + $0x538] sm:$0xff]
  %v182 = vld [vmem:[%s0 + $0x540] sm:$0xff]
  %v183 = vld [vmem:[%s0 + $0x548] sm:$0xff]
  %v184 = vld [vmem:[%s0 + $0x550] sm:$0xff]
  %v185 = vld [vmem:[%s0 + $0x558] sm:$0xff]
  %v186 = vld [vmem:[%s0 + $0x560] sm:$0xff]
  %v187 = vld [vmem:[%s0 + $0x568] sm:$0xff]
  %v188 = vld [vmem:[%s0 + $0x570] sm:$0xff]
  %v189 = vld [vmem:[%s0 + $0x578] sm:$0xff]
  %v190 = vld [vmem:[%s0 + $0x580] sm:$0xff]
  %v191 = vld [vmem:[%s0 + $0x588] sm:$0xff]
  %v192 = vld [vmem:[%s0 + $0x590] sm:$0xff]
  %v193 = vld [vmem:[%s0 + $0x598] sm:$0xff]
  %v194 = vld [vmem:[%s0 + $0x5a0] sm:$0xff]
  %v195 = vld [vmem:[%s0 + $0x5a8] sm:$0xff]
  %v196 = vld [vmem:[%s0 + $0x5b0] sm:$0xff]
  %v197 = vld [vmem:[%s0 + $0x5b8] sm:$0xff]
  %v198 = vld [vmem:[%s0 + $0x5c0] sm:$0xff]
  %v199 = vld [vmem:[%s0 + $0x5c8] sm:$0xff]
  %v200 = vld [vmem:[%s0 + $0x5d0] sm:$0xff]
  %v201 = vld [vmem:[%s0 + $0x5d8] sm:$0xff]
  %v202 = vld [vmem:[%s0 + $0x5e0] sm:$0xff]
  %v203 = vld [vmem:[%s0 + $0x5e8] sm:$0xff]
  %v204 = vld [vmem:[%s0 + $0x5f0] sm:$0xff]
  %v205 = vld [vmem:[%s0 + $0x5f8] sm:$0xff]
  %v206 = vld [vmem:[%s0 + $0x600] sm:$0xff]
  %v207 = vld [vmem:[%s0 + $0x608] sm:$0xff]
  %v208 = vld [vmem:[%s0 + $0x610] sm:$0xff]
  %v209 = vld [vmem:[%s0 + $0x618] sm:$0xff]
  %v210 = vld [vmem:[%s0 + $0x620] sm:$0xff]
  %v211 = vld [vmem:[%s0 + $0x628] sm:$0xff]
  %v212 = vld [vmem:[%s0 + $0x630] sm:$0xff]
  %v213 = vld [vmem:[%s0 + $0x638] sm:$0xff]
  %v214 = vld [vmem:[%s0 + $0x640] sm:$0xff]
  %v215 = vld [vmem:[%s0 + $0x648] sm:$0xff]
  %v216 = vld [vmem:[%s0 + $0x650] sm:$0xff]
  %v217 = vld [vmem:[%s0 + $0x658] sm:$0xff]
  %v218 = vld [vmem:[%s0 + $0x660] sm:$0xff]
  %v219 = vld [vmem:[%s0 + $0x668] sm:$0xff]
  %v220 = vld [vmem:[%s0 + $0x670] sm:$0xff]
  %v221 = vld [vmem:[%s0 + $0x678] sm:$0xff]
  %v222 = vld [vmem:[%s0 + $0x680] sm:$0xff]
  %v223 = vld [vmem:[%s0 + $0x688] sm:$0xff]
  %v224 = vld [vmem:[%s0 + $0x690] sm:$0xff]
  %v225 = vld [vmem:[%s0 + $0x698] sm:$0xff]
  %v226 = vld [vmem:[%s0 + $0x6a0] sm:$0xff]
  %v227 = vld [vmem:[%s0 + $0x6a8] sm:$0xff]
  %v228 = vld [vmem:[%s0 + $0x6b0] sm:$0xff]
  %v229 = vld [vmem:[%s0 + $0x6b8] sm:$0xff]
  %v230 = vld [vmem:[%s0 + $0x6c0] sm:$0xff]
  %v231 = vld [vmem:[%s0 + $0x6c8] sm:$0xff]
  %v232 = vld [vmem:[%s0 + $0x6d0] sm:$0xff]
  %v233 = vld [vmem:[%s0 + $0x6d8] sm:$0xff]
  %v234 = vld [vmem:[%s0 + $0x6e0] sm:$0xff]
  %v235 = vld [vmem:[%s0 + $0x6e8] sm:$0xff]
  %v236 = vld [vmem:[%s0 + $0x6f0] sm:$0xff]
  %v237 = vld [vmem:[%s0 + $0x6f8] sm:$0xff]
  %v238 = vld [vmem:[%s0 + $0x700] sm:$0xff]
  %v239 = vld [vmem:[%s0 + $0x708] sm:$0xff]
  %v240 = vld [vmem:[%s0 + $0x710] sm:$0xff]
  %v241 = vld [vmem:[%s0 + $0x718] sm:$0xff]
  %v242 = vld [vmem:[%s0 + $0x720] sm:$0xff]
  %v243 = vld [vmem:[%s0 + $0x728] sm:$0xff]
  %v244 = vld [vmem:[%s0 + $0x730] sm:$0xff]
  %v245 = vld [vmem:[%s0 + $0x738] sm:$0xff]
  %v246 = vld [vmem:[%s0 + $0x740] sm:$0xff]
  %v247 = vld [vmem:[%s0 + $0x748] sm:$0xff]
  %v248 = vld [vmem:[%s0 + $0x750] sm:$0xff]
  %v249 = vld [vmem:[%s0 + $0x758] sm:$0xff]
  %v250 = vld [vmem:[%s0 + $0x760] sm:$0xff]
  %v251 = vld [vmem:[%s0 + $0x768] sm:$0xff]
  %v252 = vld [vmem:[%s0 + $0x770] sm:$0xff]
  %v253 = vld [vmem:[%s0 + $0x778] sm:$0xff]
  %v254 = vld [vmem:[%s0 + $0x780] sm:$0xff]
  %v255 = vld [vmem:[%s0 + $0x788] sm:$0xff]
  %v256 = vld [vmem:[%s0 + $0x790] sm:$0xff]
  %v257 = vld [vmem:[%s0 + $0x798] sm:$0xff]
  %v258 = vld [vmem:[%s0 + $0x7a0] sm:$0xff]
  %v259 = vld [vmem:[%s0 + $0x7a8] sm:$0xff]
  %v260 = vld [vmem:[%s0 + $0x7b0] sm:$0xff]
  %v261 = vld [vmem:[%s0 + $0x7b8] sm:$0xff]
  %v262 = vld [vmem:[%s0 + $0x7c0] sm:$0xff]
  %v263 = vld [vmem:[%s0 + $0x7c8] sm:$0xff]
  %v264 = vld [vmem:[%s0 + $0x7d0] sm:$0xff]
  %v265 = vld [vmem:[%s0 + $0x7d8] sm:$0xff]
  %v266 = vld [vmem:[%s0 + $0x7e0] sm:$0xff]
  %v267 = vld [vmem:[%s0 + $0x7e8] sm:$0xff]
  %v268 = vld [vmem:[%s0 + $0x7f0] sm:$0xff]
  %v269 = vld [vmem:[%s0 + $0x7f8] sm:$0xff]
  %v270 = vld [vmem:[%s0 + $0x800] sm:$0xff]
  %v271 = vld [vmem:[%s0 + $0x808] sm:$0xff]
  %v272 = vld [vmem:[%s0 + $0x810] sm:$0xff]
  %v273 = vld [vmem:[%s0 + $0x818] sm:$0xff]
  %v274 = vld [vmem:[%s0 + $0x820] sm:$0xff]
  %v275 = vld [vmem:[%s0 + $0x828] sm:$0xff]
  %v276 = vld [vmem:[%s0 + $0x830] sm:$0xff]
  %v277 = vld [vmem:[%s0 + $0x838] sm:$0xff]
  %v278 = vld [vmem:[%s0 + $0x840] sm:$0xff]
  %v279 = vld [vmem:[%s0 + $0x848] sm:$0xff]
  %v280 = vld [vmem:[%s0 + $0x850] sm:$0xff]
  %v281 = vld [vmem:[%s0 + $0x858] sm:$0xff]
  %v282 = vld [vmem:[%s0 + $0x860] sm:$0xff]
  %v283 = vld [vmem:[%s0 + $0x868] sm:$0xff]
  %v284 = vld [vmem:[%s0 + $0x870] sm:$0xff]
  %v285 = vld [vmem:[%s0 + $0x878] sm:$0xff]
  %v286 = vld [vmem:[%s0 + $0x880] sm:$0xff]
  %v287 = vld [vmem:[%s0 + $0x888] sm:$0xff]
  %v288 = vld [vmem:[%s0 + $0x890] sm:$0xff]
  %v289 = vld [vmem:[%s0 + $0x898] sm:$0xff]
  %v290 = vld [vmem:[%s0 + $0x8a0] sm:$0xff]
  %v291 = vld [vmem:[%s0 + $0x8a8] sm:$0xff]
  %v292 = vld [vmem:[%s0 + $0x8b0] sm:$0xff]
  %v293 = vld [vmem:[%s0 + $0x8b8] sm:$0xff]
  %v294 = vld [vmem:[%s0 + $0x8c0] sm:$0xff]
  %v295 = vld [vmem:[%s0 + $0x8c8] sm:$0xff]
  %v296 = vld [vmem:[%s0 + $0x8d0] sm:$0xff]
  %v297 = vld [vmem:[%s0 + $0x8d8] sm:$0xff]
  %v298 = vld [vmem:[%s0 + $0x8e0] sm:$0xff]
  %v299 = vld [vmem:[%s0 + $0x8e8] sm:$0xff]
  %v300 = vld [vmem:[%s0 + $0x8f0] sm:$0xff]
  %v301 = vld [vmem:[%s0 + $0x8f8] sm:$0xff]
  %v302 = vld [vmem:[%s0 + $0x900] sm:$0xff]
  %v303 = vld [vmem:[%s0 + $0x908] sm:$0xff]
  %v304 = vld [vmem:[%s0 + $0x910] sm:$0xff]
  %v305 = vld [vmem:[%s0 + $0x918] sm:$0xff]
  %v306 = vld [vmem:[%s0 + $0x920] sm:$0xff]
  %v307 = vld [vmem:[%s0 + $0x928] sm:$0xff]
  %v308 = vld [vmem:[%s0 + $0x930] sm:$0xff]
  %v309 = vld [vmem:[%s0 + $0x938] sm:$0xff]
  %v310 = vld [vmem:[%s0 + $0x940] sm:$0xff]
  %v311 = vld [vmem:[%s0 + $0x948] sm:$0xff]
  %v312 = vld [vmem:[%s0 + $0x950] sm:$0xff]
  %v313 = vld [vmem:[%s0 + $0x958] sm:$0xff]
  %v314 = vld [vmem:[%s0 + $0x960] sm:$0xff]
  %v315 = vld [vmem:[%s0 + $0x968] sm:$0xff]
  %v316 = vld [vmem:[%s0 + $0x970] sm:$0xff]
  %v317 = vld [vmem:[%s0 + $0x978] sm:$0xff]
  %v318 = vld [vmem:[%s0 + $0x980] sm:$0xff]
  %v319 = vld [vmem:[%s0 + $0x988] sm:$0xff]
  %v320 = vld [vmem:[%s0 + $0x990] sm:$0xff]
  %v321 = vld [vmem:[%s0 + $0x998] sm:$0xff]
  %v322 = vld [vmem:[%s0 + $0x9a0] sm:$0xff]
  %v323 = vld [vmem:[%s0 + $0x9a8] sm:$0xff]
  %v324 = vld [vmem:[%s0 + $0x9b0] sm:$0xff]
  %v325 = vld [vmem:[%s0 + $0x9b8] sm:$0xff]
  %v326 = vld [vmem:[%s0 + $0x9c0] sm:$0xff]
  %v327 = vld [vmem:[%s0 + $0x9c8] sm:$0xff]
  %v328 = vld [vmem:[%s0 + $0x9d0] sm:$0xff]
  %v329 = vld [vmem:[%s0 + $0x9d8] sm:$0xff]
  %v330 = vld [vmem:[%s0 + $0x9e0] sm:$0xff]
  %v331 = vld [vmem:[%s0 + $0x9e8] sm:$0xff]
  %v332 = vld [vmem:[%s0 + $0x9f0] sm:$0xff]
  %v333 = vld [vmem:[%s0 + $0x9f8] sm:$0xff]
  %v334 = vld [vmem:[%s0 + $0xa00] sm:$0xff]
  %v335 = vld [vmem:[%s0 + $0xa08] sm:$0xff]
  %v336 = vld [vmem:[%s0 + $0xa10] sm:$0xff]
  %v337 = vld [vmem:[%s0 + $0xa18] sm:$0xff]
  %v338 = vld [vmem:[%s0 + $0xa20] sm:$0xff]
  %v339 = vld [vmem:[%s0 + $0xa28] sm:$0xff]
  %v340 = vld [vmem:[%s0 + $0xa30] sm:$0xff]
  %v341 = vld [vmem:[%s0 + $0xa38] sm:$0xff]
  %v342 = vld [vmem:[%s0 + $0xa40] sm:$0xff]
  %v343 = vld [vmem:[%s0 + $0xa48] sm:$0xff]
  %v344 = vld [vmem:[%s0 + $0xa50] sm:$0xff]
  %v345 = vld [vmem:[%s0 + $0xa58] sm:$0xff]
  %v346 = vld [vmem:[%s0 + $0xa60] sm:$0xff]
  %v347 = vld [vmem:[%s0 + $0xa68] sm:$0xff]
  %v348 = vld [vmem:[%s0 + $0xa70] sm:$0xff]
  %v349 = vld [vmem:[%s0 + $0xa78] sm:$0xff]
  %v350 = vld [vmem:[%s0 + $0xa80] sm:$0xff]
  %v351 = vld [vmem:[%s0 + $0xa88] sm:$0xff]
  %v352 = vld [vmem:[%s0 + $0xa90] sm:$0xff]
  %v353 = vld [vmem:[%s0 + $0xa98] sm:$0xff]
  %v354 = vld [vmem:[%s0 + $0xaa0] sm:$0xff]
  %v355 = vld [vmem:[%s0 + $0xaa8] sm:$0xff]
  %v356 = vld [vmem:[%s0 + $0xab0] sm:$0xff]
  %v357 = vld [vmem:[%s0 + $0xab8] sm:$0xff]
  %v358 = vld [vmem:[%s0 + $0xac0] sm:$0xff]
  %v359 = vld [vmem:[%s0 + $0xac8] sm:$0xff]
  %v360 = vld [vmem:[%s0 + $0xad0] sm:$0xff]
  %v361 = vld [vmem:[%s0 + $0xad8] sm:$0xff]
  %v362 = vld [vmem:[%s0 + $0xae0] sm:$0xff]
  %v363 = vld [vmem:[%s0 + $0xae8] sm:$0xff]
  %v364 = vld [vmem:[%s0 + $0xaf0] sm:$0xff]
  %v365 = vld [vmem:[%s0 + $0xaf8] sm:$0xff]
  %v366 = vld [vmem:[%s0 + $0xb00] sm:$0xff]
  %v367 = vld [vmem:[%s0 + $0xb08] sm:$0xff]
  %v368 = vld [vmem:[%s0 + $0xb10] sm:$0xff]
  %v369 = vld [vmem:[%s0 + $0xb18] sm:$0xff]
  %v370 = vld [vmem:[%s0 + $0xb20] sm:$0xff]
  %v371 = vld [vmem:[%s0 + $0xb28] sm:$0xff]
  %v372 = vld [vmem:[%s0 + $0xb30] sm:$0xff]
  %v373 = vld [vmem:[%s0 + $0xb38] sm:$0xff]
  %v374 = vld [vmem:[%s0 + $0xb40] sm:$0xff]
  %v375 = vld [vmem:[%s0 + $0xb48] sm:$0xff]
  %v376 = vld [vmem:[%s0 + $0xb50] sm:$0xff]
  %v377 = vld [vmem:[%s0 + $0xb58] sm:$0xff]
  %v378 = vld [vmem:[%s0 + $0xb60] sm:$0xff]
  %v379 = vld [vmem:[%s0 + $0xb68] sm:$0xff]
  %v380 = vld [vmem:[%s0 + $0xb70] sm:$0xff]
  %v381 = vld [vmem:[%s0 + $0xb78] sm:$0xff]
  %v382 = vld [vmem:[%s0 + $0xb80] sm:$0xff]
  %v383 = vld [vmem:[%s0 + $0xb88] sm:$0xff]
  %v384 = vld [vmem:[%s0 + $0xb90] sm:$0xff]
  %v385 = vld [vmem:[%s0 + $0xb98] sm:$0xff]
  %v386 = vld [vmem:[%s0 + $0xba0] sm:$0xff]
  %v387 = vld [vmem:[%s0 + $0xba8] sm:$0xff]
  %v388 = vld [vmem:[%s0 + $0xbb0] sm:$0xff]
  %v389 = vld [vmem:[%s0 + $0xbb8] sm:$0xff]
  %v390 = vld [vmem:[%s0 + $0xbc0] sm:$0xff]
  %v391 = vld [vmem:[%s0 + $0xbc8] sm:$0xff]
  %v392 = vld [vmem:[%s0 + $0xbd0] sm:$0xff]
  %v393 = vld [vmem:[%s0 + $0xbd8] sm:$0xff]
  %v394 = vld [vmem:[%s0 + $0xbe0] sm:$0xff]
  %v395 = vld [vmem:[%s0 + $0xbe8] sm:$0xff]
  %v396 = vld [vmem:[%s0 + $0xbf0] sm:$0xff]
  %v397 = vld [vmem:[%s0 + $0xbf8] sm:$0xff]
  %v398 = vld [vmem:[%s0 + $0xc00] sm:$0xff]
  %v399 = vld [vmem:[%s0 + $0xc08] sm:$0xff]
  %v400 = vld [vmem:[%s0 + $0xc10] sm:$0xff]
  %v401 = vld [vmem:[%s0 + $0xc18] sm:$0xff]
  %v402 = vld [vmem:[%s0 + $0xc20] sm:$0xff]
  %v403 = vld [vmem:[%s0 + $0xc28] sm:$0xff]
  %v404 = vld [vmem:[%s0 + $0xc30] sm:$0xff]
  %v405 = vld [vmem:[%s0 + $0xc38] sm:$0xff]
  %v406 = vld [vmem:[%s0 + $0xc40] sm:$0xff]
  %v407 = vld [vmem:[%s0 + $0xc48] sm:$0xff]
  %v408 = vld [vmem:[%s0 + $0xc50] sm:$0xff]
  %v409 = vld [vmem:[%s0 + $0xc58] sm:$0xff]
  %v410 = vld [vmem:[%s0 + $0xc60] sm:$0xff]
  %v411 = vld [vmem:[%s0 + $0xc68] sm:$0xff]
  %v412 = vld [vmem:[%s0 + $0xc70] sm:$0xff]
  %v413 = vld [vmem:[%s0 + $0xc78] sm:$0xff]
  %v414 = vld [vmem:[%s0 + $0xc80] sm:$0xff]
  %v415 = vld [vmem:[%s0 + $0xc88] sm:$0xff]
  %v416 = vld [vmem:[%s0 + $0xc90] sm:$0xff]
  %v417 = vld [vmem:[%s0 + $0xc98] sm:$0xff]
  %v418 = vld [vmem:[%s0 + $0xca0] sm:$0xff]
  %v419 = vld [vmem:[%s0 + $0xca8] sm:$0xff]
  %v420 = vld [vmem:[%s0 + $0xcb0] sm:$0xff]
  %v421 = vld [vmem:[%s0 + $0xcb8] sm:$0xff]
  %v422 = vld [vmem:[%s0 + $0xcc0] sm:$0xff]
  %v423 = vld [vmem:[%s0 + $0xcc8] sm:$0xff]
  %v424 = vld [vmem:[%s0 + $0xcd0] sm:$0xff]
  %v425 = vld [vmem:[%s0 + $0xcd8] sm:$0xff]
  %v426 = vld [vmem:[%s0 + $0xce0] sm:$0xff]
  %v427 = vld [vmem:[%s0 + $0xce8] sm:$0xff]
  %v428 = vld [vmem:[%s0 + $0xcf0] sm:$0xff]
  %v429 = vld [vmem:[%s0 + $0xcf8] sm:$0xff]
  %v430 = vld [vmem:[%s0 + $0xd00] sm:$0xff]
  %v431 = vld [vmem:[%s0 + $0xd08] sm:$0xff]
  %v432 = vld [vmem:[%s0 + $0xd10] sm:$0xff]
  %v433 = vld [vmem:[%s0 + $0xd18] sm:$0xff]
  %v434 = vld [vmem:[%s0 + $0xd20] sm:$0xff]
  %v435 = vld [vmem:[%s0 + $0xd28] sm:$0xff]
  %v436 = vld [vmem:[%s0 + $0xd30] sm:$0xff]
  %v437 = vld [vmem:[%s0 + $0xd38] sm:$0xff]
  %v438 = vld [vmem:[%s0 + $0xd40] sm:$0xff]
  %v439 = vld [vmem:[%s0 + $0xd48] sm:$0xff]
  %v440 = vld [vmem:[%s0 + $0xd50] sm:$0xff]
  %v441 = vld [vmem:[%s0 + $0xd58] sm:$0xff]
  %v442 = vld [vmem:[%s0 + $0xd60] sm:$0xff]
  %v443 = vld [vmem:[%s0 + $0xd68] sm:$0xff]
  %v444 = vld [vmem:[%s0 + $0xd70] sm:$0xff]
  %v445 = vld [vmem:[%s0 + $0xd78] sm:$0xff]
  %v446 = vld [vmem:[%s0 + $0xd80] sm:$0xff]
  %v447 = vld [vmem:[%s0 + $0xd88] sm:$0xff]
  %v448 = vld [vmem:[%s0 + $0xd90] sm:$0xff]
  %v449 = vld [vmem:[%s0 + $0xd98] sm:$0xff]
  %v450 = vld [vmem:[%s0 + $0xda0] sm:$0xff]
  %v451 = vld [vmem:[%s0 + $0xda8] sm:$0xff]
  %v452 = vld [vmem:[%s0 + $0xdb0] sm:$0xff]
  %v453 = vld [vmem:[%s0 + $0xdb8] sm:$0xff]
  %v454 = vld [vmem:[%s0 + $0xdc0] sm:$0xff]
  %v455 = vld [vmem:[%s0 + $0xdc8] sm:$0xff]
  %v456 = vld [vmem:[%s0 + $0xdd0] sm:$0xff]
  %v457 = vld [vmem:[%s0 + $0xdd8] sm:$0xff]
  %v458 = vld [vmem:[%s0 + $0xde0] sm:$0xff]
  %v459 = vld [vmem:[%s0 + $0xde8] sm:$0xff]
  %v460 = vld [vmem:[%s0 + $0xdf0] sm:$0xff]
  %v461 = vld [vmem:[%s0 + $0xdf8] sm:$0xff]
  %v462 = vld [vmem:[%s0 + $0xe00] sm:$0xff]
  %v463 = vld [vmem:[%s0 + $0xe08] sm:$0xff]
  %v464 = vld [vmem:[%s0 + $0xe10] sm:$0xff]
  %v465 = vld [vmem:[%s0 + $0xe18] sm:$0xff]
  %v466 = vld [vmem:[%s0 + $0xe20] sm:$0xff]
  %v467 = vld [vmem:[%s0 + $0xe28] sm:$0xff]
  %v468 = vld [vmem:[%s0 + $0xe30] sm:$0xff]
  %v469 = vld [vmem:[%s0 + $0xe38] sm:$0xff]
  %v470 = vld [vmem:[%s0 + $0xe40] sm:$0xff]
  %v471 = vld [vmem:[%s0 + $0xe48] sm:$0xff]
  %v472 = vld [vmem:[%s0 + $0xe50] sm:$0xff]
  %v473 = vld [vmem:[%s0 + $0xe58] sm:$0xff]
  %v474 = vld [vmem:[%s0 + $0xe60] sm:$0xff]
  %v475 = vld [vmem:[%s0 + $0xe68] sm:$0xff]
  %v476 = vld [vmem:[%s0 + $0xe70] sm:$0xff]
  %v477 = vld [vmem:[%s0 + $0xe78] sm:$0xff]
  %v478 = vld [vmem:[%s0 + $0xe80] sm:$0xff]
  %v479 = vld [vmem:[%s0 + $0xe88] sm:$0xff]
  %v480 = vld [vmem:[%s0 + $0xe90] sm:$0xff]
  %v481 = vld [vmem:[%s0 + $0xe98] sm:$0xff]
  %v482 = vld [vmem:[%s0 + $0xea0] sm:$0xff]
  %v483 = vld [vmem:[%s0 + $0xea8] sm:$0xff]
  %v484 = vld [vmem:[%s0 + $0xeb0] sm:$0xff]
  %v485 = vld [vmem:[%s0 + $0xeb8] sm:$0xff]
  %v486 = vld [vmem:[%s0 + $0xec0] sm:$0xff]
  %v487 = vld [vmem:[%s0 + $0xec8] sm:$0xff]
  %v488 = vld [vmem:[%s0 + $0xed0] sm:$0xff]
  %v489 = vld [vmem:[%s0 + $0xed8] sm:$0xff]
  %v490 = vld [vmem:[%s0 + $0xee0] sm:$0xff]
  %v491 = vld [vmem:[%s0 + $0xee8] sm:$0xff]
  %v492 = vld [vmem:[%s0 + $0xef0] sm:$0xff]
  %v493 = vld [vmem:[%s0 + $0xef8] sm:$0xff]
  %v494 = vld [vmem:[%s0 + $0xf00] sm:$0xff]
  %v495 = vld [vmem:[%s0 + $0xf08] sm:$0xff]
  %v496 = vld [vmem:[%s0 + $0xf10] sm:$0xff]
  %v497 = vld [vmem:[%s0 + $0xf18] sm:$0xff]
  %v498 = vld [vmem:[%s0 + $0xf20] sm:$0xff]
  %v499 = vld [vmem:[%s0 + $0xf28] sm:$0xff]
  %v500 = vld [vmem:[%s0 + $0xf30] sm:$0xff]
  %v501 = vld [vmem:[%s0 + $0xf38] sm:$0xff]
  %v502 = vld [vmem:[%s0 + $0xf40] sm:$0xff]
  %v503 = vld [vmem:[%s0 + $0xf48] sm:$0xff]
  %v504 = vld [vmem:[%s0 + $0xf50] sm:$0xff]
  %v505 = vld [vmem:[%s0 + $0xf58] sm:$0xff]
  %v506 = vld [vmem:[%s0 + $0xf60] sm:$0xff]
  %v507 = vld [vmem:[%s0 + $0xf68] sm:$0xff]
  %v508 = vld [vmem:[%s0 + $0xf70] sm:$0xff]
  %v509 = vld [vmem:[%s0 + $0xf78] sm:$0xff]
  %v510 = vld [vmem:[%s0 + $0xf80] sm:$0xff]
  %v511 = vld [vmem:[%s0 + $0xf88] sm:$0xff]
  %v512 = vld [vmem:[%s0 + $0xf90] sm:$0xff]
  %v513 = vld [vmem:[%s0 + $0xf98] sm:$0xff]
  %v514 = vld [vmem:[%s0 + $0xfa0] sm:$0xff]
  %v515 = vld [vmem:[%s0 + $0xfa8] sm:$0xff]
  %v516 = vld [vmem:[%s0 + $0xfb0] sm:$0xff]
  %v517 = vld [vmem:[%s0 + $0xfb8] sm:$0xff]
  %v518 = vld [vmem:[%s0 + $0xfc0] sm:$0xff]
  %v519 = vld [vmem:[%s0 + $0xfc8] sm:$0xff]
  %v520 = vld [vmem:[%s0 + $0xfd0] sm:$0xff]
  %v521 = vld [vmem:[%s0 + $0xfd8] sm:$0xff]
  %v522 = vld [vmem:[%s0 + $0xfe0] sm:$0xff]
  %v523 = vld [vmem:[%s0 + $0xfe8] sm:$0xff]
  %v524 = vld [vmem:[%s0 + $0xff0] sm:$0xff]
  %v525 = vld [vmem:[%s0 + $0xff8] sm:$0xff]
  %v526 = vld [vmem:[%s0 + $0x1000] sm:$0xff]
  %v527 = vld [vmem:[%s0 + $0x1008] sm:$0xff]
  %v528 = vld [vmem:[%s0 + $0x1010] sm:$0xff]
  %v529 = vld [vmem:[%s0 + $0x1018] sm:$0xff]
  %v530 = vld [vmem:[%s0 + $0x1020] sm:$0xff]
  %v531 = vld [vmem:[%s0 + $0x1028] sm:$0xff]
  %v532 = vld [vmem:[%s0 + $0x1030] sm:$0xff]
  %v533 = vld [vmem:[%s0 + $0x1038] sm:$0xff]
  %v534 = vld [vmem:[%s0 + $0x1040] sm:$0xff]
  %v535 = vld [vmem:[%s0 + $0x1048] sm:$0xff]
  %v536 = vld [vmem:[%s0 + $0x1050] sm:$0xff]
  %v537 = vld [vmem:[%s0 + $0x1058] sm:$0xff]
  %v538 = vld [vmem:[%s0 + $0x1060] sm:$0xff]
  %v539 = vld [vmem:[%s0 + $0x1068] sm:$0xff]
  %v540 = vld [vmem:[%s0 + $0x1070] sm:$0xff]
  %v541 = vld [vmem:[%s0 + $0x1078] sm:$0xff]
  %v542 = vld [vmem:[%s0 + $0x1080] sm:$0xff]
  %v543 = vld [vmem:[%s0 + $0x1088] sm:$0xff]
  %v544 = vld [vmem:[%s0 + $0x1090] sm:$0xff]
  %v545 = vld [vmem:[%s0 + $0x1098] sm:$0xff]
  %v546 = vld [vmem:[%s0 + $0x10a0] sm:$0xff]
  %v547 = vld [vmem:[%s0 + $0x10a8] sm:$0xff]
  %v548 = vld [vmem:[%s0 + $0x10b0] sm:$0xff]
  %v549 = vld [vmem:[%s0 + $0x10b8] sm:$0xff]
  %v550 = vld [vmem:[%s0 + $0x10c0] sm:$0xff]
  %v551 = vld [vmem:[%s0 + $0x10c8] sm:$0xff]
  %v552 = vld [vmem:[%s0 + $0x10d0] sm:$0xff]
  %v553 = vld [vmem:[%s0 + $0x10d8] sm:$0xff]
  %v554 = vld [vmem:[%s0 + $0x10e0] sm:$0xff]
  %v555 = vld [vmem:[%s0 + $0x10e8] sm:$0xff]
  %v556 = vld [vmem:[%s0 + $0x10f0] sm:$0xff]
  %v557 = vld [vmem:[%s0 + $0x10f8] sm:$0xff]
  %v558 = vld [vmem:[%s0 + $0x1100] sm:$0xff]
  %v559 = vld [vmem:[%s0 + $0x1108] sm:$0xff]
  %v560 = vld [vmem:[%s0 + $0x1110] sm:$0xff]
  %v561 = vld [vmem:[%s0 + $0x1118] sm:$0xff]
  %v562 = vld [vmem:[%s0 + $0x1120] sm:$0xff]
  %v563 = vld [vmem:[%s0 + $0x1128] sm:$0xff]
  %v564 = vld [vmem:[%s0 + $0x1130] sm:$0xff]
  %v565 = vld [vmem:[%s0 + $0x1138] sm:$0xff]
  %v566 = vld [vmem:[%s0 + $0x1140] sm:$0xff]
  %v567 = vld [vmem:[%s0 + $0x1148] sm:$0xff]
  %v568 = vld [vmem:[%s0 + $0x1150] sm:$0xff]
  %v569 = vld [vmem:[%s0 + $0x1158] sm:$0xff]
  %v570 = vld [vmem:[%s0 + $0x1160] sm:$0xff]
  %v571 = vld [vmem:[%s0 + $0x1168] sm:$0xff]
  %v572 = vld [vmem:[%s0 + $0x1170] sm:$0xff]
  %v573 = vld [vmem:[%s0 + $0x1178] sm:$0xff]
  %v574 = vld [vmem:[%s0 + $0x1180] sm:$0xff]
  %v575 = vld [vmem:[%s0 + $0x1188] sm:$0xff]
  %v576 = vld [vmem:[%s0 + $0x1190] sm:$0xff]
  %v577 = vld [vmem:[%s0 + $0x1198] sm:$0xff]
  %v578 = vld [vmem:[%s0 + $0x11a0] sm:$0xff]
  %v579 = vld [vmem:[%s0 + $0x11a8] sm:$0xff]
  %v580 = vld [vmem:[%s0 + $0x11b0] sm:$0xff]
  %v581 = vld [vmem:[%s0 + $0x11b8] sm:$0xff]
  %v582 = vld [vmem:[%s0 + $0x11c0] sm:$0xff]
  %v583 = vld [vmem:[%s0 + $0x11c8] sm:$0xff]
  %v584 = vld [vmem:[%s0 + $0x11d0] sm:$0xff]
  %v585 = vld [vmem:[%s0 + $0x11d8] sm:$0xff]
  %v586 = vld [vmem:[%s0 + $0x11e0] sm:$0xff]
  %v587 = vld [vmem:[%s0 + $0x11e8] sm:$0xff]
  %v588 = vld [vmem:[%s0 + $0x11f0] sm:$0xff]
  %v589 = vld [vmem:[%s0 + $0x11f8] sm:$0xff]
  %v590 = vld [vmem:[%s0 + $0x1200] sm:$0xff]
  %v591 = vld [vmem:[%s0 + $0x1208] sm:$0xff]
  %v592 = vld [vmem:[%s0 + $0x1210] sm:$0xff]
  %v593 = vld [vmem:[%s0 + $0x1218] sm:$0xff]
  %v594 = vld [vmem:[%s0 + $0x1220] sm:$0xff]
  %v595 = vld [vmem:[%s0 + $0x1228] sm:$0xff]
  %v596 = vld [vmem:[%s0 + $0x1230] sm:$0xff]
  %v597 = vld [vmem:[%s0 + $0x1238] sm:$0xff]
  %v598 = vld [vmem:[%s0 + $0x1240] sm:$0xff]
  %v599 = vld [vmem:[%s0 + $0x1248] sm:$0xff]
  %v600 = vld [vmem:[%s0 + $0x1250] sm:$0xff]
  %v601 = vld [vmem:[%s0 + $0x1258] sm:$0xff]
  %v602 = vld [vmem:[%s0 + $0x1260] sm:$0xff]
  %v603 = vld [vmem:[%s0 + $0x1268] sm:$0xff]
  %v604 = vld [vmem:[%s0 + $0x1270] sm:$0xff]
  %v605 = vld [vmem:[%s0 + $0x1278] sm:$0xff]
  %v606 = vld [vmem:[%s0 + $0x1280] sm:$0xff]
  %v607 = vld [vmem:[%s0 + $0x1288] sm:$0xff]
  %v608 = vld [vmem:[%s0 + $0x1290] sm:$0xff]
  %v609 = vld [vmem:[%s0 + $0x1298] sm:$0xff]
  %v610 = vld [vmem:[%s0 + $0x12a0] sm:$0xff]
  %v611 = vld [vmem:[%s0 + $0x12a8] sm:$0xff]
  %v612 = vld [vmem:[%s0 + $0x12b0] sm:$0xff]
  %v613 = vld [vmem:[%s0 + $0x12b8] sm:$0xff]
  %v614 = vld [vmem:[%s0 + $0x12c0] sm:$0xff]
  %v615 = vld [vmem:[%s0 + $0x12c8] sm:$0xff]
  %v616 = vld [vmem:[%s0 + $0x12d0] sm:$0xff]
  %v617 = vld [vmem:[%s0 + $0x12d8] sm:$0xff]
  %v618 = vld [vmem:[%s0 + $0x12e0] sm:$0xff]
  %v619 = vld [vmem:[%s0 + $0x12e8] sm:$0xff]
  %v620 = vld [vmem:[%s0 + $0x12f0] sm:$0xff]
  %v621 = vld [vmem:[%s0 + $0x12f8] sm:$0xff]
  %v622 = vld [vmem:[%s0 + $0x1300] sm:$0xff]
  %v623 = vld [vmem:[%s0 + $0x1308] sm:$0xff]
  %v624 = vld [vmem:[%s0 + $0x1310] sm:$0xff]
  %v625 = vld [vmem:[%s0 + $0x1318] sm:$0xff]
  %v626 = vld [vmem:[%s0 + $0x1320] sm:$0xff]
  %v627 = vld [vmem:[%s0 + $0x1328] sm:$0xff]
  %v628 = vld [vmem:[%s0 + $0x1330] sm:$0xff]
  %v629 = vld [vmem:[%s0 + $0x1338] sm:$0xff]
  %v630 = vld [vmem:[%s0 + $0x1340] sm:$0xff]
  %v631 = vld [vmem:[%s0 + $0x1348] sm:$0xff]
  %v632 = vld [vmem:[%s0 + $0x1350] sm:$0xff]
  %v633 = vld [vmem:[%s0 + $0x1358] sm:$0xff]
  %v634 = vld [vmem:[%s0 + $0x1360] sm:$0xff]
  %v635 = vld [vmem:[%s0 + $0x1368] sm:$0xff]
  %v636 = vld [vmem:[%s0 + $0x1370] sm:$0xff]
  %v637 = vld [vmem:[%s0 + $0x1378] sm:$0xff]
  %v638 = vld [vmem:[%s0 + $0x1380] sm:$0xff]
  %v639 = vld [vmem:[%s0 + $0x1388] sm:$0xff]
  %v640 = vld [vmem:[%s0 + $0x1390] sm:$0xff]
  %v641 = vld [vmem:[%s0 + $0x1398] sm:$0xff]
  %v642 = vld [vmem:[%s0 + $0x13a0] sm:$0xff]
  %v643 = vld [vmem:[%s0 + $0x13a8] sm:$0xff]
  %v644 = vld [vmem:[%s0 + $0x13b0] sm:$0xff]
  %v645 = vld [vmem:[%s0 + $0x13b8] sm:$0xff]
  %v646 = vld [vmem:[%s0 + $0x13c0] sm:$0xff]
  %v647 = vld [vmem:[%s0 + $0x13c8] sm:$0xff]
  %v648 = vld [vmem:[%s0 + $0x13d0] sm:$0xff]
  %v649 = vld [vmem:[%s0 + $0x13d8] sm:$0xff]
  %v650 = vld [vmem:[%s0 + $0x13e0] sm:$0xff]
  %v651 = vld [vmem:[%s0 + $0x13e8] sm:$0xff]
  %v652 = vld [vmem:[%s0 + $0x13f0] sm:$0xff]
  %v653 = vld [vmem:[%s0 + $0x13f8] sm:$0xff]
  %v654 = vld [vmem:[%s0 + $0x1400] sm:$0xff]
  %v655 = vld [vmem:[%s0 + $0x1408] sm:$0xff]
  %v656 = vld [vmem:[%s0 + $0x1410] sm:$0xff]
  %v657 = vld [vmem:[%s0 + $0x1418] sm:$0xff]
  %v658 = vld [vmem:[%s0 + $0x1420] sm:$0xff]
  %v659 = vld [vmem:[%s0 + $0x1428] sm:$0xff]
  %v660 = vld [vmem:[%s0 + $0x1430] sm:$0xff]
  %v661 = vld [vmem:[%s0 + $0x1438] sm:$0xff]
  %v662 = vld [vmem:[%s1] sm:$0xff]
  %v663 = vld [vmem:[%s1 + $0x8] sm:$0xff]
  %v664 = vld [vmem:[%s1 + $0x10] sm:$0xff]
  %v665 = vld [vmem:[%s1 + $0x18] sm:$0xff]
  %v666 = vld [vmem:[%s1 + $0x20] sm:$0xff]
  %v667 = vld [vmem:[%s1 + $0x28] sm:$0xff]
  %v668 = vld [vmem:[%s1 + $0x30] sm:$0xff]
  %v669 = vld [vmem:[%s1 + $0x38] sm:$0xff]
  %v670 = vld [vmem:[%s1 + $0x40] sm:$0xff]
  %v671 = vld [vmem:[%s1 + $0x48] sm:$0xff]
  %v672 = vld [vmem:[%s1 + $0x50] sm:$0xff]
  %v673 = vld [vmem:[%s1 + $0x58] sm:$0xff]
  %v674 = vld [vmem:[%s1 + $0x60] sm:$0xff]
  %v675 = vld [vmem:[%s1 + $0x68] sm:$0xff]
  %v676 = vld [vmem:[%s1 + $0x70] sm:$0xff]
  %v677 = vld [vmem:[%s1 + $0x78] sm:$0xff]
  %v678 = vld [vmem:[%s1 + $0x80] sm:$0xff]
  %v679 = vld [vmem:[%s1 + $0x88] sm:$0xff]
  %v680 = vld [vmem:[%s1 + $0x90] sm:$0xff]
  %v681 = vld [vmem:[%s1 + $0x98] sm:$0xff]
  %v682 = vld [vmem:[%s1 + $0xa0] sm:$0xff]
  %v683 = vld [vmem:[%s1 + $0xa8] sm:$0xff]
  %v684 = vld [vmem:[%s1 + $0xb0] sm:$0xff]
  %v685 = vld [vmem:[%s1 + $0xb8] sm:$0xff]
  %v686 = vld [vmem:[%s1 + $0xc0] sm:$0xff]
  %v687 = vld [vmem:[%s1 + $0xc8] sm:$0xff]
  %v688 = vld [vmem:[%s1 + $0xd0] sm:$0xff]
  %v689 = vld [vmem:[%s1 + $0xd8] sm:$0xff]
  %v690 = vld [vmem:[%s1 + $0xe0] sm:$0xff]
  %v691 = vld [vmem:[%s1 + $0xe8] sm:$0xff]
  %v692 = vld [vmem:[%s1 + $0xf0] sm:$0xff]
  %v693 = vld [vmem:[%s1 + $0xf8] sm:$0xff]
  %v694 = vld [vmem:[%s1 + $0x100] sm:$0xff]
  %v695 = vld [vmem:[%s1 + $0x108] sm:$0xff]
  %v696 = vld [vmem:[%s1 + $0x110] sm:$0xff]
  %v697 = vld [vmem:[%s1 + $0x118] sm:$0xff]
  %v698 = vld [vmem:[%s1 + $0x120] sm:$0xff]
  %v699 = vld [vmem:[%s1 + $0x128] sm:$0xff]
  %v700 = vld [vmem:[%s1 + $0x130] sm:$0xff]
  %v701 = vld [vmem:[%s1 + $0x138] sm:$0xff]
  %v702 = vld [vmem:[%s1 + $0x140] sm:$0xff]
  %v703 = vld [vmem:[%s1 + $0x148] sm:$0xff]
  %v704 = vld [vmem:[%s1 + $0x150] sm:$0xff]
  %v705 = vld [vmem:[%s1 + $0x158] sm:$0xff]
  %v706 = vld [vmem:[%s1 + $0x160] sm:$0xff]
  %v707 = vld [vmem:[%s1 + $0x168] sm:$0xff]
  %v708 = vld [vmem:[%s1 + $0x170] sm:$0xff]
  %v709 = vld [vmem:[%s1 + $0x178] sm:$0xff]
  %v710 = vld [vmem:[%s1 + $0x180] sm:$0xff]
  %v711 = vld [vmem:[%s1 + $0x188] sm:$0xff]
  %v712 = vld [vmem:[%s1 + $0x190] sm:$0xff]
  %v713 = vld [vmem:[%s1 + $0x198] sm:$0xff]
  %v714 = vld [vmem:[%s1 + $0x1a0] sm:$0xff]
  %v715 = vld [vmem:[%s1 + $0x1a8] sm:$0xff]
  %v716 = vmul.f32 %v14, %v662
  %v717 = vmul.f32 %v15, %v663
  %v718 = vmul.f32 %v16, %v664
  %v719 = vmul.f32 %v17, %v665
  %v720 = vmul.f32 %v18, %v666
  %v721 = vmul.f32 %v19, %v667
  %v722 = vmul.f32 %v20, %v668
  %v723 = vmul.f32 %v21, %v669
  %v724 = vmul.f32 %v22, %v670
  %v725 = vmul.f32 %v23, %v671
  %v726 = vmul.f32 %v24, %v672
  %v727 = vmul.f32 %v25, %v673
  %v728 = vmul.f32 %v26, %v674
  %v729 = vmul.f32 %v27, %v675
  %v730 = vmul.f32 %v28, %v676
  %v731 = vmul.f32 %v29, %v677
  %v732 = vmul.f32 %v30, %v678
  %v733 = vmul.f32 %v31, %v679
  %v734 = vmul.f32 %v32, %v680
  %v735 = vmul.f32 %v33, %v681
  %v736 = vmul.f32 %v34, %v682
  %v737 = vmul.f32 %v35, %v683
  %v738 = vmul.f32 %v36, %v684
  %v739 = vmul.f32 %v37, %v685
  %v740 = vmul.f32 %v38, %v686
  %v741 = vmul.f32 %v39, %v687
  %v742 = vmul.f32 %v40, %v688
  %v743 = vmul.f32 %v41, %v689
  %v744 = vmul.f32 %v42, %v690
  %v745 = vmul.f32 %v43, %v691
  %v746 = vmul.f32 %v44, %v692
  %v747 = vmul.f32 %v45, %v693
  %v748 = vmul.f32 %v46, %v694
  %v749 = vmul.f32 %v47, %v695
  %v750 = vmul.f32 %v48, %v696
  %v751 = vmul.f32 %v49, %v697
  %v752 = vmul.f32 %v50, %v698
  %v753 = vmul.f32 %v51, %v699
  %v754 = vmul.f32 %v52, %v700
  %v755 = vmul.f32 %v53, %v701
  %v756 = vmul.f32 %v54, %v702
  %v757 = vmul.f32 %v55, %v703
  %v758 = vmul.f32 %v56, %v704
  %v759 = vmul.f32 %v57, %v705
  %v760 = vmul.f32 %v58, %v706
  %v761 = vmul.f32 %v59, %v707
  %v762 = vmul.f32 %v60, %v708
  %v763 = vmul.f32 %v61, %v709
  %v764 = vmul.f32 %v62, %v710
  %v765 = vmul.f32 %v63, %v711
  %v766 = vmul.f32 %v64, %v712
  %v767 = vmul.f32 %v65, %v713
  %v768 = vmul.f32 %v66, %v714
  %v769 = vmul.f32 %v67, %v715
  %v770 = vmul.f32 %v68, %v662
  %v771 = vmul.f32 %v69, %v663
  %v772 = vmul.f32 %v70, %v664
  %v773 = vmul.f32 %v71, %v665
  %v774 = vmul.f32 %v72, %v666
  %v775 = vmul.f32 %v73, %v667
  %v776 = vmul.f32 %v74, %v668
  %v777 = vmul.f32 %v75, %v669
  %v778 = vmul.f32 %v76, %v670
  %v779 = vmul.f32 %v77, %v671
  %v780 = vmul.f32 %v78, %v672
  %v781 = vmul.f32 %v79, %v673
  %v782 = vmul.f32 %v80, %v674
  %v783 = vmul.f32 %v81, %v675
  %v784 = vmul.f32 %v82, %v676
  %v785 = vmul.f32 %v83, %v677
  %v786 = vmul.f32 %v84, %v678
  %v787 = vmul.f32 %v85, %v679
  %v788 = vmul.f32 %v86, %v680
  %v789 = vmul.f32 %v87, %v681
  %v790 = vmul.f32 %v88, %v682
  %v791 = vmul.f32 %v89, %v683
  %v792 = vmul.f32 %v90, %v684
  %v793 = vmul.f32 %v91, %v685
  %v794 = vmul.f32 %v92, %v686
  %v795 = vmul.f32 %v93, %v687
  %v796 = vmul.f32 %v94, %v688
  %v797 = vmul.f32 %v95, %v689
  %v798 = vmul.f32 %v96, %v690
  %v799 = vmul.f32 %v97, %v691
  %v800 = vmul.f32 %v98, %v692
  %v801 = vmul.f32 %v99, %v693
  %v802 = vmul.f32 %v100, %v694
  %v803 = vmul.f32 %v101, %v695
  %v804 = vmul.f32 %v102, %v696
  %v805 = vmul.f32 %v103, %v697
  %v806 = vmul.f32 %v104, %v698
  %v807 = vmul.f32 %v105, %v699
  %v808 = vmul.f32 %v106, %v700
  %v809 = vmul.f32 %v107, %v701
  %v810 = vmul.f32 %v108, %v702
  %v811 = vmul.f32 %v109, %v703
  %v812 = vmul.f32 %v110, %v704
  %v813 = vmul.f32 %v111, %v705
  %v814 = vmul.f32 %v112, %v706
  %v815 = vmul.f32 %v113, %v707
  %v816 = vmul.f32 %v114, %v708
  %v817 = vmul.f32 %v115, %v709
  %v818 = vmul.f32 %v116, %v710
  %v819 = vmul.f32 %v117, %v711
  %v820 = vmul.f32 %v118, %v712
  %v821 = vmul.f32 %v119, %v713
  %v822 = vmul.f32 %v120, %v714
  %v823 = vmul.f32 %v121, %v715
  %v824 = vmul.f32 %v122, %v662
  %v825 = vmul.f32 %v123, %v663
  %v826 = vmul.f32 %v124, %v664
  %v827 = vmul.f32 %v125, %v665
  %v828 = vmul.f32 %v126, %v666
  %v829 = vmul.f32 %v127, %v667
  %v830 = vmul.f32 %v128, %v668
  %v831 = vmul.f32 %v129, %v669
  %v832 = vmul.f32 %v130, %v670
  %v833 = vmul.f32 %v131, %v671
  %v834 = vmul.f32 %v132, %v672
  %v835 = vmul.f32 %v133, %v673
  %v836 = vmul.f32 %v134, %v674
  %v837 = vmul.f32 %v135, %v675
  %v838 = vmul.f32 %v136, %v676
  %v839 = vmul.f32 %v137, %v677
  %v840 = vmul.f32 %v138, %v678
  %v841 = vmul.f32 %v139, %v679
  %v842 = vmul.f32 %v140, %v680
  %v843 = vmul.f32 %v141, %v681
  %v844 = vmul.f32 %v142, %v682
  %v845 = vmul.f32 %v143, %v683
  %v846 = vmul.f32 %v144, %v684
  %v847 = vmul.f32 %v145, %v685
  %v848 = vmul.f32 %v146, %v686
  %v849 = vmul.f32 %v147, %v687
  %v850 = vmul.f32 %v148, %v688
  %v851 = vmul.f32 %v149, %v689
  %v852 = vmul.f32 %v150, %v690
  %v853 = vmul.f32 %v151, %v691
  %v854 = vmul.f32 %v152, %v692
  %v855 = vmul.f32 %v153, %v693
  %v856 = vmul.f32 %v154, %v694
  %v857 = vmul.f32 %v155, %v695
  %v858 = vmul.f32 %v156, %v696
  %v859 = vmul.f32 %v157, %v697
  %v860 = vmul.f32 %v158, %v698
  %v861 = vmul.f32 %v159, %v699
  %v862 = vmul.f32 %v160, %v700
  %v863 = vmul.f32 %v161, %v701
  %v864 = vmul.f32 %v162, %v702
  %v865 = vmul.f32 %v163, %v703
  %v866 = vmul.f32 %v164, %v704
  %v867 = vmul.f32 %v165, %v705
  %v868 = vmul.f32 %v166, %v706
  %v869 = vmul.f32 %v167, %v707
  %v870 = vmul.f32 %v168, %v708
  %v871 = vmul.f32 %v169, %v709
  %v872 = vmul.f32 %v170, %v710
  %v873 = vmul.f32 %v171, %v711
  %v874 = vmul.f32 %v172, %v712
  %v875 = vmul.f32 %v173, %v713
  %v876 = vmul.f32 %v174, %v714
  %v877 = vmul.f32 %v175, %v715
  %v878 = vmul.f32 %v176, %v662
  %v879 = vmul.f32 %v177, %v663
  %v880 = vmul.f32 %v178, %v664
  %v881 = vmul.f32 %v179, %v665
  %v882 = vmul.f32 %v180, %v666
  %v883 = vmul.f32 %v181, %v667
  %v884 = vmul.f32 %v182, %v668
  %v885 = vmul.f32 %v183, %v669
  %v886 = vmul.f32 %v184, %v670
  %v887 = vmul.f32 %v185, %v671
  %v888 = vmul.f32 %v186, %v672
  %v889 = vmul.f32 %v187, %v673
  %v890 = vmul.f32 %v188, %v674
  %v891 = vmul.f32 %v189, %v675
  %v892 = vmul.f32 %v190, %v676
  %v893 = vmul.f32 %v191, %v677
  %v894 = vmul.f32 %v192, %v678
  %v895 = vmul.f32 %v193, %v679
  %v896 = vmul.f32 %v194, %v680
  %v897 = vmul.f32 %v195, %v681
  %v898 = vmul.f32 %v196, %v682
  %v899 = vmul.f32 %v197, %v683
  %v900 = vmul.f32 %v198, %v684
  %v901 = vmul.f32 %v199, %v685
  %v902 = vmul.f32 %v200, %v686
  %v903 = vmul.f32 %v201, %v687
  %v904 = vmul.f32 %v202, %v688
  %v905 = vmul.f32 %v203, %v689
  %v906 = vmul.f32 %v204, %v690
  %v907 = vmul.f32 %v205, %v691
  %v908 = vmul.f32 %v206, %v692
  %v909 = vmul.f32 %v207, %v693
  %v910 = vmul.f32 %v208, %v694
  %v911 = vmul.f32 %v209, %v695
  %v912 = vmul.f32 %v210, %v696
  %v913 = vmul.f32 %v211, %v697
  %v914 = vmul.f32 %v212, %v698
  %v915 = vmul.f32 %v213, %v699
  %v916 = vmul.f32 %v214, %v700
  %v917 = vmul.f32 %v215, %v701
  %v918 = vmul.f32 %v216, %v702
  %v919 = vmul.f32 %v217, %v703
  %v920 = vmul.f32 %v218, %v704
  %v921 = vmul.f32 %v219, %v705
  %v922 = vmul.f32 %v220, %v706
  %v923 = vmul.f32 %v221, %v707
  %v924 = vmul.f32 %v222, %v708
  %v925 = vmul.f32 %v223, %v709
  %v926 = vmul.f32 %v224, %v710
  %v927 = vmul.f32 %v225, %v711
  %v928 = vmul.f32 %v226, %v712
  %v929 = vmul.f32 %v227, %v713
  %v930 = vmul.f32 %v228, %v714
  %v931 = vmul.f32 %v229, %v715
  %v932 = vmul.f32 %v230, %v662
  %v933 = vmul.f32 %v231, %v663
  %v934 = vmul.f32 %v232, %v664
  %v935 = vmul.f32 %v233, %v665
  %v936 = vmul.f32 %v234, %v666
  %v937 = vmul.f32 %v235, %v667
  %v938 = vmul.f32 %v236, %v668
  %v939 = vmul.f32 %v237, %v669
  %v940 = vmul.f32 %v238, %v670
  %v941 = vmul.f32 %v239, %v671
  %v942 = vmul.f32 %v240, %v672
  %v943 = vmul.f32 %v241, %v673
  %v944 = vmul.f32 %v242, %v674
  %v945 = vmul.f32 %v243, %v675
  %v946 = vmul.f32 %v244, %v676
  %v947 = vmul.f32 %v245, %v677
  %v948 = vmul.f32 %v246, %v678
  %v949 = vmul.f32 %v247, %v679
  %v950 = vmul.f32 %v248, %v680
  %v951 = vmul.f32 %v249, %v681
  %v952 = vmul.f32 %v250, %v682
  %v953 = vmul.f32 %v251, %v683
  %v954 = vmul.f32 %v252, %v684
  %v955 = vmul.f32 %v253, %v685
  %v956 = vmul.f32 %v254, %v686
  %v957 = vmul.f32 %v255, %v687
  %v958 = vmul.f32 %v256, %v688
  %v959 = vmul.f32 %v257, %v689
  %v960 = vmul.f32 %v258, %v690
  %v961 = vmul.f32 %v259, %v691
  %v962 = vmul.f32 %v260, %v692
  %v963 = vmul.f32 %v261, %v693
  %v964 = vmul.f32 %v262, %v694
  %v965 = vmul.f32 %v263, %v695
  %v966 = vmul.f32 %v264, %v696
  %v967 = vmul.f32 %v265, %v697
  %v968 = vmul.f32 %v266, %v698
  %v969 = vmul.f32 %v267, %v699
  %v970 = vmul.f32 %v268, %v700
  %v971 = vmul.f32 %v269, %v701
  %v972 = vmul.f32 %v270, %v702
  %v973 = vmul.f32 %v271, %v703
  %v974 = vmul.f32 %v272, %v704
  %v975 = vmul.f32 %v273, %v705
  %v976 = vmul.f32 %v274, %v706
  %v977 = vmul.f32 %v275, %v707
  %v978 = vmul.f32 %v276, %v708
  %v979 = vmul.f32 %v277, %v709
  %v980 = vmul.f32 %v278, %v710
  %v981 = vmul.f32 %v279, %v711
  %v982 = vmul.f32 %v280, %v712
  %v983 = vmul.f32 %v281, %v713
  %v984 = vmul.f32 %v282, %v714
  %v985 = vmul.f32 %v283, %v715
  %v986 = vmul.f32 %v284, %v662
  %v987 = vmul.f32 %v285, %v663
  %v988 = vmul.f32 %v286, %v664
  %v989 = vmul.f32 %v287, %v665
  %v990 = vmul.f32 %v288, %v666
  %v991 = vmul.f32 %v289, %v667
  %v992 = vmul.f32 %v290, %v668
  %v993 = vmul.f32 %v291, %v669
  %v994 = vmul.f32 %v292, %v670
  %v995 = vmul.f32 %v293, %v671
  %v996 = vmul.f32 %v294, %v672
  %v997 = vmul.f32 %v295, %v673
  %v998 = vmul.f32 %v296, %v674
  %v999 = vmul.f32 %v297, %v675
  %v1000 = vmul.f32 %v298, %v676
  %v1001 = vmul.f32 %v299, %v677
  %v1002 = vmul.f32 %v300, %v678
  %v1003 = vmul.f32 %v301, %v679
  %v1004 = vmul.f32 %v302, %v680
  %v1005 = vmul.f32 %v303, %v681
  %v1006 = vmul.f32 %v304, %v682
  %v1007 = vmul.f32 %v305, %v683
  %v1008 = vmul.f32 %v306, %v684
  %v1009 = vmul.f32 %v307, %v685
  %v1010 = vmul.f32 %v308, %v686
  %v1011 = vmul.f32 %v309, %v687
  %v1012 = vmul.f32 %v310, %v688
  %v1013 = vmul.f32 %v311, %v689
  %v1014 = vmul.f32 %v312, %v690
  %v1015 = vmul.f32 %v313, %v691
  %v1016 = vmul.f32 %v314, %v692
  %v1017 = vmul.f32 %v315, %v693
  %v1018 = vmul.f32 %v316, %v694
  %v1019 = vmul.f32 %v317, %v695
  %v1020 = vmul.f32 %v318, %v696
  %v1021 = vmul.f32 %v319, %v697
  %v1022 = vmul.f32 %v320, %v698
  %v1023 = vmul.f32 %v321, %v699
  %v1024 = vmul.f32 %v322, %v700
  %v1025 = vmul.f32 %v323, %v701
  %v1026 = vmul.f32 %v324, %v702
  %v1027 = vmul.f32 %v325, %v703
  %v1028 = vmul.f32 %v326, %v704
  %v1029 = vmul.f32 %v327, %v705
  %v1030 = vmul.f32 %v328, %v706
  %v1031 = vmul.f32 %v329, %v707
  %v1032 = vmul.f32 %v330, %v708
  %v1033 = vmul.f32 %v331, %v709
  %v1034 = vmul.f32 %v332, %v710
  %v1035 = vmul.f32 %v333, %v711
  %v1036 = vmul.f32 %v334, %v712
  %v1037 = vmul.f32 %v335, %v713
  %v1038 = vmul.f32 %v336, %v714
  %v1039 = vmul.f32 %v337, %v715
  %v1040 = vmul.f32 %v338, %v662
  %v1041 = vmul.f32 %v339, %v663
  %v1042 = vmul.f32 %v340, %v664
  %v1043 = vmul.f32 %v341, %v665
  %v1044 = vmul.f32 %v342, %v666
  %v1045 = vmul.f32 %v343, %v667
  %v1046 = vmul.f32 %v344, %v668
  %v1047 = vmul.f32 %v345, %v669
  %v1048 = vmul.f32 %v346, %v670
  %v1049 = vmul.f32 %v347, %v671
  %v1050 = vmul.f32 %v348, %v672
  %v1051 = vmul.f32 %v349, %v673
  %v1052 = vmul.f32 %v350, %v674
  %v1053 = vmul.f32 %v351, %v675
  %v1054 = vmul.f32 %v352, %v676
  %v1055 = vmul.f32 %v353, %v677
  %v1056 = vmul.f32 %v354, %v678
  %v1057 = vmul.f32 %v355, %v679
  %v1058 = vmul.f32 %v356, %v680
  %v1059 = vmul.f32 %v357, %v681
  %v1060 = vmul.f32 %v358, %v682
  %v1061 = vmul.f32 %v359, %v683
  %v1062 = vmul.f32 %v360, %v684
  %v1063 = vmul.f32 %v361, %v685
  %v1064 = vmul.f32 %v362, %v686
  %v1065 = vmul.f32 %v363, %v687
  %v1066 = vmul.f32 %v364, %v688
  %v1067 = vmul.f32 %v365, %v689
  %v1068 = vmul.f32 %v366, %v690
  %v1069 = vmul.f32 %v367, %v691
  %v1070 = vmul.f32 %v368, %v692
  %v1071 = vmul.f32 %v369, %v693
  %v1072 = vmul.f32 %v370, %v694
  %v1073 = vmul.f32 %v371, %v695
  %v1074 = vmul.f32 %v372, %v696
  %v1075 = vmul.f32 %v373, %v697
  %v1076 = vmul.f32 %v374, %v698
  %v1077 = vmul.f32 %v375, %v699
  %v1078 = vmul.f32 %v376, %v700
  %v1079 = vmul.f32 %v377, %v701
  %v1080 = vmul.f32 %v378, %v702
  %v1081 = vmul.f32 %v379, %v703
  %v1082 = vmul.f32 %v380, %v704
  %v1083 = vmul.f32 %v381, %v705
  %v1084 = vmul.f32 %v382, %v706
  %v1085 = vmul.f32 %v383, %v707
  %v1086 = vmul.f32 %v384, %v708
  %v1087 = vmul.f32 %v385, %v709
  %v1088 = vmul.f32 %v386, %v710
  %v1089 = vmul.f32 %v387, %v711
  %v1090 = vmul.f32 %v388, %v712
  %v1091 = vmul.f32 %v389, %v713
  %v1092 = vmul.f32 %v390, %v714
  %v1093 = vmul.f32 %v391, %v715
  %v1094 = vmul.f32 %v392, %v662
  %v1095 = vmul.f32 %v393, %v663
  %v1096 = vmul.f32 %v394, %v664
  %v1097 = vmul.f32 %v395, %v665
  %v1098 = vmul.f32 %v396, %v666
  %v1099 = vmul.f32 %v397, %v667
  %v1100 = vmul.f32 %v398, %v668
  %v1101 = vmul.f32 %v399, %v669
  %v1102 = vmul.f32 %v400, %v670
  %v1103 = vmul.f32 %v401, %v671
  %v1104 = vmul.f32 %v402, %v672
  %v1105 = vmul.f32 %v403, %v673
  %v1106 = vmul.f32 %v404, %v674
  %v1107 = vmul.f32 %v405, %v675
  %v1108 = vmul.f32 %v406, %v676
  %v1109 = vmul.f32 %v407, %v677
  %v1110 = vmul.f32 %v408, %v678
  %v1111 = vmul.f32 %v409, %v679
  %v1112 = vmul.f32 %v410, %v680
  %v1113 = vmul.f32 %v411, %v681
  %v1114 = vmul.f32 %v412, %v682
  %v1115 = vmul.f32 %v413, %v683
  %v1116 = vmul.f32 %v414, %v684
  %v1117 = vmul.f32 %v415, %v685
  %v1118 = vmul.f32 %v416, %v686
  %v1119 = vmul.f32 %v417, %v687
  %v1120 = vmul.f32 %v418, %v688
  %v1121 = vmul.f32 %v419, %v689
  %v1122 = vmul.f32 %v420, %v690
  %v1123 = vmul.f32 %v421, %v691
  %v1124 = vmul.f32 %v422, %v692
  %v1125 = vmul.f32 %v423, %v693
  %v1126 = vmul.f32 %v424, %v694
  %v1127 = vmul.f32 %v425, %v695
  %v1128 = vmul.f32 %v426, %v696
  %v1129 = vmul.f32 %v427, %v697
  %v1130 = vmul.f32 %v428, %v698
  %v1131 = vmul.f32 %v429, %v699
  %v1132 = vmul.f32 %v430, %v700
  %v1133 = vmul.f32 %v431, %v701
  %v1134 = vmul.f32 %v432, %v702
  %v1135 = vmul.f32 %v433, %v703
  %v1136 = vmul.f32 %v434, %v704
  %v1137 = vmul.f32 %v435, %v705
  %v1138 = vmul.f32 %v436, %v706
  %v1139 = vmul.f32 %v437, %v707
  %v1140 = vmul.f32 %v438, %v708
  %v1141 = vmul.f32 %v439, %v709
  %v1142 = vmul.f32 %v440, %v710
  %v1143 = vmul.f32 %v441, %v711
  %v1144 = vmul.f32 %v442, %v712
  %v1145 = vmul.f32 %v443, %v713
  %v1146 = vmul.f32 %v444, %v714
  %v1147 = vmul.f32 %v445, %v715
  %v1148 = vmul.f32 %v446, %v662
  %v1149 = vmul.f32 %v447, %v663
  %v1150 = vmul.f32 %v448, %v664
  %v1151 = vmul.f32 %v449, %v665
  %v1152 = vmul.f32 %v450, %v666
  %v1153 = vmul.f32 %v451, %v667
  %v1154 = vmul.f32 %v452, %v668
  %v1155 = vmul.f32 %v453, %v669
  %v1156 = vmul.f32 %v454, %v670
  %v1157 = vmul.f32 %v455, %v671
  %v1158 = vmul.f32 %v456, %v672
  %v1159 = vmul.f32 %v457, %v673
  %v1160 = vmul.f32 %v458, %v674
  %v1161 = vmul.f32 %v459, %v675
  %v1162 = vmul.f32 %v460, %v676
  %v1163 = vmul.f32 %v461, %v677
  %v1164 = vmul.f32 %v462, %v678
  %v1165 = vmul.f32 %v463, %v679
  %v1166 = vmul.f32 %v464, %v680
  %v1167 = vmul.f32 %v465, %v681
  %v1168 = vmul.f32 %v466, %v682
  %v1169 = vmul.f32 %v467, %v683
  %v1170 = vmul.f32 %v468, %v684
  %v1171 = vmul.f32 %v469, %v685
  %v1172 = vmul.f32 %v470, %v686
  %v1173 = vmul.f32 %v471, %v687
  %v1174 = vmul.f32 %v472, %v688
  %v1175 = vmul.f32 %v473, %v689
  %v1176 = vmul.f32 %v474, %v690
  %v1177 = vmul.f32 %v475, %v691
  %v1178 = vmul.f32 %v476, %v692
  %v1179 = vmul.f32 %v477, %v693
  %v1180 = vmul.f32 %v478, %v694
  %v1181 = vmul.f32 %v479, %v695
  %v1182 = vmul.f32 %v480, %v696
  %v1183 = vmul.f32 %v481, %v697
  %v1184 = vmul.f32 %v482, %v698
  %v1185 = vmul.f32 %v483, %v699
  %v1186 = vmul.f32 %v484, %v700
  %v1187 = vmul.f32 %v485, %v701
  %v1188 = vmul.f32 %v486, %v702
  %v1189 = vmul.f32 %v487, %v703
  %v1190 = vmul.f32 %v488, %v704
  %v1191 = vmul.f32 %v489, %v705
  %v1192 = vmul.f32 %v490, %v706
  %v1193 = vmul.f32 %v491, %v707
  %v1194 = vmul.f32 %v492, %v708
  %v1195 = vmul.f32 %v493, %v709
  %v1196 = vmul.f32 %v494, %v710
  %v1197 = vmul.f32 %v495, %v711
  %v1198 = vmul.f32 %v496, %v712
  %v1199 = vmul.f32 %v497, %v713
  %v1200 = vmul.f32 %v498, %v714
  %v1201 = vmul.f32 %v499, %v715
  %v1202 = vmul.f32 %v500, %v662
  %v1203 = vmul.f32 %v501, %v663
  %v1204 = vmul.f32 %v502, %v664
  %v1205 = vmul.f32 %v503, %v665
  %v1206 = vmul.f32 %v504, %v666
  %v1207 = vmul.f32 %v505, %v667
  %v1208 = vmul.f32 %v506, %v668
  %v1209 = vmul.f32 %v507, %v669
  %v1210 = vmul.f32 %v508, %v670
  %v1211 = vmul.f32 %v509, %v671
  %v1212 = vmul.f32 %v510, %v672
  %v1213 = vmul.f32 %v511, %v673
  %v1214 = vmul.f32 %v512, %v674
  %v1215 = vmul.f32 %v513, %v675
  %v1216 = vmul.f32 %v514, %v676
  %v1217 = vmul.f32 %v515, %v677
  %v1218 = vmul.f32 %v516, %v678
  %v1219 = vmul.f32 %v517, %v679
  %v1220 = vmul.f32 %v518, %v680
  %v1221 = vmul.f32 %v519, %v681
  %v1222 = vmul.f32 %v520, %v682
  %v1223 = vmul.f32 %v521, %v683
  %v1224 = vmul.f32 %v522, %v684
  %v1225 = vmul.f32 %v523, %v685
  %v1226 = vmul.f32 %v524, %v686
  %v1227 = vmul.f32 %v525, %v687
  %v1228 = vmul.f32 %v526, %v688
  %v1229 = vmul.f32 %v527, %v689
  %v1230 = vmul.f32 %v528, %v690
  %v1231 = vmul.f32 %v529, %v691
  %v1232 = vmul.f32 %v530, %v692
  %v1233 = vmul.f32 %v531, %v693
  %v1234 = vmul.f32 %v532, %v694
  %v1235 = vmul.f32 %v533, %v695
  %v1236 = vmul.f32 %v534, %v696
  %v1237 = vmul.f32 %v535, %v697
  %v1238 = vmul.f32 %v536, %v698
  %v1239 = vmul.f32 %v537, %v699
  %v1240 = vmul.f32 %v538, %v700
  %v1241 = vmul.f32 %v539, %v701
  %v1242 = vmul.f32 %v540, %v702
  %v1243 = vmul.f32 %v541, %v703
  %v1244 = vmul.f32 %v542, %v704
  %v1245 = vmul.f32 %v543, %v705
  %v1246 = vmul.f32 %v544, %v706
  %v1247 = vmul.f32 %v545, %v707
  %v1248 = vmul.f32 %v546, %v708
  %v1249 = vmul.f32 %v547, %v709
  %v1250 = vmul.f32 %v548, %v710
  %v1251 = vmul.f32 %v549, %v711
  %v1252 = vmul.f32 %v550, %v712
  %v1253 = vmul.f32 %v551, %v713
  %v1254 = vmul.f32 %v552, %v714
  %v1255 = vmul.f32 %v553, %v715
  %v1256 = vmul.f32 %v554, %v662
  %v1257 = vmul.f32 %v555, %v663
  %v1258 = vmul.f32 %v556, %v664
  %v1259 = vmul.f32 %v557, %v665
  %v1260 = vmul.f32 %v558, %v666
  %v1261 = vmul.f32 %v559, %v667
  %v1262 = vmul.f32 %v560, %v668
  %v1263 = vmul.f32 %v561, %v669
  %v1264 = vmul.f32 %v562, %v670
  %v1265 = vmul.f32 %v563, %v671
  %v1266 = vmul.f32 %v564, %v672
  %v1267 = vmul.f32 %v565, %v673
  %v1268 = vmul.f32 %v566, %v674
  %v1269 = vmul.f32 %v567, %v675
  %v1270 = vmul.f32 %v568, %v676
  %v1271 = vmul.f32 %v569, %v677
  %v1272 = vmul.f32 %v570, %v678
  %v1273 = vmul.f32 %v571, %v679
  %v1274 = vmul.f32 %v572, %v680
  %v1275 = vmul.f32 %v573, %v681
  %v1276 = vmul.f32 %v574, %v682
  %v1277 = vmul.f32 %v575, %v683
  %v1278 = vmul.f32 %v576, %v684
  %v1279 = vmul.f32 %v577, %v685
  %v1280 = vmul.f32 %v578, %v686
  %v1281 = vmul.f32 %v579, %v687
  %v1282 = vmul.f32 %v580, %v688
  %v1283 = vmul.f32 %v581, %v689
  %v1284 = vmul.f32 %v582, %v690
  %v1285 = vmul.f32 %v583, %v691
  %v1286 = vmul.f32 %v584, %v692
  %v1287 = vmul.f32 %v585, %v693
  %v1288 = vmul.f32 %v586, %v694
  %v1289 = vmul.f32 %v587, %v695
  %v1290 = vmul.f32 %v588, %v696
  %v1291 = vmul.f32 %v589, %v697
  %v1292 = vmul.f32 %v590, %v698
  %v1293 = vmul.f32 %v591, %v699
  %v1294 = vmul.f32 %v592, %v700
  %v1295 = vmul.f32 %v593, %v701
  %v1296 = vmul.f32 %v594, %v702
  %v1297 = vmul.f32 %v595, %v703
  %v1298 = vmul.f32 %v596, %v704
  %v1299 = vmul.f32 %v597, %v705
  %v1300 = vmul.f32 %v598, %v706
  %v1301 = vmul.f32 %v599, %v707
  %v1302 = vmul.f32 %v600, %v708
  %v1303 = vmul.f32 %v601, %v709
  %v1304 = vmul.f32 %v602, %v710
  %v1305 = vmul.f32 %v603, %v711
  %v1306 = vmul.f32 %v604, %v712
  %v1307 = vmul.f32 %v605, %v713
  %v1308 = vmul.f32 %v606, %v714
  %v1309 = vmul.f32 %v607, %v715
  %v1310 = vmul.f32 %v608, %v662
  %v1311 = vmul.f32 %v609, %v663
  %v1312 = vmul.f32 %v610, %v664
  %v1313 = vmul.f32 %v611, %v665
  %v1314 = vmul.f32 %v612, %v666
  %v1315 = vmul.f32 %v613, %v667
  %v1316 = vmul.f32 %v614, %v668
  %v1317 = vmul.f32 %v615, %v669
  %v1318 = vmul.f32 %v616, %v670
  %v1319 = vmul.f32 %v617, %v671
  %v1320 = vmul.f32 %v618, %v672
  %v1321 = vmul.f32 %v619, %v673
  %v1322 = vmul.f32 %v620, %v674
  %v1323 = vmul.f32 %v621, %v675
  %v1324 = vmul.f32 %v622, %v676
  %v1325 = vmul.f32 %v623, %v677
  %v1326 = vmul.f32 %v624, %v678
  %v1327 = vmul.f32 %v625, %v679
  %v1328 = vmul.f32 %v626, %v680
  %v1329 = vmul.f32 %v627, %v681
  %v1330 = vmul.f32 %v628, %v682
  %v1331 = vmul.f32 %v629, %v683
  %v1332 = vmul.f32 %v630, %v684
  %v1333 = vmul.f32 %v631, %v685
  %v1334 = vmul.f32 %v632, %v686
  %v1335 = vmul.f32 %v633, %v687
  %v1336 = vmul.f32 %v634, %v688
  %v1337 = vmul.f32 %v635, %v689
  %v1338 = vmul.f32 %v636, %v690
  %v1339 = vmul.f32 %v637, %v691
  %v1340 = vmul.f32 %v638, %v692
  %v1341 = vmul.f32 %v639, %v693
  %v1342 = vmul.f32 %v640, %v694
  %v1343 = vmul.f32 %v641, %v695
  %v1344 = vmul.f32 %v642, %v696
  %v1345 = vmul.f32 %v643, %v697
  %v1346 = vmul.f32 %v644, %v698
  %v1347 = vmul.f32 %v645, %v699
  %v1348 = vmul.f32 %v646, %v700
  %v1349 = vmul.f32 %v647, %v701
  %v1350 = vmul.f32 %v648, %v702
  %v1351 = vmul.f32 %v649, %v703
  %v1352 = vmul.f32 %v650, %v704
  %v1353 = vmul.f32 %v651, %v705
  %v1354 = vmul.f32 %v652, %v706
  %v1355 = vmul.f32 %v653, %v707
  %v1356 = vmul.f32 %v654, %v708
  %v1357 = vmul.f32 %v655, %v709
  %v1358 = vmul.f32 %v656, %v710
  %v1359 = vmul.f32 %v657, %v711
  %v1360 = vmul.f32 %v658, %v712
  %v1361 = vmul.f32 %v659, %v713
  %v1362 = vmul.f32 %v660, %v714
  %v1363 = vmul.f32 %v661, %v715
  %v1364 = vadd.f32 %v716, %v718
  %v1365 = vadd.f32 %v1364, %v720
  %v1366 = vadd.f32 %v1365, %v722
  %v1367 = vadd.f32 %v1366, %v724
  %v1368 = vadd.f32 %v1367, %v726
  %v1369 = vadd.f32 %v1368, %v728
  %v1370 = vadd.f32 %v1369, %v730
  %v1371 = vadd.f32 %v1370, %v732
  %v1372 = vadd.f32 %v1371, %v734
  %v1373 = vadd.f32 %v1372, %v736
  %v1374 = vadd.f32 %v1373, %v738
  %v1375 = vadd.f32 %v1374, %v740
  %v1376 = vadd.f32 %v1375, %v742
  %v1377 = vadd.f32 %v1376, %v744
  %v1378 = vadd.f32 %v1377, %v746
  %v1379 = vadd.f32 %v1378, %v748
  %v1380 = vadd.f32 %v1379, %v750
  %v1381 = vadd.f32 %v1380, %v752
  %v1382 = vadd.f32 %v1381, %v754
  %v1383 = vadd.f32 %v1382, %v756
  %v1384 = vadd.f32 %v1383, %v758
  %v1385 = vadd.f32 %v1384, %v760
  %v1386 = vadd.f32 %v1385, %v762
  %v1387 = vadd.f32 %v1386, %v764
  %v1388 = vadd.f32 %v1387, %v766
  %v1389 = vadd.f32 %v1388, %v768
  %v1390 = vrot.slane %v1389, 4
  %v1391 = vadd.f32 %v1389, %v1390
  %v1392 = vrot.slane %v1391, 2
  %v1393 = vadd.f32 %v1391, %v1392
  %v1394 = vrot.slane %v1393, 1
  %v1395 = vadd.f32 %v1393, %v1394
  %v1396 = vadd.f32 %v717, %v719
  %v1397 = vadd.f32 %v1396, %v721
  %v1398 = vadd.f32 %v1397, %v723
  %v1399 = vadd.f32 %v1398, %v725
  %v1400 = vadd.f32 %v1399, %v727
  %v1401 = vadd.f32 %v1400, %v729
  %v1402 = vadd.f32 %v1401, %v731
  %v1403 = vadd.f32 %v1402, %v733
  %v1404 = vadd.f32 %v1403, %v735
  %v1405 = vadd.f32 %v1404, %v737
  %v1406 = vadd.f32 %v1405, %v739
  %v1407 = vadd.f32 %v1406, %v741
  %v1408 = vadd.f32 %v1407, %v743
  %v1409 = vadd.f32 %v1408, %v745
  %v1410 = vadd.f32 %v1409, %v747
  %v1411 = vadd.f32 %v1410, %v749
  %v1412 = vadd.f32 %v1411, %v751
  %v1413 = vadd.f32 %v1412, %v753
  %v1414 = vadd.f32 %v1413, %v755
  %v1415 = vadd.f32 %v1414, %v757
  %v1416 = vadd.f32 %v1415, %v759
  %v1417 = vadd.f32 %v1416, %v761
  %v1418 = vadd.f32 %v1417, %v763
  %v1419 = vadd.f32 %v1418, %v765
  %v1420 = vadd.f32 %v1419, %v767
  %v1421 = vadd.f32 %v1420, %v769
  %v1422 = vrot.slane %v1421, 4
  %v1423 = vadd.f32 %v1421, %v1422
  %v1424 = vrot.slane %v1423, 2
  %v1425 = vadd.f32 %v1423, %v1424
  %v1426 = vrot.slane %v1425, 1
  %v1427 = vadd.f32 %v1425, %v1426
  %v1428 = vadd.f32 %v770, %v772
  %v1429 = vadd.f32 %v1428, %v774
  %v1430 = vadd.f32 %v1429, %v776
  %v1431 = vadd.f32 %v1430, %v778
  %v1432 = vadd.f32 %v1431, %v780
  %v1433 = vadd.f32 %v1432, %v782
  %v1434 = vadd.f32 %v1433, %v784
  %v1435 = vadd.f32 %v1434, %v786
  %v1436 = vadd.f32 %v1435, %v788
  %v1437 = vadd.f32 %v1436, %v790
  %v1438 = vadd.f32 %v1437, %v792
  %v1439 = vadd.f32 %v1438, %v794
  %v1440 = vadd.f32 %v1439, %v796
  %v1441 = vadd.f32 %v1440, %v798
  %v1442 = vadd.f32 %v1441, %v800
  %v1443 = vadd.f32 %v1442, %v802
  %v1444 = vadd.f32 %v1443, %v804
  %v1445 = vadd.f32 %v1444, %v806
  %v1446 = vadd.f32 %v1445, %v808
  %v1447 = vadd.f32 %v1446, %v810
  %v1448 = vadd.f32 %v1447, %v812
  %v1449 = vadd.f32 %v1448, %v814
  %v1450 = vadd.f32 %v1449, %v816
  %v1451 = vadd.f32 %v1450, %v818
  %v1452 = vadd.f32 %v1451, %v820
  %v1453 = vadd.f32 %v1452, %v822
  %v1454 = vrot.slane %v1453, 4
  %v1455 = vadd.f32 %v1453, %v1454
  %v1456 = vrot.slane %v1455, 2
  %v1457 = vadd.f32 %v1455, %v1456
  %v1458 = vrot.slane %v1457, 1
  %v1459 = vadd.f32 %v1457, %v1458
  %v1460 = vadd.f32 %v771, %v773
  %v1461 = vadd.f32 %v1460, %v775
  %v1462 = vadd.f32 %v1461, %v777
  %v1463 = vadd.f32 %v1462, %v779
  %v1464 = vadd.f32 %v1463, %v781
  %v1465 = vadd.f32 %v1464, %v783
  %v1466 = vadd.f32 %v1465, %v785
  %v1467 = vadd.f32 %v1466, %v787
  %v1468 = vadd.f32 %v1467, %v789
  %v1469 = vadd.f32 %v1468, %v791
  %v1470 = vadd.f32 %v1469, %v793
  %v1471 = vadd.f32 %v1470, %v795
  %v1472 = vadd.f32 %v1471, %v797
  %v1473 = vadd.f32 %v1472, %v799
  %v1474 = vadd.f32 %v1473, %v801
  %v1475 = vadd.f32 %v1474, %v803
  %v1476 = vadd.f32 %v1475, %v805
  %v1477 = vadd.f32 %v1476, %v807
  %v1478 = vadd.f32 %v1477, %v809
  %v1479 = vadd.f32 %v1478, %v811
  %v1480 = vadd.f32 %v1479, %v813
  %v1481 = vadd.f32 %v1480, %v815
  %v1482 = vadd.f32 %v1481, %v817
  %v1483 = vadd.f32 %v1482, %v819
  %v1484 = vadd.f32 %v1483, %v821
  %v1485 = vadd.f32 %v1484, %v823
  %v1486 = vrot.slane %v1485, 4
  %v1487 = vadd.f32 %v1485, %v1486
  %v1488 = vrot.slane %v1487, 2
  %v1489 = vadd.f32 %v1487, %v1488
  %v1490 = vrot.slane %v1489, 1
  %v1491 = vadd.f32 %v1489, %v1490
  %v1492 = vadd.f32 %v824, %v826
  %v1493 = vadd.f32 %v1492, %v828
  %v1494 = vadd.f32 %v1493, %v830
  %v1495 = vadd.f32 %v1494, %v832
  %v1496 = vadd.f32 %v1495, %v834
  %v1497 = vadd.f32 %v1496, %v836
  %v1498 = vadd.f32 %v1497, %v838
  %v1499 = vadd.f32 %v1498, %v840
  %v1500 = vadd.f32 %v1499, %v842
  %v1501 = vadd.f32 %v1500, %v844
  %v1502 = vadd.f32 %v1501, %v846
  %v1503 = vadd.f32 %v1502, %v848
  %v1504 = vadd.f32 %v1503, %v850
  %v1505 = vadd.f32 %v1504, %v852
  %v1506 = vadd.f32 %v1505, %v854
  %v1507 = vadd.f32 %v1506, %v856
  %v1508 = vadd.f32 %v1507, %v858
  %v1509 = vadd.f32 %v1508, %v860
  %v1510 = vadd.f32 %v1509, %v862
  %v1511 = vadd.f32 %v1510, %v864
  %v1512 = vadd.f32 %v1511, %v866
  %v1513 = vadd.f32 %v1512, %v868
  %v1514 = vadd.f32 %v1513, %v870
  %v1515 = vadd.f32 %v1514, %v872
  %v1516 = vadd.f32 %v1515, %v874
  %v1517 = vadd.f32 %v1516, %v876
  %v1518 = vrot.slane %v1517, 4
  %v1519 = vadd.f32 %v1517, %v1518
  %v1520 = vrot.slane %v1519, 2
  %v1521 = vadd.f32 %v1519, %v1520
  %v1522 = vrot.slane %v1521, 1
  %v1523 = vadd.f32 %v1521, %v1522
  %v1524 = vadd.f32 %v825, %v827
  %v1525 = vadd.f32 %v1524, %v829
  %v1526 = vadd.f32 %v1525, %v831
  %v1527 = vadd.f32 %v1526, %v833
  %v1528 = vadd.f32 %v1527, %v835
  %v1529 = vadd.f32 %v1528, %v837
  %v1530 = vadd.f32 %v1529, %v839
  %v1531 = vadd.f32 %v1530, %v841
  %v1532 = vadd.f32 %v1531, %v843
  %v1533 = vadd.f32 %v1532, %v845
  %v1534 = vadd.f32 %v1533, %v847
  %v1535 = vadd.f32 %v1534, %v849
  %v1536 = vadd.f32 %v1535, %v851
  %v1537 = vadd.f32 %v1536, %v853
  %v1538 = vadd.f32 %v1537, %v855
  %v1539 = vadd.f32 %v1538, %v857
  %v1540 = vadd.f32 %v1539, %v859
  %v1541 = vadd.f32 %v1540, %v861
  %v1542 = vadd.f32 %v1541, %v863
  %v1543 = vadd.f32 %v1542, %v865
  %v1544 = vadd.f32 %v1543, %v867
  %v1545 = vadd.f32 %v1544, %v869
  %v1546 = vadd.f32 %v1545, %v871
  %v1547 = vadd.f32 %v1546, %v873
  %v1548 = vadd.f32 %v1547, %v875
  %v1549 = vadd.f32 %v1548, %v877
  %v1550 = vrot.slane %v1549, 4
  %v1551 = vadd.f32 %v1549, %v1550
  %v1552 = vrot.slane %v1551, 2
  %v1553 = vadd.f32 %v1551, %v1552
  %v1554 = vrot.slane %v1553, 1
  %v1555 = vadd.f32 %v1553, %v1554
  %v1556 = vadd.f32 %v878, %v880
  %v1557 = vadd.f32 %v1556, %v882
  %v1558 = vadd.f32 %v1557, %v884
  %v1559 = vadd.f32 %v1558, %v886
  %v1560 = vadd.f32 %v1559, %v888
  %v1561 = vadd.f32 %v1560, %v890
  %v1562 = vadd.f32 %v1561, %v892
  %v1563 = vadd.f32 %v1562, %v894
  %v1564 = vadd.f32 %v1563, %v896
  %v1565 = vadd.f32 %v1564, %v898
  %v1566 = vadd.f32 %v1565, %v900
  %v1567 = vadd.f32 %v1566, %v902
  %v1568 = vadd.f32 %v1567, %v904
  %v1569 = vadd.f32 %v1568, %v906
  %v1570 = vadd.f32 %v1569, %v908
  %v1571 = vadd.f32 %v1570, %v910
  %v1572 = vadd.f32 %v1571, %v912
  %v1573 = vadd.f32 %v1572, %v914
  %v1574 = vadd.f32 %v1573, %v916
  %v1575 = vadd.f32 %v1574, %v918
  %v1576 = vadd.f32 %v1575, %v920
  %v1577 = vadd.f32 %v1576, %v922
  %v1578 = vadd.f32 %v1577, %v924
  %v1579 = vadd.f32 %v1578, %v926
  %v1580 = vadd.f32 %v1579, %v928
  %v1581 = vadd.f32 %v1580, %v930
  %v1582 = vrot.slane %v1581, 4
  %v1583 = vadd.f32 %v1581, %v1582
  %v1584 = vrot.slane %v1583, 2
  %v1585 = vadd.f32 %v1583, %v1584
  %v1586 = vrot.slane %v1585, 1
  %v1587 = vadd.f32 %v1585, %v1586
  %v1588 = vadd.f32 %v879, %v881
  %v1589 = vadd.f32 %v1588, %v883
  %v1590 = vadd.f32 %v1589, %v885
  %v1591 = vadd.f32 %v1590, %v887
  %v1592 = vadd.f32 %v1591, %v889
  %v1593 = vadd.f32 %v1592, %v891
  %v1594 = vadd.f32 %v1593, %v893
  %v1595 = vadd.f32 %v1594, %v895
  %v1596 = vadd.f32 %v1595, %v897
  %v1597 = vadd.f32 %v1596, %v899
  %v1598 = vadd.f32 %v1597, %v901
  %v1599 = vadd.f32 %v1598, %v903
  %v1600 = vadd.f32 %v1599, %v905
  %v1601 = vadd.f32 %v1600, %v907
  %v1602 = vadd.f32 %v1601, %v909
  %v1603 = vadd.f32 %v1602, %v911
  %v1604 = vadd.f32 %v1603, %v913
  %v1605 = vadd.f32 %v1604, %v915
  %v1606 = vadd.f32 %v1605, %v917
  %v1607 = vadd.f32 %v1606, %v919
  %v1608 = vadd.f32 %v1607, %v921
  %v1609 = vadd.f32 %v1608, %v923
  %v1610 = vadd.f32 %v1609, %v925
  %v1611 = vadd.f32 %v1610, %v927
  %v1612 = vadd.f32 %v1611, %v929
  %v1613 = vadd.f32 %v1612, %v931
  %v1614 = vrot.slane %v1613, 4
  %v1615 = vadd.f32 %v1613, %v1614
  %v1616 = vrot.slane %v1615, 2
  %v1617 = vadd.f32 %v1615, %v1616
  %v1618 = vrot.slane %v1617, 1
  %v1619 = vadd.f32 %v1617, %v1618
  %v1620 = vadd.f32 %v932, %v934
  %v1621 = vadd.f32 %v1620, %v936
  %v1622 = vadd.f32 %v1621, %v938
  %v1623 = vadd.f32 %v1622, %v940
  %v1624 = vadd.f32 %v1623, %v942
  %v1625 = vadd.f32 %v1624, %v944
  %v1626 = vadd.f32 %v1625, %v946
  %v1627 = vadd.f32 %v1626, %v948
  %v1628 = vadd.f32 %v1627, %v950
  %v1629 = vadd.f32 %v1628, %v952
  %v1630 = vadd.f32 %v1629, %v954
  %v1631 = vadd.f32 %v1630, %v956
  %v1632 = vadd.f32 %v1631, %v958
  %v1633 = vadd.f32 %v1632, %v960
  %v1634 = vadd.f32 %v1633, %v962
  %v1635 = vadd.f32 %v1634, %v964
  %v1636 = vadd.f32 %v1635, %v966
  %v1637 = vadd.f32 %v1636, %v968
  %v1638 = vadd.f32 %v1637, %v970
  %v1639 = vadd.f32 %v1638, %v972
  %v1640 = vadd.f32 %v1639, %v974
  %v1641 = vadd.f32 %v1640, %v976
  %v1642 = vadd.f32 %v1641, %v978
  %v1643 = vadd.f32 %v1642, %v980
  %v1644 = vadd.f32 %v1643, %v982
  %v1645 = vadd.f32 %v1644, %v984
  %v1646 = vrot.slane %v1645, 4
  %v1647 = vadd.f32 %v1645, %v1646
  %v1648 = vrot.slane %v1647, 2
  %v1649 = vadd.f32 %v1647, %v1648
  %v1650 = vrot.slane %v1649, 1
  %v1651 = vadd.f32 %v1649, %v1650
  %v1652 = vadd.f32 %v933, %v935
  %v1653 = vadd.f32 %v1652, %v937
  %v1654 = vadd.f32 %v1653, %v939
  %v1655 = vadd.f32 %v1654, %v941
  %v1656 = vadd.f32 %v1655, %v943
  %v1657 = vadd.f32 %v1656, %v945
  %v1658 = vadd.f32 %v1657, %v947
  %v1659 = vadd.f32 %v1658, %v949
  %v1660 = vadd.f32 %v1659, %v951
  %v1661 = vadd.f32 %v1660, %v953
  %v1662 = vadd.f32 %v1661, %v955
  %v1663 = vadd.f32 %v1662, %v957
  %v1664 = vadd.f32 %v1663, %v959
  %v1665 = vadd.f32 %v1664, %v961
  %v1666 = vadd.f32 %v1665, %v963
  %v1667 = vadd.f32 %v1666, %v965
  %v1668 = vadd.f32 %v1667, %v967
  %v1669 = vadd.f32 %v1668, %v969
  %v1670 = vadd.f32 %v1669, %v971
  %v1671 = vadd.f32 %v1670, %v973
  %v1672 = vadd.f32 %v1671, %v975
  %v1673 = vadd.f32 %v1672, %v977
  %v1674 = vadd.f32 %v1673, %v979
  %v1675 = vadd.f32 %v1674, %v981
  %v1676 = vadd.f32 %v1675, %v983
  %v1677 = vadd.f32 %v1676, %v985
  %v1678 = vrot.slane %v1677, 4
  %v1679 = vadd.f32 %v1677, %v1678
  %v1680 = vrot.slane %v1679, 2
  %v1681 = vadd.f32 %v1679, %v1680
  %v1682 = vrot.slane %v1681, 1
  %v1683 = vadd.f32 %v1681, %v1682
  %v1684 = vadd.f32 %v986, %v988
  %v1685 = vadd.f32 %v1684, %v990
  %v1686 = vadd.f32 %v1685, %v992
  %v1687 = vadd.f32 %v1686, %v994
  %v1688 = vadd.f32 %v1687, %v996
  %v1689 = vadd.f32 %v1688, %v998
  %v1690 = vadd.f32 %v1689, %v1000
  %v1691 = vadd.f32 %v1690, %v1002
  %v1692 = vadd.f32 %v1691, %v1004
  %v1693 = vadd.f32 %v1692, %v1006
  %v1694 = vadd.f32 %v1693, %v1008
  %v1695 = vadd.f32 %v1694, %v1010
  %v1696 = vadd.f32 %v1695, %v1012
  %v1697 = vadd.f32 %v1696, %v1014
  %v1698 = vadd.f32 %v1697, %v1016
  %v1699 = vadd.f32 %v1698, %v1018
  %v1700 = vadd.f32 %v1699, %v1020
  %v1701 = vadd.f32 %v1700, %v1022
  %v1702 = vadd.f32 %v1701, %v1024
  %v1703 = vadd.f32 %v1702, %v1026
  %v1704 = vadd.f32 %v1703, %v1028
  %v1705 = vadd.f32 %v1704, %v1030
  %v1706 = vadd.f32 %v1705, %v1032
  %v1707 = vadd.f32 %v1706, %v1034
  %v1708 = vadd.f32 %v1707, %v1036
  %v1709 = vadd.f32 %v1708, %v1038
  %v1710 = vrot.slane %v1709, 4
  %v1711 = vadd.f32 %v1709, %v1710
  %v1712 = vrot.slane %v1711, 2
  %v1713 = vadd.f32 %v1711, %v1712
  %v1714 = vrot.slane %v1713, 1
  %v1715 = vadd.f32 %v1713, %v1714
  %v1716 = vadd.f32 %v987, %v989
  %v1717 = vadd.f32 %v1716, %v991
  %v1718 = vadd.f32 %v1717, %v993
  %v1719 = vadd.f32 %v1718, %v995
  %v1720 = vadd.f32 %v1719, %v997
  %v1721 = vadd.f32 %v1720, %v999
  %v1722 = vadd.f32 %v1721, %v1001
  %v1723 = vadd.f32 %v1722, %v1003
  %v1724 = vadd.f32 %v1723, %v1005
  %v1725 = vadd.f32 %v1724, %v1007
  %v1726 = vadd.f32 %v1725, %v1009
  %v1727 = vadd.f32 %v1726, %v1011
  %v1728 = vadd.f32 %v1727, %v1013
  %v1729 = vadd.f32 %v1728, %v1015
  %v1730 = vadd.f32 %v1729, %v1017
  %v1731 = vadd.f32 %v1730, %v1019
  %v1732 = vadd.f32 %v1731, %v1021
  %v1733 = vadd.f32 %v1732, %v1023
  %v1734 = vadd.f32 %v1733, %v1025
  %v1735 = vadd.f32 %v1734, %v1027
  %v1736 = vadd.f32 %v1735, %v1029
  %v1737 = vadd.f32 %v1736, %v1031
  %v1738 = vadd.f32 %v1737, %v1033
  %v1739 = vadd.f32 %v1738, %v1035
  %v1740 = vadd.f32 %v1739, %v1037
  %v1741 = vadd.f32 %v1740, %v1039
  %v1742 = vrot.slane %v1741, 4
  %v1743 = vadd.f32 %v1741, %v1742
  %v1744 = vrot.slane %v1743, 2
  %v1745 = vadd.f32 %v1743, %v1744
  %v1746 = vrot.slane %v1745, 1
  %v1747 = vadd.f32 %v1745, %v1746
  %v1748 = vadd.f32 %v1040, %v1042
  %v1749 = vadd.f32 %v1748, %v1044
  %v1750 = vadd.f32 %v1749, %v1046
  %v1751 = vadd.f32 %v1750, %v1048
  %v1752 = vadd.f32 %v1751, %v1050
  %v1753 = vadd.f32 %v1752, %v1052
  %v1754 = vadd.f32 %v1753, %v1054
  %v1755 = vadd.f32 %v1754, %v1056
  %v1756 = vadd.f32 %v1755, %v1058
  %v1757 = vadd.f32 %v1756, %v1060
  %v1758 = vadd.f32 %v1757, %v1062
  %v1759 = vadd.f32 %v1758, %v1064
  %v1760 = vadd.f32 %v1759, %v1066
  %v1761 = vadd.f32 %v1760, %v1068
  %v1762 = vadd.f32 %v1761, %v1070
  %v1763 = vadd.f32 %v1762, %v1072
  %v1764 = vadd.f32 %v1763, %v1074
  %v1765 = vadd.f32 %v1764, %v1076
  %v1766 = vadd.f32 %v1765, %v1078
  %v1767 = vadd.f32 %v1766, %v1080
  %v1768 = vadd.f32 %v1767, %v1082
  %v1769 = vadd.f32 %v1768, %v1084
  %v1770 = vadd.f32 %v1769, %v1086
  %v1771 = vadd.f32 %v1770, %v1088
  %v1772 = vadd.f32 %v1771, %v1090
  %v1773 = vadd.f32 %v1772, %v1092
  %v1774 = vrot.slane %v1773, 4
  %v1775 = vadd.f32 %v1773, %v1774
  %v1776 = vrot.slane %v1775, 2
  %v1777 = vadd.f32 %v1775, %v1776
  %v1778 = vrot.slane %v1777, 1
  %v1779 = vadd.f32 %v1777, %v1778
  %v1780 = vadd.f32 %v1041, %v1043
  %v1781 = vadd.f32 %v1780, %v1045
  %v1782 = vadd.f32 %v1781, %v1047
  %v1783 = vadd.f32 %v1782, %v1049
  %v1784 = vadd.f32 %v1783, %v1051
  %v1785 = vadd.f32 %v1784, %v1053
  %v1786 = vadd.f32 %v1785, %v1055
  %v1787 = vadd.f32 %v1786, %v1057
  %v1788 = vadd.f32 %v1787, %v1059
  %v1789 = vadd.f32 %v1788, %v1061
  %v1790 = vadd.f32 %v1789, %v1063
  %v1791 = vadd.f32 %v1790, %v1065
  %v1792 = vadd.f32 %v1791, %v1067
  %v1793 = vadd.f32 %v1792, %v1069
  %v1794 = vadd.f32 %v1793, %v1071
  %v1795 = vadd.f32 %v1794, %v1073
  %v1796 = vadd.f32 %v1795, %v1075
  %v1797 = vadd.f32 %v1796, %v1077
  %v1798 = vadd.f32 %v1797, %v1079
  %v1799 = vadd.f32 %v1798, %v1081
  %v1800 = vadd.f32 %v1799, %v1083
  %v1801 = vadd.f32 %v1800, %v1085
  %v1802 = vadd.f32 %v1801, %v1087
  %v1803 = vadd.f32 %v1802, %v1089
  %v1804 = vadd.f32 %v1803, %v1091
  %v1805 = vadd.f32 %v1804, %v1093
  %v1806 = vrot.slane %v1805, 4
  %v1807 = vadd.f32 %v1805, %v1806
  %v1808 = vrot.slane %v1807, 2
  %v1809 = vadd.f32 %v1807, %v1808
  %v1810 = vrot.slane %v1809, 1
  %v1811 = vadd.f32 %v1809, %v1810
  %v1812 = vadd.f32 %v1094, %v1096
  %v1813 = vadd.f32 %v1812, %v1098
  %v1814 = vadd.f32 %v1813, %v1100
  %v1815 = vadd.f32 %v1814, %v1102
  %v1816 = vadd.f32 %v1815, %v1104
  %v1817 = vadd.f32 %v1816, %v1106
  %v1818 = vadd.f32 %v1817, %v1108
  %v1819 = vadd.f32 %v1818, %v1110
  %v1820 = vadd.f32 %v1819, %v1112
  %v1821 = vadd.f32 %v1820, %v1114
  %v1822 = vadd.f32 %v1821, %v1116
  %v1823 = vadd.f32 %v1822, %v1118
  %v1824 = vadd.f32 %v1823, %v1120
  %v1825 = vadd.f32 %v1824, %v1122
  %v1826 = vadd.f32 %v1825, %v1124
  %v1827 = vadd.f32 %v1826, %v1126
  %v1828 = vadd.f32 %v1827, %v1128
  %v1829 = vadd.f32 %v1828, %v1130
  %v1830 = vadd.f32 %v1829, %v1132
  %v1831 = vadd.f32 %v1830, %v1134
  %v1832 = vadd.f32 %v1831, %v1136
  %v1833 = vadd.f32 %v1832, %v1138
  %v1834 = vadd.f32 %v1833, %v1140
  %v1835 = vadd.f32 %v1834, %v1142
  %v1836 = vadd.f32 %v1835, %v1144
  %v1837 = vadd.f32 %v1836, %v1146
  %v1838 = vrot.slane %v1837, 4
  %v1839 = vadd.f32 %v1837, %v1838
  %v1840 = vrot.slane %v1839, 2
  %v1841 = vadd.f32 %v1839, %v1840
  %v1842 = vrot.slane %v1841, 1
  %v1843 = vadd.f32 %v1841, %v1842
  %v1844 = vadd.f32 %v1095, %v1097
  %v1845 = vadd.f32 %v1844, %v1099
  %v1846 = vadd.f32 %v1845, %v1101
  %v1847 = vadd.f32 %v1846, %v1103
  %v1848 = vadd.f32 %v1847, %v1105
  %v1849 = vadd.f32 %v1848, %v1107
  %v1850 = vadd.f32 %v1849, %v1109
  %v1851 = vadd.f32 %v1850, %v1111
  %v1852 = vadd.f32 %v1851, %v1113
  %v1853 = vadd.f32 %v1852, %v1115
  %v1854 = vadd.f32 %v1853, %v1117
  %v1855 = vadd.f32 %v1854, %v1119
  %v1856 = vadd.f32 %v1855, %v1121
  %v1857 = vadd.f32 %v1856, %v1123
  %v1858 = vadd.f32 %v1857, %v1125
  %v1859 = vadd.f32 %v1858, %v1127
  %v1860 = vadd.f32 %v1859, %v1129
  %v1861 = vadd.f32 %v1860, %v1131
  %v1862 = vadd.f32 %v1861, %v1133
  %v1863 = vadd.f32 %v1862, %v1135
  %v1864 = vadd.f32 %v1863, %v1137
  %v1865 = vadd.f32 %v1864, %v1139
  %v1866 = vadd.f32 %v1865, %v1141
  %v1867 = vadd.f32 %v1866, %v1143
  %v1868 = vadd.f32 %v1867, %v1145
  %v1869 = vadd.f32 %v1868, %v1147
  %v1870 = vrot.slane %v1869, 4
  %v1871 = vadd.f32 %v1869, %v1870
  %v1872 = vrot.slane %v1871, 2
  %v1873 = vadd.f32 %v1871, %v1872
  %v1874 = vrot.slane %v1873, 1
  %v1875 = vadd.f32 %v1873, %v1874
  %v1876 = vadd.f32 %v1148, %v1150
  %v1877 = vadd.f32 %v1876, %v1152
  %v1878 = vadd.f32 %v1877, %v1154
  %v1879 = vadd.f32 %v1878, %v1156
  %v1880 = vadd.f32 %v1879, %v1158
  %v1881 = vadd.f32 %v1880, %v1160
  %v1882 = vadd.f32 %v1881, %v1162
  %v1883 = vadd.f32 %v1882, %v1164
  %v1884 = vadd.f32 %v1883, %v1166
  %v1885 = vadd.f32 %v1884, %v1168
  %v1886 = vadd.f32 %v1885, %v1170
  %v1887 = vadd.f32 %v1886, %v1172
  %v1888 = vadd.f32 %v1887, %v1174
  %v1889 = vadd.f32 %v1888, %v1176
  %v1890 = vadd.f32 %v1889, %v1178
  %v1891 = vadd.f32 %v1890, %v1180
  %v1892 = vadd.f32 %v1891, %v1182
  %v1893 = vadd.f32 %v1892, %v1184
  %v1894 = vadd.f32 %v1893, %v1186
  %v1895 = vadd.f32 %v1894, %v1188
  %v1896 = vadd.f32 %v1895, %v1190
  %v1897 = vadd.f32 %v1896, %v1192
  %v1898 = vadd.f32 %v1897, %v1194
  %v1899 = vadd.f32 %v1898, %v1196
  %v1900 = vadd.f32 %v1899, %v1198
  %v1901 = vadd.f32 %v1900, %v1200
  %v1902 = vrot.slane %v1901, 4
  %v1903 = vadd.f32 %v1901, %v1902
  %v1904 = vrot.slane %v1903, 2
  %v1905 = vadd.f32 %v1903, %v1904
  %v1906 = vrot.slane %v1905, 1
  %v1907 = vadd.f32 %v1905, %v1906
  %v1908 = vadd.f32 %v1149, %v1151
  %v1909 = vadd.f32 %v1908, %v1153
  %v1910 = vadd.f32 %v1909, %v1155
  %v1911 = vadd.f32 %v1910, %v1157
  %v1912 = vadd.f32 %v1911, %v1159
  %v1913 = vadd.f32 %v1912, %v1161
  %v1914 = vadd.f32 %v1913, %v1163
  %v1915 = vadd.f32 %v1914, %v1165
  %v1916 = vadd.f32 %v1915, %v1167
  %v1917 = vadd.f32 %v1916, %v1169
  %v1918 = vadd.f32 %v1917, %v1171
  %v1919 = vadd.f32 %v1918, %v1173
  %v1920 = vadd.f32 %v1919, %v1175
  %v1921 = vadd.f32 %v1920, %v1177
  %v1922 = vadd.f32 %v1921, %v1179
  %v1923 = vadd.f32 %v1922, %v1181
  %v1924 = vadd.f32 %v1923, %v1183
  %v1925 = vadd.f32 %v1924, %v1185
  %v1926 = vadd.f32 %v1925, %v1187
  %v1927 = vadd.f32 %v1926, %v1189
  %v1928 = vadd.f32 %v1927, %v1191
  %v1929 = vadd.f32 %v1928, %v1193
  %v1930 = vadd.f32 %v1929, %v1195
  %v1931 = vadd.f32 %v1930, %v1197
  %v1932 = vadd.f32 %v1931, %v1199
  %v1933 = vadd.f32 %v1932, %v1201
  %v1934 = vrot.slane %v1933, 4
  %v1935 = vadd.f32 %v1933, %v1934
  %v1936 = vrot.slane %v1935, 2
  %v1937 = vadd.f32 %v1935, %v1936
  %v1938 = vrot.slane %v1937, 1
  %v1939 = vadd.f32 %v1937, %v1938
  %v1940 = vadd.f32 %v1202, %v1204
  %v1941 = vadd.f32 %v1940, %v1206
  %v1942 = vadd.f32 %v1941, %v1208
  %v1943 = vadd.f32 %v1942, %v1210
  %v1944 = vadd.f32 %v1943, %v1212
  %v1945 = vadd.f32 %v1944, %v1214
  %v1946 = vadd.f32 %v1945, %v1216
  %v1947 = vadd.f32 %v1946, %v1218
  %v1948 = vadd.f32 %v1947, %v1220
  %v1949 = vadd.f32 %v1948, %v1222
  %v1950 = vadd.f32 %v1949, %v1224
  %v1951 = vadd.f32 %v1950, %v1226
  %v1952 = vadd.f32 %v1951, %v1228
  %v1953 = vadd.f32 %v1952, %v1230
  %v1954 = vadd.f32 %v1953, %v1232
  %v1955 = vadd.f32 %v1954, %v1234
  %v1956 = vadd.f32 %v1955, %v1236
  %v1957 = vadd.f32 %v1956, %v1238
  %v1958 = vadd.f32 %v1957, %v1240
  %v1959 = vadd.f32 %v1958, %v1242
  %v1960 = vadd.f32 %v1959, %v1244
  %v1961 = vadd.f32 %v1960, %v1246
  %v1962 = vadd.f32 %v1961, %v1248
  %v1963 = vadd.f32 %v1962, %v1250
  %v1964 = vadd.f32 %v1963, %v1252
  %v1965 = vadd.f32 %v1964, %v1254
  %v1966 = vrot.slane %v1965, 4
  %v1967 = vadd.f32 %v1965, %v1966
  %v1968 = vrot.slane %v1967, 2
  %v1969 = vadd.f32 %v1967, %v1968
  %v1970 = vrot.slane %v1969, 1
  %v1971 = vadd.f32 %v1969, %v1970
  %v1972 = vadd.f32 %v1203, %v1205
  %v1973 = vadd.f32 %v1972, %v1207
  %v1974 = vadd.f32 %v1973, %v1209
  %v1975 = vadd.f32 %v1974, %v1211
  %v1976 = vadd.f32 %v1975, %v1213
  %v1977 = vadd.f32 %v1976, %v1215
  %v1978 = vadd.f32 %v1977, %v1217
  %v1979 = vadd.f32 %v1978, %v1219
  %v1980 = vadd.f32 %v1979, %v1221
  %v1981 = vadd.f32 %v1980, %v1223
  %v1982 = vadd.f32 %v1981, %v1225
  %v1983 = vadd.f32 %v1982, %v1227
  %v1984 = vadd.f32 %v1983, %v1229
  %v1985 = vadd.f32 %v1984, %v1231
  %v1986 = vadd.f32 %v1985, %v1233
  %v1987 = vadd.f32 %v1986, %v1235
  %v1988 = vadd.f32 %v1987, %v1237
  %v1989 = vadd.f32 %v1988, %v1239
  %v1990 = vadd.f32 %v1989, %v1241
  %v1991 = vadd.f32 %v1990, %v1243
  %v1992 = vadd.f32 %v1991, %v1245
  %v1993 = vadd.f32 %v1992, %v1247
  %v1994 = vadd.f32 %v1993, %v1249
  %v1995 = vadd.f32 %v1994, %v1251
  %v1996 = vadd.f32 %v1995, %v1253
  %v1997 = vadd.f32 %v1996, %v1255
  %v1998 = vrot.slane %v1997, 4
  %v1999 = vadd.f32 %v1997, %v1998
  %v2000 = vrot.slane %v1999, 2
  %v2001 = vadd.f32 %v1999, %v2000
  %v2002 = vrot.slane %v2001, 1
  %v2003 = vadd.f32 %v2001, %v2002
  %v2004 = vadd.f32 %v1256, %v1258
  %v2005 = vadd.f32 %v2004, %v1260
  %v2006 = vadd.f32 %v2005, %v1262
  %v2007 = vadd.f32 %v2006, %v1264
  %v2008 = vadd.f32 %v2007, %v1266
  %v2009 = vadd.f32 %v2008, %v1268
  %v2010 = vadd.f32 %v2009, %v1270
  %v2011 = vadd.f32 %v2010, %v1272
  %v2012 = vadd.f32 %v2011, %v1274
  %v2013 = vadd.f32 %v2012, %v1276
  %v2014 = vadd.f32 %v2013, %v1278
  %v2015 = vadd.f32 %v2014, %v1280
  %v2016 = vadd.f32 %v2015, %v1282
  %v2017 = vadd.f32 %v2016, %v1284
  %v2018 = vadd.f32 %v2017, %v1286
  %v2019 = vadd.f32 %v2018, %v1288
  %v2020 = vadd.f32 %v2019, %v1290
  %v2021 = vadd.f32 %v2020, %v1292
  %v2022 = vadd.f32 %v2021, %v1294
  %v2023 = vadd.f32 %v2022, %v1296
  %v2024 = vadd.f32 %v2023, %v1298
  %v2025 = vadd.f32 %v2024, %v1300
  %v2026 = vadd.f32 %v2025, %v1302
  %v2027 = vadd.f32 %v2026, %v1304
  %v2028 = vadd.f32 %v2027, %v1306
  %v2029 = vadd.f32 %v2028, %v1308
  %v2030 = vrot.slane %v2029, 4
  %v2031 = vadd.f32 %v2029, %v2030
  %v2032 = vrot.slane %v2031, 2
  %v2033 = vadd.f32 %v2031, %v2032
  %v2034 = vrot.slane %v2033, 1
  %v2035 = vadd.f32 %v2033, %v2034
  %v2036 = vadd.f32 %v1257, %v1259
  %v2037 = vadd.f32 %v2036, %v1261
  %v2038 = vadd.f32 %v2037, %v1263
  %v2039 = vadd.f32 %v2038, %v1265
  %v2040 = vadd.f32 %v2039, %v1267
  %v2041 = vadd.f32 %v2040, %v1269
  %v2042 = vadd.f32 %v2041, %v1271
  %v2043 = vadd.f32 %v2042, %v1273
  %v2044 = vadd.f32 %v2043, %v1275
  %v2045 = vadd.f32 %v2044, %v1277
  %v2046 = vadd.f32 %v2045, %v1279
  %v2047 = vadd.f32 %v2046, %v1281
  %v2048 = vadd.f32 %v2047, %v1283
  %v2049 = vadd.f32 %v2048, %v1285
  %v2050 = vadd.f32 %v2049, %v1287
  %v2051 = vadd.f32 %v2050, %v1289
  %v2052 = vadd.f32 %v2051, %v1291
  %v2053 = vadd.f32 %v2052, %v1293
  %v2054 = vadd.f32 %v2053, %v1295
  %v2055 = vadd.f32 %v2054, %v1297
  %v2056 = vadd.f32 %v2055, %v1299
  %v2057 = vadd.f32 %v2056, %v1301
  %v2058 = vadd.f32 %v2057, %v1303
  %v2059 = vadd.f32 %v2058, %v1305
  %v2060 = vadd.f32 %v2059, %v1307
  %v2061 = vadd.f32 %v2060, %v1309
  %v2062 = vrot.slane %v2061, 4
  %v2063 = vadd.f32 %v2061, %v2062
  %v2064 = vrot.slane %v2063, 2
  %v2065 = vadd.f32 %v2063, %v2064
  %v2066 = vrot.slane %v2065, 1
  %v2067 = vadd.f32 %v2065, %v2066
  %v2068 = vadd.f32 %v1310, %v1312
  %v2069 = vadd.f32 %v2068, %v1314
  %v2070 = vadd.f32 %v2069, %v1316
  %v2071 = vadd.f32 %v2070, %v1318
  %v2072 = vadd.f32 %v2071, %v1320
  %v2073 = vadd.f32 %v2072, %v1322
  %v2074 = vadd.f32 %v2073, %v1324
  %v2075 = vadd.f32 %v2074, %v1326
  %v2076 = vadd.f32 %v2075, %v1328
  %v2077 = vadd.f32 %v2076, %v1330
  %v2078 = vadd.f32 %v2077, %v1332
  %v2079 = vadd.f32 %v2078, %v1334
  %v2080 = vadd.f32 %v2079, %v1336
  %v2081 = vadd.f32 %v2080, %v1338
  %v2082 = vadd.f32 %v2081, %v1340
  %v2083 = vadd.f32 %v2082, %v1342
  %v2084 = vadd.f32 %v2083, %v1344
  %v2085 = vadd.f32 %v2084, %v1346
  %v2086 = vadd.f32 %v2085, %v1348
  %v2087 = vadd.f32 %v2086, %v1350
  %v2088 = vadd.f32 %v2087, %v1352
  %v2089 = vadd.f32 %v2088, %v1354
  %v2090 = vadd.f32 %v2089, %v1356
  %v2091 = vadd.f32 %v2090, %v1358
  %v2092 = vadd.f32 %v2091, %v1360
  %v2093 = vadd.f32 %v2092, %v1362
  %v2094 = vrot.slane %v2093, 4
  %v2095 = vadd.f32 %v2093, %v2094
  %v2096 = vrot.slane %v2095, 2
  %v2097 = vadd.f32 %v2095, %v2096
  %v2098 = vrot.slane %v2097, 1
  %v2099 = vadd.f32 %v2097, %v2098
  %v2100 = vadd.f32 %v1311, %v1313
  %v2101 = vadd.f32 %v2100, %v1315
  %v2102 = vadd.f32 %v2101, %v1317
  %v2103 = vadd.f32 %v2102, %v1319
  %v2104 = vadd.f32 %v2103, %v1321
  %v2105 = vadd.f32 %v2104, %v1323
  %v2106 = vadd.f32 %v2105, %v1325
  %v2107 = vadd.f32 %v2106, %v1327
  %v2108 = vadd.f32 %v2107, %v1329
  %v2109 = vadd.f32 %v2108, %v1331
  %v2110 = vadd.f32 %v2109, %v1333
  %v2111 = vadd.f32 %v2110, %v1335
  %v2112 = vadd.f32 %v2111, %v1337
  %v2113 = vadd.f32 %v2112, %v1339
  %v2114 = vadd.f32 %v2113, %v1341
  %v2115 = vadd.f32 %v2114, %v1343
  %v2116 = vadd.f32 %v2115, %v1345
  %v2117 = vadd.f32 %v2116, %v1347
  %v2118 = vadd.f32 %v2117, %v1349
  %v2119 = vadd.f32 %v2118, %v1351
  %v2120 = vadd.f32 %v2119, %v1353
  %v2121 = vadd.f32 %v2120, %v1355
  %v2122 = vadd.f32 %v2121, %v1357
  %v2123 = vadd.f32 %v2122, %v1359
  %v2124 = vadd.f32 %v2123, %v1361
  %v2125 = vadd.f32 %v2124, %v1363
  %v2126 = vrot.slane %v2125, 4
  %v2127 = vadd.f32 %v2125, %v2126
  %v2128 = vrot.slane %v2127, 2
  %v2129 = vadd.f32 %v2127, %v2128
  %v2130 = vrot.slane %v2129, 1
  %v2131 = vadd.f32 %v2129, %v2130
  %v2132 = vld [vmem:[%s2] sm:$0xff]
  %v2133 = vld [vmem:[%s2 + $0x8] sm:$0xff]
  %v2134 = vld [vmem:[%s2 + $0x10] sm:$0xf]
  %v2135 = vld [vmem:[%s2 + $0x18] sm:$0xf]
  %v2140 = vrot.slane %v2132, 1
  %v2141 = vrot.slane %v2133, 1
  %v2142 = vrot.slane %v2132, 2
  %v2143 = vrot.slane %v2133, 2
  %v2144 = vrot.slane %v2132, 3
  %v2145 = vrot.slane %v2133, 3
  %v2146 = vrot.slane %v2132, 4
  %v2147 = vrot.slane %v2133, 4
  %v2148 = vrot.slane %v2132, 5
  %v2149 = vrot.slane %v2133, 5
  %v2150 = vrot.slane %v2132, 6
  %v2151 = vrot.slane %v2133, 6
  %v2152 = vrot.slane %v2132, 7
  %v2153 = vrot.slane %v2133, 7
  %v2154 = vrot.slane %v2134, 1
  %v2155 = vrot.slane %v2135, 1
  %v2156 = vrot.slane %v2134, 2
  %v2157 = vrot.slane %v2135, 2
  %v2158 = vrot.slane %v2134, 3
  %v2159 = vrot.slane %v2135, 3
  %v2184 = vadd.f32 %v1395, %v2132
  %v2185 = vadd.f32 %v1427, %v2133
  %v2186 = vadd.f32 %v1459, %v2140
  %v2187 = vadd.f32 %v1491, %v2141
  %v2188 = vadd.f32 %v1523, %v2142
  %v2189 = vadd.f32 %v1555, %v2143
  %v2190 = vadd.f32 %v1587, %v2144
  %v2191 = vadd.f32 %v1619, %v2145
  %v2192 = vadd.f32 %v1651, %v2146
  %v2193 = vadd.f32 %v1683, %v2147
  %v2194 = vadd.f32 %v1715, %v2148
  %v2195 = vadd.f32 %v1747, %v2149
  %v2196 = vadd.f32 %v1779, %v2150
  %v2197 = vadd.f32 %v1811, %v2151
  %v2198 = vadd.f32 %v1843, %v2152
  %v2199 = vadd.f32 %v1875, %v2153
  %v2200 = vadd.f32 %v1907, %v2134
  %v2201 = vadd.f32 %v1939, %v2135
  %v2202 = vadd.f32 %v1971, %v2154
  %v2203 = vadd.f32 %v2003, %v2155
  %v2204 = vadd.f32 %v2035, %v2156
  %v2205 = vadd.f32 %v2067, %v2157
  %v2206 = vadd.f32 %v2099, %v2158
  %v2207 = vadd.f32 %v2131, %v2159
  %v2232 = vrot.slane %v2186, 7
  %vm2233 = vcmask 1041409
  %v2234 = vsel %vm2233, %v2232, %v2184
  %v2235 = vrot.slane %v2188, 6
  %vm2236 = vcmask 1042434
  %v2237 = vsel %vm2236, %v2235, %v2234
  %v2238 = vrot.slane %v2190, 5
  %vm2239 = vcmask 1043459
  %v2240 = vsel %vm2239, %v2238, %v2237
  %v2241 = vrot.slane %v2192, 4
  %vm2242 = vcmask 1044484
  %v2243 = vsel %vm2242, %v2241, %v2240
  %v2244 = vrot.slane %v2194, 3
  %vm2245 = vcmask 1045509
  %v2246 = vsel %vm2245, %v2244, %v2243
  %v2247 = vrot.slane %v2196, 2
  %vm2248 = vcmask 1046534
  %v2249 = vsel %vm2248, %v2247, %v2246
  %v2250 = vrot.slane %v2198, 1
  %vm2251 = vcmask 1047559
  %v2252 = vsel %vm2251, %v2250, %v2249
  %v2253 = vrot.slane %v2187, 7
  %v2254 = vsel %vm2233, %v2253, %v2185
  %v2255 = vrot.slane %v2189, 6
  %v2256 = vsel %vm2236, %v2255, %v2254
  %v2257 = vrot.slane %v2191, 5
  %v2258 = vsel %vm2239, %v2257, %v2256
  %v2259 = vrot.slane %v2193, 4
  %v2260 = vsel %vm2242, %v2259, %v2258
  %v2261 = vrot.slane %v2195, 3
  %v2262 = vsel %vm2245, %v2261, %v2260
  %v2263 = vrot.slane %v2197, 2
  %v2264 = vsel %vm2248, %v2263, %v2262
  %v2265 = vrot.slane %v2199, 1
  %v2266 = vsel %vm2251, %v2265, %v2264
  %v2267 = vrot.slane %v2202, 7
  %v2268 = vsel %vm2233, %v2267, %v2200
  %v2269 = vrot.slane %v2204, 6
  %v2270 = vsel %vm2236, %v2269, %v2268
  %v2271 = vrot.slane %v2206, 5
  %v2272 = vsel %vm2239, %v2271, %v2270
  %v2273 = vrot.slane %v2203, 7
  %v2274 = vsel %vm2233, %v2273, %v2201
  %v2275 = vrot.slane %v2205, 6
  %v2276 = vsel %vm2236, %v2275, %v2274
  %v2277 = vrot.slane %v2207, 5
  %v2278 = vsel %vm2239, %v2277, %v2276
  %2283 = vst [vmem:[%s3] sm:$0xff] %v2252
  %2284 = vst [vmem:[%s3 + $0x8] sm:$0xff] %v2266
  %2285 = vst [vmem:[%s3 + $0x10] sm:$0xf] %v2272
  %2286 = vst [vmem:[%s3 + $0x18] sm:$0xf] %v2278
  // Predicated region
  $region14: #{forward.17} parent=0 // pred_check
    _
  $region15: #{forward.17} parent=0 // pred_check_branch
    %2288 = sbr.rel (0) target = $region17
  $region16: #{forward.17} parent=0 // pred_region
    _
  $region17: #{forward.17} parent=0 // pred_fallthru
    _
  // Predicated region
  $region18: #{forward.17} parent=0 // pred_check
    _
  $region19: #{forward.17} parent=0 // pred_check_branch
    %2290 = sbr.rel (0) target = $region21
  $region20: #{forward.17} parent=0 // pred_region
    _
  $region21: #{forward.17} parent=0 // pred_fallthru
    _

</llo_original>
